<compile_context>
chip_gen: v7x
topology: tpu7x:2x2x1
jax: 0.10.0
libtpu: 0.0.40
codegen_flags: <defaults>
</compile_context>

<pallas_src>
import jax
import jax.numpy as jnp
from jax import lax
from jax.experimental import pallas as pl
from jax.experimental.pallas import tpu as pltpu

# Exact f32 matmuls for kernel, wrapper prep and reference (see header note).
jax.config.update("jax_default_matmul_precision", "highest")

# ---- problem sizes (small, consistent with the module) ----------------------
B, N, DIM = 2, 8, 32
HEADS, DIM_HEAD = 4, 16
INNER = HEADS * DIM_HEAD          # inner_dim = dim_head * heads
SCALE = DIM_HEAD ** -0.5
LN_EPS = 1e-5


def reattention_kernel(x_ref, wqk_ref, wvo_ref, cmix_ref, ksum_ref,
                       gcol_ref, bcol_ref, bias_ref, o_ref):
    x = x_ref[...]                                                     # (B*N, DIM)

    # q|k projection and the (w_out-folded, per-head) v projection: two lane-dense matmuls.
    qk = jnp.dot(x, wqk_ref[...], preferred_element_type=jnp.float32)   # (B*N, 2*INNER)
    vp = jnp.dot(x, wvo_ref[...], preferred_element_type=jnp.float32)   # (B*N, HEADS*DIM)

    # per-(batch, head) q.k^T, packed batch-major / head-major along sublanes -> (B*H*N, N)
    dots = []
    for b in range(B):
        qk_b = qk[b * N:(b + 1) * N, :]                                  # (N, 2*INNER)
        for h in range(HEADS):
            q_bh = qk_b[:, h * DIM_HEAD:(h + 1) * DIM_HEAD]
            k_bh = qk_b[:, INNER + h * DIM_HEAD: INNER + (h + 1) * DIM_HEAD]
            dots.append(lax.dot_general(q_bh, k_bh, (((1,), (1,)), ((), ())),
                                        preferred_element_type=jnp.float32))
    s = jnp.concatenate(dots, axis=0) * SCALE                            # (B*H*N, N)

    # softmax over keys -- ONE pass over the packed tile (exact divide for parity)
    m = jnp.max(s, axis=-1, keepdims=True)
    e = jnp.exp(s - m)
    p = e / jnp.sum(e, axis=-1, keepdims=True)

    # re-attention head mixing fused with the LayerNorm mean-subtraction:
    #   centered[b,g,i,j] = sum_h [(I_H - 1/H) @ rw^T]_{g,h} * attn[b,h,i,j]
    centered = jnp.dot(cmix_ref[...], p, preferred_element_type=jnp.float32)    # (B*H*N, N)

    # per-(b,i,j) variance over heads: sum of squares across head blocks, broadcast
    # back to every head row by the kron(I_B, ones(H,H), I_N) matmul.
    ssq = jnp.dot(ksum_ref[...], centered * centered,
                  preferred_element_type=jnp.float32)                           # (B*H*N, N)
    inv = lax.rsqrt(ssq * (1.0 / HEADS) + LN_EPS)

    # LayerNorm affine with pre-broadcast gamma/beta columns (no SMEM scalar loads)
    a = centered * inv * gcol_ref[...] + bcol_ref[...]                          # (B*H*N, N)

    # attn @ (V @ W_out) accumulated per head; one small matmul per (b, g)
    rows = []
    for b in range(B):
        vp_b = vp[b * N:(b + 1) * N, :]                                  # (N, HEADS*DIM)
        acc = jnp.zeros((N, DIM), jnp.float32)
        for g in range(HEADS):
            a_bg = a[(b * HEADS + g) * N:(b * HEADS + g + 1) * N, :]     # (N, N)
            acc = acc + jnp.dot(a_bg, vp_b[:, g * DIM:(g + 1) * DIM],
                                preferred_element_type=jnp.float32)      # (N, DIM)
        rows.append(acc)

    # single (B*N, DIM) store
    o_ref[...] = (jnp.concatenate(rows, axis=0) + bias_ref[...]).astype(o_ref.dtype)


@jax.jit
def reattention(x, w_qkv, reattn_w, ln_gamma, ln_beta, w_out, b_out):
    x_flat = x.reshape(B * N, DIM)

    # --- parameter-only precomputation (constant-foldable in a real model) ----
    w_qk = w_qkv[:, :2 * INNER]                                          # (DIM, 2*INNER)
    w_v = w_qkv[:, 2 * INNER:]                                           # (DIM, INNER)
    # fold w_out into the V projection, per head, stacked along lanes -> (DIM, H*DIM)
    w_vout = jnp.concatenate(
        [w_v[:, g * DIM_HEAD:(g + 1) * DIM_HEAD] @ w_out[g * DIM_HEAD:(g + 1) * DIM_HEAD, :]
         for g in range(HEADS)], axis=1)

    eye_n = jnp.eye(N, dtype=jnp.float32)
    eye_b = jnp.eye(B, dtype=jnp.float32)
    center = jnp.eye(HEADS, dtype=jnp.float32) - 1.0 / HEADS             # (I_H - 1/H)
    # mixing + mean-subtraction:   centered = cmix @ attn_packed
    cmix = jnp.kron(eye_b, jnp.kron(center @ reattn_w.T, eye_n))         # (B*H*N, B*H*N)
    # head-block sum (and broadcast back):  ssq = ksum @ centered^2
    ksum = jnp.kron(eye_b, jnp.kron(jnp.ones((HEADS, HEADS), jnp.float32), eye_n))

    gcol = jnp.tile(jnp.repeat(ln_gamma, N), B).reshape(B * HEADS * N, 1)
    bcol = jnp.tile(jnp.repeat(ln_beta, N), B).reshape(B * HEADS * N, 1)

    y_flat = pl.pallas_call(
        reattention_kernel,
        out_shape=jax.ShapeDtypeStruct((B * N, DIM), jnp.float32),
        in_specs=[
            pl.BlockSpec(memory_space=pltpu.MemorySpace.VMEM),   # x_flat  (B*N, DIM)
            pl.BlockSpec(memory_space=pltpu.MemorySpace.VMEM),   # w_qk    (DIM, 2*INNER)
            pl.BlockSpec(memory_space=pltpu.MemorySpace.VMEM),   # w_vout  (DIM, H*DIM)
            pl.BlockSpec(memory_space=pltpu.MemorySpace.VMEM),   # cmix    (B*H*N, B*H*N)
            pl.BlockSpec(memory_space=pltpu.MemorySpace.VMEM),   # ksum    (B*H*N, B*H*N)
            pl.BlockSpec(memory_space=pltpu.MemorySpace.VMEM),   # gcol    (B*H*N, 1)
            pl.BlockSpec(memory_space=pltpu.MemorySpace.VMEM),   # bcol    (B*H*N, 1)
            pl.BlockSpec(memory_space=pltpu.MemorySpace.VMEM),   # b_out   (1, DIM)
        ],
        out_specs=pl.BlockSpec(memory_space=pltpu.MemorySpace.VMEM),
    )(x_flat, w_qk, w_vout, cmix, ksum, gcol, bcol, b_out)
    return y_flat.reshape(B, N, DIM)


def reference(x, w_qkv, reattn_w, ln_gamma, ln_beta, w_out, b_out):
    """Pure-JAX mirror of the PyTorch forward, for validation."""
    hi = jax.lax.Precision.HIGHEST
    qkv = jnp.matmul(x, w_qkv, precision=hi)              # (B, N, 3*INNER)
    q, k, v = jnp.split(qkv, 3, axis=-1)
    to_heads = lambda t: t.reshape(B, N, HEADS, DIM_HEAD).transpose(0, 2, 1, 3)
    q, k, v = map(to_heads, (q, k, v))
    dots = jnp.einsum('bhid,bhjd->bhij', q, k, precision=hi) * SCALE
    attn = jax.nn.softmax(dots, axis=-1)
    attn = jnp.einsum('bhij,hg->bgij', attn, reattn_w, precision=hi)
    mean = attn.mean(axis=1, keepdims=True)
    var = attn.var(axis=1, keepdims=True)
    attn = (attn - mean) / jnp.sqrt(var + LN_EPS)
    attn = attn * ln_gamma[None, :, None, None] + ln_beta[None, :, None, None]
    out = jnp.einsum('bhij,bhjd->bhid', attn, v, precision=hi)
    out = out.transpose(0, 2, 1, 3).reshape(B, N, INNER)
    return jnp.matmul(out, w_out, precision=hi) + b_out


if __name__ == "__main__":
    key = jax.random.PRNGKey(0)
    k_x, k_qkv, k_rw, k_out, k_b = jax.random.split(key, 5)

    x = jax.random.normal(k_x, (B, N, DIM), dtype=jnp.float32)

    # deterministic synthetic parameters (shapes from __init__)
    w_qkv = jax.random.normal(k_qkv, (DIM, 3 * INNER), dtype=jnp.float32) * (DIM ** -0.5)
    reattn_w = jax.random.normal(k_rw, (HEADS, HEADS), dtype=jnp.float32)      # randn(h, h)
    ln_gamma = jnp.ones((HEADS,), dtype=jnp.float32)                           # LayerNorm weight
    ln_beta = jnp.zeros((HEADS,), dtype=jnp.float32)                           # LayerNorm bias
    w_out = jax.random.normal(k_out, (INNER, DIM), dtype=jnp.float32) * (INNER ** -0.5)
    b_out = jax.random.normal(k_b, (1, DIM), dtype=jnp.float32) * 0.01

    y = reattention(x, w_qkv, reattn_w, ln_gamma, ln_beta, w_out, b_out)
    y = jax.block_until_ready(y)

    y_ref = reference(x, w_qkv, reattn_w, ln_gamma, ln_beta, w_out, b_out)
    assert y.shape == (B, N, DIM)
    assert jnp.allclose(y, y_ref, rtol=1e-2, atol=1e-2), "mismatch vs reference"

    print("KERNEL_OK")
</pallas_src>

<mosaic_0001>
module attributes {stable_mosaic.version = 11 : i64} {
  func.func @reattention_kernel(%arg0: memref<16x32xf32, #tpu.memory_space<vmem>>, %arg1: memref<32x128xf32, #tpu.memory_space<vmem>>, %arg2: memref<32x128xf32, #tpu.memory_space<vmem>>, %arg3: memref<64x64xf32, #tpu.memory_space<vmem>>, %arg4: memref<64x64xf32, #tpu.memory_space<vmem>>, %arg5: memref<64x1xf32, #tpu.memory_space<vmem>>, %arg6: memref<64x1xf32, #tpu.memory_space<vmem>>, %arg7: memref<1x32xf32, #tpu.memory_space<vmem>>, %arg8: memref<16x32xf32, #tpu.memory_space<vmem>>) attributes {dimension_semantics = [], scalar_prefetch = 0 : i64, scratch_operands = 0 : i64, tpu.core_type = #tpu.core_type<tc>} {
    %c0 = arith.constant 0 : index
    %c0_0 = arith.constant 0 : index
    %0 = vector.load %arg0[%c0, %c0_0] : memref<16x32xf32, #tpu.memory_space<vmem>>, vector<16x32xf32>
    %c0_1 = arith.constant 0 : index
    %c0_2 = arith.constant 0 : index
    %1 = vector.load %arg1[%c0_1, %c0_2] : memref<32x128xf32, #tpu.memory_space<vmem>>, vector<32x128xf32>
    %cst = arith.constant dense<0.000000e+00> : vector<16x128xf32>
    %2 = tpu.matmul %0, %1, %cst {dimension_numbers = #tpu.dot_dimension_numbers<[1], [0], [0], [1], [0, 0, 1, 1], [], []>, precision = #tpu.contract_precision<fp32>} : vector<16x32xf32>, vector<32x128xf32>, vector<16x128xf32> -> vector<16x128xf32>
    %c0_3 = arith.constant 0 : index
    %c0_4 = arith.constant 0 : index
    %3 = vector.load %arg2[%c0_3, %c0_4] : memref<32x128xf32, #tpu.memory_space<vmem>>, vector<32x128xf32>
    %cst_5 = arith.constant dense<0.000000e+00> : vector<16x128xf32>
    %4 = tpu.matmul %0, %3, %cst_5 {dimension_numbers = #tpu.dot_dimension_numbers<[1], [0], [0], [1], [0, 0, 1, 1], [], []>, precision = #tpu.contract_precision<fp32>} : vector<16x32xf32>, vector<32x128xf32>, vector<16x128xf32> -> vector<16x128xf32>
    %5 = vector.extract_strided_slice %2 {offsets = [0, 0], sizes = [8, 128], strides = [1, 1]} : vector<16x128xf32> to vector<8x128xf32>
    %6 = vector.extract_strided_slice %5 {offsets = [0, 0], sizes = [8, 16], strides = [1, 1]} : vector<8x128xf32> to vector<8x16xf32>
    %7 = vector.extract_strided_slice %5 {offsets = [0, 64], sizes = [8, 16], strides = [1, 1]} : vector<8x128xf32> to vector<8x16xf32>
    %cst_6 = arith.constant dense<0.000000e+00> : vector<8x8xf32>
    %8 = tpu.matmul %6, %7, %cst_6 {dimension_numbers = #tpu.dot_dimension_numbers<[1], [1], [0], [0], [0, 0, 1, 0], [], []>, precision = #tpu.contract_precision<fp32>} : vector<8x16xf32>, vector<8x16xf32>, vector<8x8xf32> -> vector<8x8xf32>
    %9 = vector.extract_strided_slice %5 {offsets = [0, 16], sizes = [8, 16], strides = [1, 1]} : vector<8x128xf32> to vector<8x16xf32>
    %10 = vector.extract_strided_slice %5 {offsets = [0, 80], sizes = [8, 16], strides = [1, 1]} : vector<8x128xf32> to vector<8x16xf32>
    %cst_7 = arith.constant dense<0.000000e+00> : vector<8x8xf32>
    %11 = tpu.matmul %9, %10, %cst_7 {dimension_numbers = #tpu.dot_dimension_numbers<[1], [1], [0], [0], [0, 0, 1, 0], [], []>, precision = #tpu.contract_precision<fp32>} : vector<8x16xf32>, vector<8x16xf32>, vector<8x8xf32> -> vector<8x8xf32>
    %12 = vector.extract_strided_slice %5 {offsets = [0, 32], sizes = [8, 16], strides = [1, 1]} : vector<8x128xf32> to vector<8x16xf32>
    %13 = vector.extract_strided_slice %5 {offsets = [0, 96], sizes = [8, 16], strides = [1, 1]} : vector<8x128xf32> to vector<8x16xf32>
    %cst_8 = arith.constant dense<0.000000e+00> : vector<8x8xf32>
    %14 = tpu.matmul %12, %13, %cst_8 {dimension_numbers = #tpu.dot_dimension_numbers<[1], [1], [0], [0], [0, 0, 1, 0], [], []>, precision = #tpu.contract_precision<fp32>} : vector<8x16xf32>, vector<8x16xf32>, vector<8x8xf32> -> vector<8x8xf32>
    %15 = vector.extract_strided_slice %5 {offsets = [0, 48], sizes = [8, 16], strides = [1, 1]} : vector<8x128xf32> to vector<8x16xf32>
    %16 = vector.extract_strided_slice %5 {offsets = [0, 112], sizes = [8, 16], strides = [1, 1]} : vector<8x128xf32> to vector<8x16xf32>
    %cst_9 = arith.constant dense<0.000000e+00> : vector<8x8xf32>
    %17 = tpu.matmul %15, %16, %cst_9 {dimension_numbers = #tpu.dot_dimension_numbers<[1], [1], [0], [0], [0, 0, 1, 0], [], []>, precision = #tpu.contract_precision<fp32>} : vector<8x16xf32>, vector<8x16xf32>, vector<8x8xf32> -> vector<8x8xf32>
    %18 = vector.extract_strided_slice %2 {offsets = [8, 0], sizes = [8, 128], strides = [1, 1]} : vector<16x128xf32> to vector<8x128xf32>
    %19 = vector.extract_strided_slice %18 {offsets = [0, 0], sizes = [8, 16], strides = [1, 1]} : vector<8x128xf32> to vector<8x16xf32>
    %20 = vector.extract_strided_slice %18 {offsets = [0, 64], sizes = [8, 16], strides = [1, 1]} : vector<8x128xf32> to vector<8x16xf32>
    %cst_10 = arith.constant dense<0.000000e+00> : vector<8x8xf32>
    %21 = tpu.matmul %19, %20, %cst_10 {dimension_numbers = #tpu.dot_dimension_numbers<[1], [1], [0], [0], [0, 0, 1, 0], [], []>, precision = #tpu.contract_precision<fp32>} : vector<8x16xf32>, vector<8x16xf32>, vector<8x8xf32> -> vector<8x8xf32>
    %22 = vector.extract_strided_slice %18 {offsets = [0, 16], sizes = [8, 16], strides = [1, 1]} : vector<8x128xf32> to vector<8x16xf32>
    %23 = vector.extract_strided_slice %18 {offsets = [0, 80], sizes = [8, 16], strides = [1, 1]} : vector<8x128xf32> to vector<8x16xf32>
    %cst_11 = arith.constant dense<0.000000e+00> : vector<8x8xf32>
    %24 = tpu.matmul %22, %23, %cst_11 {dimension_numbers = #tpu.dot_dimension_numbers<[1], [1], [0], [0], [0, 0, 1, 0], [], []>, precision = #tpu.contract_precision<fp32>} : vector<8x16xf32>, vector<8x16xf32>, vector<8x8xf32> -> vector<8x8xf32>
    %25 = vector.extract_strided_slice %18 {offsets = [0, 32], sizes = [8, 16], strides = [1, 1]} : vector<8x128xf32> to vector<8x16xf32>
    %26 = vector.extract_strided_slice %18 {offsets = [0, 96], sizes = [8, 16], strides = [1, 1]} : vector<8x128xf32> to vector<8x16xf32>
    %cst_12 = arith.constant dense<0.000000e+00> : vector<8x8xf32>
    %27 = tpu.matmul %25, %26, %cst_12 {dimension_numbers = #tpu.dot_dimension_numbers<[1], [1], [0], [0], [0, 0, 1, 0], [], []>, precision = #tpu.contract_precision<fp32>} : vector<8x16xf32>, vector<8x16xf32>, vector<8x8xf32> -> vector<8x8xf32>
    %28 = vector.extract_strided_slice %18 {offsets = [0, 48], sizes = [8, 16], strides = [1, 1]} : vector<8x128xf32> to vector<8x16xf32>
    %29 = vector.extract_strided_slice %18 {offsets = [0, 112], sizes = [8, 16], strides = [1, 1]} : vector<8x128xf32> to vector<8x16xf32>
    %cst_13 = arith.constant dense<0.000000e+00> : vector<8x8xf32>
    %30 = tpu.matmul %28, %29, %cst_13 {dimension_numbers = #tpu.dot_dimension_numbers<[1], [1], [0], [0], [0, 0, 1, 0], [], []>, precision = #tpu.contract_precision<fp32>} : vector<8x16xf32>, vector<8x16xf32>, vector<8x8xf32> -> vector<8x8xf32>
    %31 = tpu.concatenate %8, %11, %14, %17, %21, %24, %27, %30 in 0 : vector<8x8xf32>, vector<8x8xf32>, vector<8x8xf32>, vector<8x8xf32>, vector<8x8xf32>, vector<8x8xf32>, vector<8x8xf32>, vector<8x8xf32> -> vector<64x8xf32>
    %cst_14 = arith.constant 2.500000e-01 : f32
    %32 = vector.broadcast %cst_14 : f32 to vector<64x8xf32>
    %33 = arith.mulf %31, %32 : vector<64x8xf32>
    %cst_15 = arith.constant dense<0xFF800000> : vector<64xf32>
    %34 = vector.multi_reduction <maximumf>, %33, %cst_15 [1] : vector<64x8xf32> to vector<64xf32>
    %35 = vector.shape_cast %34 : vector<64xf32> to vector<64x1xf32>
    %36 = vector.broadcast %35 : vector<64x1xf32> to vector<64x8xf32>
    %37 = arith.subf %33, %36 : vector<64x8xf32>
    %38 = math.exp %37 : vector<64x8xf32>
    %cst_16 = arith.constant dense<0.000000e+00> : vector<64xf32>
    %39 = vector.multi_reduction <add>, %38, %cst_16 [1] : vector<64x8xf32> to vector<64xf32>
    %40 = vector.shape_cast %39 : vector<64xf32> to vector<64x1xf32>
    %41 = vector.broadcast %40 : vector<64x1xf32> to vector<64x8xf32>
    %42 = arith.divf %38, %41 : vector<64x8xf32>
    %c0_17 = arith.constant 0 : index
    %c0_18 = arith.constant 0 : index
    %43 = vector.load %arg3[%c0_17, %c0_18] : memref<64x64xf32, #tpu.memory_space<vmem>>, vector<64x64xf32>
    %cst_19 = arith.constant dense<0.000000e+00> : vector<64x8xf32>
    %44 = tpu.matmul %43, %42, %cst_19 {dimension_numbers = #tpu.dot_dimension_numbers<[1], [0], [0], [1], [0, 0, 1, 1], [], []>, precision = #tpu.contract_precision<fp32>} : vector<64x64xf32>, vector<64x8xf32>, vector<64x8xf32> -> vector<64x8xf32>
    %c0_20 = arith.constant 0 : index
    %c0_21 = arith.constant 0 : index
    %45 = vector.load %arg4[%c0_20, %c0_21] : memref<64x64xf32, #tpu.memory_space<vmem>>, vector<64x64xf32>
    %46 = arith.mulf %44, %44 : vector<64x8xf32>
    %cst_22 = arith.constant dense<0.000000e+00> : vector<64x8xf32>
    %47 = tpu.matmul %45, %46, %cst_22 {dimension_numbers = #tpu.dot_dimension_numbers<[1], [0], [0], [1], [0, 0, 1, 1], [], []>, precision = #tpu.contract_precision<fp32>} : vector<64x64xf32>, vector<64x8xf32>, vector<64x8xf32> -> vector<64x8xf32>
    %cst_23 = arith.constant 2.500000e-01 : f32
    %48 = vector.broadcast %cst_23 : f32 to vector<64x8xf32>
    %49 = arith.mulf %47, %48 : vector<64x8xf32>
    %cst_24 = arith.constant 9.99999974E-6 : f32
    %50 = vector.broadcast %cst_24 : f32 to vector<64x8xf32>
    %51 = arith.addf %49, %50 : vector<64x8xf32>
    %52 = math.rsqrt %51 : vector<64x8xf32>
    %53 = arith.mulf %44, %52 : vector<64x8xf32>
    %c0_25 = arith.constant 0 : index
    %c0_26 = arith.constant 0 : index
    %54 = vector.load %arg5[%c0_25, %c0_26] : memref<64x1xf32, #tpu.memory_space<vmem>>, vector<64x1xf32>
    %55 = vector.broadcast %54 : vector<64x1xf32> to vector<64x8xf32>
    %56 = arith.mulf %53, %55 : vector<64x8xf32>
    %c0_27 = arith.constant 0 : index
    %c0_28 = arith.constant 0 : index
    %57 = vector.load %arg6[%c0_27, %c0_28] : memref<64x1xf32, #tpu.memory_space<vmem>>, vector<64x1xf32>
    %58 = vector.broadcast %57 : vector<64x1xf32> to vector<64x8xf32>
    %59 = arith.addf %56, %58 : vector<64x8xf32>
    %60 = vector.extract_strided_slice %4 {offsets = [0, 0], sizes = [8, 128], strides = [1, 1]} : vector<16x128xf32> to vector<8x128xf32>
    %cst_29 = arith.constant 0.000000e+00 : f32
    %61 = vector.broadcast %cst_29 : f32 to vector<8x32xf32>
    %62 = vector.extract_strided_slice %59 {offsets = [0, 0], sizes = [8, 8], strides = [1, 1]} : vector<64x8xf32> to vector<8x8xf32>
    %63 = vector.extract_strided_slice %60 {offsets = [0, 0], sizes = [8, 32], strides = [1, 1]} : vector<8x128xf32> to vector<8x32xf32>
    %cst_30 = arith.constant dense<0.000000e+00> : vector<8x32xf32>
    %64 = tpu.matmul %62, %63, %cst_30 {dimension_numbers = #tpu.dot_dimension_numbers<[1], [0], [0], [1], [0, 0, 1, 1], [], []>, precision = #tpu.contract_precision<fp32>} : vector<8x8xf32>, vector<8x32xf32>, vector<8x32xf32> -> vector<8x32xf32>
    %65 = arith.addf %61, %64 : vector<8x32xf32>
    %66 = vector.extract_strided_slice %59 {offsets = [8, 0], sizes = [8, 8], strides = [1, 1]} : vector<64x8xf32> to vector<8x8xf32>
    %67 = vector.extract_strided_slice %60 {offsets = [0, 32], sizes = [8, 32], strides = [1, 1]} : vector<8x128xf32> to vector<8x32xf32>
    %cst_31 = arith.constant dense<0.000000e+00> : vector<8x32xf32>
    %68 = tpu.matmul %66, %67, %cst_31 {dimension_numbers = #tpu.dot_dimension_numbers<[1], [0], [0], [1], [0, 0, 1, 1], [], []>, precision = #tpu.contract_precision<fp32>} : vector<8x8xf32>, vector<8x32xf32>, vector<8x32xf32> -> vector<8x32xf32>
    %69 = arith.addf %65, %68 : vector<8x32xf32>
    %70 = vector.extract_strided_slice %59 {offsets = [16, 0], sizes = [8, 8], strides = [1, 1]} : vector<64x8xf32> to vector<8x8xf32>
    %71 = vector.extract_strided_slice %60 {offsets = [0, 64], sizes = [8, 32], strides = [1, 1]} : vector<8x128xf32> to vector<8x32xf32>
    %cst_32 = arith.constant dense<0.000000e+00> : vector<8x32xf32>
    %72 = tpu.matmul %70, %71, %cst_32 {dimension_numbers = #tpu.dot_dimension_numbers<[1], [0], [0], [1], [0, 0, 1, 1], [], []>, precision = #tpu.contract_precision<fp32>} : vector<8x8xf32>, vector<8x32xf32>, vector<8x32xf32> -> vector<8x32xf32>
    %73 = arith.addf %69, %72 : vector<8x32xf32>
    %74 = vector.extract_strided_slice %59 {offsets = [24, 0], sizes = [8, 8], strides = [1, 1]} : vector<64x8xf32> to vector<8x8xf32>
    %75 = vector.extract_strided_slice %60 {offsets = [0, 96], sizes = [8, 32], strides = [1, 1]} : vector<8x128xf32> to vector<8x32xf32>
    %cst_33 = arith.constant dense<0.000000e+00> : vector<8x32xf32>
    %76 = tpu.matmul %74, %75, %cst_33 {dimension_numbers = #tpu.dot_dimension_numbers<[1], [0], [0], [1], [0, 0, 1, 1], [], []>, precision = #tpu.contract_precision<fp32>} : vector<8x8xf32>, vector<8x32xf32>, vector<8x32xf32> -> vector<8x32xf32>
    %77 = arith.addf %73, %76 : vector<8x32xf32>
    %78 = vector.extract_strided_slice %4 {offsets = [8, 0], sizes = [8, 128], strides = [1, 1]} : vector<16x128xf32> to vector<8x128xf32>
    %cst_34 = arith.constant 0.000000e+00 : f32
    %79 = vector.broadcast %cst_34 : f32 to vector<8x32xf32>
    %80 = vector.extract_strided_slice %59 {offsets = [32, 0], sizes = [8, 8], strides = [1, 1]} : vector<64x8xf32> to vector<8x8xf32>
    %81 = vector.extract_strided_slice %78 {offsets = [0, 0], sizes = [8, 32], strides = [1, 1]} : vector<8x128xf32> to vector<8x32xf32>
    %cst_35 = arith.constant dense<0.000000e+00> : vector<8x32xf32>
    %82 = tpu.matmul %80, %81, %cst_35 {dimension_numbers = #tpu.dot_dimension_numbers<[1], [0], [0], [1], [0, 0, 1, 1], [], []>, precision = #tpu.contract_precision<fp32>} : vector<8x8xf32>, vector<8x32xf32>, vector<8x32xf32> -> vector<8x32xf32>
    %83 = arith.addf %79, %82 : vector<8x32xf32>
    %84 = vector.extract_strided_slice %59 {offsets = [40, 0], sizes = [8, 8], strides = [1, 1]} : vector<64x8xf32> to vector<8x8xf32>
    %85 = vector.extract_strided_slice %78 {offsets = [0, 32], sizes = [8, 32], strides = [1, 1]} : vector<8x128xf32> to vector<8x32xf32>
    %cst_36 = arith.constant dense<0.000000e+00> : vector<8x32xf32>
    %86 = tpu.matmul %84, %85, %cst_36 {dimension_numbers = #tpu.dot_dimension_numbers<[1], [0], [0], [1], [0, 0, 1, 1], [], []>, precision = #tpu.contract_precision<fp32>} : vector<8x8xf32>, vector<8x32xf32>, vector<8x32xf32> -> vector<8x32xf32>
    %87 = arith.addf %83, %86 : vector<8x32xf32>
    %88 = vector.extract_strided_slice %59 {offsets = [48, 0], sizes = [8, 8], strides = [1, 1]} : vector<64x8xf32> to vector<8x8xf32>
    %89 = vector.extract_strided_slice %78 {offsets = [0, 64], sizes = [8, 32], strides = [1, 1]} : vector<8x128xf32> to vector<8x32xf32>
    %cst_37 = arith.constant dense<0.000000e+00> : vector<8x32xf32>
    %90 = tpu.matmul %88, %89, %cst_37 {dimension_numbers = #tpu.dot_dimension_numbers<[1], [0], [0], [1], [0, 0, 1, 1], [], []>, precision = #tpu.contract_precision<fp32>} : vector<8x8xf32>, vector<8x32xf32>, vector<8x32xf32> -> vector<8x32xf32>
    %91 = arith.addf %87, %90 : vector<8x32xf32>
    %92 = vector.extract_strided_slice %59 {offsets = [56, 0], sizes = [8, 8], strides = [1, 1]} : vector<64x8xf32> to vector<8x8xf32>
    %93 = vector.extract_strided_slice %78 {offsets = [0, 96], sizes = [8, 32], strides = [1, 1]} : vector<8x128xf32> to vector<8x32xf32>
    %cst_38 = arith.constant dense<0.000000e+00> : vector<8x32xf32>
    %94 = tpu.matmul %92, %93, %cst_38 {dimension_numbers = #tpu.dot_dimension_numbers<[1], [0], [0], [1], [0, 0, 1, 1], [], []>, precision = #tpu.contract_precision<fp32>} : vector<8x8xf32>, vector<8x32xf32>, vector<8x32xf32> -> vector<8x32xf32>
    %95 = arith.addf %91, %94 : vector<8x32xf32>
    %96 = tpu.concatenate %77, %95 in 0 : vector<8x32xf32>, vector<8x32xf32> -> vector<16x32xf32>
    %c0_39 = arith.constant 0 : index
    %c0_40 = arith.constant 0 : index
    %97 = vector.load %arg7[%c0_39, %c0_40] : memref<1x32xf32, #tpu.memory_space<vmem>>, vector<1x32xf32>
    %98 = vector.broadcast %97 : vector<1x32xf32> to vector<16x32xf32>
    %99 = arith.addf %96, %98 : vector<16x32xf32>
    %c0_41 = arith.constant 0 : index
    %c0_42 = arith.constant 0 : index
    %100 = vector.load %arg8[%c0_41, %c0_42] : memref<16x32xf32, #tpu.memory_space<vmem>>, vector<16x32xf32>
    tpu.vector_store %arg8[%c0_41, %c0_42], %99 {strides = array<i32>} : memref<16x32xf32, #tpu.memory_space<vmem>>, vector<16x32xf32>,
    return
  }
}

</mosaic_0001>

<llo_original>
// kernel: mul.48
$region0: #{mul.48}
  #allocation0 [shape = 's32[1]{0}', space=sflag, size = 0x4, scoped, tag = 'scoped memory for mul.48']
  %s0 = inlined_call_operand.vmem [shape: f32[32,32], index: 0, kind: input, shape index: {}]
  %s1 = inlined_call_operand.vmem [shape: f32[32,32], index: 1, kind: input, shape index: {}]
  %s2 = inlined_call_operand.vmem [shape: f32[32,32], index: 2, kind: output, shape index: {}]
  %v3 = vld [vmem:[%s0] sm:$0xff]
  %v4 = vld [vmem:[%s1] sm:$0xff]
  %5 = xla_tuple %v3, %v4
  %6 = xla_tuple %5
  %v7 = vmul.f32 %v3, %v4
  %8 = xla_tuple %v7
  %9 = vst [vmem:[%s2] sm:$0xff] %v7
  %s10 = scalar_lea.vmem %s0, 8
  %v11 = vld [vmem:[%s10] sm:$0xff]
  %s12 = scalar_lea.vmem %s1, 8
  %v13 = vld [vmem:[%s12] sm:$0xff]
  %14 = xla_tuple %v11, %v13
  %15 = xla_tuple %14
  %v16 = vmul.f32 %v11, %v13
  %17 = xla_tuple %v16
  %s18 = scalar_lea.vmem %s2, 8
  %19 = vst [vmem:[%s18] sm:$0xff] %v16
  %s20 = scalar_lea.vmem %s0, 16
  %v21 = vld [vmem:[%s20] sm:$0xff]
  %s22 = scalar_lea.vmem %s1, 16
  %v23 = vld [vmem:[%s22] sm:$0xff]
  %24 = xla_tuple %v21, %v23
  %25 = xla_tuple %24
  %v26 = vmul.f32 %v21, %v23
  %27 = xla_tuple %v26
  %s28 = scalar_lea.vmem %s2, 16
  %29 = vst [vmem:[%s28] sm:$0xff] %v26
  %s30 = scalar_lea.vmem %s0, 24
  %v31 = vld [vmem:[%s30] sm:$0xff]
  %s32 = scalar_lea.vmem %s1, 24
  %v33 = vld [vmem:[%s32] sm:$0xff]
  %34 = xla_tuple %v31, %v33
  %35 = xla_tuple %34
  %v36 = vmul.f32 %v31, %v33
  %37 = xla_tuple %v36
  %s38 = scalar_lea.vmem %s2, 24
  %39 = vst [vmem:[%s38] sm:$0xff] %v36

// kernel: tile.9
$region0: #{tile.9}
  %s0 = inlined_call_operand.vmem [shape: f32[4,8], index: 0, kind: input, shape index: {}]
  %s1 = inlined_call_operand.vmem [shape: f32[32], index: 1, kind: output, shape index: {}]
  $region1: #{tile.9} parent=0
    #allocation0 [shape = 'u8[4096]{0}', space=vmem, size = 0x1000, scoped, tag = 'scoped mem for output reshape']
    #allocation1 [shape = 'u8[4096]{0}', space=vmem, size = 0x1000, scoped, tag = 'scoped mem for input reshape']
    %s3 = sshllo.u32 0, 4
    %v4 = vld [vmem:[%s0] sm:%s3]
    %5 = vst [vmem:[#allocation1] sm:%s3] %v4
    %v6 = vld [vmem:[#allocation1] sm:$0x1]
    %vm7 = vcmask 64512
    %8 = vst.msk [vmem:[#allocation0] sm:$0x1] %vm7, %v6
    %s9 = scalar_lea.vmem [#allocation1], 3
    %v10 = vld [vmem:[%s9] sm:$0x1]
    %11 = vrot.lane.b32.xlu0 %v10, 24
    %v12 = vpop.permute.xlu0 %11
    %vm13 = vcmask 261312
    %14 = vst.msk [vmem:[#allocation0] sm:$0x1] %vm13, %v12
    %s15 = scalar_lea.vmem [#allocation1], 2
    %v16 = vld [vmem:[%s15] sm:$0x1]
    %17 = vrot.lane.b32.xlu0 %v16, 16
    %v18 = vpop.permute.xlu0 %17
    %vm19 = vcmask 195712
    %20 = vst.msk [vmem:[#allocation0] sm:$0x1] %vm19, %v18
    %s21 = scalar_lea.vmem [#allocation1], 1
    %v22 = vld [vmem:[%s21] sm:$0x1]
    %23 = vrot.lane.b32.xlu0 %v22, 8
    %v24 = vpop.permute.xlu0 %23
    %vm25 = vcmask 130112
    %26 = vst.msk [vmem:[#allocation0] sm:$0x1] %vm25, %v24
    %s28 = sshllo.u32 0, 1
    %v30 = vld [vmem:[#allocation0] sm:%s28]
    %s31 = sshllo.u32 0, 1
    %32 = vst [vmem:[%s1] sm:%s31] %v30

// kernel: tile.10
$region0: #{tile.10}
  #allocation0 [shape = 's32[1]{0}', space=sflag, size = 0x4, scoped, tag = 'scoped memory for tile.10']
  %s0 = inlined_call_operand.vmem [shape: f32[32], index: 0, kind: input, shape index: {}]
  %s1 = inlined_call_operand.vmem [shape: f32[2,32], index: 1, kind: output, shape index: {}]
  // Predicated region
  $region2: #{tile.10} parent=0 // pred_check
    _
  $region3: #{tile.10} parent=0 // pred_check_branch
    %3 = sbr.rel (0) target = $region5
  $region4: #{tile.10} parent=0 // pred_region
    _
  $region5: #{tile.10} parent=0 // pred_fallthru
    _
  %v4 = vld [vmem:[%s0] ss:$0 sm:$0xff]
  %5 = vst [vmem:[%s1] sm:$0x3] %v4

// kernel: tile.0
$region0: #{tile.0}
  %s0 = inlined_call_operand.vmem [shape: f32[2,32], index: 0, kind: input, shape index: {}]
  %s1 = inlined_call_operand.vmem [shape: f32[64,1], index: 1, kind: output, shape index: {}]
  $region1: #{tile.0} parent=0
    #allocation0 [shape = 'u8[4096]{0}', space=vmem, size = 0x1000, scoped, tag = 'scoped mem for input reshape']
    %s3 = sshllo.u32 0, 2
    %v4 = vld [vmem:[%s0] sm:%s3]
    %5 = vst [vmem:[#allocation0] sm:%s3] %v4
    %v6 = vld [vmem:[#allocation0] sm:$0x3]
    %vm7 = vcmask 7168
    %8 = vst.msk [vmem:[%s1] sm:$0x1] %vm7, %v6
    %s9 = scalar_lea.vmem %s1, 31
    %10 = vst.msk [vmem:[%s9] sm:$0x2] %vm7, %v6
    %v11 = vld [vmem:[#allocation0] sm:$0x3]
    %12 = vrot.lane.b32.xlu0 %v11, 127
    %v13 = vpop.permute.xlu0 %12
    %vm14 = vcmask 7168
    %s15 = scalar_lea.vmem %s1, 1
    %16 = vst.msk [vmem:[%s15] sm:$0x1] %vm14, %v13
    %s17 = scalar_lea.vmem %s1, 32
    %18 = vst.msk [vmem:[%s17] sm:$0x2] %vm14, %v13
    %v19 = vld [vmem:[#allocation0] sm:$0x3]
    %20 = vrot.lane.b32.xlu0 %v19, 126
    %v21 = vpop.permute.xlu0 %20
    %vm22 = vcmask 7168
    %s23 = scalar_lea.vmem %s1, 2
    %24 = vst.msk [vmem:[%s23] sm:$0x1] %vm22, %v21
    %s25 = scalar_lea.vmem %s1, 33
    %26 = vst.msk [vmem:[%s25] sm:$0x2] %vm22, %v21
    %v27 = vld [vmem:[#allocation0] sm:$0x3]
    %28 = vrot.lane.b32.xlu0 %v27, 125
    %v29 = vpop.permute.xlu0 %28
    %vm30 = vcmask 7168
    %s31 = scalar_lea.vmem %s1, 3
    %32 = vst.msk [vmem:[%s31] sm:$0x1] %vm30, %v29
    %s33 = scalar_lea.vmem %s1, 34
    %34 = vst.msk [vmem:[%s33] sm:$0x2] %vm30, %v29
    %v35 = vld [vmem:[#allocation0] sm:$0x3]
    %36 = vrot.lane.b32.xlu0 %v35, 124
    %v37 = vpop.permute.xlu0 %36
    %vm38 = vcmask 7168
    %s39 = scalar_lea.vmem %s1, 4
    %40 = vst.msk [vmem:[%s39] sm:$0x1] %vm38, %v37
    %s41 = scalar_lea.vmem %s1, 35
    %42 = vst.msk [vmem:[%s41] sm:$0x2] %vm38, %v37
    %v43 = vld [vmem:[#allocation0] sm:$0x3]
    %44 = vrot.lane.b32.xlu0 %v43, 123
    %v45 = vpop.permute.xlu0 %44
    %vm46 = vcmask 7168
    %s47 = scalar_lea.vmem %s1, 5
    %48 = vst.msk [vmem:[%s47] sm:$0x1] %vm46, %v45
    %s49 = scalar_lea.vmem %s1, 36
    %50 = vst.msk [vmem:[%s49] sm:$0x2] %vm46, %v45
    %v51 = vld [vmem:[#allocation0] sm:$0x3]
    %52 = vrot.lane.b32.xlu0 %v51, 122
    %v53 = vpop.permute.xlu0 %52
    %vm54 = vcmask 7168
    %s55 = scalar_lea.vmem %s1, 6
    %56 = vst.msk [vmem:[%s55] sm:$0x1] %vm54, %v53
    %s57 = scalar_lea.vmem %s1, 37
    %58 = vst.msk [vmem:[%s57] sm:$0x2] %vm54, %v53
    %v59 = vld [vmem:[#allocation0] sm:$0x3]
    %60 = vrot.lane.b32.xlu0 %v59, 121
    %v61 = vpop.permute.xlu0 %60
    %vm62 = vcmask 7168
    %s63 = scalar_lea.vmem %s1, 7
    %64 = vst.msk [vmem:[%s63] sm:$0x1] %vm62, %v61
    %s65 = scalar_lea.vmem %s1, 38
    %66 = vst.msk [vmem:[%s65] sm:$0x2] %vm62, %v61
    %v67 = vld [vmem:[#allocation0] sm:$0x3]
    %68 = vrot.lane.b32.xlu0 %v67, 120
    %v69 = vpop.permute.xlu0 %68
    %vm70 = vcmask 7168
    %s71 = scalar_lea.vmem %s1, 8
    %72 = vst.msk [vmem:[%s71] sm:$0x1] %vm70, %v69
    %s73 = scalar_lea.vmem %s1, 39
    %74 = vst.msk [vmem:[%s73] sm:$0x2] %vm70, %v69
    %v75 = vld [vmem:[#allocation0] sm:$0x3]
    %76 = vrot.lane.b32.xlu0 %v75, 119
    %v77 = vpop.permute.xlu0 %76
    %vm78 = vcmask 7168
    %s79 = scalar_lea.vmem %s1, 9
    %80 = vst.msk [vmem:[%s79] sm:$0x1] %vm78, %v77
    %s81 = scalar_lea.vmem %s1, 40
    %82 = vst.msk [vmem:[%s81] sm:$0x2] %vm78, %v77
    %v83 = vld [vmem:[#allocation0] sm:$0x3]
    %84 = vrot.lane.b32.xlu0 %v83, 118
    %v85 = vpop.permute.xlu0 %84
    %vm86 = vcmask 7168
    %s87 = scalar_lea.vmem %s1, 10
    %88 = vst.msk [vmem:[%s87] sm:$0x1] %vm86, %v85
    %s89 = scalar_lea.vmem %s1, 41
    %90 = vst.msk [vmem:[%s89] sm:$0x2] %vm86, %v85
    %v91 = vld [vmem:[#allocation0] sm:$0x3]
    %92 = vrot.lane.b32.xlu0 %v91, 117
    %v93 = vpop.permute.xlu0 %92
    %vm94 = vcmask 7168
    %s95 = scalar_lea.vmem %s1, 11
    %96 = vst.msk [vmem:[%s95] sm:$0x1] %vm94, %v93
    %s97 = scalar_lea.vmem %s1, 42
    %98 = vst.msk [vmem:[%s97] sm:$0x2] %vm94, %v93
    %v99 = vld [vmem:[#allocation0] sm:$0x3]
    %100 = vrot.lane.b32.xlu0 %v99, 116
    %v101 = vpop.permute.xlu0 %100
    %vm102 = vcmask 7168
    %s103 = scalar_lea.vmem %s1, 12
    %104 = vst.msk [vmem:[%s103] sm:$0x1] %vm102, %v101
    %s105 = scalar_lea.vmem %s1, 43
    %106 = vst.msk [vmem:[%s105] sm:$0x2] %vm102, %v101
    %v107 = vld [vmem:[#allocation0] sm:$0x3]
    %108 = vrot.lane.b32.xlu0 %v107, 115
    %v109 = vpop.permute.xlu0 %108
    %vm110 = vcmask 7168
    %s111 = scalar_lea.vmem %s1, 13
    %112 = vst.msk [vmem:[%s111] sm:$0x1] %vm110, %v109
    %s113 = scalar_lea.vmem %s1, 44
    %114 = vst.msk [vmem:[%s113] sm:$0x2] %vm110, %v109
    %v115 = vld [vmem:[#allocation0] sm:$0x3]
    %116 = vrot.lane.b32.xlu0 %v115, 114
    %v117 = vpop.permute.xlu0 %116
    %vm118 = vcmask 7168
    %s119 = scalar_lea.vmem %s1, 14
    %120 = vst.msk [vmem:[%s119] sm:$0x1] %vm118, %v117
    %s121 = scalar_lea.vmem %s1, 45
    %122 = vst.msk [vmem:[%s121] sm:$0x2] %vm118, %v117
    %v123 = vld [vmem:[#allocation0] sm:$0x3]
    %124 = vrot.lane.b32.xlu0 %v123, 113
    %v125 = vpop.permute.xlu0 %124
    %vm126 = vcmask 7168
    %s127 = scalar_lea.vmem %s1, 15
    %128 = vst.msk [vmem:[%s127] sm:$0x1] %vm126, %v125
    %s129 = scalar_lea.vmem %s1, 46
    %130 = vst.msk [vmem:[%s129] sm:$0x2] %vm126, %v125
    %v131 = vld [vmem:[#allocation0] sm:$0x3]
    %132 = vrot.lane.b32.xlu0 %v131, 112
    %v133 = vpop.permute.xlu0 %132
    %vm134 = vcmask 7168
    %s135 = scalar_lea.vmem %s1, 16
    %136 = vst.msk [vmem:[%s135] sm:$0x1] %vm134, %v133
    %s137 = scalar_lea.vmem %s1, 47
    %138 = vst.msk [vmem:[%s137] sm:$0x2] %vm134, %v133
    %v139 = vld [vmem:[#allocation0] sm:$0x3]
    %140 = vrot.lane.b32.xlu0 %v139, 111
    %v141 = vpop.permute.xlu0 %140
    %vm142 = vcmask 7168
    %s143 = scalar_lea.vmem %s1, 17
    %144 = vst.msk [vmem:[%s143] sm:$0x1] %vm142, %v141
    %s145 = scalar_lea.vmem %s1, 48
    %146 = vst.msk [vmem:[%s145] sm:$0x2] %vm142, %v141
    %v147 = vld [vmem:[#allocation0] sm:$0x3]
    %148 = vrot.lane.b32.xlu0 %v147, 110
    %v149 = vpop.permute.xlu0 %148
    %vm150 = vcmask 7168
    %s151 = scalar_lea.vmem %s1, 18
    %152 = vst.msk [vmem:[%s151] sm:$0x1] %vm150, %v149
    %s153 = scalar_lea.vmem %s1, 49
    %154 = vst.msk [vmem:[%s153] sm:$0x2] %vm150, %v149
    %v155 = vld [vmem:[#allocation0] sm:$0x3]
    %156 = vrot.lane.b32.xlu0 %v155, 109
    %v157 = vpop.permute.xlu0 %156
    %vm158 = vcmask 7168
    %s159 = scalar_lea.vmem %s1, 19
    %160 = vst.msk [vmem:[%s159] sm:$0x1] %vm158, %v157
    %s161 = scalar_lea.vmem %s1, 50
    %162 = vst.msk [vmem:[%s161] sm:$0x2] %vm158, %v157
    %v163 = vld [vmem:[#allocation0] sm:$0x3]
    %164 = vrot.lane.b32.xlu0 %v163, 108
    %v165 = vpop.permute.xlu0 %164
    %vm166 = vcmask 7168
    %s167 = scalar_lea.vmem %s1, 20
    %168 = vst.msk [vmem:[%s167] sm:$0x1] %vm166, %v165
    %s169 = scalar_lea.vmem %s1, 51
    %170 = vst.msk [vmem:[%s169] sm:$0x2] %vm166, %v165
    %v171 = vld [vmem:[#allocation0] sm:$0x3]
    %172 = vrot.lane.b32.xlu0 %v171, 107
    %v173 = vpop.permute.xlu0 %172
    %vm174 = vcmask 7168
    %s175 = scalar_lea.vmem %s1, 21
    %176 = vst.msk [vmem:[%s175] sm:$0x1] %vm174, %v173
    %s177 = scalar_lea.vmem %s1, 52
    %178 = vst.msk [vmem:[%s177] sm:$0x2] %vm174, %v173
    %v179 = vld [vmem:[#allocation0] sm:$0x3]
    %180 = vrot.lane.b32.xlu0 %v179, 106
    %v181 = vpop.permute.xlu0 %180
    %vm182 = vcmask 7168
    %s183 = scalar_lea.vmem %s1, 22
    %184 = vst.msk [vmem:[%s183] sm:$0x1] %vm182, %v181
    %s185 = scalar_lea.vmem %s1, 53
    %186 = vst.msk [vmem:[%s185] sm:$0x2] %vm182, %v181
    %v187 = vld [vmem:[#allocation0] sm:$0x3]
    %188 = vrot.lane.b32.xlu0 %v187, 105
    %v189 = vpop.permute.xlu0 %188
    %vm190 = vcmask 7168
    %s191 = scalar_lea.vmem %s1, 23
    %192 = vst.msk [vmem:[%s191] sm:$0x1] %vm190, %v189
    %s193 = scalar_lea.vmem %s1, 54
    %194 = vst.msk [vmem:[%s193] sm:$0x2] %vm190, %v189
    %v195 = vld [vmem:[#allocation0] sm:$0x3]
    %196 = vrot.lane.b32.xlu0 %v195, 104
    %v197 = vpop.permute.xlu0 %196
    %vm198 = vcmask 7168
    %s199 = scalar_lea.vmem %s1, 24
    %200 = vst.msk [vmem:[%s199] sm:$0x1] %vm198, %v197
    %s201 = scalar_lea.vmem %s1, 55
    %202 = vst.msk [vmem:[%s201] sm:$0x2] %vm198, %v197
    %v203 = vld [vmem:[#allocation0] sm:$0x3]
    %204 = vrot.lane.b32.xlu0 %v203, 103
    %v205 = vpop.permute.xlu0 %204
    %vm206 = vcmask 7168
    %s207 = scalar_lea.vmem %s1, 25
    %208 = vst.msk [vmem:[%s207] sm:$0x1] %vm206, %v205
    %s209 = scalar_lea.vmem %s1, 56
    %210 = vst.msk [vmem:[%s209] sm:$0x2] %vm206, %v205
    %v211 = vld [vmem:[#allocation0] sm:$0x3]
    %212 = vrot.lane.b32.xlu0 %v211, 102
    %v213 = vpop.permute.xlu0 %212
    %vm214 = vcmask 7168
    %s215 = scalar_lea.vmem %s1, 26
    %216 = vst.msk [vmem:[%s215] sm:$0x1] %vm214, %v213
    %s217 = scalar_lea.vmem %s1, 57
    %218 = vst.msk [vmem:[%s217] sm:$0x2] %vm214, %v213
    %v219 = vld [vmem:[#allocation0] sm:$0x3]
    %220 = vrot.lane.b32.xlu0 %v219, 101
    %v221 = vpop.permute.xlu0 %220
    %vm222 = vcmask 7168
    %s223 = scalar_lea.vmem %s1, 27
    %224 = vst.msk [vmem:[%s223] sm:$0x1] %vm222, %v221
    %s225 = scalar_lea.vmem %s1, 58
    %226 = vst.msk [vmem:[%s225] sm:$0x2] %vm222, %v221
    %v227 = vld [vmem:[#allocation0] sm:$0x3]
    %228 = vrot.lane.b32.xlu0 %v227, 100
    %v229 = vpop.permute.xlu0 %228
    %vm230 = vcmask 7168
    %s231 = scalar_lea.vmem %s1, 28
    %232 = vst.msk [vmem:[%s231] sm:$0x1] %vm230, %v229
    %s233 = scalar_lea.vmem %s1, 59
    %234 = vst.msk [vmem:[%s233] sm:$0x2] %vm230, %v229
    %v235 = vld [vmem:[#allocation0] sm:$0x3]
    %236 = vrot.lane.b32.xlu0 %v235, 99
    %v237 = vpop.permute.xlu0 %236
    %vm238 = vcmask 7168
    %s239 = scalar_lea.vmem %s1, 29
    %240 = vst.msk [vmem:[%s239] sm:$0x1] %vm238, %v237
    %s241 = scalar_lea.vmem %s1, 60
    %242 = vst.msk [vmem:[%s241] sm:$0x2] %vm238, %v237
    %v243 = vld [vmem:[#allocation0] sm:$0x3]
    %244 = vrot.lane.b32.xlu0 %v243, 98
    %v245 = vpop.permute.xlu0 %244
    %vm246 = vcmask 7168
    %s247 = scalar_lea.vmem %s1, 30
    %248 = vst.msk [vmem:[%s247] sm:$0x1] %vm246, %v245
    %s249 = scalar_lea.vmem %s1, 61
    %250 = vst.msk [vmem:[%s249] sm:$0x2] %vm246, %v245
    %v251 = vld [vmem:[#allocation0] sm:$0x3]
    %252 = vrot.lane.b32.xlu0 %v251, 97
    %v253 = vpop.permute.xlu0 %252
    %vm254 = vcmask 7168
    %s255 = scalar_lea.vmem %s1, 31
    %256 = vst.msk [vmem:[%s255] sm:$0x1] %vm254, %v253
    %s257 = scalar_lea.vmem %s1, 62
    %258 = vst.msk [vmem:[%s257] sm:$0x2] %vm254, %v253

// kernel: reattention.1
$region0: #{reattention.1}
  #allocation0 [shape = 'u32[]', space=smem, size = 0x4, offset = 0x4, fixed_abs, tag = 'smem constant byte address 0x4 - core index']
  #allocation1 [shape = 'u32[144,128]{1,0:T(1,128)}', space=vmem, size = 0x12000, scoped, tag = 'internal scratch']
  %s0 = inlined_call_operand.vmem [shape: f32[16,32], index: 0, kind: input, shape index: {}]
  %s1 = inlined_call_operand.vmem [shape: f32[32,128], index: 1, kind: input, shape index: {}]
  %s2 = inlined_call_operand.vmem [shape: f32[32,128], index: 2, kind: input, shape index: {}]
  %s3 = inlined_call_operand.vmem [shape: f32[64,64], index: 3, kind: input, shape index: {}]
  %s4 = inlined_call_operand.vmem [shape: f32[64,64], index: 4, kind: input, shape index: {}]
  %s5 = inlined_call_operand.vmem [shape: f32[64,1], index: 5, kind: input, shape index: {}]
  %s6 = inlined_call_operand.vmem [shape: f32[64,1], index: 6, kind: input, shape index: {}]
  %s7 = inlined_call_operand.vmem [shape: f32[1,32], index: 7, kind: input, shape index: {}]
  %s8 = inlined_call_operand.hbm [shape: f32[16,32], index: 8, kind: output, shape index: {}]
  %s9 = sld [smem:[#allocation0]]
  $region42: #{reattention.1} parent=0
    _
  %s11 = ssub.s32 1, %s9
  %s12 = scalar_select 0, %s11, %s9
  $region1: #{reattention.1} parent=0
    #allocation2 [shape = 'u8[8192]{0}', space=vmem, size = 0x2000, scoped, tag = 'output window, operand 0, single buffered']
    #allocation3 [shape = 's32[1]{0}', space=sflag, size = 0x4, scoped, tag = 'scoped memory for reattention.1']
    %13 = vsyncpa [#allocation3], 0
    // Predicated region
    $region2: #{reattention.1} parent=1 // pred_check
      _
    $region3: #{reattention.1} parent=1 // pred_check_branch
      %15 = sbr.rel (0) target = $region5
    $region4: #{reattention.1} parent=1 // pred_region
      _
    $region5: #{reattention.1} parent=1 // pred_fallthru
      _
    // Predicated region
    $region6: #{reattention.1} parent=1 // pred_check
      _
    $region7: #{reattention.1} parent=1 // pred_check_branch
      %17 = sbr.rel (0) target = $region9
    $region8: #{reattention.1} parent=1 // pred_region
      _
    $region9: #{reattention.1} parent=1 // pred_fallthru
      _
    // Predicated region
    $region10: #{reattention.1} parent=1 // pred_check
      _
    $region11: #{reattention.1} parent=1 // pred_check_branch
      %19 = sbr.rel (0) target = $region13
    $region12: #{reattention.1} parent=1 // pred_region
      _
    $region13: #{reattention.1} parent=1 // pred_fallthru
      _
    // Predicated region
    $region14: #{reattention.1} parent=1 // pred_check
      _
    $region15: #{reattention.1} parent=1 // pred_check_branch
      %21 = sbr.rel (0) target = $region17
    $region16: #{reattention.1} parent=1 // pred_region
      _
    $region17: #{reattention.1} parent=1 // pred_fallthru
      _
    // Predicated region
    $region18: #{reattention.1} parent=1 // pred_check
      _
    $region19: #{reattention.1} parent=1 // pred_check_branch
      %23 = sbr.rel (0) target = $region21
    $region20: #{reattention.1} parent=1 // pred_region
      _
    $region21: #{reattention.1} parent=1 // pred_fallthru
      _
    // Predicated region
    $region22: #{reattention.1} parent=1 // pred_check
      _
    $region23: #{reattention.1} parent=1 // pred_check_branch
      %25 = sbr.rel (0) target = $region25
    $region24: #{reattention.1} parent=1 // pred_region
      _
    $region25: #{reattention.1} parent=1 // pred_fallthru
      _
    // Predicated region
    $region26: #{reattention.1} parent=1 // pred_check
      _
    $region27: #{reattention.1} parent=1 // pred_check_branch
      %27 = sbr.rel (0) target = $region29
    $region28: #{reattention.1} parent=1 // pred_region
      _
    $region29: #{reattention.1} parent=1 // pred_fallthru
      _
    // Predicated region
    $region30: #{reattention.1} parent=1 // pred_check
      _
    $region31: #{reattention.1} parent=1 // pred_check_branch
      %29 = sbr.rel (0) target = $region33
    $region32: #{reattention.1} parent=1 // pred_region
      _
    $region33: #{reattention.1} parent=1 // pred_fallthru
      _
    %v30 = vld [vmem:[%s0] sm:$0xff]
    %v31 = vld [vmem:[%s0 + $0x8] sm:$0xff]
    %v32 = vld [vmem:[%s1] sm:$0xff]
    %v33 = vld [vmem:[%s1 + $0x8] sm:$0xff]
    %v34 = vld [vmem:[%s1 + $0x10] sm:$0xff]
    %v35 = vld [vmem:[%s1 + $0x18] sm:$0xff]
    %vm36 = vcmask 261120
    %v38 = vsel %vm36, %v30, 0
    %v41 = vsel %vm36, %v31, 0
    %43 = vmatprep.subr.mxu0 0.0
    %v44 = vand.u32 %v32, 4294901760
    %45 = vmatpush1.msra.mxu0 %v44
    %46 = vmatprep.subr.mxu0 0.0
    %v47 = vand.u32 %v33, 4294901760
    %48 = vmatpush1.msra.mxu0 %v47
    %49 = vmatprep.subr.mxu0 0.0
    %v50 = vand.u32 %v34, 4294901760
    %51 = vmatpush1.msra.mxu0 %v50
    %52 = vmatprep.subr.mxu0 0.0
    %v53 = vand.u32 %v35, 4294901760
    %54 = vmatpush1.msra.mxu0 %v53
    %55 = vmatprep.subr.mxu0 0.0
    %56 = vmatpush1.msra.mxu0 0.0
    %57 = vmatprep.subr.mxu0 0.0
    %58 = vmatpush1.msra.mxu0 0.0
    %59 = vmatprep.subr.mxu0 0.0
    %60 = vmatpush1.msra.mxu0 0.0
    %61 = vmatprep.subr.mxu0 0.0
    %62 = vmatpush1.msra.mxu0 0.0
    %63 = vmatprep.subr.mxu0 0.0
    %64 = vmatpush1.msra.mxu0 0.0
    %65 = vmatprep.subr.mxu0 0.0
    %66 = vmatpush1.msra.mxu0 0.0
    %67 = vmatprep.subr.mxu0 0.0
    %68 = vmatpush1.msra.mxu0 0.0
    %69 = vmatprep.subr.mxu0 0.0
    %70 = vmatpush1.msra.mxu0 0.0
    %71 = vmatprep.subr.mxu0 0.0
    %72 = vmatpush1.msra.mxu0 0.0
    %73 = vmatprep.subr.mxu0 0.0
    %74 = vmatpush1.msra.mxu0 0.0
    %75 = vmatprep.subr.mxu0 0.0
    %76 = vmatpush1.msra.mxu0 0.0
    %77 = vmatprep.subr.mxu0 0.0
    %78 = vmatpush1.msra.mxu0 0.0
    %79 = vmatprep.subr.mxu0 0.0
    %80 = vmatpush1.msra.mxu0 0.0
    %81 = vmatprep.subr.mxu0 0.0
    %82 = vmatpush1.msra.mxu0 0.0
    %83 = vmatprep.subr.mxu0 0.0
    %84 = vmatpush1.msra.mxu0 0.0
    %85 = vmatprep.subr.mxu0 0.0
    %86 = vmatpush1.msra.mxu0 0.0
    %87 = vmatprep.subr.mxu0 0.0
    %88 = vmatpush1.msra.mxu0 0.0
    %89 = vmatprep.subr.mxu0 0.0
    %90 = vmatpush1.msra.mxu0 0.0
    %91 = vmatprep.subr.mxu0 0.0
    %92 = vmatpush1.msra.mxu0 0.0
    %93 = vmatprep.subr.mxu0 0.0
    %94 = vmatpush1.msra.mxu0 0.0
    %95 = vmatprep.subr.mxu0 0.0
    %96 = vmatpush1.msra.mxu0 0.0
    %97 = vmatprep.subr.mxu0 0.0
    %98 = vmatpush1.msra.mxu0 0.0
    %99 = vmatprep.subr.mxu0 0.0
    %100 = vmatpush1.msra.mxu0 0.0
    %101 = vmatprep.subr.mxu0 0.0
    %102 = vmatpush1.msra.mxu0 0.0
    %103 = vmatprep.subr.mxu0 0.0
    %104 = vmatpush1.msra.mxu0 0.0
    %105 = vmatprep.subr.mxu0 0.0
    %106 = vmatpush1.msra.mxu0 0.0
    %107 = vmatprep.subr.mxu0 0.0
    %108 = vmatpush1.msra.mxu0 0.0
    %109 = vmatprep.subr.mxu0 0.0
    %110 = vmatpush1.msra.mxu0 0.0
    %111 = vmatprep.mubr.f32.mxu0 0.0
    %v112 = vand.u32 %v38, 4294901760
    %v113 = vsub.f32 %v38, %v112
    %v114 = vand.u32 %v113, 4294901760
    %v115 = vsub.f32 %v113, %v114
    %v116 = vand.u32 %v115, 4294901760
    %117 = vmatmul.mubr.f32.gmra.mrb[0].mxu0 %v116
    %v118 = vpop.f32.mrb[0].mxu0
    %v119 = vadd.f32 0.0, %v118
    %v120 = vpop.f32.mrb[0].mxu0
    %121 = vmatprep.mubr.f32.mxu0 0.0
    %v122 = vand.u32 %v41, 4294901760
    %v123 = vsub.f32 %v41, %v122
    %v124 = vand.u32 %v123, 4294901760
    %v125 = vsub.f32 %v123, %v124
    %v126 = vand.u32 %v125, 4294901760
    %127 = vmatmul.mubr.f32.gmra.mrb[0].mxu0 %v126
    %v128 = vpop.f32.mrb[0].mxu0
    %v129 = vadd.f32 0.0, %v128
    %v130 = vpop.f32.mrb[0].mxu0
    %131 = vdwg.mxu0
    %132 = vmatprep.subr.mxu0 0.0
    %v133 = vand.u32 %v32, 4294901760
    %v134 = vsub.f32 %v32, %v133
    %v135 = vand.u32 %v134, 4294901760
    %v136 = vsub.f32 %v134, %v135
    %v137 = vand.u32 %v136, 4294901760
    %138 = vmatpush1.msra.mxu0 %v137
    %139 = vmatprep.subr.mxu0 0.0
    %v140 = vand.u32 %v33, 4294901760
    %v141 = vsub.f32 %v33, %v140
    %v142 = vand.u32 %v141, 4294901760
    %v143 = vsub.f32 %v141, %v142
    %v144 = vand.u32 %v143, 4294901760
    %145 = vmatpush1.msra.mxu0 %v144
    %146 = vmatprep.subr.mxu0 0.0
    %v147 = vand.u32 %v34, 4294901760
    %v148 = vsub.f32 %v34, %v147
    %v149 = vand.u32 %v148, 4294901760
    %v150 = vsub.f32 %v148, %v149
    %v151 = vand.u32 %v150, 4294901760
    %152 = vmatpush1.msra.mxu0 %v151
    %153 = vmatprep.subr.mxu0 0.0
    %v154 = vand.u32 %v35, 4294901760
    %v155 = vsub.f32 %v35, %v154
    %v156 = vand.u32 %v155, 4294901760
    %v157 = vsub.f32 %v155, %v156
    %v158 = vand.u32 %v157, 4294901760
    %159 = vmatpush1.msra.mxu0 %v158
    %160 = vmatprep.subr.mxu0 0.0
    %161 = vmatpush1.msra.mxu0 0.0
    %162 = vmatprep.subr.mxu0 0.0
    %163 = vmatpush1.msra.mxu0 0.0
    %164 = vmatprep.subr.mxu0 0.0
    %165 = vmatpush1.msra.mxu0 0.0
    %166 = vmatprep.subr.mxu0 0.0
    %167 = vmatpush1.msra.mxu0 0.0
    %168 = vmatprep.subr.mxu0 0.0
    %169 = vmatpush1.msra.mxu0 0.0
    %170 = vmatprep.subr.mxu0 0.0
    %171 = vmatpush1.msra.mxu0 0.0
    %172 = vmatprep.subr.mxu0 0.0
    %173 = vmatpush1.msra.mxu0 0.0
    %174 = vmatprep.subr.mxu0 0.0
    %175 = vmatpush1.msra.mxu0 0.0
    %176 = vmatprep.subr.mxu0 0.0
    %177 = vmatpush1.msra.mxu0 0.0
    %178 = vmatprep.subr.mxu0 0.0
    %179 = vmatpush1.msra.mxu0 0.0
    %180 = vmatprep.subr.mxu0 0.0
    %181 = vmatpush1.msra.mxu0 0.0
    %182 = vmatprep.subr.mxu0 0.0
    %183 = vmatpush1.msra.mxu0 0.0
    %184 = vmatprep.subr.mxu0 0.0
    %185 = vmatpush1.msra.mxu0 0.0
    %186 = vmatprep.subr.mxu0 0.0
    %187 = vmatpush1.msra.mxu0 0.0
    %188 = vmatprep.subr.mxu0 0.0
    %189 = vmatpush1.msra.mxu0 0.0
    %190 = vmatprep.subr.mxu0 0.0
    %191 = vmatpush1.msra.mxu0 0.0
    %192 = vmatprep.subr.mxu0 0.0
    %193 = vmatpush1.msra.mxu0 0.0
    %194 = vmatprep.subr.mxu0 0.0
    %195 = vmatpush1.msra.mxu0 0.0
    %196 = vmatprep.subr.mxu0 0.0
    %197 = vmatpush1.msra.mxu0 0.0
    %198 = vmatprep.subr.mxu0 0.0
    %199 = vmatpush1.msra.mxu0 0.0
    %200 = vmatprep.subr.mxu0 0.0
    %201 = vmatpush1.msra.mxu0 0.0
    %202 = vmatprep.subr.mxu0 0.0
    %203 = vmatpush1.msra.mxu0 0.0
    %204 = vmatprep.subr.mxu0 0.0
    %205 = vmatpush1.msra.mxu0 0.0
    %206 = vmatprep.subr.mxu0 0.0
    %207 = vmatpush1.msra.mxu0 0.0
    %208 = vmatprep.subr.mxu0 0.0
    %209 = vmatpush1.msra.mxu0 0.0
    %210 = vmatprep.subr.mxu0 0.0
    %211 = vmatpush1.msra.mxu0 0.0
    %212 = vmatprep.subr.mxu0 0.0
    %213 = vmatpush1.msra.mxu0 0.0
    %214 = vmatprep.subr.mxu0 0.0
    %215 = vmatpush1.msra.mxu0 0.0
    %216 = vmatprep.mubr.f32.mxu0 0.0
    %v217 = vand.u32 %v38, 4294901760
    %218 = vmatmul.mubr.f32.gmra.mrb[0].mxu0 %v217
    %v219 = vpop.f32.mrb[0].mxu0
    %v220 = vadd.f32 %v119, %v219
    %v221 = vpop.f32.mrb[0].mxu0
    %222 = vmatprep.mubr.f32.mxu0 0.0
    %v223 = vand.u32 %v41, 4294901760
    %224 = vmatmul.mubr.f32.gmra.mrb[0].mxu0 %v223
    %v225 = vpop.f32.mrb[0].mxu0
    %v226 = vadd.f32 %v129, %v225
    %v227 = vpop.f32.mrb[0].mxu0
    %228 = vdwg.mxu0
    %229 = vmatprep.subr.mxu0 0.0
    %v230 = vand.u32 %v32, 4294901760
    %v231 = vsub.f32 %v32, %v230
    %232 = vmatpush1.msra.mxu0 %v231
    %233 = vmatprep.subr.mxu0 0.0
    %v234 = vand.u32 %v33, 4294901760
    %v235 = vsub.f32 %v33, %v234
    %236 = vmatpush1.msra.mxu0 %v235
    %237 = vmatprep.subr.mxu0 0.0
    %v238 = vand.u32 %v34, 4294901760
    %v239 = vsub.f32 %v34, %v238
    %240 = vmatpush1.msra.mxu0 %v239
    %241 = vmatprep.subr.mxu0 0.0
    %v242 = vand.u32 %v35, 4294901760
    %v243 = vsub.f32 %v35, %v242
    %244 = vmatpush1.msra.mxu0 %v243
    %245 = vmatprep.subr.mxu0 0.0
    %246 = vmatpush1.msra.mxu0 0.0
    %247 = vmatprep.subr.mxu0 0.0
    %248 = vmatpush1.msra.mxu0 0.0
    %249 = vmatprep.subr.mxu0 0.0
    %250 = vmatpush1.msra.mxu0 0.0
    %251 = vmatprep.subr.mxu0 0.0
    %252 = vmatpush1.msra.mxu0 0.0
    %253 = vmatprep.subr.mxu0 0.0
    %254 = vmatpush1.msra.mxu0 0.0
    %255 = vmatprep.subr.mxu0 0.0
    %256 = vmatpush1.msra.mxu0 0.0
    %257 = vmatprep.subr.mxu0 0.0
    %258 = vmatpush1.msra.mxu0 0.0
    %259 = vmatprep.subr.mxu0 0.0
    %260 = vmatpush1.msra.mxu0 0.0
    %261 = vmatprep.subr.mxu0 0.0
    %262 = vmatpush1.msra.mxu0 0.0
    %263 = vmatprep.subr.mxu0 0.0
    %264 = vmatpush1.msra.mxu0 0.0
    %265 = vmatprep.subr.mxu0 0.0
    %266 = vmatpush1.msra.mxu0 0.0
    %267 = vmatprep.subr.mxu0 0.0
    %268 = vmatpush1.msra.mxu0 0.0
    %269 = vmatprep.subr.mxu0 0.0
    %270 = vmatpush1.msra.mxu0 0.0
    %271 = vmatprep.subr.mxu0 0.0
    %272 = vmatpush1.msra.mxu0 0.0
    %273 = vmatprep.subr.mxu0 0.0
    %274 = vmatpush1.msra.mxu0 0.0
    %275 = vmatprep.subr.mxu0 0.0
    %276 = vmatpush1.msra.mxu0 0.0
    %277 = vmatprep.subr.mxu0 0.0
    %278 = vmatpush1.msra.mxu0 0.0
    %279 = vmatprep.subr.mxu0 0.0
    %280 = vmatpush1.msra.mxu0 0.0
    %281 = vmatprep.subr.mxu0 0.0
    %282 = vmatpush1.msra.mxu0 0.0
    %283 = vmatprep.subr.mxu0 0.0
    %284 = vmatpush1.msra.mxu0 0.0
    %285 = vmatprep.subr.mxu0 0.0
    %286 = vmatpush1.msra.mxu0 0.0
    %287 = vmatprep.subr.mxu0 0.0
    %288 = vmatpush1.msra.mxu0 0.0
    %289 = vmatprep.subr.mxu0 0.0
    %290 = vmatpush1.msra.mxu0 0.0
    %291 = vmatprep.subr.mxu0 0.0
    %292 = vmatpush1.msra.mxu0 0.0
    %293 = vmatprep.subr.mxu0 0.0
    %294 = vmatpush1.msra.mxu0 0.0
    %295 = vmatprep.subr.mxu0 0.0
    %296 = vmatpush1.msra.mxu0 0.0
    %297 = vmatprep.subr.mxu0 0.0
    %298 = vmatpush1.msra.mxu0 0.0
    %299 = vmatprep.subr.mxu0 0.0
    %300 = vmatpush1.msra.mxu0 0.0
    %301 = vmatprep.mubr.f32.mxu0 0.0
    %v302 = vand.u32 %v38, 4294901760
    %v303 = vsub.f32 %v38, %v302
    %304 = vmatmul.mubr.f32.gmra.mrb[0].mxu0 %v303
    %v305 = vpop.f32.mrb[0].mxu0
    %v306 = vadd.f32 %v220, %v305
    %v307 = vpop.f32.mrb[0].mxu0
    %308 = vmatprep.mubr.f32.mxu0 0.0
    %v309 = vand.u32 %v41, 4294901760
    %v310 = vsub.f32 %v41, %v309
    %311 = vmatmul.mubr.f32.gmra.mrb[0].mxu0 %v310
    %v312 = vpop.f32.mrb[0].mxu0
    %v313 = vadd.f32 %v226, %v312
    %v314 = vpop.f32.mrb[0].mxu0
    %315 = vdwg.mxu0
    %316 = vmatprep.subr.mxu0 0.0
    %v317 = vand.u32 %v32, 4294901760
    %318 = vmatpush1.msra.mxu0 %v317
    %319 = vmatprep.subr.mxu0 0.0
    %v320 = vand.u32 %v33, 4294901760
    %321 = vmatpush1.msra.mxu0 %v320
    %322 = vmatprep.subr.mxu0 0.0
    %v323 = vand.u32 %v34, 4294901760
    %324 = vmatpush1.msra.mxu0 %v323
    %325 = vmatprep.subr.mxu0 0.0
    %v326 = vand.u32 %v35, 4294901760
    %327 = vmatpush1.msra.mxu0 %v326
    %328 = vmatprep.subr.mxu0 0.0
    %329 = vmatpush1.msra.mxu0 0.0
    %330 = vmatprep.subr.mxu0 0.0
    %331 = vmatpush1.msra.mxu0 0.0
    %332 = vmatprep.subr.mxu0 0.0
    %333 = vmatpush1.msra.mxu0 0.0
    %334 = vmatprep.subr.mxu0 0.0
    %335 = vmatpush1.msra.mxu0 0.0
    %336 = vmatprep.subr.mxu0 0.0
    %337 = vmatpush1.msra.mxu0 0.0
    %338 = vmatprep.subr.mxu0 0.0
    %339 = vmatpush1.msra.mxu0 0.0
    %340 = vmatprep.subr.mxu0 0.0
    %341 = vmatpush1.msra.mxu0 0.0
    %342 = vmatprep.subr.mxu0 0.0
    %343 = vmatpush1.msra.mxu0 0.0
    %344 = vmatprep.subr.mxu0 0.0
    %345 = vmatpush1.msra.mxu0 0.0
    %346 = vmatprep.subr.mxu0 0.0
    %347 = vmatpush1.msra.mxu0 0.0
    %348 = vmatprep.subr.mxu0 0.0
    %349 = vmatpush1.msra.mxu0 0.0
    %350 = vmatprep.subr.mxu0 0.0
    %351 = vmatpush1.msra.mxu0 0.0
    %352 = vmatprep.subr.mxu0 0.0
    %353 = vmatpush1.msra.mxu0 0.0
    %354 = vmatprep.subr.mxu0 0.0
    %355 = vmatpush1.msra.mxu0 0.0
    %356 = vmatprep.subr.mxu0 0.0
    %357 = vmatpush1.msra.mxu0 0.0
    %358 = vmatprep.subr.mxu0 0.0
    %359 = vmatpush1.msra.mxu0 0.0
    %360 = vmatprep.subr.mxu0 0.0
    %361 = vmatpush1.msra.mxu0 0.0
    %362 = vmatprep.subr.mxu0 0.0
    %363 = vmatpush1.msra.mxu0 0.0
    %364 = vmatprep.subr.mxu0 0.0
    %365 = vmatpush1.msra.mxu0 0.0
    %366 = vmatprep.subr.mxu0 0.0
    %367 = vmatpush1.msra.mxu0 0.0
    %368 = vmatprep.subr.mxu0 0.0
    %369 = vmatpush1.msra.mxu0 0.0
    %370 = vmatprep.subr.mxu0 0.0
    %371 = vmatpush1.msra.mxu0 0.0
    %372 = vmatprep.subr.mxu0 0.0
    %373 = vmatpush1.msra.mxu0 0.0
    %374 = vmatprep.subr.mxu0 0.0
    %375 = vmatpush1.msra.mxu0 0.0
    %376 = vmatprep.subr.mxu0 0.0
    %377 = vmatpush1.msra.mxu0 0.0
    %378 = vmatprep.subr.mxu0 0.0
    %379 = vmatpush1.msra.mxu0 0.0
    %380 = vmatprep.subr.mxu0 0.0
    %381 = vmatpush1.msra.mxu0 0.0
    %382 = vmatprep.subr.mxu0 0.0
    %383 = vmatpush1.msra.mxu0 0.0
    %384 = vmatprep.mubr.f32.mxu0 0.0
    %v385 = vand.u32 %v38, 4294901760
    %v386 = vsub.f32 %v38, %v385
    %v387 = vand.u32 %v386, 4294901760
    %388 = vmatmul.mubr.f32.gmra.mrb[0].mxu0 %v387
    %v389 = vpop.f32.mrb[0].mxu0
    %v390 = vadd.f32 %v306, %v389
    %v391 = vpop.f32.mrb[0].mxu0
    %392 = vmatprep.mubr.f32.mxu0 0.0
    %v393 = vand.u32 %v41, 4294901760
    %v394 = vsub.f32 %v41, %v393
    %v395 = vand.u32 %v394, 4294901760
    %396 = vmatmul.mubr.f32.gmra.mrb[0].mxu0 %v395
    %v397 = vpop.f32.mrb[0].mxu0
    %v398 = vadd.f32 %v313, %v397
    %v399 = vpop.f32.mrb[0].mxu0
    %400 = vdwg.mxu0
    %401 = vmatprep.subr.mxu0 0.0
    %v402 = vand.u32 %v32, 4294901760
    %v403 = vsub.f32 %v32, %v402
    %v404 = vand.u32 %v403, 4294901760
    %405 = vmatpush1.msra.mxu0 %v404
    %406 = vmatprep.subr.mxu0 0.0
    %v407 = vand.u32 %v33, 4294901760
    %v408 = vsub.f32 %v33, %v407
    %v409 = vand.u32 %v408, 4294901760
    %410 = vmatpush1.msra.mxu0 %v409
    %411 = vmatprep.subr.mxu0 0.0
    %v412 = vand.u32 %v34, 4294901760
    %v413 = vsub.f32 %v34, %v412
    %v414 = vand.u32 %v413, 4294901760
    %415 = vmatpush1.msra.mxu0 %v414
    %416 = vmatprep.subr.mxu0 0.0
    %v417 = vand.u32 %v35, 4294901760
    %v418 = vsub.f32 %v35, %v417
    %v419 = vand.u32 %v418, 4294901760
    %420 = vmatpush1.msra.mxu0 %v419
    %421 = vmatprep.subr.mxu0 0.0
    %422 = vmatpush1.msra.mxu0 0.0
    %423 = vmatprep.subr.mxu0 0.0
    %424 = vmatpush1.msra.mxu0 0.0
    %425 = vmatprep.subr.mxu0 0.0
    %426 = vmatpush1.msra.mxu0 0.0
    %427 = vmatprep.subr.mxu0 0.0
    %428 = vmatpush1.msra.mxu0 0.0
    %429 = vmatprep.subr.mxu0 0.0
    %430 = vmatpush1.msra.mxu0 0.0
    %431 = vmatprep.subr.mxu0 0.0
    %432 = vmatpush1.msra.mxu0 0.0
    %433 = vmatprep.subr.mxu0 0.0
    %434 = vmatpush1.msra.mxu0 0.0
    %435 = vmatprep.subr.mxu0 0.0
    %436 = vmatpush1.msra.mxu0 0.0
    %437 = vmatprep.subr.mxu0 0.0
    %438 = vmatpush1.msra.mxu0 0.0
    %439 = vmatprep.subr.mxu0 0.0
    %440 = vmatpush1.msra.mxu0 0.0
    %441 = vmatprep.subr.mxu0 0.0
    %442 = vmatpush1.msra.mxu0 0.0
    %443 = vmatprep.subr.mxu0 0.0
    %444 = vmatpush1.msra.mxu0 0.0
    %445 = vmatprep.subr.mxu0 0.0
    %446 = vmatpush1.msra.mxu0 0.0
    %447 = vmatprep.subr.mxu0 0.0
    %448 = vmatpush1.msra.mxu0 0.0
    %449 = vmatprep.subr.mxu0 0.0
    %450 = vmatpush1.msra.mxu0 0.0
    %451 = vmatprep.subr.mxu0 0.0
    %452 = vmatpush1.msra.mxu0 0.0
    %453 = vmatprep.subr.mxu0 0.0
    %454 = vmatpush1.msra.mxu0 0.0
    %455 = vmatprep.subr.mxu0 0.0
    %456 = vmatpush1.msra.mxu0 0.0
    %457 = vmatprep.subr.mxu0 0.0
    %458 = vmatpush1.msra.mxu0 0.0
    %459 = vmatprep.subr.mxu0 0.0
    %460 = vmatpush1.msra.mxu0 0.0
    %461 = vmatprep.subr.mxu0 0.0
    %462 = vmatpush1.msra.mxu0 0.0
    %463 = vmatprep.subr.mxu0 0.0
    %464 = vmatpush1.msra.mxu0 0.0
    %465 = vmatprep.subr.mxu0 0.0
    %466 = vmatpush1.msra.mxu0 0.0
    %467 = vmatprep.subr.mxu0 0.0
    %468 = vmatpush1.msra.mxu0 0.0
    %469 = vmatprep.subr.mxu0 0.0
    %470 = vmatpush1.msra.mxu0 0.0
    %471 = vmatprep.subr.mxu0 0.0
    %472 = vmatpush1.msra.mxu0 0.0
    %473 = vmatprep.subr.mxu0 0.0
    %474 = vmatpush1.msra.mxu0 0.0
    %475 = vmatprep.subr.mxu0 0.0
    %476 = vmatpush1.msra.mxu0 0.0
    %477 = vmatprep.mubr.f32.mxu0 0.0
    %v478 = vand.u32 %v38, 4294901760
    %479 = vmatmul.mubr.f32.gmra.mrb[0].mxu0 %v478
    %v480 = vpop.f32.mrb[0].mxu0
    %v481 = vadd.f32 %v390, %v480
    %v482 = vpop.f32.mrb[0].mxu0
    %483 = vmatprep.mubr.f32.mxu0 0.0
    %v484 = vand.u32 %v41, 4294901760
    %485 = vmatmul.mubr.f32.gmra.mrb[0].mxu0 %v484
    %v486 = vpop.f32.mrb[0].mxu0
    %v487 = vadd.f32 %v398, %v486
    %v488 = vpop.f32.mrb[0].mxu0
    %489 = vdwg.mxu0
    %490 = vmatprep.subr.mxu0 0.0
    %v491 = vand.u32 %v32, 4294901760
    %492 = vmatpush1.msra.mxu0 %v491
    %493 = vmatprep.subr.mxu0 0.0
    %v494 = vand.u32 %v33, 4294901760
    %495 = vmatpush1.msra.mxu0 %v494
    %496 = vmatprep.subr.mxu0 0.0
    %v497 = vand.u32 %v34, 4294901760
    %498 = vmatpush1.msra.mxu0 %v497
    %499 = vmatprep.subr.mxu0 0.0
    %v500 = vand.u32 %v35, 4294901760
    %501 = vmatpush1.msra.mxu0 %v500
    %502 = vmatprep.subr.mxu0 0.0
    %503 = vmatpush1.msra.mxu0 0.0
    %504 = vmatprep.subr.mxu0 0.0
    %505 = vmatpush1.msra.mxu0 0.0
    %506 = vmatprep.subr.mxu0 0.0
    %507 = vmatpush1.msra.mxu0 0.0
    %508 = vmatprep.subr.mxu0 0.0
    %509 = vmatpush1.msra.mxu0 0.0
    %510 = vmatprep.subr.mxu0 0.0
    %511 = vmatpush1.msra.mxu0 0.0
    %512 = vmatprep.subr.mxu0 0.0
    %513 = vmatpush1.msra.mxu0 0.0
    %514 = vmatprep.subr.mxu0 0.0
    %515 = vmatpush1.msra.mxu0 0.0
    %516 = vmatprep.subr.mxu0 0.0
    %517 = vmatpush1.msra.mxu0 0.0
    %518 = vmatprep.subr.mxu0 0.0
    %519 = vmatpush1.msra.mxu0 0.0
    %520 = vmatprep.subr.mxu0 0.0
    %521 = vmatpush1.msra.mxu0 0.0
    %522 = vmatprep.subr.mxu0 0.0
    %523 = vmatpush1.msra.mxu0 0.0
    %524 = vmatprep.subr.mxu0 0.0
    %525 = vmatpush1.msra.mxu0 0.0
    %526 = vmatprep.subr.mxu0 0.0
    %527 = vmatpush1.msra.mxu0 0.0
    %528 = vmatprep.subr.mxu0 0.0
    %529 = vmatpush1.msra.mxu0 0.0
    %530 = vmatprep.subr.mxu0 0.0
    %531 = vmatpush1.msra.mxu0 0.0
    %532 = vmatprep.subr.mxu0 0.0
    %533 = vmatpush1.msra.mxu0 0.0
    %534 = vmatprep.subr.mxu0 0.0
    %535 = vmatpush1.msra.mxu0 0.0
    %536 = vmatprep.subr.mxu0 0.0
    %537 = vmatpush1.msra.mxu0 0.0
    %538 = vmatprep.subr.mxu0 0.0
    %539 = vmatpush1.msra.mxu0 0.0
    %540 = vmatprep.subr.mxu0 0.0
    %541 = vmatpush1.msra.mxu0 0.0
    %542 = vmatprep.subr.mxu0 0.0
    %543 = vmatpush1.msra.mxu0 0.0
    %544 = vmatprep.subr.mxu0 0.0
    %545 = vmatpush1.msra.mxu0 0.0
    %546 = vmatprep.subr.mxu0 0.0
    %547 = vmatpush1.msra.mxu0 0.0
    %548 = vmatprep.subr.mxu0 0.0
    %549 = vmatpush1.msra.mxu0 0.0
    %550 = vmatprep.subr.mxu0 0.0
    %551 = vmatpush1.msra.mxu0 0.0
    %552 = vmatprep.subr.mxu0 0.0
    %553 = vmatpush1.msra.mxu0 0.0
    %554 = vmatprep.subr.mxu0 0.0
    %555 = vmatpush1.msra.mxu0 0.0
    %556 = vmatprep.subr.mxu0 0.0
    %557 = vmatpush1.msra.mxu0 0.0
    %558 = vmatprep.mubr.f32.mxu0 0.0
    %v559 = vand.u32 %v38, 4294901760
    %560 = vmatmul.mubr.f32.gmra.mrb[0].mxu0 %v559
    %v561 = vpop.f32.mrb[0].mxu0
    %v562 = vadd.f32 %v481, %v561
    %v563 = vpop.f32.mrb[0].mxu0
    %564 = vmatprep.mubr.f32.mxu0 0.0
    %v565 = vand.u32 %v41, 4294901760
    %566 = vmatmul.mubr.f32.gmra.mrb[0].mxu0 %v565
    %v567 = vpop.f32.mrb[0].mxu0
    %v568 = vadd.f32 %v487, %v567
    %v569 = vpop.f32.mrb[0].mxu0
    %570 = vdwg.mxu0
    %v571 = vld [vmem:[%s2] sm:$0xff]
    %v572 = vld [vmem:[%s2 + $0x8] sm:$0xff]
    %v573 = vld [vmem:[%s2 + $0x10] sm:$0xff]
    %v574 = vld [vmem:[%s2 + $0x18] sm:$0xff]
    %575 = vmatprep.subr.mxu0 0.0
    %v576 = vand.u32 %v571, 4294901760
    %577 = vmatpush1.msra.mxu0 %v576
    %578 = vmatprep.subr.mxu0 0.0
    %v579 = vand.u32 %v572, 4294901760
    %580 = vmatpush1.msra.mxu0 %v579
    %581 = vmatprep.subr.mxu0 0.0
    %v582 = vand.u32 %v573, 4294901760
    %583 = vmatpush1.msra.mxu0 %v582
    %584 = vmatprep.subr.mxu0 0.0
    %v585 = vand.u32 %v574, 4294901760
    %586 = vmatpush1.msra.mxu0 %v585
    %587 = vmatprep.subr.mxu0 0.0
    %588 = vmatpush1.msra.mxu0 0.0
    %589 = vmatprep.subr.mxu0 0.0
    %590 = vmatpush1.msra.mxu0 0.0
    %591 = vmatprep.subr.mxu0 0.0
    %592 = vmatpush1.msra.mxu0 0.0
    %593 = vmatprep.subr.mxu0 0.0
    %594 = vmatpush1.msra.mxu0 0.0
    %595 = vmatprep.subr.mxu0 0.0
    %596 = vmatpush1.msra.mxu0 0.0
    %597 = vmatprep.subr.mxu0 0.0
    %598 = vmatpush1.msra.mxu0 0.0
    %599 = vmatprep.subr.mxu0 0.0
    %600 = vmatpush1.msra.mxu0 0.0
    %601 = vmatprep.subr.mxu0 0.0
    %602 = vmatpush1.msra.mxu0 0.0
    %603 = vmatprep.subr.mxu0 0.0
    %604 = vmatpush1.msra.mxu0 0.0
    %605 = vmatprep.subr.mxu0 0.0
    %606 = vmatpush1.msra.mxu0 0.0
    %607 = vmatprep.subr.mxu0 0.0
    %608 = vmatpush1.msra.mxu0 0.0
    %609 = vmatprep.subr.mxu0 0.0
    %610 = vmatpush1.msra.mxu0 0.0
    %611 = vmatprep.subr.mxu0 0.0
    %612 = vmatpush1.msra.mxu0 0.0
    %613 = vmatprep.subr.mxu0 0.0
    %614 = vmatpush1.msra.mxu0 0.0
    %615 = vmatprep.subr.mxu0 0.0
    %616 = vmatpush1.msra.mxu0 0.0
    %617 = vmatprep.subr.mxu0 0.0
    %618 = vmatpush1.msra.mxu0 0.0
    %619 = vmatprep.subr.mxu0 0.0
    %620 = vmatpush1.msra.mxu0 0.0
    %621 = vmatprep.subr.mxu0 0.0
    %622 = vmatpush1.msra.mxu0 0.0
    %623 = vmatprep.subr.mxu0 0.0
    %624 = vmatpush1.msra.mxu0 0.0
    %625 = vmatprep.subr.mxu0 0.0
    %626 = vmatpush1.msra.mxu0 0.0
    %627 = vmatprep.subr.mxu0 0.0
    %628 = vmatpush1.msra.mxu0 0.0
    %629 = vmatprep.subr.mxu0 0.0
    %630 = vmatpush1.msra.mxu0 0.0
    %631 = vmatprep.subr.mxu0 0.0
    %632 = vmatpush1.msra.mxu0 0.0
    %633 = vmatprep.subr.mxu0 0.0
    %634 = vmatpush1.msra.mxu0 0.0
    %635 = vmatprep.subr.mxu0 0.0
    %636 = vmatpush1.msra.mxu0 0.0
    %637 = vmatprep.subr.mxu0 0.0
    %638 = vmatpush1.msra.mxu0 0.0
    %639 = vmatprep.subr.mxu0 0.0
    %640 = vmatpush1.msra.mxu0 0.0
    %641 = vmatprep.subr.mxu0 0.0
    %642 = vmatpush1.msra.mxu0 0.0
    %643 = vmatprep.mubr.f32.mxu0 0.0
    %v644 = vand.u32 %v38, 4294901760
    %v645 = vsub.f32 %v38, %v644
    %v646 = vand.u32 %v645, 4294901760
    %v647 = vsub.f32 %v645, %v646
    %v648 = vand.u32 %v647, 4294901760
    %649 = vmatmul.mubr.f32.gmra.mrb[0].mxu0 %v648
    %v650 = vpop.f32.mrb[0].mxu0
    %v651 = vadd.f32 0.0, %v650
    %v652 = vpop.f32.mrb[0].mxu0
    %653 = vmatprep.mubr.f32.mxu0 0.0
    %v654 = vand.u32 %v41, 4294901760
    %v655 = vsub.f32 %v41, %v654
    %v656 = vand.u32 %v655, 4294901760
    %v657 = vsub.f32 %v655, %v656
    %v658 = vand.u32 %v657, 4294901760
    %659 = vmatmul.mubr.f32.gmra.mrb[0].mxu0 %v658
    %v660 = vpop.f32.mrb[0].mxu0
    %v661 = vadd.f32 0.0, %v660
    %v662 = vpop.f32.mrb[0].mxu0
    %663 = vdwg.mxu0
    %664 = vmatprep.subr.mxu0 0.0
    %v665 = vand.u32 %v571, 4294901760
    %v666 = vsub.f32 %v571, %v665
    %v667 = vand.u32 %v666, 4294901760
    %v668 = vsub.f32 %v666, %v667
    %v669 = vand.u32 %v668, 4294901760
    %670 = vmatpush1.msra.mxu0 %v669
    %671 = vmatprep.subr.mxu0 0.0
    %v672 = vand.u32 %v572, 4294901760
    %v673 = vsub.f32 %v572, %v672
    %v674 = vand.u32 %v673, 4294901760
    %v675 = vsub.f32 %v673, %v674
    %v676 = vand.u32 %v675, 4294901760
    %677 = vmatpush1.msra.mxu0 %v676
    %678 = vmatprep.subr.mxu0 0.0
    %v679 = vand.u32 %v573, 4294901760
    %v680 = vsub.f32 %v573, %v679
    %v681 = vand.u32 %v680, 4294901760
    %v682 = vsub.f32 %v680, %v681
    %v683 = vand.u32 %v682, 4294901760
    %684 = vmatpush1.msra.mxu0 %v683
    %685 = vmatprep.subr.mxu0 0.0
    %v686 = vand.u32 %v574, 4294901760
    %v687 = vsub.f32 %v574, %v686
    %v688 = vand.u32 %v687, 4294901760
    %v689 = vsub.f32 %v687, %v688
    %v690 = vand.u32 %v689, 4294901760
    %691 = vmatpush1.msra.mxu0 %v690
    %692 = vmatprep.subr.mxu0 0.0
    %693 = vmatpush1.msra.mxu0 0.0
    %694 = vmatprep.subr.mxu0 0.0
    %695 = vmatpush1.msra.mxu0 0.0
    %696 = vmatprep.subr.mxu0 0.0
    %697 = vmatpush1.msra.mxu0 0.0
    %698 = vmatprep.subr.mxu0 0.0
    %699 = vmatpush1.msra.mxu0 0.0
    %700 = vmatprep.subr.mxu0 0.0
    %701 = vmatpush1.msra.mxu0 0.0
    %702 = vmatprep.subr.mxu0 0.0
    %703 = vmatpush1.msra.mxu0 0.0
    %704 = vmatprep.subr.mxu0 0.0
    %705 = vmatpush1.msra.mxu0 0.0
    %706 = vmatprep.subr.mxu0 0.0
    %707 = vmatpush1.msra.mxu0 0.0
    %708 = vmatprep.subr.mxu0 0.0
    %709 = vmatpush1.msra.mxu0 0.0
    %710 = vmatprep.subr.mxu0 0.0
    %711 = vmatpush1.msra.mxu0 0.0
    %712 = vmatprep.subr.mxu0 0.0
    %713 = vmatpush1.msra.mxu0 0.0
    %714 = vmatprep.subr.mxu0 0.0
    %715 = vmatpush1.msra.mxu0 0.0
    %716 = vmatprep.subr.mxu0 0.0
    %717 = vmatpush1.msra.mxu0 0.0
    %718 = vmatprep.subr.mxu0 0.0
    %719 = vmatpush1.msra.mxu0 0.0
    %720 = vmatprep.subr.mxu0 0.0
    %721 = vmatpush1.msra.mxu0 0.0
    %722 = vmatprep.subr.mxu0 0.0
    %723 = vmatpush1.msra.mxu0 0.0
    %724 = vmatprep.subr.mxu0 0.0
    %725 = vmatpush1.msra.mxu0 0.0
    %726 = vmatprep.subr.mxu0 0.0
    %727 = vmatpush1.msra.mxu0 0.0
    %728 = vmatprep.subr.mxu0 0.0
    %729 = vmatpush1.msra.mxu0 0.0
    %730 = vmatprep.subr.mxu0 0.0
    %731 = vmatpush1.msra.mxu0 0.0
    %732 = vmatprep.subr.mxu0 0.0
    %733 = vmatpush1.msra.mxu0 0.0
    %734 = vmatprep.subr.mxu0 0.0
    %735 = vmatpush1.msra.mxu0 0.0
    %736 = vmatprep.subr.mxu0 0.0
    %737 = vmatpush1.msra.mxu0 0.0
    %738 = vmatprep.subr.mxu0 0.0
    %739 = vmatpush1.msra.mxu0 0.0
    %740 = vmatprep.subr.mxu0 0.0
    %741 = vmatpush1.msra.mxu0 0.0
    %742 = vmatprep.subr.mxu0 0.0
    %743 = vmatpush1.msra.mxu0 0.0
    %744 = vmatprep.subr.mxu0 0.0
    %745 = vmatpush1.msra.mxu0 0.0
    %746 = vmatprep.subr.mxu0 0.0
    %747 = vmatpush1.msra.mxu0 0.0
    %748 = vmatprep.mubr.f32.mxu0 0.0
    %v749 = vand.u32 %v38, 4294901760
    %750 = vmatmul.mubr.f32.gmra.mrb[0].mxu0 %v749
    %v751 = vpop.f32.mrb[0].mxu0
    %v752 = vadd.f32 %v651, %v751
    %v753 = vpop.f32.mrb[0].mxu0
    %754 = vmatprep.mubr.f32.mxu0 0.0
    %v755 = vand.u32 %v41, 4294901760
    %756 = vmatmul.mubr.f32.gmra.mrb[0].mxu0 %v755
    %v757 = vpop.f32.mrb[0].mxu0
    %v758 = vadd.f32 %v661, %v757
    %v759 = vpop.f32.mrb[0].mxu0
    %760 = vdwg.mxu0
    %761 = vmatprep.subr.mxu0 0.0
    %v762 = vand.u32 %v571, 4294901760
    %v763 = vsub.f32 %v571, %v762
    %764 = vmatpush1.msra.mxu0 %v763
    %765 = vmatprep.subr.mxu0 0.0
    %v766 = vand.u32 %v572, 4294901760
    %v767 = vsub.f32 %v572, %v766
    %768 = vmatpush1.msra.mxu0 %v767
    %769 = vmatprep.subr.mxu0 0.0
    %v770 = vand.u32 %v573, 4294901760
    %v771 = vsub.f32 %v573, %v770
    %772 = vmatpush1.msra.mxu0 %v771
    %773 = vmatprep.subr.mxu0 0.0
    %v774 = vand.u32 %v574, 4294901760
    %v775 = vsub.f32 %v574, %v774
    %776 = vmatpush1.msra.mxu0 %v775
    %777 = vmatprep.subr.mxu0 0.0
    %778 = vmatpush1.msra.mxu0 0.0
    %779 = vmatprep.subr.mxu0 0.0
    %780 = vmatpush1.msra.mxu0 0.0
    %781 = vmatprep.subr.mxu0 0.0
    %782 = vmatpush1.msra.mxu0 0.0
    %783 = vmatprep.subr.mxu0 0.0
    %784 = vmatpush1.msra.mxu0 0.0
    %785 = vmatprep.subr.mxu0 0.0
    %786 = vmatpush1.msra.mxu0 0.0
    %787 = vmatprep.subr.mxu0 0.0
    %788 = vmatpush1.msra.mxu0 0.0
    %789 = vmatprep.subr.mxu0 0.0
    %790 = vmatpush1.msra.mxu0 0.0
    %791 = vmatprep.subr.mxu0 0.0
    %792 = vmatpush1.msra.mxu0 0.0
    %793 = vmatprep.subr.mxu0 0.0
    %794 = vmatpush1.msra.mxu0 0.0
    %795 = vmatprep.subr.mxu0 0.0
    %796 = vmatpush1.msra.mxu0 0.0
    %797 = vmatprep.subr.mxu0 0.0
    %798 = vmatpush1.msra.mxu0 0.0
    %799 = vmatprep.subr.mxu0 0.0
    %800 = vmatpush1.msra.mxu0 0.0
    %801 = vmatprep.subr.mxu0 0.0
    %802 = vmatpush1.msra.mxu0 0.0
    %803 = vmatprep.subr.mxu0 0.0
    %804 = vmatpush1.msra.mxu0 0.0
    %805 = vmatprep.subr.mxu0 0.0
    %806 = vmatpush1.msra.mxu0 0.0
    %807 = vmatprep.subr.mxu0 0.0
    %808 = vmatpush1.msra.mxu0 0.0
    %809 = vmatprep.subr.mxu0 0.0
    %810 = vmatpush1.msra.mxu0 0.0
    %811 = vmatprep.subr.mxu0 0.0
    %812 = vmatpush1.msra.mxu0 0.0
    %813 = vmatprep.subr.mxu0 0.0
    %814 = vmatpush1.msra.mxu0 0.0
    %815 = vmatprep.subr.mxu0 0.0
    %816 = vmatpush1.msra.mxu0 0.0
    %817 = vmatprep.subr.mxu0 0.0
    %818 = vmatpush1.msra.mxu0 0.0
    %819 = vmatprep.subr.mxu0 0.0
    %820 = vmatpush1.msra.mxu0 0.0
    %821 = vmatprep.subr.mxu0 0.0
    %822 = vmatpush1.msra.mxu0 0.0
    %823 = vmatprep.subr.mxu0 0.0
    %824 = vmatpush1.msra.mxu0 0.0
    %825 = vmatprep.subr.mxu0 0.0
    %826 = vmatpush1.msra.mxu0 0.0
    %827 = vmatprep.subr.mxu0 0.0
    %828 = vmatpush1.msra.mxu0 0.0
    %829 = vmatprep.subr.mxu0 0.0
    %830 = vmatpush1.msra.mxu0 0.0
    %831 = vmatprep.subr.mxu0 0.0
    %832 = vmatpush1.msra.mxu0 0.0
    %833 = vmatprep.mubr.f32.mxu0 0.0
    %v834 = vand.u32 %v38, 4294901760
    %v835 = vsub.f32 %v38, %v834
    %836 = vmatmul.mubr.f32.gmra.mrb[0].mxu0 %v835
    %v837 = vpop.f32.mrb[0].mxu0
    %v838 = vadd.f32 %v752, %v837
    %v839 = vpop.f32.mrb[0].mxu0
    %840 = vmatprep.mubr.f32.mxu0 0.0
    %v841 = vand.u32 %v41, 4294901760
    %v842 = vsub.f32 %v41, %v841
    %843 = vmatmul.mubr.f32.gmra.mrb[0].mxu0 %v842
    %v844 = vpop.f32.mrb[0].mxu0
    %v845 = vadd.f32 %v758, %v844
    %v846 = vpop.f32.mrb[0].mxu0
    %847 = vdwg.mxu0
    %848 = vmatprep.subr.mxu0 0.0
    %v849 = vand.u32 %v571, 4294901760
    %850 = vmatpush1.msra.mxu0 %v849
    %851 = vmatprep.subr.mxu0 0.0
    %v852 = vand.u32 %v572, 4294901760
    %853 = vmatpush1.msra.mxu0 %v852
    %854 = vmatprep.subr.mxu0 0.0
    %v855 = vand.u32 %v573, 4294901760
    %856 = vmatpush1.msra.mxu0 %v855
    %857 = vmatprep.subr.mxu0 0.0
    %v858 = vand.u32 %v574, 4294901760
    %859 = vmatpush1.msra.mxu0 %v858
    %860 = vmatprep.subr.mxu0 0.0
    %861 = vmatpush1.msra.mxu0 0.0
    %862 = vmatprep.subr.mxu0 0.0
    %863 = vmatpush1.msra.mxu0 0.0
    %864 = vmatprep.subr.mxu0 0.0
    %865 = vmatpush1.msra.mxu0 0.0
    %866 = vmatprep.subr.mxu0 0.0
    %867 = vmatpush1.msra.mxu0 0.0
    %868 = vmatprep.subr.mxu0 0.0
    %869 = vmatpush1.msra.mxu0 0.0
    %870 = vmatprep.subr.mxu0 0.0
    %871 = vmatpush1.msra.mxu0 0.0
    %872 = vmatprep.subr.mxu0 0.0
    %873 = vmatpush1.msra.mxu0 0.0
    %874 = vmatprep.subr.mxu0 0.0
    %875 = vmatpush1.msra.mxu0 0.0
    %876 = vmatprep.subr.mxu0 0.0
    %877 = vmatpush1.msra.mxu0 0.0
    %878 = vmatprep.subr.mxu0 0.0
    %879 = vmatpush1.msra.mxu0 0.0
    %880 = vmatprep.subr.mxu0 0.0
    %881 = vmatpush1.msra.mxu0 0.0
    %882 = vmatprep.subr.mxu0 0.0
    %883 = vmatpush1.msra.mxu0 0.0
    %884 = vmatprep.subr.mxu0 0.0
    %885 = vmatpush1.msra.mxu0 0.0
    %886 = vmatprep.subr.mxu0 0.0
    %887 = vmatpush1.msra.mxu0 0.0
    %888 = vmatprep.subr.mxu0 0.0
    %889 = vmatpush1.msra.mxu0 0.0
    %890 = vmatprep.subr.mxu0 0.0
    %891 = vmatpush1.msra.mxu0 0.0
    %892 = vmatprep.subr.mxu0 0.0
    %893 = vmatpush1.msra.mxu0 0.0
    %894 = vmatprep.subr.mxu0 0.0
    %895 = vmatpush1.msra.mxu0 0.0
    %896 = vmatprep.subr.mxu0 0.0
    %897 = vmatpush1.msra.mxu0 0.0
    %898 = vmatprep.subr.mxu0 0.0
    %899 = vmatpush1.msra.mxu0 0.0
    %900 = vmatprep.subr.mxu0 0.0
    %901 = vmatpush1.msra.mxu0 0.0
    %902 = vmatprep.subr.mxu0 0.0
    %903 = vmatpush1.msra.mxu0 0.0
    %904 = vmatprep.subr.mxu0 0.0
    %905 = vmatpush1.msra.mxu0 0.0
    %906 = vmatprep.subr.mxu0 0.0
    %907 = vmatpush1.msra.mxu0 0.0
    %908 = vmatprep.subr.mxu0 0.0
    %909 = vmatpush1.msra.mxu0 0.0
    %910 = vmatprep.subr.mxu0 0.0
    %911 = vmatpush1.msra.mxu0 0.0
    %912 = vmatprep.subr.mxu0 0.0
    %913 = vmatpush1.msra.mxu0 0.0
    %914 = vmatprep.subr.mxu0 0.0
    %915 = vmatpush1.msra.mxu0 0.0
    %916 = vmatprep.mubr.f32.mxu0 0.0
    %v917 = vand.u32 %v38, 4294901760
    %v918 = vsub.f32 %v38, %v917
    %v919 = vand.u32 %v918, 4294901760
    %920 = vmatmul.mubr.f32.gmra.mrb[0].mxu0 %v919
    %v921 = vpop.f32.mrb[0].mxu0
    %v922 = vadd.f32 %v838, %v921
    %v923 = vpop.f32.mrb[0].mxu0
    %924 = vmatprep.mubr.f32.mxu0 0.0
    %v925 = vand.u32 %v41, 4294901760
    %v926 = vsub.f32 %v41, %v925
    %v927 = vand.u32 %v926, 4294901760
    %928 = vmatmul.mubr.f32.gmra.mrb[0].mxu0 %v927
    %v929 = vpop.f32.mrb[0].mxu0
    %v930 = vadd.f32 %v845, %v929
    %v931 = vpop.f32.mrb[0].mxu0
    %932 = vdwg.mxu0
    %933 = vmatprep.subr.mxu0 0.0
    %v934 = vand.u32 %v571, 4294901760
    %v935 = vsub.f32 %v571, %v934
    %v936 = vand.u32 %v935, 4294901760
    %937 = vmatpush1.msra.mxu0 %v936
    %938 = vmatprep.subr.mxu0 0.0
    %v939 = vand.u32 %v572, 4294901760
    %v940 = vsub.f32 %v572, %v939
    %v941 = vand.u32 %v940, 4294901760
    %942 = vmatpush1.msra.mxu0 %v941
    %943 = vmatprep.subr.mxu0 0.0
    %v944 = vand.u32 %v573, 4294901760
    %v945 = vsub.f32 %v573, %v944
    %v946 = vand.u32 %v945, 4294901760
    %947 = vmatpush1.msra.mxu0 %v946
    %948 = vmatprep.subr.mxu0 0.0
    %v949 = vand.u32 %v574, 4294901760
    %v950 = vsub.f32 %v574, %v949
    %v951 = vand.u32 %v950, 4294901760
    %952 = vmatpush1.msra.mxu0 %v951
    %953 = vmatprep.subr.mxu0 0.0
    %954 = vmatpush1.msra.mxu0 0.0
    %955 = vmatprep.subr.mxu0 0.0
    %956 = vmatpush1.msra.mxu0 0.0
    %957 = vmatprep.subr.mxu0 0.0
    %958 = vmatpush1.msra.mxu0 0.0
    %959 = vmatprep.subr.mxu0 0.0
    %960 = vmatpush1.msra.mxu0 0.0
    %961 = vmatprep.subr.mxu0 0.0
    %962 = vmatpush1.msra.mxu0 0.0
    %963 = vmatprep.subr.mxu0 0.0
    %964 = vmatpush1.msra.mxu0 0.0
    %965 = vmatprep.subr.mxu0 0.0
    %966 = vmatpush1.msra.mxu0 0.0
    %967 = vmatprep.subr.mxu0 0.0
    %968 = vmatpush1.msra.mxu0 0.0
    %969 = vmatprep.subr.mxu0 0.0
    %970 = vmatpush1.msra.mxu0 0.0
    %971 = vmatprep.subr.mxu0 0.0
    %972 = vmatpush1.msra.mxu0 0.0
    %973 = vmatprep.subr.mxu0 0.0
    %974 = vmatpush1.msra.mxu0 0.0
    %975 = vmatprep.subr.mxu0 0.0
    %976 = vmatpush1.msra.mxu0 0.0
    %977 = vmatprep.subr.mxu0 0.0
    %978 = vmatpush1.msra.mxu0 0.0
    %979 = vmatprep.subr.mxu0 0.0
    %980 = vmatpush1.msra.mxu0 0.0
    %981 = vmatprep.subr.mxu0 0.0
    %982 = vmatpush1.msra.mxu0 0.0
    %983 = vmatprep.subr.mxu0 0.0
    %984 = vmatpush1.msra.mxu0 0.0
    %985 = vmatprep.subr.mxu0 0.0
    %986 = vmatpush1.msra.mxu0 0.0
    %987 = vmatprep.subr.mxu0 0.0
    %988 = vmatpush1.msra.mxu0 0.0
    %989 = vmatprep.subr.mxu0 0.0
    %990 = vmatpush1.msra.mxu0 0.0
    %991 = vmatprep.subr.mxu0 0.0
    %992 = vmatpush1.msra.mxu0 0.0
    %993 = vmatprep.subr.mxu0 0.0
    %994 = vmatpush1.msra.mxu0 0.0
    %995 = vmatprep.subr.mxu0 0.0
    %996 = vmatpush1.msra.mxu0 0.0
    %997 = vmatprep.subr.mxu0 0.0
    %998 = vmatpush1.msra.mxu0 0.0
    %999 = vmatprep.subr.mxu0 0.0
    %1000 = vmatpush1.msra.mxu0 0.0
    %1001 = vmatprep.subr.mxu0 0.0
    %1002 = vmatpush1.msra.mxu0 0.0
    %1003 = vmatprep.subr.mxu0 0.0
    %1004 = vmatpush1.msra.mxu0 0.0
    %1005 = vmatprep.subr.mxu0 0.0
    %1006 = vmatpush1.msra.mxu0 0.0
    %1007 = vmatprep.subr.mxu0 0.0
    %1008 = vmatpush1.msra.mxu0 0.0
    %1009 = vmatprep.mubr.f32.mxu0 0.0
    %v1010 = vand.u32 %v38, 4294901760
    %1011 = vmatmul.mubr.f32.gmra.mrb[0].mxu0 %v1010
    %v1012 = vpop.f32.mrb[0].mxu0
    %v1013 = vadd.f32 %v922, %v1012
    %v1014 = vpop.f32.mrb[0].mxu0
    %1015 = vmatprep.mubr.f32.mxu0 0.0
    %v1016 = vand.u32 %v41, 4294901760
    %1017 = vmatmul.mubr.f32.gmra.mrb[0].mxu0 %v1016
    %v1018 = vpop.f32.mrb[0].mxu0
    %v1019 = vadd.f32 %v930, %v1018
    %v1020 = vpop.f32.mrb[0].mxu0
    %1021 = vdwg.mxu0
    %1022 = vmatprep.subr.mxu0 0.0
    %v1023 = vand.u32 %v571, 4294901760
    %1024 = vmatpush1.msra.mxu0 %v1023
    %1025 = vmatprep.subr.mxu0 0.0
    %v1026 = vand.u32 %v572, 4294901760
    %1027 = vmatpush1.msra.mxu0 %v1026
    %1028 = vmatprep.subr.mxu0 0.0
    %v1029 = vand.u32 %v573, 4294901760
    %1030 = vmatpush1.msra.mxu0 %v1029
    %1031 = vmatprep.subr.mxu0 0.0
    %v1032 = vand.u32 %v574, 4294901760
    %1033 = vmatpush1.msra.mxu0 %v1032
    %1034 = vmatprep.subr.mxu0 0.0
    %1035 = vmatpush1.msra.mxu0 0.0
    %1036 = vmatprep.subr.mxu0 0.0
    %1037 = vmatpush1.msra.mxu0 0.0
    %1038 = vmatprep.subr.mxu0 0.0
    %1039 = vmatpush1.msra.mxu0 0.0
    %1040 = vmatprep.subr.mxu0 0.0
    %1041 = vmatpush1.msra.mxu0 0.0
    %1042 = vmatprep.subr.mxu0 0.0
    %1043 = vmatpush1.msra.mxu0 0.0
    %1044 = vmatprep.subr.mxu0 0.0
    %1045 = vmatpush1.msra.mxu0 0.0
    %1046 = vmatprep.subr.mxu0 0.0
    %1047 = vmatpush1.msra.mxu0 0.0
    %1048 = vmatprep.subr.mxu0 0.0
    %1049 = vmatpush1.msra.mxu0 0.0
    %1050 = vmatprep.subr.mxu0 0.0
    %1051 = vmatpush1.msra.mxu0 0.0
    %1052 = vmatprep.subr.mxu0 0.0
    %1053 = vmatpush1.msra.mxu0 0.0
    %1054 = vmatprep.subr.mxu0 0.0
    %1055 = vmatpush1.msra.mxu0 0.0
    %1056 = vmatprep.subr.mxu0 0.0
    %1057 = vmatpush1.msra.mxu0 0.0
    %1058 = vmatprep.subr.mxu0 0.0
    %1059 = vmatpush1.msra.mxu0 0.0
    %1060 = vmatprep.subr.mxu0 0.0
    %1061 = vmatpush1.msra.mxu0 0.0
    %1062 = vmatprep.subr.mxu0 0.0
    %1063 = vmatpush1.msra.mxu0 0.0
    %1064 = vmatprep.subr.mxu0 0.0
    %1065 = vmatpush1.msra.mxu0 0.0
    %1066 = vmatprep.subr.mxu0 0.0
    %1067 = vmatpush1.msra.mxu0 0.0
    %1068 = vmatprep.subr.mxu0 0.0
    %1069 = vmatpush1.msra.mxu0 0.0
    %1070 = vmatprep.subr.mxu0 0.0
    %1071 = vmatpush1.msra.mxu0 0.0
    %1072 = vmatprep.subr.mxu0 0.0
    %1073 = vmatpush1.msra.mxu0 0.0
    %1074 = vmatprep.subr.mxu0 0.0
    %1075 = vmatpush1.msra.mxu0 0.0
    %1076 = vmatprep.subr.mxu0 0.0
    %1077 = vmatpush1.msra.mxu0 0.0
    %1078 = vmatprep.subr.mxu0 0.0
    %1079 = vmatpush1.msra.mxu0 0.0
    %1080 = vmatprep.subr.mxu0 0.0
    %1081 = vmatpush1.msra.mxu0 0.0
    %1082 = vmatprep.subr.mxu0 0.0
    %1083 = vmatpush1.msra.mxu0 0.0
    %1084 = vmatprep.subr.mxu0 0.0
    %1085 = vmatpush1.msra.mxu0 0.0
    %1086 = vmatprep.subr.mxu0 0.0
    %1087 = vmatpush1.msra.mxu0 0.0
    %1088 = vmatprep.subr.mxu0 0.0
    %1089 = vmatpush1.msra.mxu0 0.0
    %1090 = vmatprep.mubr.f32.mxu0 0.0
    %v1091 = vand.u32 %v38, 4294901760
    %1092 = vmatmul.mubr.f32.gmra.mrb[0].mxu0 %v1091
    %v1093 = vpop.f32.mrb[0].mxu0
    %v1094 = vadd.f32 %v1013, %v1093
    %v1095 = vpop.f32.mrb[0].mxu0
    %1096 = vmatprep.mubr.f32.mxu0 0.0
    %v1097 = vand.u32 %v41, 4294901760
    %1098 = vmatmul.mubr.f32.gmra.mrb[0].mxu0 %v1097
    %v1099 = vpop.f32.mrb[0].mxu0
    %v1100 = vadd.f32 %v1019, %v1099
    %v1101 = vpop.f32.mrb[0].mxu0
    %1102 = vdwg.mxu0
    %1104 = vrot.lane.b32.xlu0 %v562, 64
    %v1105 = vpop.permute.xlu0 %1104
    %vm1106 = vcmask 130048
    %v1107 = vsel %vm1106, %v562, 0
    %v1109 = vsel %vm1106, %v1105, 0
    %1111 = vmatprep.subr.mxu0 0.0
    %v1112 = vand.u32 %v1109, 4294901760
    %1113 = vmatpush1.xpose.msra.mxu0 %v1112
    %1114 = vmatprep.subr.mxu0 0.0
    %1115 = vmatpush1.xpose.msra.mxu0 0.0
    %1116 = vmatprep.subr.mxu0 0.0
    %1117 = vmatpush1.xpose.msra.mxu0 0.0
    %1118 = vmatprep.subr.mxu0 0.0
    %1119 = vmatpush1.xpose.msra.mxu0 0.0
    %1120 = vmatprep.subr.mxu0 0.0
    %1121 = vmatpush1.xpose.msra.mxu0 0.0
    %1122 = vmatprep.subr.mxu0 0.0
    %1123 = vmatpush1.xpose.msra.mxu0 0.0
    %1124 = vmatprep.subr.mxu0 0.0
    %1125 = vmatpush1.xpose.msra.mxu0 0.0
    %1126 = vmatprep.subr.mxu0 0.0
    %1127 = vmatpush1.xpose.msra.mxu0 0.0
    %1128 = vmatprep.subr.mxu0 0.0
    %1129 = vmatpush1.xpose.msra.mxu0 0.0
    %1130 = vmatprep.subr.mxu0 0.0
    %1131 = vmatpush1.xpose.msra.mxu0 0.0
    %1132 = vmatprep.subr.mxu0 0.0
    %1133 = vmatpush1.xpose.msra.mxu0 0.0
    %1134 = vmatprep.subr.mxu0 0.0
    %1135 = vmatpush1.xpose.msra.mxu0 0.0
    %1136 = vmatprep.subr.mxu0 0.0
    %1137 = vmatpush1.xpose.msra.mxu0 0.0
    %1138 = vmatprep.subr.mxu0 0.0
    %1139 = vmatpush1.xpose.msra.mxu0 0.0
    %1140 = vmatprep.subr.mxu0 0.0
    %1141 = vmatpush1.xpose.msra.mxu0 0.0
    %1142 = vmatprep.subr.mxu0 0.0
    %1143 = vmatpush1.xpose.msra.mxu0 0.0
    %1144 = vmatprep.subr.mxu0 0.0
    %1145 = vmatpush1.xpose.msra.mxu0 0.0
    %1146 = vmatprep.subr.mxu0 0.0
    %1147 = vmatpush1.xpose.msra.mxu0 0.0
    %1148 = vmatprep.subr.mxu0 0.0
    %1149 = vmatpush1.xpose.msra.mxu0 0.0
    %1150 = vmatprep.subr.mxu0 0.0
    %1151 = vmatpush1.xpose.msra.mxu0 0.0
    %1152 = vmatprep.subr.mxu0 0.0
    %1153 = vmatpush1.xpose.msra.mxu0 0.0
    %1154 = vmatprep.subr.mxu0 0.0
    %1155 = vmatpush1.xpose.msra.mxu0 0.0
    %1156 = vmatprep.subr.mxu0 0.0
    %1157 = vmatpush1.xpose.msra.mxu0 0.0
    %1158 = vmatprep.subr.mxu0 0.0
    %1159 = vmatpush1.xpose.msra.mxu0 0.0
    %1160 = vmatprep.subr.mxu0 0.0
    %1161 = vmatpush1.xpose.msra.mxu0 0.0
    %1162 = vmatprep.subr.mxu0 0.0
    %1163 = vmatpush1.xpose.msra.mxu0 0.0
    %1164 = vmatprep.subr.mxu0 0.0
    %1165 = vmatpush1.xpose.msra.mxu0 0.0
    %1166 = vmatprep.subr.mxu0 0.0
    %1167 = vmatpush1.xpose.msra.mxu0 0.0
    %1168 = vmatprep.subr.mxu0 0.0
    %1169 = vmatpush1.xpose.msra.mxu0 0.0
    %1170 = vmatprep.subr.mxu0 0.0
    %1171 = vmatpush1.xpose.msra.mxu0 0.0
    %1172 = vmatprep.subr.mxu0 0.0
    %1173 = vmatpush1.xpose.msra.mxu0 0.0
    %1174 = vmatprep.subr.mxu0 0.0
    %1175 = vmatpush1.xpose.msra.mxu0 0.0
    %1176 = vmatprep.mubr.f32.mxu0 0.0
    %v1177 = vand.u32 %v1107, 4294901760
    %v1178 = vsub.f32 %v1107, %v1177
    %v1179 = vand.u32 %v1178, 4294901760
    %v1180 = vsub.f32 %v1178, %v1179
    %v1181 = vand.u32 %v1180, 4294901760
    %1182 = vmatmul.mubr.f32.gmra.mrb[0].mxu0 %v1181
    %v1183 = vpop.f32.mrb[0].mxu0
    %v1184 = vadd.f32 0.0, %v1183
    %v1185 = vpop.f32.mrb[0].mxu0
    %1186 = vdwg.mxu0
    %1187 = vmatprep.subr.mxu0 0.0
    %v1188 = vand.u32 %v1109, 4294901760
    %v1189 = vsub.f32 %v1109, %v1188
    %v1190 = vand.u32 %v1189, 4294901760
    %v1191 = vsub.f32 %v1189, %v1190
    %v1192 = vand.u32 %v1191, 4294901760
    %1193 = vmatpush1.xpose.msra.mxu0 %v1192
    %1194 = vmatprep.subr.mxu0 0.0
    %1195 = vmatpush1.xpose.msra.mxu0 0.0
    %1196 = vmatprep.subr.mxu0 0.0
    %1197 = vmatpush1.xpose.msra.mxu0 0.0
    %1198 = vmatprep.subr.mxu0 0.0
    %1199 = vmatpush1.xpose.msra.mxu0 0.0
    %1200 = vmatprep.subr.mxu0 0.0
    %1201 = vmatpush1.xpose.msra.mxu0 0.0
    %1202 = vmatprep.subr.mxu0 0.0
    %1203 = vmatpush1.xpose.msra.mxu0 0.0
    %1204 = vmatprep.subr.mxu0 0.0
    %1205 = vmatpush1.xpose.msra.mxu0 0.0
    %1206 = vmatprep.subr.mxu0 0.0
    %1207 = vmatpush1.xpose.msra.mxu0 0.0
    %1208 = vmatprep.subr.mxu0 0.0
    %1209 = vmatpush1.xpose.msra.mxu0 0.0
    %1210 = vmatprep.subr.mxu0 0.0
    %1211 = vmatpush1.xpose.msra.mxu0 0.0
    %1212 = vmatprep.subr.mxu0 0.0
    %1213 = vmatpush1.xpose.msra.mxu0 0.0
    %1214 = vmatprep.subr.mxu0 0.0
    %1215 = vmatpush1.xpose.msra.mxu0 0.0
    %1216 = vmatprep.subr.mxu0 0.0
    %1217 = vmatpush1.xpose.msra.mxu0 0.0
    %1218 = vmatprep.subr.mxu0 0.0
    %1219 = vmatpush1.xpose.msra.mxu0 0.0
    %1220 = vmatprep.subr.mxu0 0.0
    %1221 = vmatpush1.xpose.msra.mxu0 0.0
    %1222 = vmatprep.subr.mxu0 0.0
    %1223 = vmatpush1.xpose.msra.mxu0 0.0
    %1224 = vmatprep.subr.mxu0 0.0
    %1225 = vmatpush1.xpose.msra.mxu0 0.0
    %1226 = vmatprep.subr.mxu0 0.0
    %1227 = vmatpush1.xpose.msra.mxu0 0.0
    %1228 = vmatprep.subr.mxu0 0.0
    %1229 = vmatpush1.xpose.msra.mxu0 0.0
    %1230 = vmatprep.subr.mxu0 0.0
    %1231 = vmatpush1.xpose.msra.mxu0 0.0
    %1232 = vmatprep.subr.mxu0 0.0
    %1233 = vmatpush1.xpose.msra.mxu0 0.0
    %1234 = vmatprep.subr.mxu0 0.0
    %1235 = vmatpush1.xpose.msra.mxu0 0.0
    %1236 = vmatprep.subr.mxu0 0.0
    %1237 = vmatpush1.xpose.msra.mxu0 0.0
    %1238 = vmatprep.subr.mxu0 0.0
    %1239 = vmatpush1.xpose.msra.mxu0 0.0
    %1240 = vmatprep.subr.mxu0 0.0
    %1241 = vmatpush1.xpose.msra.mxu0 0.0
    %1242 = vmatprep.subr.mxu0 0.0
    %1243 = vmatpush1.xpose.msra.mxu0 0.0
    %1244 = vmatprep.subr.mxu0 0.0
    %1245 = vmatpush1.xpose.msra.mxu0 0.0
    %1246 = vmatprep.subr.mxu0 0.0
    %1247 = vmatpush1.xpose.msra.mxu0 0.0
    %1248 = vmatprep.subr.mxu0 0.0
    %1249 = vmatpush1.xpose.msra.mxu0 0.0
    %1250 = vmatprep.subr.mxu0 0.0
    %1251 = vmatpush1.xpose.msra.mxu0 0.0
    %1252 = vmatprep.subr.mxu0 0.0
    %1253 = vmatpush1.xpose.msra.mxu0 0.0
    %1254 = vmatprep.subr.mxu0 0.0
    %1255 = vmatpush1.xpose.msra.mxu0 0.0
    %1256 = vmatprep.mubr.f32.mxu0 0.0
    %v1257 = vand.u32 %v1107, 4294901760
    %1258 = vmatmul.mubr.f32.gmra.mrb[0].mxu0 %v1257
    %v1259 = vpop.f32.mrb[0].mxu0
    %v1260 = vadd.f32 %v1184, %v1259
    %v1261 = vpop.f32.mrb[0].mxu0
    %1262 = vdwg.mxu0
    %1263 = vmatprep.subr.mxu0 0.0
    %v1264 = vand.u32 %v1109, 4294901760
    %v1265 = vsub.f32 %v1109, %v1264
    %1266 = vmatpush1.xpose.msra.mxu0 %v1265
    %1267 = vmatprep.subr.mxu0 0.0
    %1268 = vmatpush1.xpose.msra.mxu0 0.0
    %1269 = vmatprep.subr.mxu0 0.0
    %1270 = vmatpush1.xpose.msra.mxu0 0.0
    %1271 = vmatprep.subr.mxu0 0.0
    %1272 = vmatpush1.xpose.msra.mxu0 0.0
    %1273 = vmatprep.subr.mxu0 0.0
    %1274 = vmatpush1.xpose.msra.mxu0 0.0
    %1275 = vmatprep.subr.mxu0 0.0
    %1276 = vmatpush1.xpose.msra.mxu0 0.0
    %1277 = vmatprep.subr.mxu0 0.0
    %1278 = vmatpush1.xpose.msra.mxu0 0.0
    %1279 = vmatprep.subr.mxu0 0.0
    %1280 = vmatpush1.xpose.msra.mxu0 0.0
    %1281 = vmatprep.subr.mxu0 0.0
    %1282 = vmatpush1.xpose.msra.mxu0 0.0
    %1283 = vmatprep.subr.mxu0 0.0
    %1284 = vmatpush1.xpose.msra.mxu0 0.0
    %1285 = vmatprep.subr.mxu0 0.0
    %1286 = vmatpush1.xpose.msra.mxu0 0.0
    %1287 = vmatprep.subr.mxu0 0.0
    %1288 = vmatpush1.xpose.msra.mxu0 0.0
    %1289 = vmatprep.subr.mxu0 0.0
    %1290 = vmatpush1.xpose.msra.mxu0 0.0
    %1291 = vmatprep.subr.mxu0 0.0
    %1292 = vmatpush1.xpose.msra.mxu0 0.0
    %1293 = vmatprep.subr.mxu0 0.0
    %1294 = vmatpush1.xpose.msra.mxu0 0.0
    %1295 = vmatprep.subr.mxu0 0.0
    %1296 = vmatpush1.xpose.msra.mxu0 0.0
    %1297 = vmatprep.subr.mxu0 0.0
    %1298 = vmatpush1.xpose.msra.mxu0 0.0
    %1299 = vmatprep.subr.mxu0 0.0
    %1300 = vmatpush1.xpose.msra.mxu0 0.0
    %1301 = vmatprep.subr.mxu0 0.0
    %1302 = vmatpush1.xpose.msra.mxu0 0.0
    %1303 = vmatprep.subr.mxu0 0.0
    %1304 = vmatpush1.xpose.msra.mxu0 0.0
    %1305 = vmatprep.subr.mxu0 0.0
    %1306 = vmatpush1.xpose.msra.mxu0 0.0
    %1307 = vmatprep.subr.mxu0 0.0
    %1308 = vmatpush1.xpose.msra.mxu0 0.0
    %1309 = vmatprep.subr.mxu0 0.0
    %1310 = vmatpush1.xpose.msra.mxu0 0.0
    %1311 = vmatprep.subr.mxu0 0.0
    %1312 = vmatpush1.xpose.msra.mxu0 0.0
    %1313 = vmatprep.subr.mxu0 0.0
    %1314 = vmatpush1.xpose.msra.mxu0 0.0
    %1315 = vmatprep.subr.mxu0 0.0
    %1316 = vmatpush1.xpose.msra.mxu0 0.0
    %1317 = vmatprep.subr.mxu0 0.0
    %1318 = vmatpush1.xpose.msra.mxu0 0.0
    %1319 = vmatprep.subr.mxu0 0.0
    %1320 = vmatpush1.xpose.msra.mxu0 0.0
    %1321 = vmatprep.subr.mxu0 0.0
    %1322 = vmatpush1.xpose.msra.mxu0 0.0
    %1323 = vmatprep.subr.mxu0 0.0
    %1324 = vmatpush1.xpose.msra.mxu0 0.0
    %1325 = vmatprep.subr.mxu0 0.0
    %1326 = vmatpush1.xpose.msra.mxu0 0.0
    %1327 = vmatprep.subr.mxu0 0.0
    %1328 = vmatpush1.xpose.msra.mxu0 0.0
    %1329 = vmatprep.mubr.f32.mxu0 0.0
    %v1330 = vand.u32 %v1107, 4294901760
    %v1331 = vsub.f32 %v1107, %v1330
    %1332 = vmatmul.mubr.f32.gmra.mrb[0].mxu0 %v1331
    %v1333 = vpop.f32.mrb[0].mxu0
    %v1334 = vadd.f32 %v1260, %v1333
    %v1335 = vpop.f32.mrb[0].mxu0
    %1336 = vdwg.mxu0
    %1337 = vmatprep.subr.mxu0 0.0
    %v1338 = vand.u32 %v1109, 4294901760
    %1339 = vmatpush1.xpose.msra.mxu0 %v1338
    %1340 = vmatprep.subr.mxu0 0.0
    %1341 = vmatpush1.xpose.msra.mxu0 0.0
    %1342 = vmatprep.subr.mxu0 0.0
    %1343 = vmatpush1.xpose.msra.mxu0 0.0
    %1344 = vmatprep.subr.mxu0 0.0
    %1345 = vmatpush1.xpose.msra.mxu0 0.0
    %1346 = vmatprep.subr.mxu0 0.0
    %1347 = vmatpush1.xpose.msra.mxu0 0.0
    %1348 = vmatprep.subr.mxu0 0.0
    %1349 = vmatpush1.xpose.msra.mxu0 0.0
    %1350 = vmatprep.subr.mxu0 0.0
    %1351 = vmatpush1.xpose.msra.mxu0 0.0
    %1352 = vmatprep.subr.mxu0 0.0
    %1353 = vmatpush1.xpose.msra.mxu0 0.0
    %1354 = vmatprep.subr.mxu0 0.0
    %1355 = vmatpush1.xpose.msra.mxu0 0.0
    %1356 = vmatprep.subr.mxu0 0.0
    %1357 = vmatpush1.xpose.msra.mxu0 0.0
    %1358 = vmatprep.subr.mxu0 0.0
    %1359 = vmatpush1.xpose.msra.mxu0 0.0
    %1360 = vmatprep.subr.mxu0 0.0
    %1361 = vmatpush1.xpose.msra.mxu0 0.0
    %1362 = vmatprep.subr.mxu0 0.0
    %1363 = vmatpush1.xpose.msra.mxu0 0.0
    %1364 = vmatprep.subr.mxu0 0.0
    %1365 = vmatpush1.xpose.msra.mxu0 0.0
    %1366 = vmatprep.subr.mxu0 0.0
    %1367 = vmatpush1.xpose.msra.mxu0 0.0
    %1368 = vmatprep.subr.mxu0 0.0
    %1369 = vmatpush1.xpose.msra.mxu0 0.0
    %1370 = vmatprep.subr.mxu0 0.0
    %1371 = vmatpush1.xpose.msra.mxu0 0.0
    %1372 = vmatprep.subr.mxu0 0.0
    %1373 = vmatpush1.xpose.msra.mxu0 0.0
    %1374 = vmatprep.subr.mxu0 0.0
    %1375 = vmatpush1.xpose.msra.mxu0 0.0
    %1376 = vmatprep.subr.mxu0 0.0
    %1377 = vmatpush1.xpose.msra.mxu0 0.0
    %1378 = vmatprep.subr.mxu0 0.0
    %1379 = vmatpush1.xpose.msra.mxu0 0.0
    %1380 = vmatprep.subr.mxu0 0.0
    %1381 = vmatpush1.xpose.msra.mxu0 0.0
    %1382 = vmatprep.subr.mxu0 0.0
    %1383 = vmatpush1.xpose.msra.mxu0 0.0
    %1384 = vmatprep.subr.mxu0 0.0
    %1385 = vmatpush1.xpose.msra.mxu0 0.0
    %1386 = vmatprep.subr.mxu0 0.0
    %1387 = vmatpush1.xpose.msra.mxu0 0.0
    %1388 = vmatprep.subr.mxu0 0.0
    %1389 = vmatpush1.xpose.msra.mxu0 0.0
    %1390 = vmatprep.subr.mxu0 0.0
    %1391 = vmatpush1.xpose.msra.mxu0 0.0
    %1392 = vmatprep.subr.mxu0 0.0
    %1393 = vmatpush1.xpose.msra.mxu0 0.0
    %1394 = vmatprep.subr.mxu0 0.0
    %1395 = vmatpush1.xpose.msra.mxu0 0.0
    %1396 = vmatprep.subr.mxu0 0.0
    %1397 = vmatpush1.xpose.msra.mxu0 0.0
    %1398 = vmatprep.subr.mxu0 0.0
    %1399 = vmatpush1.xpose.msra.mxu0 0.0
    %1400 = vmatprep.subr.mxu0 0.0
    %1401 = vmatpush1.xpose.msra.mxu0 0.0
    %1402 = vmatprep.mubr.f32.mxu0 0.0
    %v1403 = vand.u32 %v1107, 4294901760
    %v1404 = vsub.f32 %v1107, %v1403
    %v1405 = vand.u32 %v1404, 4294901760
    %1406 = vmatmul.mubr.f32.gmra.mrb[0].mxu0 %v1405
    %v1407 = vpop.f32.mrb[0].mxu0
    %v1408 = vadd.f32 %v1334, %v1407
    %v1409 = vpop.f32.mrb[0].mxu0
    %1410 = vdwg.mxu0
    %1411 = vmatprep.subr.mxu0 0.0
    %v1412 = vand.u32 %v1109, 4294901760
    %v1413 = vsub.f32 %v1109, %v1412
    %v1414 = vand.u32 %v1413, 4294901760
    %1415 = vmatpush1.xpose.msra.mxu0 %v1414
    %1416 = vmatprep.subr.mxu0 0.0
    %1417 = vmatpush1.xpose.msra.mxu0 0.0
    %1418 = vmatprep.subr.mxu0 0.0
    %1419 = vmatpush1.xpose.msra.mxu0 0.0
    %1420 = vmatprep.subr.mxu0 0.0
    %1421 = vmatpush1.xpose.msra.mxu0 0.0
    %1422 = vmatprep.subr.mxu0 0.0
    %1423 = vmatpush1.xpose.msra.mxu0 0.0
    %1424 = vmatprep.subr.mxu0 0.0
    %1425 = vmatpush1.xpose.msra.mxu0 0.0
    %1426 = vmatprep.subr.mxu0 0.0
    %1427 = vmatpush1.xpose.msra.mxu0 0.0
    %1428 = vmatprep.subr.mxu0 0.0
    %1429 = vmatpush1.xpose.msra.mxu0 0.0
    %1430 = vmatprep.subr.mxu0 0.0
    %1431 = vmatpush1.xpose.msra.mxu0 0.0
    %1432 = vmatprep.subr.mxu0 0.0
    %1433 = vmatpush1.xpose.msra.mxu0 0.0
    %1434 = vmatprep.subr.mxu0 0.0
    %1435 = vmatpush1.xpose.msra.mxu0 0.0
    %1436 = vmatprep.subr.mxu0 0.0
    %1437 = vmatpush1.xpose.msra.mxu0 0.0
    %1438 = vmatprep.subr.mxu0 0.0
    %1439 = vmatpush1.xpose.msra.mxu0 0.0
    %1440 = vmatprep.subr.mxu0 0.0
    %1441 = vmatpush1.xpose.msra.mxu0 0.0
    %1442 = vmatprep.subr.mxu0 0.0
    %1443 = vmatpush1.xpose.msra.mxu0 0.0
    %1444 = vmatprep.subr.mxu0 0.0
    %1445 = vmatpush1.xpose.msra.mxu0 0.0
    %1446 = vmatprep.subr.mxu0 0.0
    %1447 = vmatpush1.xpose.msra.mxu0 0.0
    %1448 = vmatprep.subr.mxu0 0.0
    %1449 = vmatpush1.xpose.msra.mxu0 0.0
    %1450 = vmatprep.subr.mxu0 0.0
    %1451 = vmatpush1.xpose.msra.mxu0 0.0
    %1452 = vmatprep.subr.mxu0 0.0
    %1453 = vmatpush1.xpose.msra.mxu0 0.0
    %1454 = vmatprep.subr.mxu0 0.0
    %1455 = vmatpush1.xpose.msra.mxu0 0.0
    %1456 = vmatprep.subr.mxu0 0.0
    %1457 = vmatpush1.xpose.msra.mxu0 0.0
    %1458 = vmatprep.subr.mxu0 0.0
    %1459 = vmatpush1.xpose.msra.mxu0 0.0
    %1460 = vmatprep.subr.mxu0 0.0
    %1461 = vmatpush1.xpose.msra.mxu0 0.0
    %1462 = vmatprep.subr.mxu0 0.0
    %1463 = vmatpush1.xpose.msra.mxu0 0.0
    %1464 = vmatprep.subr.mxu0 0.0
    %1465 = vmatpush1.xpose.msra.mxu0 0.0
    %1466 = vmatprep.subr.mxu0 0.0
    %1467 = vmatpush1.xpose.msra.mxu0 0.0
    %1468 = vmatprep.subr.mxu0 0.0
    %1469 = vmatpush1.xpose.msra.mxu0 0.0
    %1470 = vmatprep.subr.mxu0 0.0
    %1471 = vmatpush1.xpose.msra.mxu0 0.0
    %1472 = vmatprep.subr.mxu0 0.0
    %1473 = vmatpush1.xpose.msra.mxu0 0.0
    %1474 = vmatprep.subr.mxu0 0.0
    %1475 = vmatpush1.xpose.msra.mxu0 0.0
    %1476 = vmatprep.subr.mxu0 0.0
    %1477 = vmatpush1.xpose.msra.mxu0 0.0
    %1478 = vmatprep.mubr.f32.mxu0 0.0
    %v1479 = vand.u32 %v1107, 4294901760
    %1480 = vmatmul.mubr.f32.gmra.mrb[0].mxu0 %v1479
    %v1481 = vpop.f32.mrb[0].mxu0
    %v1482 = vadd.f32 %v1408, %v1481
    %v1483 = vpop.f32.mrb[0].mxu0
    %1484 = vdwg.mxu0
    %1485 = vmatprep.subr.mxu0 0.0
    %v1486 = vand.u32 %v1109, 4294901760
    %1487 = vmatpush1.xpose.msra.mxu0 %v1486
    %1488 = vmatprep.subr.mxu0 0.0
    %1489 = vmatpush1.xpose.msra.mxu0 0.0
    %1490 = vmatprep.subr.mxu0 0.0
    %1491 = vmatpush1.xpose.msra.mxu0 0.0
    %1492 = vmatprep.subr.mxu0 0.0
    %1493 = vmatpush1.xpose.msra.mxu0 0.0
    %1494 = vmatprep.subr.mxu0 0.0
    %1495 = vmatpush1.xpose.msra.mxu0 0.0
    %1496 = vmatprep.subr.mxu0 0.0
    %1497 = vmatpush1.xpose.msra.mxu0 0.0
    %1498 = vmatprep.subr.mxu0 0.0
    %1499 = vmatpush1.xpose.msra.mxu0 0.0
    %1500 = vmatprep.subr.mxu0 0.0
    %1501 = vmatpush1.xpose.msra.mxu0 0.0
    %1502 = vmatprep.subr.mxu0 0.0
    %1503 = vmatpush1.xpose.msra.mxu0 0.0
    %1504 = vmatprep.subr.mxu0 0.0
    %1505 = vmatpush1.xpose.msra.mxu0 0.0
    %1506 = vmatprep.subr.mxu0 0.0
    %1507 = vmatpush1.xpose.msra.mxu0 0.0
    %1508 = vmatprep.subr.mxu0 0.0
    %1509 = vmatpush1.xpose.msra.mxu0 0.0
    %1510 = vmatprep.subr.mxu0 0.0
    %1511 = vmatpush1.xpose.msra.mxu0 0.0
    %1512 = vmatprep.subr.mxu0 0.0
    %1513 = vmatpush1.xpose.msra.mxu0 0.0
    %1514 = vmatprep.subr.mxu0 0.0
    %1515 = vmatpush1.xpose.msra.mxu0 0.0
    %1516 = vmatprep.subr.mxu0 0.0
    %1517 = vmatpush1.xpose.msra.mxu0 0.0
    %1518 = vmatprep.subr.mxu0 0.0
    %1519 = vmatpush1.xpose.msra.mxu0 0.0
    %1520 = vmatprep.subr.mxu0 0.0
    %1521 = vmatpush1.xpose.msra.mxu0 0.0
    %1522 = vmatprep.subr.mxu0 0.0
    %1523 = vmatpush1.xpose.msra.mxu0 0.0
    %1524 = vmatprep.subr.mxu0 0.0
    %1525 = vmatpush1.xpose.msra.mxu0 0.0
    %1526 = vmatprep.subr.mxu0 0.0
    %1527 = vmatpush1.xpose.msra.mxu0 0.0
    %1528 = vmatprep.subr.mxu0 0.0
    %1529 = vmatpush1.xpose.msra.mxu0 0.0
    %1530 = vmatprep.subr.mxu0 0.0
    %1531 = vmatpush1.xpose.msra.mxu0 0.0
    %1532 = vmatprep.subr.mxu0 0.0
    %1533 = vmatpush1.xpose.msra.mxu0 0.0
    %1534 = vmatprep.subr.mxu0 0.0
    %1535 = vmatpush1.xpose.msra.mxu0 0.0
    %1536 = vmatprep.subr.mxu0 0.0
    %1537 = vmatpush1.xpose.msra.mxu0 0.0
    %1538 = vmatprep.subr.mxu0 0.0
    %1539 = vmatpush1.xpose.msra.mxu0 0.0
    %1540 = vmatprep.subr.mxu0 0.0
    %1541 = vmatpush1.xpose.msra.mxu0 0.0
    %1542 = vmatprep.subr.mxu0 0.0
    %1543 = vmatpush1.xpose.msra.mxu0 0.0
    %1544 = vmatprep.subr.mxu0 0.0
    %1545 = vmatpush1.xpose.msra.mxu0 0.0
    %1546 = vmatprep.subr.mxu0 0.0
    %1547 = vmatpush1.xpose.msra.mxu0 0.0
    %1548 = vmatprep.subr.mxu0 0.0
    %1549 = vmatpush1.xpose.msra.mxu0 0.0
    %1550 = vmatprep.mubr.f32.mxu0 0.0
    %v1551 = vand.u32 %v1107, 4294901760
    %1552 = vmatmul.mubr.f32.gmra.mrb[0].mxu0 %v1551
    %v1553 = vpop.f32.mrb[0].mxu0
    %v1554 = vadd.f32 %v1482, %v1553
    %v1555 = vpop.f32.mrb[0].mxu0
    %1556 = vdwg.mxu0
    %1557 = vrot.lane.b32.xlu0 %v562, 112
    %v1558 = vpop.permute.xlu0 %1557
    %1559 = vrot.lane.b32.xlu0 %v562, 48
    %v1560 = vpop.permute.xlu0 %1559
    %v1561 = vsel %vm1106, %v1558, 0
    %v1563 = vsel %vm1106, %v1560, 0
    %1565 = vmatprep.subr.mxu0 0.0
    %v1566 = vand.u32 %v1563, 4294901760
    %1567 = vmatpush1.xpose.msra.mxu0 %v1566
    %1568 = vmatprep.subr.mxu0 0.0
    %1569 = vmatpush1.xpose.msra.mxu0 0.0
    %1570 = vmatprep.subr.mxu0 0.0
    %1571 = vmatpush1.xpose.msra.mxu0 0.0
    %1572 = vmatprep.subr.mxu0 0.0
    %1573 = vmatpush1.xpose.msra.mxu0 0.0
    %1574 = vmatprep.subr.mxu0 0.0
    %1575 = vmatpush1.xpose.msra.mxu0 0.0
    %1576 = vmatprep.subr.mxu0 0.0
    %1577 = vmatpush1.xpose.msra.mxu0 0.0
    %1578 = vmatprep.subr.mxu0 0.0
    %1579 = vmatpush1.xpose.msra.mxu0 0.0
    %1580 = vmatprep.subr.mxu0 0.0
    %1581 = vmatpush1.xpose.msra.mxu0 0.0
    %1582 = vmatprep.subr.mxu0 0.0
    %1583 = vmatpush1.xpose.msra.mxu0 0.0
    %1584 = vmatprep.subr.mxu0 0.0
    %1585 = vmatpush1.xpose.msra.mxu0 0.0
    %1586 = vmatprep.subr.mxu0 0.0
    %1587 = vmatpush1.xpose.msra.mxu0 0.0
    %1588 = vmatprep.subr.mxu0 0.0
    %1589 = vmatpush1.xpose.msra.mxu0 0.0
    %1590 = vmatprep.subr.mxu0 0.0
    %1591 = vmatpush1.xpose.msra.mxu0 0.0
    %1592 = vmatprep.subr.mxu0 0.0
    %1593 = vmatpush1.xpose.msra.mxu0 0.0
    %1594 = vmatprep.subr.mxu0 0.0
    %1595 = vmatpush1.xpose.msra.mxu0 0.0
    %1596 = vmatprep.subr.mxu0 0.0
    %1597 = vmatpush1.xpose.msra.mxu0 0.0
    %1598 = vmatprep.subr.mxu0 0.0
    %1599 = vmatpush1.xpose.msra.mxu0 0.0
    %1600 = vmatprep.subr.mxu0 0.0
    %1601 = vmatpush1.xpose.msra.mxu0 0.0
    %1602 = vmatprep.subr.mxu0 0.0
    %1603 = vmatpush1.xpose.msra.mxu0 0.0
    %1604 = vmatprep.subr.mxu0 0.0
    %1605 = vmatpush1.xpose.msra.mxu0 0.0
    %1606 = vmatprep.subr.mxu0 0.0
    %1607 = vmatpush1.xpose.msra.mxu0 0.0
    %1608 = vmatprep.subr.mxu0 0.0
    %1609 = vmatpush1.xpose.msra.mxu0 0.0
    %1610 = vmatprep.subr.mxu0 0.0
    %1611 = vmatpush1.xpose.msra.mxu0 0.0
    %1612 = vmatprep.subr.mxu0 0.0
    %1613 = vmatpush1.xpose.msra.mxu0 0.0
    %1614 = vmatprep.subr.mxu0 0.0
    %1615 = vmatpush1.xpose.msra.mxu0 0.0
    %1616 = vmatprep.subr.mxu0 0.0
    %1617 = vmatpush1.xpose.msra.mxu0 0.0
    %1618 = vmatprep.subr.mxu0 0.0
    %1619 = vmatpush1.xpose.msra.mxu0 0.0
    %1620 = vmatprep.subr.mxu0 0.0
    %1621 = vmatpush1.xpose.msra.mxu0 0.0
    %1622 = vmatprep.subr.mxu0 0.0
    %1623 = vmatpush1.xpose.msra.mxu0 0.0
    %1624 = vmatprep.subr.mxu0 0.0
    %1625 = vmatpush1.xpose.msra.mxu0 0.0
    %1626 = vmatprep.subr.mxu0 0.0
    %1627 = vmatpush1.xpose.msra.mxu0 0.0
    %1628 = vmatprep.subr.mxu0 0.0
    %1629 = vmatpush1.xpose.msra.mxu0 0.0
    %1630 = vmatprep.mubr.f32.mxu0 0.0
    %v1631 = vand.u32 %v1561, 4294901760
    %v1632 = vsub.f32 %v1561, %v1631
    %v1633 = vand.u32 %v1632, 4294901760
    %v1634 = vsub.f32 %v1632, %v1633
    %v1635 = vand.u32 %v1634, 4294901760
    %1636 = vmatmul.mubr.f32.gmra.mrb[0].mxu0 %v1635
    %v1637 = vpop.f32.mrb[0].mxu0
    %v1638 = vadd.f32 0.0, %v1637
    %v1639 = vpop.f32.mrb[0].mxu0
    %1640 = vdwg.mxu0
    %1641 = vmatprep.subr.mxu0 0.0
    %v1642 = vand.u32 %v1563, 4294901760
    %v1643 = vsub.f32 %v1563, %v1642
    %v1644 = vand.u32 %v1643, 4294901760
    %v1645 = vsub.f32 %v1643, %v1644
    %v1646 = vand.u32 %v1645, 4294901760
    %1647 = vmatpush1.xpose.msra.mxu0 %v1646
    %1648 = vmatprep.subr.mxu0 0.0
    %1649 = vmatpush1.xpose.msra.mxu0 0.0
    %1650 = vmatprep.subr.mxu0 0.0
    %1651 = vmatpush1.xpose.msra.mxu0 0.0
    %1652 = vmatprep.subr.mxu0 0.0
    %1653 = vmatpush1.xpose.msra.mxu0 0.0
    %1654 = vmatprep.subr.mxu0 0.0
    %1655 = vmatpush1.xpose.msra.mxu0 0.0
    %1656 = vmatprep.subr.mxu0 0.0
    %1657 = vmatpush1.xpose.msra.mxu0 0.0
    %1658 = vmatprep.subr.mxu0 0.0
    %1659 = vmatpush1.xpose.msra.mxu0 0.0
    %1660 = vmatprep.subr.mxu0 0.0
    %1661 = vmatpush1.xpose.msra.mxu0 0.0
    %1662 = vmatprep.subr.mxu0 0.0
    %1663 = vmatpush1.xpose.msra.mxu0 0.0
    %1664 = vmatprep.subr.mxu0 0.0
    %1665 = vmatpush1.xpose.msra.mxu0 0.0
    %1666 = vmatprep.subr.mxu0 0.0
    %1667 = vmatpush1.xpose.msra.mxu0 0.0
    %1668 = vmatprep.subr.mxu0 0.0
    %1669 = vmatpush1.xpose.msra.mxu0 0.0
    %1670 = vmatprep.subr.mxu0 0.0
    %1671 = vmatpush1.xpose.msra.mxu0 0.0
    %1672 = vmatprep.subr.mxu0 0.0
    %1673 = vmatpush1.xpose.msra.mxu0 0.0
    %1674 = vmatprep.subr.mxu0 0.0
    %1675 = vmatpush1.xpose.msra.mxu0 0.0
    %1676 = vmatprep.subr.mxu0 0.0
    %1677 = vmatpush1.xpose.msra.mxu0 0.0
    %1678 = vmatprep.subr.mxu0 0.0
    %1679 = vmatpush1.xpose.msra.mxu0 0.0
    %1680 = vmatprep.subr.mxu0 0.0
    %1681 = vmatpush1.xpose.msra.mxu0 0.0
    %1682 = vmatprep.subr.mxu0 0.0
    %1683 = vmatpush1.xpose.msra.mxu0 0.0
    %1684 = vmatprep.subr.mxu0 0.0
    %1685 = vmatpush1.xpose.msra.mxu0 0.0
    %1686 = vmatprep.subr.mxu0 0.0
    %1687 = vmatpush1.xpose.msra.mxu0 0.0
    %1688 = vmatprep.subr.mxu0 0.0
    %1689 = vmatpush1.xpose.msra.mxu0 0.0
    %1690 = vmatprep.subr.mxu0 0.0
    %1691 = vmatpush1.xpose.msra.mxu0 0.0
    %1692 = vmatprep.subr.mxu0 0.0
    %1693 = vmatpush1.xpose.msra.mxu0 0.0
    %1694 = vmatprep.subr.mxu0 0.0
    %1695 = vmatpush1.xpose.msra.mxu0 0.0
    %1696 = vmatprep.subr.mxu0 0.0
    %1697 = vmatpush1.xpose.msra.mxu0 0.0
    %1698 = vmatprep.subr.mxu0 0.0
    %1699 = vmatpush1.xpose.msra.mxu0 0.0
    %1700 = vmatprep.subr.mxu0 0.0
    %1701 = vmatpush1.xpose.msra.mxu0 0.0
    %1702 = vmatprep.subr.mxu0 0.0
    %1703 = vmatpush1.xpose.msra.mxu0 0.0
    %1704 = vmatprep.subr.mxu0 0.0
    %1705 = vmatpush1.xpose.msra.mxu0 0.0
    %1706 = vmatprep.subr.mxu0 0.0
    %1707 = vmatpush1.xpose.msra.mxu0 0.0
    %1708 = vmatprep.subr.mxu0 0.0
    %1709 = vmatpush1.xpose.msra.mxu0 0.0
    %1710 = vmatprep.mubr.f32.mxu0 0.0
    %v1711 = vand.u32 %v1561, 4294901760
    %1712 = vmatmul.mubr.f32.gmra.mrb[0].mxu0 %v1711
    %v1713 = vpop.f32.mrb[0].mxu0
    %v1714 = vadd.f32 %v1638, %v1713
    %v1715 = vpop.f32.mrb[0].mxu0
    %1716 = vdwg.mxu0
    %1717 = vmatprep.subr.mxu0 0.0
    %v1718 = vand.u32 %v1563, 4294901760
    %v1719 = vsub.f32 %v1563, %v1718
    %1720 = vmatpush1.xpose.msra.mxu0 %v1719
    %1721 = vmatprep.subr.mxu0 0.0
    %1722 = vmatpush1.xpose.msra.mxu0 0.0
    %1723 = vmatprep.subr.mxu0 0.0
    %1724 = vmatpush1.xpose.msra.mxu0 0.0
    %1725 = vmatprep.subr.mxu0 0.0
    %1726 = vmatpush1.xpose.msra.mxu0 0.0
    %1727 = vmatprep.subr.mxu0 0.0
    %1728 = vmatpush1.xpose.msra.mxu0 0.0
    %1729 = vmatprep.subr.mxu0 0.0
    %1730 = vmatpush1.xpose.msra.mxu0 0.0
    %1731 = vmatprep.subr.mxu0 0.0
    %1732 = vmatpush1.xpose.msra.mxu0 0.0
    %1733 = vmatprep.subr.mxu0 0.0
    %1734 = vmatpush1.xpose.msra.mxu0 0.0
    %1735 = vmatprep.subr.mxu0 0.0
    %1736 = vmatpush1.xpose.msra.mxu0 0.0
    %1737 = vmatprep.subr.mxu0 0.0
    %1738 = vmatpush1.xpose.msra.mxu0 0.0
    %1739 = vmatprep.subr.mxu0 0.0
    %1740 = vmatpush1.xpose.msra.mxu0 0.0
    %1741 = vmatprep.subr.mxu0 0.0
    %1742 = vmatpush1.xpose.msra.mxu0 0.0
    %1743 = vmatprep.subr.mxu0 0.0
    %1744 = vmatpush1.xpose.msra.mxu0 0.0
    %1745 = vmatprep.subr.mxu0 0.0
    %1746 = vmatpush1.xpose.msra.mxu0 0.0
    %1747 = vmatprep.subr.mxu0 0.0
    %1748 = vmatpush1.xpose.msra.mxu0 0.0
    %1749 = vmatprep.subr.mxu0 0.0
    %1750 = vmatpush1.xpose.msra.mxu0 0.0
    %1751 = vmatprep.subr.mxu0 0.0
    %1752 = vmatpush1.xpose.msra.mxu0 0.0
    %1753 = vmatprep.subr.mxu0 0.0
    %1754 = vmatpush1.xpose.msra.mxu0 0.0
    %1755 = vmatprep.subr.mxu0 0.0
    %1756 = vmatpush1.xpose.msra.mxu0 0.0
    %1757 = vmatprep.subr.mxu0 0.0
    %1758 = vmatpush1.xpose.msra.mxu0 0.0
    %1759 = vmatprep.subr.mxu0 0.0
    %1760 = vmatpush1.xpose.msra.mxu0 0.0
    %1761 = vmatprep.subr.mxu0 0.0
    %1762 = vmatpush1.xpose.msra.mxu0 0.0
    %1763 = vmatprep.subr.mxu0 0.0
    %1764 = vmatpush1.xpose.msra.mxu0 0.0
    %1765 = vmatprep.subr.mxu0 0.0
    %1766 = vmatpush1.xpose.msra.mxu0 0.0
    %1767 = vmatprep.subr.mxu0 0.0
    %1768 = vmatpush1.xpose.msra.mxu0 0.0
    %1769 = vmatprep.subr.mxu0 0.0
    %1770 = vmatpush1.xpose.msra.mxu0 0.0
    %1771 = vmatprep.subr.mxu0 0.0
    %1772 = vmatpush1.xpose.msra.mxu0 0.0
    %1773 = vmatprep.subr.mxu0 0.0
    %1774 = vmatpush1.xpose.msra.mxu0 0.0
    %1775 = vmatprep.subr.mxu0 0.0
    %1776 = vmatpush1.xpose.msra.mxu0 0.0
    %1777 = vmatprep.subr.mxu0 0.0
    %1778 = vmatpush1.xpose.msra.mxu0 0.0
    %1779 = vmatprep.subr.mxu0 0.0
    %1780 = vmatpush1.xpose.msra.mxu0 0.0
    %1781 = vmatprep.subr.mxu0 0.0
    %1782 = vmatpush1.xpose.msra.mxu0 0.0
    %1783 = vmatprep.mubr.f32.mxu0 0.0
    %v1784 = vand.u32 %v1561, 4294901760
    %v1785 = vsub.f32 %v1561, %v1784
    %1786 = vmatmul.mubr.f32.gmra.mrb[0].mxu0 %v1785
    %v1787 = vpop.f32.mrb[0].mxu0
    %v1788 = vadd.f32 %v1714, %v1787
    %v1789 = vpop.f32.mrb[0].mxu0
    %1790 = vdwg.mxu0
    %1791 = vmatprep.subr.mxu0 0.0
    %v1792 = vand.u32 %v1563, 4294901760
    %1793 = vmatpush1.xpose.msra.mxu0 %v1792
    %1794 = vmatprep.subr.mxu0 0.0
    %1795 = vmatpush1.xpose.msra.mxu0 0.0
    %1796 = vmatprep.subr.mxu0 0.0
    %1797 = vmatpush1.xpose.msra.mxu0 0.0
    %1798 = vmatprep.subr.mxu0 0.0
    %1799 = vmatpush1.xpose.msra.mxu0 0.0
    %1800 = vmatprep.subr.mxu0 0.0
    %1801 = vmatpush1.xpose.msra.mxu0 0.0
    %1802 = vmatprep.subr.mxu0 0.0
    %1803 = vmatpush1.xpose.msra.mxu0 0.0
    %1804 = vmatprep.subr.mxu0 0.0
    %1805 = vmatpush1.xpose.msra.mxu0 0.0
    %1806 = vmatprep.subr.mxu0 0.0
    %1807 = vmatpush1.xpose.msra.mxu0 0.0
    %1808 = vmatprep.subr.mxu0 0.0
    %1809 = vmatpush1.xpose.msra.mxu0 0.0
    %1810 = vmatprep.subr.mxu0 0.0
    %1811 = vmatpush1.xpose.msra.mxu0 0.0
    %1812 = vmatprep.subr.mxu0 0.0
    %1813 = vmatpush1.xpose.msra.mxu0 0.0
    %1814 = vmatprep.subr.mxu0 0.0
    %1815 = vmatpush1.xpose.msra.mxu0 0.0
    %1816 = vmatprep.subr.mxu0 0.0
    %1817 = vmatpush1.xpose.msra.mxu0 0.0
    %1818 = vmatprep.subr.mxu0 0.0
    %1819 = vmatpush1.xpose.msra.mxu0 0.0
    %1820 = vmatprep.subr.mxu0 0.0
    %1821 = vmatpush1.xpose.msra.mxu0 0.0
    %1822 = vmatprep.subr.mxu0 0.0
    %1823 = vmatpush1.xpose.msra.mxu0 0.0
    %1824 = vmatprep.subr.mxu0 0.0
    %1825 = vmatpush1.xpose.msra.mxu0 0.0
    %1826 = vmatprep.subr.mxu0 0.0
    %1827 = vmatpush1.xpose.msra.mxu0 0.0
    %1828 = vmatprep.subr.mxu0 0.0
    %1829 = vmatpush1.xpose.msra.mxu0 0.0
    %1830 = vmatprep.subr.mxu0 0.0
    %1831 = vmatpush1.xpose.msra.mxu0 0.0
    %1832 = vmatprep.subr.mxu0 0.0
    %1833 = vmatpush1.xpose.msra.mxu0 0.0
    %1834 = vmatprep.subr.mxu0 0.0
    %1835 = vmatpush1.xpose.msra.mxu0 0.0
    %1836 = vmatprep.subr.mxu0 0.0
    %1837 = vmatpush1.xpose.msra.mxu0 0.0
    %1838 = vmatprep.subr.mxu0 0.0
    %1839 = vmatpush1.xpose.msra.mxu0 0.0
    %1840 = vmatprep.subr.mxu0 0.0
    %1841 = vmatpush1.xpose.msra.mxu0 0.0
    %1842 = vmatprep.subr.mxu0 0.0
    %1843 = vmatpush1.xpose.msra.mxu0 0.0
    %1844 = vmatprep.subr.mxu0 0.0
    %1845 = vmatpush1.xpose.msra.mxu0 0.0
    %1846 = vmatprep.subr.mxu0 0.0
    %1847 = vmatpush1.xpose.msra.mxu0 0.0
    %1848 = vmatprep.subr.mxu0 0.0
    %1849 = vmatpush1.xpose.msra.mxu0 0.0
    %1850 = vmatprep.subr.mxu0 0.0
    %1851 = vmatpush1.xpose.msra.mxu0 0.0
    %1852 = vmatprep.subr.mxu0 0.0
    %1853 = vmatpush1.xpose.msra.mxu0 0.0
    %1854 = vmatprep.subr.mxu0 0.0
    %1855 = vmatpush1.xpose.msra.mxu0 0.0
    %1856 = vmatprep.mubr.f32.mxu0 0.0
    %v1857 = vand.u32 %v1561, 4294901760
    %v1858 = vsub.f32 %v1561, %v1857
    %v1859 = vand.u32 %v1858, 4294901760
    %1860 = vmatmul.mubr.f32.gmra.mrb[0].mxu0 %v1859
    %v1861 = vpop.f32.mrb[0].mxu0
    %v1862 = vadd.f32 %v1788, %v1861
    %v1863 = vpop.f32.mrb[0].mxu0
    %1864 = vdwg.mxu0
    %1865 = vmatprep.subr.mxu0 0.0
    %v1866 = vand.u32 %v1563, 4294901760
    %v1867 = vsub.f32 %v1563, %v1866
    %v1868 = vand.u32 %v1867, 4294901760
    %1869 = vmatpush1.xpose.msra.mxu0 %v1868
    %1870 = vmatprep.subr.mxu0 0.0
    %1871 = vmatpush1.xpose.msra.mxu0 0.0
    %1872 = vmatprep.subr.mxu0 0.0
    %1873 = vmatpush1.xpose.msra.mxu0 0.0
    %1874 = vmatprep.subr.mxu0 0.0
    %1875 = vmatpush1.xpose.msra.mxu0 0.0
    %1876 = vmatprep.subr.mxu0 0.0
    %1877 = vmatpush1.xpose.msra.mxu0 0.0
    %1878 = vmatprep.subr.mxu0 0.0
    %1879 = vmatpush1.xpose.msra.mxu0 0.0
    %1880 = vmatprep.subr.mxu0 0.0
    %1881 = vmatpush1.xpose.msra.mxu0 0.0
    %1882 = vmatprep.subr.mxu0 0.0
    %1883 = vmatpush1.xpose.msra.mxu0 0.0
    %1884 = vmatprep.subr.mxu0 0.0
    %1885 = vmatpush1.xpose.msra.mxu0 0.0
    %1886 = vmatprep.subr.mxu0 0.0
    %1887 = vmatpush1.xpose.msra.mxu0 0.0
    %1888 = vmatprep.subr.mxu0 0.0
    %1889 = vmatpush1.xpose.msra.mxu0 0.0
    %1890 = vmatprep.subr.mxu0 0.0
    %1891 = vmatpush1.xpose.msra.mxu0 0.0
    %1892 = vmatprep.subr.mxu0 0.0
    %1893 = vmatpush1.xpose.msra.mxu0 0.0
    %1894 = vmatprep.subr.mxu0 0.0
    %1895 = vmatpush1.xpose.msra.mxu0 0.0
    %1896 = vmatprep.subr.mxu0 0.0
    %1897 = vmatpush1.xpose.msra.mxu0 0.0
    %1898 = vmatprep.subr.mxu0 0.0
    %1899 = vmatpush1.xpose.msra.mxu0 0.0
    %1900 = vmatprep.subr.mxu0 0.0
    %1901 = vmatpush1.xpose.msra.mxu0 0.0
    %1902 = vmatprep.subr.mxu0 0.0
    %1903 = vmatpush1.xpose.msra.mxu0 0.0
    %1904 = vmatprep.subr.mxu0 0.0
    %1905 = vmatpush1.xpose.msra.mxu0 0.0
    %1906 = vmatprep.subr.mxu0 0.0
    %1907 = vmatpush1.xpose.msra.mxu0 0.0
    %1908 = vmatprep.subr.mxu0 0.0
    %1909 = vmatpush1.xpose.msra.mxu0 0.0
    %1910 = vmatprep.subr.mxu0 0.0
    %1911 = vmatpush1.xpose.msra.mxu0 0.0
    %1912 = vmatprep.subr.mxu0 0.0
    %1913 = vmatpush1.xpose.msra.mxu0 0.0
    %1914 = vmatprep.subr.mxu0 0.0
    %1915 = vmatpush1.xpose.msra.mxu0 0.0
    %1916 = vmatprep.subr.mxu0 0.0
    %1917 = vmatpush1.xpose.msra.mxu0 0.0
    %1918 = vmatprep.subr.mxu0 0.0
    %1919 = vmatpush1.xpose.msra.mxu0 0.0
    %1920 = vmatprep.subr.mxu0 0.0
    %1921 = vmatpush1.xpose.msra.mxu0 0.0
    %1922 = vmatprep.subr.mxu0 0.0
    %1923 = vmatpush1.xpose.msra.mxu0 0.0
    %1924 = vmatprep.subr.mxu0 0.0
    %1925 = vmatpush1.xpose.msra.mxu0 0.0
    %1926 = vmatprep.subr.mxu0 0.0
    %1927 = vmatpush1.xpose.msra.mxu0 0.0
    %1928 = vmatprep.subr.mxu0 0.0
    %1929 = vmatpush1.xpose.msra.mxu0 0.0
    %1930 = vmatprep.subr.mxu0 0.0
    %1931 = vmatpush1.xpose.msra.mxu0 0.0
    %1932 = vmatprep.mubr.f32.mxu0 0.0
    %v1933 = vand.u32 %v1561, 4294901760
    %1934 = vmatmul.mubr.f32.gmra.mrb[0].mxu0 %v1933
    %v1935 = vpop.f32.mrb[0].mxu0
    %v1936 = vadd.f32 %v1862, %v1935
    %v1937 = vpop.f32.mrb[0].mxu0
    %1938 = vdwg.mxu0
    %1939 = vmatprep.subr.mxu0 0.0
    %v1940 = vand.u32 %v1563, 4294901760
    %1941 = vmatpush1.xpose.msra.mxu0 %v1940
    %1942 = vmatprep.subr.mxu0 0.0
    %1943 = vmatpush1.xpose.msra.mxu0 0.0
    %1944 = vmatprep.subr.mxu0 0.0
    %1945 = vmatpush1.xpose.msra.mxu0 0.0
    %1946 = vmatprep.subr.mxu0 0.0
    %1947 = vmatpush1.xpose.msra.mxu0 0.0
    %1948 = vmatprep.subr.mxu0 0.0
    %1949 = vmatpush1.xpose.msra.mxu0 0.0
    %1950 = vmatprep.subr.mxu0 0.0
    %1951 = vmatpush1.xpose.msra.mxu0 0.0
    %1952 = vmatprep.subr.mxu0 0.0
    %1953 = vmatpush1.xpose.msra.mxu0 0.0
    %1954 = vmatprep.subr.mxu0 0.0
    %1955 = vmatpush1.xpose.msra.mxu0 0.0
    %1956 = vmatprep.subr.mxu0 0.0
    %1957 = vmatpush1.xpose.msra.mxu0 0.0
    %1958 = vmatprep.subr.mxu0 0.0
    %1959 = vmatpush1.xpose.msra.mxu0 0.0
    %1960 = vmatprep.subr.mxu0 0.0
    %1961 = vmatpush1.xpose.msra.mxu0 0.0
    %1962 = vmatprep.subr.mxu0 0.0
    %1963 = vmatpush1.xpose.msra.mxu0 0.0
    %1964 = vmatprep.subr.mxu0 0.0
    %1965 = vmatpush1.xpose.msra.mxu0 0.0
    %1966 = vmatprep.subr.mxu0 0.0
    %1967 = vmatpush1.xpose.msra.mxu0 0.0
    %1968 = vmatprep.subr.mxu0 0.0
    %1969 = vmatpush1.xpose.msra.mxu0 0.0
    %1970 = vmatprep.subr.mxu0 0.0
    %1971 = vmatpush1.xpose.msra.mxu0 0.0
    %1972 = vmatprep.subr.mxu0 0.0
    %1973 = vmatpush1.xpose.msra.mxu0 0.0
    %1974 = vmatprep.subr.mxu0 0.0
    %1975 = vmatpush1.xpose.msra.mxu0 0.0
    %1976 = vmatprep.subr.mxu0 0.0
    %1977 = vmatpush1.xpose.msra.mxu0 0.0
    %1978 = vmatprep.subr.mxu0 0.0
    %1979 = vmatpush1.xpose.msra.mxu0 0.0
    %1980 = vmatprep.subr.mxu0 0.0
    %1981 = vmatpush1.xpose.msra.mxu0 0.0
    %1982 = vmatprep.subr.mxu0 0.0
    %1983 = vmatpush1.xpose.msra.mxu0 0.0
    %1984 = vmatprep.subr.mxu0 0.0
    %1985 = vmatpush1.xpose.msra.mxu0 0.0
    %1986 = vmatprep.subr.mxu0 0.0
    %1987 = vmatpush1.xpose.msra.mxu0 0.0
    %1988 = vmatprep.subr.mxu0 0.0
    %1989 = vmatpush1.xpose.msra.mxu0 0.0
    %1990 = vmatprep.subr.mxu0 0.0
    %1991 = vmatpush1.xpose.msra.mxu0 0.0
    %1992 = vmatprep.subr.mxu0 0.0
    %1993 = vmatpush1.xpose.msra.mxu0 0.0
    %1994 = vmatprep.subr.mxu0 0.0
    %1995 = vmatpush1.xpose.msra.mxu0 0.0
    %1996 = vmatprep.subr.mxu0 0.0
    %1997 = vmatpush1.xpose.msra.mxu0 0.0
    %1998 = vmatprep.subr.mxu0 0.0
    %1999 = vmatpush1.xpose.msra.mxu0 0.0
    %2000 = vmatprep.subr.mxu0 0.0
    %2001 = vmatpush1.xpose.msra.mxu0 0.0
    %2002 = vmatprep.subr.mxu0 0.0
    %2003 = vmatpush1.xpose.msra.mxu0 0.0
    %2004 = vmatprep.mubr.f32.mxu0 0.0
    %v2005 = vand.u32 %v1561, 4294901760
    %2006 = vmatmul.mubr.f32.gmra.mrb[0].mxu0 %v2005
    %v2007 = vpop.f32.mrb[0].mxu0
    %v2008 = vadd.f32 %v1936, %v2007
    %v2009 = vpop.f32.mrb[0].mxu0
    %2010 = vdwg.mxu0
    %2011 = vrot.lane.b32.xlu0 %v562, 96
    %v2012 = vpop.permute.xlu0 %2011
    %2013 = vrot.lane.b32.xlu0 %v562, 32
    %v2014 = vpop.permute.xlu0 %2013
    %v2015 = vsel %vm1106, %v2012, 0
    %v2017 = vsel %vm1106, %v2014, 0
    %2019 = vmatprep.subr.mxu0 0.0
    %v2020 = vand.u32 %v2017, 4294901760
    %2021 = vmatpush1.xpose.msra.mxu0 %v2020
    %2022 = vmatprep.subr.mxu0 0.0
    %2023 = vmatpush1.xpose.msra.mxu0 0.0
    %2024 = vmatprep.subr.mxu0 0.0
    %2025 = vmatpush1.xpose.msra.mxu0 0.0
    %2026 = vmatprep.subr.mxu0 0.0
    %2027 = vmatpush1.xpose.msra.mxu0 0.0
    %2028 = vmatprep.subr.mxu0 0.0
    %2029 = vmatpush1.xpose.msra.mxu0 0.0
    %2030 = vmatprep.subr.mxu0 0.0
    %2031 = vmatpush1.xpose.msra.mxu0 0.0
    %2032 = vmatprep.subr.mxu0 0.0
    %2033 = vmatpush1.xpose.msra.mxu0 0.0
    %2034 = vmatprep.subr.mxu0 0.0
    %2035 = vmatpush1.xpose.msra.mxu0 0.0
    %2036 = vmatprep.subr.mxu0 0.0
    %2037 = vmatpush1.xpose.msra.mxu0 0.0
    %2038 = vmatprep.subr.mxu0 0.0
    %2039 = vmatpush1.xpose.msra.mxu0 0.0
    %2040 = vmatprep.subr.mxu0 0.0
    %2041 = vmatpush1.xpose.msra.mxu0 0.0
    %2042 = vmatprep.subr.mxu0 0.0
    %2043 = vmatpush1.xpose.msra.mxu0 0.0
    %2044 = vmatprep.subr.mxu0 0.0
    %2045 = vmatpush1.xpose.msra.mxu0 0.0
    %2046 = vmatprep.subr.mxu0 0.0
    %2047 = vmatpush1.xpose.msra.mxu0 0.0
    %2048 = vmatprep.subr.mxu0 0.0
    %2049 = vmatpush1.xpose.msra.mxu0 0.0
    %2050 = vmatprep.subr.mxu0 0.0
    %2051 = vmatpush1.xpose.msra.mxu0 0.0
    %2052 = vmatprep.subr.mxu0 0.0
    %2053 = vmatpush1.xpose.msra.mxu0 0.0
    %2054 = vmatprep.subr.mxu0 0.0
    %2055 = vmatpush1.xpose.msra.mxu0 0.0
    %2056 = vmatprep.subr.mxu0 0.0
    %2057 = vmatpush1.xpose.msra.mxu0 0.0
    %2058 = vmatprep.subr.mxu0 0.0
    %2059 = vmatpush1.xpose.msra.mxu0 0.0
    %2060 = vmatprep.subr.mxu0 0.0
    %2061 = vmatpush1.xpose.msra.mxu0 0.0
    %2062 = vmatprep.subr.mxu0 0.0
    %2063 = vmatpush1.xpose.msra.mxu0 0.0
    %2064 = vmatprep.subr.mxu0 0.0
    %2065 = vmatpush1.xpose.msra.mxu0 0.0
    %2066 = vmatprep.subr.mxu0 0.0
    %2067 = vmatpush1.xpose.msra.mxu0 0.0
    %2068 = vmatprep.subr.mxu0 0.0
    %2069 = vmatpush1.xpose.msra.mxu0 0.0
    %2070 = vmatprep.subr.mxu0 0.0
    %2071 = vmatpush1.xpose.msra.mxu0 0.0
    %2072 = vmatprep.subr.mxu0 0.0
    %2073 = vmatpush1.xpose.msra.mxu0 0.0
    %2074 = vmatprep.subr.mxu0 0.0
    %2075 = vmatpush1.xpose.msra.mxu0 0.0
    %2076 = vmatprep.subr.mxu0 0.0
    %2077 = vmatpush1.xpose.msra.mxu0 0.0
    %2078 = vmatprep.subr.mxu0 0.0
    %2079 = vmatpush1.xpose.msra.mxu0 0.0
    %2080 = vmatprep.subr.mxu0 0.0
    %2081 = vmatpush1.xpose.msra.mxu0 0.0
    %2082 = vmatprep.subr.mxu0 0.0
    %2083 = vmatpush1.xpose.msra.mxu0 0.0
    %2084 = vmatprep.mubr.f32.mxu0 0.0
    %v2085 = vand.u32 %v2015, 4294901760
    %v2086 = vsub.f32 %v2015, %v2085
    %v2087 = vand.u32 %v2086, 4294901760
    %v2088 = vsub.f32 %v2086, %v2087
    %v2089 = vand.u32 %v2088, 4294901760
    %2090 = vmatmul.mubr.f32.gmra.mrb[0].mxu0 %v2089
    %v2091 = vpop.f32.mrb[0].mxu0
    %v2092 = vadd.f32 0.0, %v2091
    %v2093 = vpop.f32.mrb[0].mxu0
    %2094 = vdwg.mxu0
    %2095 = vmatprep.subr.mxu0 0.0
    %v2096 = vand.u32 %v2017, 4294901760
    %v2097 = vsub.f32 %v2017, %v2096
    %v2098 = vand.u32 %v2097, 4294901760
    %v2099 = vsub.f32 %v2097, %v2098
    %v2100 = vand.u32 %v2099, 4294901760
    %2101 = vmatpush1.xpose.msra.mxu0 %v2100
    %2102 = vmatprep.subr.mxu0 0.0
    %2103 = vmatpush1.xpose.msra.mxu0 0.0
    %2104 = vmatprep.subr.mxu0 0.0
    %2105 = vmatpush1.xpose.msra.mxu0 0.0
    %2106 = vmatprep.subr.mxu0 0.0
    %2107 = vmatpush1.xpose.msra.mxu0 0.0
    %2108 = vmatprep.subr.mxu0 0.0
    %2109 = vmatpush1.xpose.msra.mxu0 0.0
    %2110 = vmatprep.subr.mxu0 0.0
    %2111 = vmatpush1.xpose.msra.mxu0 0.0
    %2112 = vmatprep.subr.mxu0 0.0
    %2113 = vmatpush1.xpose.msra.mxu0 0.0
    %2114 = vmatprep.subr.mxu0 0.0
    %2115 = vmatpush1.xpose.msra.mxu0 0.0
    %2116 = vmatprep.subr.mxu0 0.0
    %2117 = vmatpush1.xpose.msra.mxu0 0.0
    %2118 = vmatprep.subr.mxu0 0.0
    %2119 = vmatpush1.xpose.msra.mxu0 0.0
    %2120 = vmatprep.subr.mxu0 0.0
    %2121 = vmatpush1.xpose.msra.mxu0 0.0
    %2122 = vmatprep.subr.mxu0 0.0
    %2123 = vmatpush1.xpose.msra.mxu0 0.0
    %2124 = vmatprep.subr.mxu0 0.0
    %2125 = vmatpush1.xpose.msra.mxu0 0.0
    %2126 = vmatprep.subr.mxu0 0.0
    %2127 = vmatpush1.xpose.msra.mxu0 0.0
    %2128 = vmatprep.subr.mxu0 0.0
    %2129 = vmatpush1.xpose.msra.mxu0 0.0
    %2130 = vmatprep.subr.mxu0 0.0
    %2131 = vmatpush1.xpose.msra.mxu0 0.0
    %2132 = vmatprep.subr.mxu0 0.0
    %2133 = vmatpush1.xpose.msra.mxu0 0.0
    %2134 = vmatprep.subr.mxu0 0.0
    %2135 = vmatpush1.xpose.msra.mxu0 0.0
    %2136 = vmatprep.subr.mxu0 0.0
    %2137 = vmatpush1.xpose.msra.mxu0 0.0
    %2138 = vmatprep.subr.mxu0 0.0
    %2139 = vmatpush1.xpose.msra.mxu0 0.0
    %2140 = vmatprep.subr.mxu0 0.0
    %2141 = vmatpush1.xpose.msra.mxu0 0.0
    %2142 = vmatprep.subr.mxu0 0.0
    %2143 = vmatpush1.xpose.msra.mxu0 0.0
    %2144 = vmatprep.subr.mxu0 0.0
    %2145 = vmatpush1.xpose.msra.mxu0 0.0
    %2146 = vmatprep.subr.mxu0 0.0
    %2147 = vmatpush1.xpose.msra.mxu0 0.0
    %2148 = vmatprep.subr.mxu0 0.0
    %2149 = vmatpush1.xpose.msra.mxu0 0.0
    %2150 = vmatprep.subr.mxu0 0.0
    %2151 = vmatpush1.xpose.msra.mxu0 0.0
    %2152 = vmatprep.subr.mxu0 0.0
    %2153 = vmatpush1.xpose.msra.mxu0 0.0
    %2154 = vmatprep.subr.mxu0 0.0
    %2155 = vmatpush1.xpose.msra.mxu0 0.0
    %2156 = vmatprep.subr.mxu0 0.0
    %2157 = vmatpush1.xpose.msra.mxu0 0.0
    %2158 = vmatprep.subr.mxu0 0.0
    %2159 = vmatpush1.xpose.msra.mxu0 0.0
    %2160 = vmatprep.subr.mxu0 0.0
    %2161 = vmatpush1.xpose.msra.mxu0 0.0
    %2162 = vmatprep.subr.mxu0 0.0
    %2163 = vmatpush1.xpose.msra.mxu0 0.0
    %2164 = vmatprep.mubr.f32.mxu0 0.0
    %v2165 = vand.u32 %v2015, 4294901760
    %2166 = vmatmul.mubr.f32.gmra.mrb[0].mxu0 %v2165
    %v2167 = vpop.f32.mrb[0].mxu0
    %v2168 = vadd.f32 %v2092, %v2167
    %v2169 = vpop.f32.mrb[0].mxu0
    %2170 = vdwg.mxu0
    %2171 = vmatprep.subr.mxu0 0.0
    %v2172 = vand.u32 %v2017, 4294901760
    %v2173 = vsub.f32 %v2017, %v2172
    %2174 = vmatpush1.xpose.msra.mxu0 %v2173
    %2175 = vmatprep.subr.mxu0 0.0
    %2176 = vmatpush1.xpose.msra.mxu0 0.0
    %2177 = vmatprep.subr.mxu0 0.0
    %2178 = vmatpush1.xpose.msra.mxu0 0.0
    %2179 = vmatprep.subr.mxu0 0.0
    %2180 = vmatpush1.xpose.msra.mxu0 0.0
    %2181 = vmatprep.subr.mxu0 0.0
    %2182 = vmatpush1.xpose.msra.mxu0 0.0
    %2183 = vmatprep.subr.mxu0 0.0
    %2184 = vmatpush1.xpose.msra.mxu0 0.0
    %2185 = vmatprep.subr.mxu0 0.0
    %2186 = vmatpush1.xpose.msra.mxu0 0.0
    %2187 = vmatprep.subr.mxu0 0.0
    %2188 = vmatpush1.xpose.msra.mxu0 0.0
    %2189 = vmatprep.subr.mxu0 0.0
    %2190 = vmatpush1.xpose.msra.mxu0 0.0
    %2191 = vmatprep.subr.mxu0 0.0
    %2192 = vmatpush1.xpose.msra.mxu0 0.0
    %2193 = vmatprep.subr.mxu0 0.0
    %2194 = vmatpush1.xpose.msra.mxu0 0.0
    %2195 = vmatprep.subr.mxu0 0.0
    %2196 = vmatpush1.xpose.msra.mxu0 0.0
    %2197 = vmatprep.subr.mxu0 0.0
    %2198 = vmatpush1.xpose.msra.mxu0 0.0
    %2199 = vmatprep.subr.mxu0 0.0
    %2200 = vmatpush1.xpose.msra.mxu0 0.0
    %2201 = vmatprep.subr.mxu0 0.0
    %2202 = vmatpush1.xpose.msra.mxu0 0.0
    %2203 = vmatprep.subr.mxu0 0.0
    %2204 = vmatpush1.xpose.msra.mxu0 0.0
    %2205 = vmatprep.subr.mxu0 0.0
    %2206 = vmatpush1.xpose.msra.mxu0 0.0
    %2207 = vmatprep.subr.mxu0 0.0
    %2208 = vmatpush1.xpose.msra.mxu0 0.0
    %2209 = vmatprep.subr.mxu0 0.0
    %2210 = vmatpush1.xpose.msra.mxu0 0.0
    %2211 = vmatprep.subr.mxu0 0.0
    %2212 = vmatpush1.xpose.msra.mxu0 0.0
    %2213 = vmatprep.subr.mxu0 0.0
    %2214 = vmatpush1.xpose.msra.mxu0 0.0
    %2215 = vmatprep.subr.mxu0 0.0
    %2216 = vmatpush1.xpose.msra.mxu0 0.0
    %2217 = vmatprep.subr.mxu0 0.0
    %2218 = vmatpush1.xpose.msra.mxu0 0.0
    %2219 = vmatprep.subr.mxu0 0.0
    %2220 = vmatpush1.xpose.msra.mxu0 0.0
    %2221 = vmatprep.subr.mxu0 0.0
    %2222 = vmatpush1.xpose.msra.mxu0 0.0
    %2223 = vmatprep.subr.mxu0 0.0
    %2224 = vmatpush1.xpose.msra.mxu0 0.0
    %2225 = vmatprep.subr.mxu0 0.0
    %2226 = vmatpush1.xpose.msra.mxu0 0.0
    %2227 = vmatprep.subr.mxu0 0.0
    %2228 = vmatpush1.xpose.msra.mxu0 0.0
    %2229 = vmatprep.subr.mxu0 0.0
    %2230 = vmatpush1.xpose.msra.mxu0 0.0
    %2231 = vmatprep.subr.mxu0 0.0
    %2232 = vmatpush1.xpose.msra.mxu0 0.0
    %2233 = vmatprep.subr.mxu0 0.0
    %2234 = vmatpush1.xpose.msra.mxu0 0.0
    %2235 = vmatprep.subr.mxu0 0.0
    %2236 = vmatpush1.xpose.msra.mxu0 0.0
    %2237 = vmatprep.mubr.f32.mxu0 0.0
    %v2238 = vand.u32 %v2015, 4294901760
    %v2239 = vsub.f32 %v2015, %v2238
    %2240 = vmatmul.mubr.f32.gmra.mrb[0].mxu0 %v2239
    %v2241 = vpop.f32.mrb[0].mxu0
    %v2242 = vadd.f32 %v2168, %v2241
    %v2243 = vpop.f32.mrb[0].mxu0
    %2244 = vdwg.mxu0
    %2245 = vmatprep.subr.mxu0 0.0
    %v2246 = vand.u32 %v2017, 4294901760
    %2247 = vmatpush1.xpose.msra.mxu0 %v2246
    %2248 = vmatprep.subr.mxu0 0.0
    %2249 = vmatpush1.xpose.msra.mxu0 0.0
    %2250 = vmatprep.subr.mxu0 0.0
    %2251 = vmatpush1.xpose.msra.mxu0 0.0
    %2252 = vmatprep.subr.mxu0 0.0
    %2253 = vmatpush1.xpose.msra.mxu0 0.0
    %2254 = vmatprep.subr.mxu0 0.0
    %2255 = vmatpush1.xpose.msra.mxu0 0.0
    %2256 = vmatprep.subr.mxu0 0.0
    %2257 = vmatpush1.xpose.msra.mxu0 0.0
    %2258 = vmatprep.subr.mxu0 0.0
    %2259 = vmatpush1.xpose.msra.mxu0 0.0
    %2260 = vmatprep.subr.mxu0 0.0
    %2261 = vmatpush1.xpose.msra.mxu0 0.0
    %2262 = vmatprep.subr.mxu0 0.0
    %2263 = vmatpush1.xpose.msra.mxu0 0.0
    %2264 = vmatprep.subr.mxu0 0.0
    %2265 = vmatpush1.xpose.msra.mxu0 0.0
    %2266 = vmatprep.subr.mxu0 0.0
    %2267 = vmatpush1.xpose.msra.mxu0 0.0
    %2268 = vmatprep.subr.mxu0 0.0
    %2269 = vmatpush1.xpose.msra.mxu0 0.0
    %2270 = vmatprep.subr.mxu0 0.0
    %2271 = vmatpush1.xpose.msra.mxu0 0.0
    %2272 = vmatprep.subr.mxu0 0.0
    %2273 = vmatpush1.xpose.msra.mxu0 0.0
    %2274 = vmatprep.subr.mxu0 0.0
    %2275 = vmatpush1.xpose.msra.mxu0 0.0
    %2276 = vmatprep.subr.mxu0 0.0
    %2277 = vmatpush1.xpose.msra.mxu0 0.0
    %2278 = vmatprep.subr.mxu0 0.0
    %2279 = vmatpush1.xpose.msra.mxu0 0.0
    %2280 = vmatprep.subr.mxu0 0.0
    %2281 = vmatpush1.xpose.msra.mxu0 0.0
    %2282 = vmatprep.subr.mxu0 0.0
    %2283 = vmatpush1.xpose.msra.mxu0 0.0
    %2284 = vmatprep.subr.mxu0 0.0
    %2285 = vmatpush1.xpose.msra.mxu0 0.0
    %2286 = vmatprep.subr.mxu0 0.0
    %2287 = vmatpush1.xpose.msra.mxu0 0.0
    %2288 = vmatprep.subr.mxu0 0.0
    %2289 = vmatpush1.xpose.msra.mxu0 0.0
    %2290 = vmatprep.subr.mxu0 0.0
    %2291 = vmatpush1.xpose.msra.mxu0 0.0
    %2292 = vmatprep.subr.mxu0 0.0
    %2293 = vmatpush1.xpose.msra.mxu0 0.0
    %2294 = vmatprep.subr.mxu0 0.0
    %2295 = vmatpush1.xpose.msra.mxu0 0.0
    %2296 = vmatprep.subr.mxu0 0.0
    %2297 = vmatpush1.xpose.msra.mxu0 0.0
    %2298 = vmatprep.subr.mxu0 0.0
    %2299 = vmatpush1.xpose.msra.mxu0 0.0
    %2300 = vmatprep.subr.mxu0 0.0
    %2301 = vmatpush1.xpose.msra.mxu0 0.0
    %2302 = vmatprep.subr.mxu0 0.0
    %2303 = vmatpush1.xpose.msra.mxu0 0.0
    %2304 = vmatprep.subr.mxu0 0.0
    %2305 = vmatpush1.xpose.msra.mxu0 0.0
    %2306 = vmatprep.subr.mxu0 0.0
    %2307 = vmatpush1.xpose.msra.mxu0 0.0
    %2308 = vmatprep.subr.mxu0 0.0
    %2309 = vmatpush1.xpose.msra.mxu0 0.0
    %2310 = vmatprep.mubr.f32.mxu0 0.0
    %v2311 = vand.u32 %v2015, 4294901760
    %v2312 = vsub.f32 %v2015, %v2311
    %v2313 = vand.u32 %v2312, 4294901760
    %2314 = vmatmul.mubr.f32.gmra.mrb[0].mxu0 %v2313
    %v2315 = vpop.f32.mrb[0].mxu0
    %v2316 = vadd.f32 %v2242, %v2315
    %v2317 = vpop.f32.mrb[0].mxu0
    %2318 = vdwg.mxu0
    %2319 = vmatprep.subr.mxu0 0.0
    %v2320 = vand.u32 %v2017, 4294901760
    %v2321 = vsub.f32 %v2017, %v2320
    %v2322 = vand.u32 %v2321, 4294901760
    %2323 = vmatpush1.xpose.msra.mxu0 %v2322
    %2324 = vmatprep.subr.mxu0 0.0
    %2325 = vmatpush1.xpose.msra.mxu0 0.0
    %2326 = vmatprep.subr.mxu0 0.0
    %2327 = vmatpush1.xpose.msra.mxu0 0.0
    %2328 = vmatprep.subr.mxu0 0.0
    %2329 = vmatpush1.xpose.msra.mxu0 0.0
    %2330 = vmatprep.subr.mxu0 0.0
    %2331 = vmatpush1.xpose.msra.mxu0 0.0
    %2332 = vmatprep.subr.mxu0 0.0
    %2333 = vmatpush1.xpose.msra.mxu0 0.0
    %2334 = vmatprep.subr.mxu0 0.0
    %2335 = vmatpush1.xpose.msra.mxu0 0.0
    %2336 = vmatprep.subr.mxu0 0.0
    %2337 = vmatpush1.xpose.msra.mxu0 0.0
    %2338 = vmatprep.subr.mxu0 0.0
    %2339 = vmatpush1.xpose.msra.mxu0 0.0
    %2340 = vmatprep.subr.mxu0 0.0
    %2341 = vmatpush1.xpose.msra.mxu0 0.0
    %2342 = vmatprep.subr.mxu0 0.0
    %2343 = vmatpush1.xpose.msra.mxu0 0.0
    %2344 = vmatprep.subr.mxu0 0.0
    %2345 = vmatpush1.xpose.msra.mxu0 0.0
    %2346 = vmatprep.subr.mxu0 0.0
    %2347 = vmatpush1.xpose.msra.mxu0 0.0
    %2348 = vmatprep.subr.mxu0 0.0
    %2349 = vmatpush1.xpose.msra.mxu0 0.0
    %2350 = vmatprep.subr.mxu0 0.0
    %2351 = vmatpush1.xpose.msra.mxu0 0.0
    %2352 = vmatprep.subr.mxu0 0.0
    %2353 = vmatpush1.xpose.msra.mxu0 0.0
    %2354 = vmatprep.subr.mxu0 0.0
    %2355 = vmatpush1.xpose.msra.mxu0 0.0
    %2356 = vmatprep.subr.mxu0 0.0
    %2357 = vmatpush1.xpose.msra.mxu0 0.0
    %2358 = vmatprep.subr.mxu0 0.0
    %2359 = vmatpush1.xpose.msra.mxu0 0.0
    %2360 = vmatprep.subr.mxu0 0.0
    %2361 = vmatpush1.xpose.msra.mxu0 0.0
    %2362 = vmatprep.subr.mxu0 0.0
    %2363 = vmatpush1.xpose.msra.mxu0 0.0
    %2364 = vmatprep.subr.mxu0 0.0
    %2365 = vmatpush1.xpose.msra.mxu0 0.0
    %2366 = vmatprep.subr.mxu0 0.0
    %2367 = vmatpush1.xpose.msra.mxu0 0.0
    %2368 = vmatprep.subr.mxu0 0.0
    %2369 = vmatpush1.xpose.msra.mxu0 0.0
    %2370 = vmatprep.subr.mxu0 0.0
    %2371 = vmatpush1.xpose.msra.mxu0 0.0
    %2372 = vmatprep.subr.mxu0 0.0
    %2373 = vmatpush1.xpose.msra.mxu0 0.0
    %2374 = vmatprep.subr.mxu0 0.0
    %2375 = vmatpush1.xpose.msra.mxu0 0.0
    %2376 = vmatprep.subr.mxu0 0.0
    %2377 = vmatpush1.xpose.msra.mxu0 0.0
    %2378 = vmatprep.subr.mxu0 0.0
    %2379 = vmatpush1.xpose.msra.mxu0 0.0
    %2380 = vmatprep.subr.mxu0 0.0
    %2381 = vmatpush1.xpose.msra.mxu0 0.0
    %2382 = vmatprep.subr.mxu0 0.0
    %2383 = vmatpush1.xpose.msra.mxu0 0.0
    %2384 = vmatprep.subr.mxu0 0.0
    %2385 = vmatpush1.xpose.msra.mxu0 0.0
    %2386 = vmatprep.mubr.f32.mxu0 0.0
    %v2387 = vand.u32 %v2015, 4294901760
    %2388 = vmatmul.mubr.f32.gmra.mrb[0].mxu0 %v2387
    %v2389 = vpop.f32.mrb[0].mxu0
    %v2390 = vadd.f32 %v2316, %v2389
    %v2391 = vpop.f32.mrb[0].mxu0
    %2392 = vdwg.mxu0
    %2393 = vmatprep.subr.mxu0 0.0
    %v2394 = vand.u32 %v2017, 4294901760
    %2395 = vmatpush1.xpose.msra.mxu0 %v2394
    %2396 = vmatprep.subr.mxu0 0.0
    %2397 = vmatpush1.xpose.msra.mxu0 0.0
    %2398 = vmatprep.subr.mxu0 0.0
    %2399 = vmatpush1.xpose.msra.mxu0 0.0
    %2400 = vmatprep.subr.mxu0 0.0
    %2401 = vmatpush1.xpose.msra.mxu0 0.0
    %2402 = vmatprep.subr.mxu0 0.0
    %2403 = vmatpush1.xpose.msra.mxu0 0.0
    %2404 = vmatprep.subr.mxu0 0.0
    %2405 = vmatpush1.xpose.msra.mxu0 0.0
    %2406 = vmatprep.subr.mxu0 0.0
    %2407 = vmatpush1.xpose.msra.mxu0 0.0
    %2408 = vmatprep.subr.mxu0 0.0
    %2409 = vmatpush1.xpose.msra.mxu0 0.0
    %2410 = vmatprep.subr.mxu0 0.0
    %2411 = vmatpush1.xpose.msra.mxu0 0.0
    %2412 = vmatprep.subr.mxu0 0.0
    %2413 = vmatpush1.xpose.msra.mxu0 0.0
    %2414 = vmatprep.subr.mxu0 0.0
    %2415 = vmatpush1.xpose.msra.mxu0 0.0
    %2416 = vmatprep.subr.mxu0 0.0
    %2417 = vmatpush1.xpose.msra.mxu0 0.0
    %2418 = vmatprep.subr.mxu0 0.0
    %2419 = vmatpush1.xpose.msra.mxu0 0.0
    %2420 = vmatprep.subr.mxu0 0.0
    %2421 = vmatpush1.xpose.msra.mxu0 0.0
    %2422 = vmatprep.subr.mxu0 0.0
    %2423 = vmatpush1.xpose.msra.mxu0 0.0
    %2424 = vmatprep.subr.mxu0 0.0
    %2425 = vmatpush1.xpose.msra.mxu0 0.0
    %2426 = vmatprep.subr.mxu0 0.0
    %2427 = vmatpush1.xpose.msra.mxu0 0.0
    %2428 = vmatprep.subr.mxu0 0.0
    %2429 = vmatpush1.xpose.msra.mxu0 0.0
    %2430 = vmatprep.subr.mxu0 0.0
    %2431 = vmatpush1.xpose.msra.mxu0 0.0
    %2432 = vmatprep.subr.mxu0 0.0
    %2433 = vmatpush1.xpose.msra.mxu0 0.0
    %2434 = vmatprep.subr.mxu0 0.0
    %2435 = vmatpush1.xpose.msra.mxu0 0.0
    %2436 = vmatprep.subr.mxu0 0.0
    %2437 = vmatpush1.xpose.msra.mxu0 0.0
    %2438 = vmatprep.subr.mxu0 0.0
    %2439 = vmatpush1.xpose.msra.mxu0 0.0
    %2440 = vmatprep.subr.mxu0 0.0
    %2441 = vmatpush1.xpose.msra.mxu0 0.0
    %2442 = vmatprep.subr.mxu0 0.0
    %2443 = vmatpush1.xpose.msra.mxu0 0.0
    %2444 = vmatprep.subr.mxu0 0.0
    %2445 = vmatpush1.xpose.msra.mxu0 0.0
    %2446 = vmatprep.subr.mxu0 0.0
    %2447 = vmatpush1.xpose.msra.mxu0 0.0
    %2448 = vmatprep.subr.mxu0 0.0
    %2449 = vmatpush1.xpose.msra.mxu0 0.0
    %2450 = vmatprep.subr.mxu0 0.0
    %2451 = vmatpush1.xpose.msra.mxu0 0.0
    %2452 = vmatprep.subr.mxu0 0.0
    %2453 = vmatpush1.xpose.msra.mxu0 0.0
    %2454 = vmatprep.subr.mxu0 0.0
    %2455 = vmatpush1.xpose.msra.mxu0 0.0
    %2456 = vmatprep.subr.mxu0 0.0
    %2457 = vmatpush1.xpose.msra.mxu0 0.0
    %2458 = vmatprep.mubr.f32.mxu0 0.0
    %v2459 = vand.u32 %v2015, 4294901760
    %2460 = vmatmul.mubr.f32.gmra.mrb[0].mxu0 %v2459
    %v2461 = vpop.f32.mrb[0].mxu0
    %v2462 = vadd.f32 %v2390, %v2461
    %v2463 = vpop.f32.mrb[0].mxu0
    %2464 = vdwg.mxu0
    %2465 = vrot.lane.b32.xlu0 %v562, 80
    %v2466 = vpop.permute.xlu0 %2465
    %2467 = vrot.lane.b32.xlu0 %v562, 16
    %v2468 = vpop.permute.xlu0 %2467
    %v2469 = vsel %vm1106, %v2466, 0
    %v2471 = vsel %vm1106, %v2468, 0
    %2473 = vmatprep.subr.mxu0 0.0
    %v2474 = vand.u32 %v2471, 4294901760
    %2475 = vmatpush1.xpose.msra.mxu0 %v2474
    %2476 = vmatprep.subr.mxu0 0.0
    %2477 = vmatpush1.xpose.msra.mxu0 0.0
    %2478 = vmatprep.subr.mxu0 0.0
    %2479 = vmatpush1.xpose.msra.mxu0 0.0
    %2480 = vmatprep.subr.mxu0 0.0
    %2481 = vmatpush1.xpose.msra.mxu0 0.0
    %2482 = vmatprep.subr.mxu0 0.0
    %2483 = vmatpush1.xpose.msra.mxu0 0.0
    %2484 = vmatprep.subr.mxu0 0.0
    %2485 = vmatpush1.xpose.msra.mxu0 0.0
    %2486 = vmatprep.subr.mxu0 0.0
    %2487 = vmatpush1.xpose.msra.mxu0 0.0
    %2488 = vmatprep.subr.mxu0 0.0
    %2489 = vmatpush1.xpose.msra.mxu0 0.0
    %2490 = vmatprep.subr.mxu0 0.0
    %2491 = vmatpush1.xpose.msra.mxu0 0.0
    %2492 = vmatprep.subr.mxu0 0.0
    %2493 = vmatpush1.xpose.msra.mxu0 0.0
    %2494 = vmatprep.subr.mxu0 0.0
    %2495 = vmatpush1.xpose.msra.mxu0 0.0
    %2496 = vmatprep.subr.mxu0 0.0
    %2497 = vmatpush1.xpose.msra.mxu0 0.0
    %2498 = vmatprep.subr.mxu0 0.0
    %2499 = vmatpush1.xpose.msra.mxu0 0.0
    %2500 = vmatprep.subr.mxu0 0.0
    %2501 = vmatpush1.xpose.msra.mxu0 0.0
    %2502 = vmatprep.subr.mxu0 0.0
    %2503 = vmatpush1.xpose.msra.mxu0 0.0
    %2504 = vmatprep.subr.mxu0 0.0
    %2505 = vmatpush1.xpose.msra.mxu0 0.0
    %2506 = vmatprep.subr.mxu0 0.0
    %2507 = vmatpush1.xpose.msra.mxu0 0.0
    %2508 = vmatprep.subr.mxu0 0.0
    %2509 = vmatpush1.xpose.msra.mxu0 0.0
    %2510 = vmatprep.subr.mxu0 0.0
    %2511 = vmatpush1.xpose.msra.mxu0 0.0
    %2512 = vmatprep.subr.mxu0 0.0
    %2513 = vmatpush1.xpose.msra.mxu0 0.0
    %2514 = vmatprep.subr.mxu0 0.0
    %2515 = vmatpush1.xpose.msra.mxu0 0.0
    %2516 = vmatprep.subr.mxu0 0.0
    %2517 = vmatpush1.xpose.msra.mxu0 0.0
    %2518 = vmatprep.subr.mxu0 0.0
    %2519 = vmatpush1.xpose.msra.mxu0 0.0
    %2520 = vmatprep.subr.mxu0 0.0
    %2521 = vmatpush1.xpose.msra.mxu0 0.0
    %2522 = vmatprep.subr.mxu0 0.0
    %2523 = vmatpush1.xpose.msra.mxu0 0.0
    %2524 = vmatprep.subr.mxu0 0.0
    %2525 = vmatpush1.xpose.msra.mxu0 0.0
    %2526 = vmatprep.subr.mxu0 0.0
    %2527 = vmatpush1.xpose.msra.mxu0 0.0
    %2528 = vmatprep.subr.mxu0 0.0
    %2529 = vmatpush1.xpose.msra.mxu0 0.0
    %2530 = vmatprep.subr.mxu0 0.0
    %2531 = vmatpush1.xpose.msra.mxu0 0.0
    %2532 = vmatprep.subr.mxu0 0.0
    %2533 = vmatpush1.xpose.msra.mxu0 0.0
    %2534 = vmatprep.subr.mxu0 0.0
    %2535 = vmatpush1.xpose.msra.mxu0 0.0
    %2536 = vmatprep.subr.mxu0 0.0
    %2537 = vmatpush1.xpose.msra.mxu0 0.0
    %2538 = vmatprep.mubr.f32.mxu0 0.0
    %v2539 = vand.u32 %v2469, 4294901760
    %v2540 = vsub.f32 %v2469, %v2539
    %v2541 = vand.u32 %v2540, 4294901760
    %v2542 = vsub.f32 %v2540, %v2541
    %v2543 = vand.u32 %v2542, 4294901760
    %2544 = vmatmul.mubr.f32.gmra.mrb[0].mxu0 %v2543
    %v2545 = vpop.f32.mrb[0].mxu0
    %v2546 = vadd.f32 0.0, %v2545
    %v2547 = vpop.f32.mrb[0].mxu0
    %2548 = vdwg.mxu0
    %2549 = vmatprep.subr.mxu0 0.0
    %v2550 = vand.u32 %v2471, 4294901760
    %v2551 = vsub.f32 %v2471, %v2550
    %v2552 = vand.u32 %v2551, 4294901760
    %v2553 = vsub.f32 %v2551, %v2552
    %v2554 = vand.u32 %v2553, 4294901760
    %2555 = vmatpush1.xpose.msra.mxu0 %v2554
    %2556 = vmatprep.subr.mxu0 0.0
    %2557 = vmatpush1.xpose.msra.mxu0 0.0
    %2558 = vmatprep.subr.mxu0 0.0
    %2559 = vmatpush1.xpose.msra.mxu0 0.0
    %2560 = vmatprep.subr.mxu0 0.0
    %2561 = vmatpush1.xpose.msra.mxu0 0.0
    %2562 = vmatprep.subr.mxu0 0.0
    %2563 = vmatpush1.xpose.msra.mxu0 0.0
    %2564 = vmatprep.subr.mxu0 0.0
    %2565 = vmatpush1.xpose.msra.mxu0 0.0
    %2566 = vmatprep.subr.mxu0 0.0
    %2567 = vmatpush1.xpose.msra.mxu0 0.0
    %2568 = vmatprep.subr.mxu0 0.0
    %2569 = vmatpush1.xpose.msra.mxu0 0.0
    %2570 = vmatprep.subr.mxu0 0.0
    %2571 = vmatpush1.xpose.msra.mxu0 0.0
    %2572 = vmatprep.subr.mxu0 0.0
    %2573 = vmatpush1.xpose.msra.mxu0 0.0
    %2574 = vmatprep.subr.mxu0 0.0
    %2575 = vmatpush1.xpose.msra.mxu0 0.0
    %2576 = vmatprep.subr.mxu0 0.0
    %2577 = vmatpush1.xpose.msra.mxu0 0.0
    %2578 = vmatprep.subr.mxu0 0.0
    %2579 = vmatpush1.xpose.msra.mxu0 0.0
    %2580 = vmatprep.subr.mxu0 0.0
    %2581 = vmatpush1.xpose.msra.mxu0 0.0
    %2582 = vmatprep.subr.mxu0 0.0
    %2583 = vmatpush1.xpose.msra.mxu0 0.0
    %2584 = vmatprep.subr.mxu0 0.0
    %2585 = vmatpush1.xpose.msra.mxu0 0.0
    %2586 = vmatprep.subr.mxu0 0.0
    %2587 = vmatpush1.xpose.msra.mxu0 0.0
    %2588 = vmatprep.subr.mxu0 0.0
    %2589 = vmatpush1.xpose.msra.mxu0 0.0
    %2590 = vmatprep.subr.mxu0 0.0
    %2591 = vmatpush1.xpose.msra.mxu0 0.0
    %2592 = vmatprep.subr.mxu0 0.0
    %2593 = vmatpush1.xpose.msra.mxu0 0.0
    %2594 = vmatprep.subr.mxu0 0.0
    %2595 = vmatpush1.xpose.msra.mxu0 0.0
    %2596 = vmatprep.subr.mxu0 0.0
    %2597 = vmatpush1.xpose.msra.mxu0 0.0
    %2598 = vmatprep.subr.mxu0 0.0
    %2599 = vmatpush1.xpose.msra.mxu0 0.0
    %2600 = vmatprep.subr.mxu0 0.0
    %2601 = vmatpush1.xpose.msra.mxu0 0.0
    %2602 = vmatprep.subr.mxu0 0.0
    %2603 = vmatpush1.xpose.msra.mxu0 0.0
    %2604 = vmatprep.subr.mxu0 0.0
    %2605 = vmatpush1.xpose.msra.mxu0 0.0
    %2606 = vmatprep.subr.mxu0 0.0
    %2607 = vmatpush1.xpose.msra.mxu0 0.0
    %2608 = vmatprep.subr.mxu0 0.0
    %2609 = vmatpush1.xpose.msra.mxu0 0.0
    %2610 = vmatprep.subr.mxu0 0.0
    %2611 = vmatpush1.xpose.msra.mxu0 0.0
    %2612 = vmatprep.subr.mxu0 0.0
    %2613 = vmatpush1.xpose.msra.mxu0 0.0
    %2614 = vmatprep.subr.mxu0 0.0
    %2615 = vmatpush1.xpose.msra.mxu0 0.0
    %2616 = vmatprep.subr.mxu0 0.0
    %2617 = vmatpush1.xpose.msra.mxu0 0.0
    %2618 = vmatprep.mubr.f32.mxu0 0.0
    %v2619 = vand.u32 %v2469, 4294901760
    %2620 = vmatmul.mubr.f32.gmra.mrb[0].mxu0 %v2619
    %v2621 = vpop.f32.mrb[0].mxu0
    %v2622 = vadd.f32 %v2546, %v2621
    %v2623 = vpop.f32.mrb[0].mxu0
    %2624 = vdwg.mxu0
    %2625 = vmatprep.subr.mxu0 0.0
    %v2626 = vand.u32 %v2471, 4294901760
    %v2627 = vsub.f32 %v2471, %v2626
    %2628 = vmatpush1.xpose.msra.mxu0 %v2627
    %2629 = vmatprep.subr.mxu0 0.0
    %2630 = vmatpush1.xpose.msra.mxu0 0.0
    %2631 = vmatprep.subr.mxu0 0.0
    %2632 = vmatpush1.xpose.msra.mxu0 0.0
    %2633 = vmatprep.subr.mxu0 0.0
    %2634 = vmatpush1.xpose.msra.mxu0 0.0
    %2635 = vmatprep.subr.mxu0 0.0
    %2636 = vmatpush1.xpose.msra.mxu0 0.0
    %2637 = vmatprep.subr.mxu0 0.0
    %2638 = vmatpush1.xpose.msra.mxu0 0.0
    %2639 = vmatprep.subr.mxu0 0.0
    %2640 = vmatpush1.xpose.msra.mxu0 0.0
    %2641 = vmatprep.subr.mxu0 0.0
    %2642 = vmatpush1.xpose.msra.mxu0 0.0
    %2643 = vmatprep.subr.mxu0 0.0
    %2644 = vmatpush1.xpose.msra.mxu0 0.0
    %2645 = vmatprep.subr.mxu0 0.0
    %2646 = vmatpush1.xpose.msra.mxu0 0.0
    %2647 = vmatprep.subr.mxu0 0.0
    %2648 = vmatpush1.xpose.msra.mxu0 0.0
    %2649 = vmatprep.subr.mxu0 0.0
    %2650 = vmatpush1.xpose.msra.mxu0 0.0
    %2651 = vmatprep.subr.mxu0 0.0
    %2652 = vmatpush1.xpose.msra.mxu0 0.0
    %2653 = vmatprep.subr.mxu0 0.0
    %2654 = vmatpush1.xpose.msra.mxu0 0.0
    %2655 = vmatprep.subr.mxu0 0.0
    %2656 = vmatpush1.xpose.msra.mxu0 0.0
    %2657 = vmatprep.subr.mxu0 0.0
    %2658 = vmatpush1.xpose.msra.mxu0 0.0
    %2659 = vmatprep.subr.mxu0 0.0
    %2660 = vmatpush1.xpose.msra.mxu0 0.0
    %2661 = vmatprep.subr.mxu0 0.0
    %2662 = vmatpush1.xpose.msra.mxu0 0.0
    %2663 = vmatprep.subr.mxu0 0.0
    %2664 = vmatpush1.xpose.msra.mxu0 0.0
    %2665 = vmatprep.subr.mxu0 0.0
    %2666 = vmatpush1.xpose.msra.mxu0 0.0
    %2667 = vmatprep.subr.mxu0 0.0
    %2668 = vmatpush1.xpose.msra.mxu0 0.0
    %2669 = vmatprep.subr.mxu0 0.0
    %2670 = vmatpush1.xpose.msra.mxu0 0.0
    %2671 = vmatprep.subr.mxu0 0.0
    %2672 = vmatpush1.xpose.msra.mxu0 0.0
    %2673 = vmatprep.subr.mxu0 0.0
    %2674 = vmatpush1.xpose.msra.mxu0 0.0
    %2675 = vmatprep.subr.mxu0 0.0
    %2676 = vmatpush1.xpose.msra.mxu0 0.0
    %2677 = vmatprep.subr.mxu0 0.0
    %2678 = vmatpush1.xpose.msra.mxu0 0.0
    %2679 = vmatprep.subr.mxu0 0.0
    %2680 = vmatpush1.xpose.msra.mxu0 0.0
    %2681 = vmatprep.subr.mxu0 0.0
    %2682 = vmatpush1.xpose.msra.mxu0 0.0
    %2683 = vmatprep.subr.mxu0 0.0
    %2684 = vmatpush1.xpose.msra.mxu0 0.0
    %2685 = vmatprep.subr.mxu0 0.0
    %2686 = vmatpush1.xpose.msra.mxu0 0.0
    %2687 = vmatprep.subr.mxu0 0.0
    %2688 = vmatpush1.xpose.msra.mxu0 0.0
    %2689 = vmatprep.subr.mxu0 0.0
    %2690 = vmatpush1.xpose.msra.mxu0 0.0
    %2691 = vmatprep.mubr.f32.mxu0 0.0
    %v2692 = vand.u32 %v2469, 4294901760
    %v2693 = vsub.f32 %v2469, %v2692
    %2694 = vmatmul.mubr.f32.gmra.mrb[0].mxu0 %v2693
    %v2695 = vpop.f32.mrb[0].mxu0
    %v2696 = vadd.f32 %v2622, %v2695
    %v2697 = vpop.f32.mrb[0].mxu0
    %2698 = vdwg.mxu0
    %2699 = vmatprep.subr.mxu0 0.0
    %v2700 = vand.u32 %v2471, 4294901760
    %2701 = vmatpush1.xpose.msra.mxu0 %v2700
    %2702 = vmatprep.subr.mxu0 0.0
    %2703 = vmatpush1.xpose.msra.mxu0 0.0
    %2704 = vmatprep.subr.mxu0 0.0
    %2705 = vmatpush1.xpose.msra.mxu0 0.0
    %2706 = vmatprep.subr.mxu0 0.0
    %2707 = vmatpush1.xpose.msra.mxu0 0.0
    %2708 = vmatprep.subr.mxu0 0.0
    %2709 = vmatpush1.xpose.msra.mxu0 0.0
    %2710 = vmatprep.subr.mxu0 0.0
    %2711 = vmatpush1.xpose.msra.mxu0 0.0
    %2712 = vmatprep.subr.mxu0 0.0
    %2713 = vmatpush1.xpose.msra.mxu0 0.0
    %2714 = vmatprep.subr.mxu0 0.0
    %2715 = vmatpush1.xpose.msra.mxu0 0.0
    %2716 = vmatprep.subr.mxu0 0.0
    %2717 = vmatpush1.xpose.msra.mxu0 0.0
    %2718 = vmatprep.subr.mxu0 0.0
    %2719 = vmatpush1.xpose.msra.mxu0 0.0
    %2720 = vmatprep.subr.mxu0 0.0
    %2721 = vmatpush1.xpose.msra.mxu0 0.0
    %2722 = vmatprep.subr.mxu0 0.0
    %2723 = vmatpush1.xpose.msra.mxu0 0.0
    %2724 = vmatprep.subr.mxu0 0.0
    %2725 = vmatpush1.xpose.msra.mxu0 0.0
    %2726 = vmatprep.subr.mxu0 0.0
    %2727 = vmatpush1.xpose.msra.mxu0 0.0
    %2728 = vmatprep.subr.mxu0 0.0
    %2729 = vmatpush1.xpose.msra.mxu0 0.0
    %2730 = vmatprep.subr.mxu0 0.0
    %2731 = vmatpush1.xpose.msra.mxu0 0.0
    %2732 = vmatprep.subr.mxu0 0.0
    %2733 = vmatpush1.xpose.msra.mxu0 0.0
    %2734 = vmatprep.subr.mxu0 0.0
    %2735 = vmatpush1.xpose.msra.mxu0 0.0
    %2736 = vmatprep.subr.mxu0 0.0
    %2737 = vmatpush1.xpose.msra.mxu0 0.0
    %2738 = vmatprep.subr.mxu0 0.0
    %2739 = vmatpush1.xpose.msra.mxu0 0.0
    %2740 = vmatprep.subr.mxu0 0.0
    %2741 = vmatpush1.xpose.msra.mxu0 0.0
    %2742 = vmatprep.subr.mxu0 0.0
    %2743 = vmatpush1.xpose.msra.mxu0 0.0
    %2744 = vmatprep.subr.mxu0 0.0
    %2745 = vmatpush1.xpose.msra.mxu0 0.0
    %2746 = vmatprep.subr.mxu0 0.0
    %2747 = vmatpush1.xpose.msra.mxu0 0.0
    %2748 = vmatprep.subr.mxu0 0.0
    %2749 = vmatpush1.xpose.msra.mxu0 0.0
    %2750 = vmatprep.subr.mxu0 0.0
    %2751 = vmatpush1.xpose.msra.mxu0 0.0
    %2752 = vmatprep.subr.mxu0 0.0
    %2753 = vmatpush1.xpose.msra.mxu0 0.0
    %2754 = vmatprep.subr.mxu0 0.0
    %2755 = vmatpush1.xpose.msra.mxu0 0.0
    %2756 = vmatprep.subr.mxu0 0.0
    %2757 = vmatpush1.xpose.msra.mxu0 0.0
    %2758 = vmatprep.subr.mxu0 0.0
    %2759 = vmatpush1.xpose.msra.mxu0 0.0
    %2760 = vmatprep.subr.mxu0 0.0
    %2761 = vmatpush1.xpose.msra.mxu0 0.0
    %2762 = vmatprep.subr.mxu0 0.0
    %2763 = vmatpush1.xpose.msra.mxu0 0.0
    %2764 = vmatprep.mubr.f32.mxu0 0.0
    %v2765 = vand.u32 %v2469, 4294901760
    %v2766 = vsub.f32 %v2469, %v2765
    %v2767 = vand.u32 %v2766, 4294901760
    %2768 = vmatmul.mubr.f32.gmra.mrb[0].mxu0 %v2767
    %v2769 = vpop.f32.mrb[0].mxu0
    %v2770 = vadd.f32 %v2696, %v2769
    %v2771 = vpop.f32.mrb[0].mxu0
    %2772 = vdwg.mxu0
    %2773 = vmatprep.subr.mxu0 0.0
    %v2774 = vand.u32 %v2471, 4294901760
    %v2775 = vsub.f32 %v2471, %v2774
    %v2776 = vand.u32 %v2775, 4294901760
    %2777 = vmatpush1.xpose.msra.mxu0 %v2776
    %2778 = vmatprep.subr.mxu0 0.0
    %2779 = vmatpush1.xpose.msra.mxu0 0.0
    %2780 = vmatprep.subr.mxu0 0.0
    %2781 = vmatpush1.xpose.msra.mxu0 0.0
    %2782 = vmatprep.subr.mxu0 0.0
    %2783 = vmatpush1.xpose.msra.mxu0 0.0
    %2784 = vmatprep.subr.mxu0 0.0
    %2785 = vmatpush1.xpose.msra.mxu0 0.0
    %2786 = vmatprep.subr.mxu0 0.0
    %2787 = vmatpush1.xpose.msra.mxu0 0.0
    %2788 = vmatprep.subr.mxu0 0.0
    %2789 = vmatpush1.xpose.msra.mxu0 0.0
    %2790 = vmatprep.subr.mxu0 0.0
    %2791 = vmatpush1.xpose.msra.mxu0 0.0
    %2792 = vmatprep.subr.mxu0 0.0
    %2793 = vmatpush1.xpose.msra.mxu0 0.0
    %2794 = vmatprep.subr.mxu0 0.0
    %2795 = vmatpush1.xpose.msra.mxu0 0.0
    %2796 = vmatprep.subr.mxu0 0.0
    %2797 = vmatpush1.xpose.msra.mxu0 0.0
    %2798 = vmatprep.subr.mxu0 0.0
    %2799 = vmatpush1.xpose.msra.mxu0 0.0
    %2800 = vmatprep.subr.mxu0 0.0
    %2801 = vmatpush1.xpose.msra.mxu0 0.0
    %2802 = vmatprep.subr.mxu0 0.0
    %2803 = vmatpush1.xpose.msra.mxu0 0.0
    %2804 = vmatprep.subr.mxu0 0.0
    %2805 = vmatpush1.xpose.msra.mxu0 0.0
    %2806 = vmatprep.subr.mxu0 0.0
    %2807 = vmatpush1.xpose.msra.mxu0 0.0
    %2808 = vmatprep.subr.mxu0 0.0
    %2809 = vmatpush1.xpose.msra.mxu0 0.0
    %2810 = vmatprep.subr.mxu0 0.0
    %2811 = vmatpush1.xpose.msra.mxu0 0.0
    %2812 = vmatprep.subr.mxu0 0.0
    %2813 = vmatpush1.xpose.msra.mxu0 0.0
    %2814 = vmatprep.subr.mxu0 0.0
    %2815 = vmatpush1.xpose.msra.mxu0 0.0
    %2816 = vmatprep.subr.mxu0 0.0
    %2817 = vmatpush1.xpose.msra.mxu0 0.0
    %2818 = vmatprep.subr.mxu0 0.0
    %2819 = vmatpush1.xpose.msra.mxu0 0.0
    %2820 = vmatprep.subr.mxu0 0.0
    %2821 = vmatpush1.xpose.msra.mxu0 0.0
    %2822 = vmatprep.subr.mxu0 0.0
    %2823 = vmatpush1.xpose.msra.mxu0 0.0
    %2824 = vmatprep.subr.mxu0 0.0
    %2825 = vmatpush1.xpose.msra.mxu0 0.0
    %2826 = vmatprep.subr.mxu0 0.0
    %2827 = vmatpush1.xpose.msra.mxu0 0.0
    %2828 = vmatprep.subr.mxu0 0.0
    %2829 = vmatpush1.xpose.msra.mxu0 0.0
    %2830 = vmatprep.subr.mxu0 0.0
    %2831 = vmatpush1.xpose.msra.mxu0 0.0
    %2832 = vmatprep.subr.mxu0 0.0
    %2833 = vmatpush1.xpose.msra.mxu0 0.0
    %2834 = vmatprep.subr.mxu0 0.0
    %2835 = vmatpush1.xpose.msra.mxu0 0.0
    %2836 = vmatprep.subr.mxu0 0.0
    %2837 = vmatpush1.xpose.msra.mxu0 0.0
    %2838 = vmatprep.subr.mxu0 0.0
    %2839 = vmatpush1.xpose.msra.mxu0 0.0
    %2840 = vmatprep.mubr.f32.mxu0 0.0
    %v2841 = vand.u32 %v2469, 4294901760
    %2842 = vmatmul.mubr.f32.gmra.mrb[0].mxu0 %v2841
    %v2843 = vpop.f32.mrb[0].mxu0
    %v2844 = vadd.f32 %v2770, %v2843
    %v2845 = vpop.f32.mrb[0].mxu0
    %2846 = vdwg.mxu0
    %2847 = vmatprep.subr.mxu0 0.0
    %v2848 = vand.u32 %v2471, 4294901760
    %2849 = vmatpush1.xpose.msra.mxu0 %v2848
    %2850 = vmatprep.subr.mxu0 0.0
    %2851 = vmatpush1.xpose.msra.mxu0 0.0
    %2852 = vmatprep.subr.mxu0 0.0
    %2853 = vmatpush1.xpose.msra.mxu0 0.0
    %2854 = vmatprep.subr.mxu0 0.0
    %2855 = vmatpush1.xpose.msra.mxu0 0.0
    %2856 = vmatprep.subr.mxu0 0.0
    %2857 = vmatpush1.xpose.msra.mxu0 0.0
    %2858 = vmatprep.subr.mxu0 0.0
    %2859 = vmatpush1.xpose.msra.mxu0 0.0
    %2860 = vmatprep.subr.mxu0 0.0
    %2861 = vmatpush1.xpose.msra.mxu0 0.0
    %2862 = vmatprep.subr.mxu0 0.0
    %2863 = vmatpush1.xpose.msra.mxu0 0.0
    %2864 = vmatprep.subr.mxu0 0.0
    %2865 = vmatpush1.xpose.msra.mxu0 0.0
    %2866 = vmatprep.subr.mxu0 0.0
    %2867 = vmatpush1.xpose.msra.mxu0 0.0
    %2868 = vmatprep.subr.mxu0 0.0
    %2869 = vmatpush1.xpose.msra.mxu0 0.0
    %2870 = vmatprep.subr.mxu0 0.0
    %2871 = vmatpush1.xpose.msra.mxu0 0.0
    %2872 = vmatprep.subr.mxu0 0.0
    %2873 = vmatpush1.xpose.msra.mxu0 0.0
    %2874 = vmatprep.subr.mxu0 0.0
    %2875 = vmatpush1.xpose.msra.mxu0 0.0
    %2876 = vmatprep.subr.mxu0 0.0
    %2877 = vmatpush1.xpose.msra.mxu0 0.0
    %2878 = vmatprep.subr.mxu0 0.0
    %2879 = vmatpush1.xpose.msra.mxu0 0.0
    %2880 = vmatprep.subr.mxu0 0.0
    %2881 = vmatpush1.xpose.msra.mxu0 0.0
    %2882 = vmatprep.subr.mxu0 0.0
    %2883 = vmatpush1.xpose.msra.mxu0 0.0
    %2884 = vmatprep.subr.mxu0 0.0
    %2885 = vmatpush1.xpose.msra.mxu0 0.0
    %2886 = vmatprep.subr.mxu0 0.0
    %2887 = vmatpush1.xpose.msra.mxu0 0.0
    %2888 = vmatprep.subr.mxu0 0.0
    %2889 = vmatpush1.xpose.msra.mxu0 0.0
    %2890 = vmatprep.subr.mxu0 0.0
    %2891 = vmatpush1.xpose.msra.mxu0 0.0
    %2892 = vmatprep.subr.mxu0 0.0
    %2893 = vmatpush1.xpose.msra.mxu0 0.0
    %2894 = vmatprep.subr.mxu0 0.0
    %2895 = vmatpush1.xpose.msra.mxu0 0.0
    %2896 = vmatprep.subr.mxu0 0.0
    %2897 = vmatpush1.xpose.msra.mxu0 0.0
    %2898 = vmatprep.subr.mxu0 0.0
    %2899 = vmatpush1.xpose.msra.mxu0 0.0
    %2900 = vmatprep.subr.mxu0 0.0
    %2901 = vmatpush1.xpose.msra.mxu0 0.0
    %2902 = vmatprep.subr.mxu0 0.0
    %2903 = vmatpush1.xpose.msra.mxu0 0.0
    %2904 = vmatprep.subr.mxu0 0.0
    %2905 = vmatpush1.xpose.msra.mxu0 0.0
    %2906 = vmatprep.subr.mxu0 0.0
    %2907 = vmatpush1.xpose.msra.mxu0 0.0
    %2908 = vmatprep.subr.mxu0 0.0
    %2909 = vmatpush1.xpose.msra.mxu0 0.0
    %2910 = vmatprep.subr.mxu0 0.0
    %2911 = vmatpush1.xpose.msra.mxu0 0.0
    %2912 = vmatprep.mubr.f32.mxu0 0.0
    %v2913 = vand.u32 %v2469, 4294901760
    %2914 = vmatmul.mubr.f32.gmra.mrb[0].mxu0 %v2913
    %v2915 = vpop.f32.mrb[0].mxu0
    %v2916 = vadd.f32 %v2844, %v2915
    %v2917 = vpop.f32.mrb[0].mxu0
    %2918 = vdwg.mxu0
    %2920 = vrot.lane.b32.xlu0 %v568, 64
    %v2921 = vpop.permute.xlu0 %2920
    %v2922 = vsel %vm1106, %v568, 0
    %v2924 = vsel %vm1106, %v2921, 0
    %2926 = vmatprep.subr.mxu0 0.0
    %v2927 = vand.u32 %v2924, 4294901760
    %2928 = vmatpush1.xpose.msra.mxu0 %v2927
    %2929 = vmatprep.subr.mxu0 0.0
    %2930 = vmatpush1.xpose.msra.mxu0 0.0
    %2931 = vmatprep.subr.mxu0 0.0
    %2932 = vmatpush1.xpose.msra.mxu0 0.0
    %2933 = vmatprep.subr.mxu0 0.0
    %2934 = vmatpush1.xpose.msra.mxu0 0.0
    %2935 = vmatprep.subr.mxu0 0.0
    %2936 = vmatpush1.xpose.msra.mxu0 0.0
    %2937 = vmatprep.subr.mxu0 0.0
    %2938 = vmatpush1.xpose.msra.mxu0 0.0
    %2939 = vmatprep.subr.mxu0 0.0
    %2940 = vmatpush1.xpose.msra.mxu0 0.0
    %2941 = vmatprep.subr.mxu0 0.0
    %2942 = vmatpush1.xpose.msra.mxu0 0.0
    %2943 = vmatprep.subr.mxu0 0.0
    %2944 = vmatpush1.xpose.msra.mxu0 0.0
    %2945 = vmatprep.subr.mxu0 0.0
    %2946 = vmatpush1.xpose.msra.mxu0 0.0
    %2947 = vmatprep.subr.mxu0 0.0
    %2948 = vmatpush1.xpose.msra.mxu0 0.0
    %2949 = vmatprep.subr.mxu0 0.0
    %2950 = vmatpush1.xpose.msra.mxu0 0.0
    %2951 = vmatprep.subr.mxu0 0.0
    %2952 = vmatpush1.xpose.msra.mxu0 0.0
    %2953 = vmatprep.subr.mxu0 0.0
    %2954 = vmatpush1.xpose.msra.mxu0 0.0
    %2955 = vmatprep.subr.mxu0 0.0
    %2956 = vmatpush1.xpose.msra.mxu0 0.0
    %2957 = vmatprep.subr.mxu0 0.0
    %2958 = vmatpush1.xpose.msra.mxu0 0.0
    %2959 = vmatprep.subr.mxu0 0.0
    %2960 = vmatpush1.xpose.msra.mxu0 0.0
    %2961 = vmatprep.subr.mxu0 0.0
    %2962 = vmatpush1.xpose.msra.mxu0 0.0
    %2963 = vmatprep.subr.mxu0 0.0
    %2964 = vmatpush1.xpose.msra.mxu0 0.0
    %2965 = vmatprep.subr.mxu0 0.0
    %2966 = vmatpush1.xpose.msra.mxu0 0.0
    %2967 = vmatprep.subr.mxu0 0.0
    %2968 = vmatpush1.xpose.msra.mxu0 0.0
    %2969 = vmatprep.subr.mxu0 0.0
    %2970 = vmatpush1.xpose.msra.mxu0 0.0
    %2971 = vmatprep.subr.mxu0 0.0
    %2972 = vmatpush1.xpose.msra.mxu0 0.0
    %2973 = vmatprep.subr.mxu0 0.0
    %2974 = vmatpush1.xpose.msra.mxu0 0.0
    %2975 = vmatprep.subr.mxu0 0.0
    %2976 = vmatpush1.xpose.msra.mxu0 0.0
    %2977 = vmatprep.subr.mxu0 0.0
    %2978 = vmatpush1.xpose.msra.mxu0 0.0
    %2979 = vmatprep.subr.mxu0 0.0
    %2980 = vmatpush1.xpose.msra.mxu0 0.0
    %2981 = vmatprep.subr.mxu0 0.0
    %2982 = vmatpush1.xpose.msra.mxu0 0.0
    %2983 = vmatprep.subr.mxu0 0.0
    %2984 = vmatpush1.xpose.msra.mxu0 0.0
    %2985 = vmatprep.subr.mxu0 0.0
    %2986 = vmatpush1.xpose.msra.mxu0 0.0
    %2987 = vmatprep.subr.mxu0 0.0
    %2988 = vmatpush1.xpose.msra.mxu0 0.0
    %2989 = vmatprep.subr.mxu0 0.0
    %2990 = vmatpush1.xpose.msra.mxu0 0.0
    %2991 = vmatprep.mubr.f32.mxu0 0.0
    %v2992 = vand.u32 %v2922, 4294901760
    %v2993 = vsub.f32 %v2922, %v2992
    %v2994 = vand.u32 %v2993, 4294901760
    %v2995 = vsub.f32 %v2993, %v2994
    %v2996 = vand.u32 %v2995, 4294901760
    %2997 = vmatmul.mubr.f32.gmra.mrb[0].mxu0 %v2996
    %v2998 = vpop.f32.mrb[0].mxu0
    %v2999 = vadd.f32 0.0, %v2998
    %v3000 = vpop.f32.mrb[0].mxu0
    %3001 = vdwg.mxu0
    %3002 = vmatprep.subr.mxu0 0.0
    %v3003 = vand.u32 %v2924, 4294901760
    %v3004 = vsub.f32 %v2924, %v3003
    %v3005 = vand.u32 %v3004, 4294901760
    %v3006 = vsub.f32 %v3004, %v3005
    %v3007 = vand.u32 %v3006, 4294901760
    %3008 = vmatpush1.xpose.msra.mxu0 %v3007
    %3009 = vmatprep.subr.mxu0 0.0
    %3010 = vmatpush1.xpose.msra.mxu0 0.0
    %3011 = vmatprep.subr.mxu0 0.0
    %3012 = vmatpush1.xpose.msra.mxu0 0.0
    %3013 = vmatprep.subr.mxu0 0.0
    %3014 = vmatpush1.xpose.msra.mxu0 0.0
    %3015 = vmatprep.subr.mxu0 0.0
    %3016 = vmatpush1.xpose.msra.mxu0 0.0
    %3017 = vmatprep.subr.mxu0 0.0
    %3018 = vmatpush1.xpose.msra.mxu0 0.0
    %3019 = vmatprep.subr.mxu0 0.0
    %3020 = vmatpush1.xpose.msra.mxu0 0.0
    %3021 = vmatprep.subr.mxu0 0.0
    %3022 = vmatpush1.xpose.msra.mxu0 0.0
    %3023 = vmatprep.subr.mxu0 0.0
    %3024 = vmatpush1.xpose.msra.mxu0 0.0
    %3025 = vmatprep.subr.mxu0 0.0
    %3026 = vmatpush1.xpose.msra.mxu0 0.0
    %3027 = vmatprep.subr.mxu0 0.0
    %3028 = vmatpush1.xpose.msra.mxu0 0.0
    %3029 = vmatprep.subr.mxu0 0.0
    %3030 = vmatpush1.xpose.msra.mxu0 0.0
    %3031 = vmatprep.subr.mxu0 0.0
    %3032 = vmatpush1.xpose.msra.mxu0 0.0
    %3033 = vmatprep.subr.mxu0 0.0
    %3034 = vmatpush1.xpose.msra.mxu0 0.0
    %3035 = vmatprep.subr.mxu0 0.0
    %3036 = vmatpush1.xpose.msra.mxu0 0.0
    %3037 = vmatprep.subr.mxu0 0.0
    %3038 = vmatpush1.xpose.msra.mxu0 0.0
    %3039 = vmatprep.subr.mxu0 0.0
    %3040 = vmatpush1.xpose.msra.mxu0 0.0
    %3041 = vmatprep.subr.mxu0 0.0
    %3042 = vmatpush1.xpose.msra.mxu0 0.0
    %3043 = vmatprep.subr.mxu0 0.0
    %3044 = vmatpush1.xpose.msra.mxu0 0.0
    %3045 = vmatprep.subr.mxu0 0.0
    %3046 = vmatpush1.xpose.msra.mxu0 0.0
    %3047 = vmatprep.subr.mxu0 0.0
    %3048 = vmatpush1.xpose.msra.mxu0 0.0
    %3049 = vmatprep.subr.mxu0 0.0
    %3050 = vmatpush1.xpose.msra.mxu0 0.0
    %3051 = vmatprep.subr.mxu0 0.0
    %3052 = vmatpush1.xpose.msra.mxu0 0.0
    %3053 = vmatprep.subr.mxu0 0.0
    %3054 = vmatpush1.xpose.msra.mxu0 0.0
    %3055 = vmatprep.subr.mxu0 0.0
    %3056 = vmatpush1.xpose.msra.mxu0 0.0
    %3057 = vmatprep.subr.mxu0 0.0
    %3058 = vmatpush1.xpose.msra.mxu0 0.0
    %3059 = vmatprep.subr.mxu0 0.0
    %3060 = vmatpush1.xpose.msra.mxu0 0.0
    %3061 = vmatprep.subr.mxu0 0.0
    %3062 = vmatpush1.xpose.msra.mxu0 0.0
    %3063 = vmatprep.subr.mxu0 0.0
    %3064 = vmatpush1.xpose.msra.mxu0 0.0
    %3065 = vmatprep.subr.mxu0 0.0
    %3066 = vmatpush1.xpose.msra.mxu0 0.0
    %3067 = vmatprep.subr.mxu0 0.0
    %3068 = vmatpush1.xpose.msra.mxu0 0.0
    %3069 = vmatprep.subr.mxu0 0.0
    %3070 = vmatpush1.xpose.msra.mxu0 0.0
    %3071 = vmatprep.mubr.f32.mxu0 0.0
    %v3072 = vand.u32 %v2922, 4294901760
    %3073 = vmatmul.mubr.f32.gmra.mrb[0].mxu0 %v3072
    %v3074 = vpop.f32.mrb[0].mxu0
    %v3075 = vadd.f32 %v2999, %v3074
    %v3076 = vpop.f32.mrb[0].mxu0
    %3077 = vdwg.mxu0
    %3078 = vmatprep.subr.mxu0 0.0
    %v3079 = vand.u32 %v2924, 4294901760
    %v3080 = vsub.f32 %v2924, %v3079
    %3081 = vmatpush1.xpose.msra.mxu0 %v3080
    %3082 = vmatprep.subr.mxu0 0.0
    %3083 = vmatpush1.xpose.msra.mxu0 0.0
    %3084 = vmatprep.subr.mxu0 0.0
    %3085 = vmatpush1.xpose.msra.mxu0 0.0
    %3086 = vmatprep.subr.mxu0 0.0
    %3087 = vmatpush1.xpose.msra.mxu0 0.0
    %3088 = vmatprep.subr.mxu0 0.0
    %3089 = vmatpush1.xpose.msra.mxu0 0.0
    %3090 = vmatprep.subr.mxu0 0.0
    %3091 = vmatpush1.xpose.msra.mxu0 0.0
    %3092 = vmatprep.subr.mxu0 0.0
    %3093 = vmatpush1.xpose.msra.mxu0 0.0
    %3094 = vmatprep.subr.mxu0 0.0
    %3095 = vmatpush1.xpose.msra.mxu0 0.0
    %3096 = vmatprep.subr.mxu0 0.0
    %3097 = vmatpush1.xpose.msra.mxu0 0.0
    %3098 = vmatprep.subr.mxu0 0.0
    %3099 = vmatpush1.xpose.msra.mxu0 0.0
    %3100 = vmatprep.subr.mxu0 0.0
    %3101 = vmatpush1.xpose.msra.mxu0 0.0
    %3102 = vmatprep.subr.mxu0 0.0
    %3103 = vmatpush1.xpose.msra.mxu0 0.0
    %3104 = vmatprep.subr.mxu0 0.0
    %3105 = vmatpush1.xpose.msra.mxu0 0.0
    %3106 = vmatprep.subr.mxu0 0.0
    %3107 = vmatpush1.xpose.msra.mxu0 0.0
    %3108 = vmatprep.subr.mxu0 0.0
    %3109 = vmatpush1.xpose.msra.mxu0 0.0
    %3110 = vmatprep.subr.mxu0 0.0
    %3111 = vmatpush1.xpose.msra.mxu0 0.0
    %3112 = vmatprep.subr.mxu0 0.0
    %3113 = vmatpush1.xpose.msra.mxu0 0.0
    %3114 = vmatprep.subr.mxu0 0.0
    %3115 = vmatpush1.xpose.msra.mxu0 0.0
    %3116 = vmatprep.subr.mxu0 0.0
    %3117 = vmatpush1.xpose.msra.mxu0 0.0
    %3118 = vmatprep.subr.mxu0 0.0
    %3119 = vmatpush1.xpose.msra.mxu0 0.0
    %3120 = vmatprep.subr.mxu0 0.0
    %3121 = vmatpush1.xpose.msra.mxu0 0.0
    %3122 = vmatprep.subr.mxu0 0.0
    %3123 = vmatpush1.xpose.msra.mxu0 0.0
    %3124 = vmatprep.subr.mxu0 0.0
    %3125 = vmatpush1.xpose.msra.mxu0 0.0
    %3126 = vmatprep.subr.mxu0 0.0
    %3127 = vmatpush1.xpose.msra.mxu0 0.0
    %3128 = vmatprep.subr.mxu0 0.0
    %3129 = vmatpush1.xpose.msra.mxu0 0.0
    %3130 = vmatprep.subr.mxu0 0.0
    %3131 = vmatpush1.xpose.msra.mxu0 0.0
    %3132 = vmatprep.subr.mxu0 0.0
    %3133 = vmatpush1.xpose.msra.mxu0 0.0
    %3134 = vmatprep.subr.mxu0 0.0
    %3135 = vmatpush1.xpose.msra.mxu0 0.0
    %3136 = vmatprep.subr.mxu0 0.0
    %3137 = vmatpush1.xpose.msra.mxu0 0.0
    %3138 = vmatprep.subr.mxu0 0.0
    %3139 = vmatpush1.xpose.msra.mxu0 0.0
    %3140 = vmatprep.subr.mxu0 0.0
    %3141 = vmatpush1.xpose.msra.mxu0 0.0
    %3142 = vmatprep.subr.mxu0 0.0
    %3143 = vmatpush1.xpose.msra.mxu0 0.0
    %3144 = vmatprep.mubr.f32.mxu0 0.0
    %v3145 = vand.u32 %v2922, 4294901760
    %v3146 = vsub.f32 %v2922, %v3145
    %3147 = vmatmul.mubr.f32.gmra.mrb[0].mxu0 %v3146
    %v3148 = vpop.f32.mrb[0].mxu0
    %v3149 = vadd.f32 %v3075, %v3148
    %v3150 = vpop.f32.mrb[0].mxu0
    %3151 = vdwg.mxu0
    %3152 = vmatprep.subr.mxu0 0.0
    %v3153 = vand.u32 %v2924, 4294901760
    %3154 = vmatpush1.xpose.msra.mxu0 %v3153
    %3155 = vmatprep.subr.mxu0 0.0
    %3156 = vmatpush1.xpose.msra.mxu0 0.0
    %3157 = vmatprep.subr.mxu0 0.0
    %3158 = vmatpush1.xpose.msra.mxu0 0.0
    %3159 = vmatprep.subr.mxu0 0.0
    %3160 = vmatpush1.xpose.msra.mxu0 0.0
    %3161 = vmatprep.subr.mxu0 0.0
    %3162 = vmatpush1.xpose.msra.mxu0 0.0
    %3163 = vmatprep.subr.mxu0 0.0
    %3164 = vmatpush1.xpose.msra.mxu0 0.0
    %3165 = vmatprep.subr.mxu0 0.0
    %3166 = vmatpush1.xpose.msra.mxu0 0.0
    %3167 = vmatprep.subr.mxu0 0.0
    %3168 = vmatpush1.xpose.msra.mxu0 0.0
    %3169 = vmatprep.subr.mxu0 0.0
    %3170 = vmatpush1.xpose.msra.mxu0 0.0
    %3171 = vmatprep.subr.mxu0 0.0
    %3172 = vmatpush1.xpose.msra.mxu0 0.0
    %3173 = vmatprep.subr.mxu0 0.0
    %3174 = vmatpush1.xpose.msra.mxu0 0.0
    %3175 = vmatprep.subr.mxu0 0.0
    %3176 = vmatpush1.xpose.msra.mxu0 0.0
    %3177 = vmatprep.subr.mxu0 0.0
    %3178 = vmatpush1.xpose.msra.mxu0 0.0
    %3179 = vmatprep.subr.mxu0 0.0
    %3180 = vmatpush1.xpose.msra.mxu0 0.0
    %3181 = vmatprep.subr.mxu0 0.0
    %3182 = vmatpush1.xpose.msra.mxu0 0.0
    %3183 = vmatprep.subr.mxu0 0.0
    %3184 = vmatpush1.xpose.msra.mxu0 0.0
    %3185 = vmatprep.subr.mxu0 0.0
    %3186 = vmatpush1.xpose.msra.mxu0 0.0
    %3187 = vmatprep.subr.mxu0 0.0
    %3188 = vmatpush1.xpose.msra.mxu0 0.0
    %3189 = vmatprep.subr.mxu0 0.0
    %3190 = vmatpush1.xpose.msra.mxu0 0.0
    %3191 = vmatprep.subr.mxu0 0.0
    %3192 = vmatpush1.xpose.msra.mxu0 0.0
    %3193 = vmatprep.subr.mxu0 0.0
    %3194 = vmatpush1.xpose.msra.mxu0 0.0
    %3195 = vmatprep.subr.mxu0 0.0
    %3196 = vmatpush1.xpose.msra.mxu0 0.0
    %3197 = vmatprep.subr.mxu0 0.0
    %3198 = vmatpush1.xpose.msra.mxu0 0.0
    %3199 = vmatprep.subr.mxu0 0.0
    %3200 = vmatpush1.xpose.msra.mxu0 0.0
    %3201 = vmatprep.subr.mxu0 0.0
    %3202 = vmatpush1.xpose.msra.mxu0 0.0
    %3203 = vmatprep.subr.mxu0 0.0
    %3204 = vmatpush1.xpose.msra.mxu0 0.0
    %3205 = vmatprep.subr.mxu0 0.0
    %3206 = vmatpush1.xpose.msra.mxu0 0.0
    %3207 = vmatprep.subr.mxu0 0.0
    %3208 = vmatpush1.xpose.msra.mxu0 0.0
    %3209 = vmatprep.subr.mxu0 0.0
    %3210 = vmatpush1.xpose.msra.mxu0 0.0
    %3211 = vmatprep.subr.mxu0 0.0
    %3212 = vmatpush1.xpose.msra.mxu0 0.0
    %3213 = vmatprep.subr.mxu0 0.0
    %3214 = vmatpush1.xpose.msra.mxu0 0.0
    %3215 = vmatprep.subr.mxu0 0.0
    %3216 = vmatpush1.xpose.msra.mxu0 0.0
    %3217 = vmatprep.mubr.f32.mxu0 0.0
    %v3218 = vand.u32 %v2922, 4294901760
    %v3219 = vsub.f32 %v2922, %v3218
    %v3220 = vand.u32 %v3219, 4294901760
    %3221 = vmatmul.mubr.f32.gmra.mrb[0].mxu0 %v3220
    %v3222 = vpop.f32.mrb[0].mxu0
    %v3223 = vadd.f32 %v3149, %v3222
    %v3224 = vpop.f32.mrb[0].mxu0
    %3225 = vdwg.mxu0
    %3226 = vmatprep.subr.mxu0 0.0
    %v3227 = vand.u32 %v2924, 4294901760
    %v3228 = vsub.f32 %v2924, %v3227
    %v3229 = vand.u32 %v3228, 4294901760
    %3230 = vmatpush1.xpose.msra.mxu0 %v3229
    %3231 = vmatprep.subr.mxu0 0.0
    %3232 = vmatpush1.xpose.msra.mxu0 0.0
    %3233 = vmatprep.subr.mxu0 0.0
    %3234 = vmatpush1.xpose.msra.mxu0 0.0
    %3235 = vmatprep.subr.mxu0 0.0
    %3236 = vmatpush1.xpose.msra.mxu0 0.0
    %3237 = vmatprep.subr.mxu0 0.0
    %3238 = vmatpush1.xpose.msra.mxu0 0.0
    %3239 = vmatprep.subr.mxu0 0.0
    %3240 = vmatpush1.xpose.msra.mxu0 0.0
    %3241 = vmatprep.subr.mxu0 0.0
    %3242 = vmatpush1.xpose.msra.mxu0 0.0
    %3243 = vmatprep.subr.mxu0 0.0
    %3244 = vmatpush1.xpose.msra.mxu0 0.0
    %3245 = vmatprep.subr.mxu0 0.0
    %3246 = vmatpush1.xpose.msra.mxu0 0.0
    %3247 = vmatprep.subr.mxu0 0.0
    %3248 = vmatpush1.xpose.msra.mxu0 0.0
    %3249 = vmatprep.subr.mxu0 0.0
    %3250 = vmatpush1.xpose.msra.mxu0 0.0
    %3251 = vmatprep.subr.mxu0 0.0
    %3252 = vmatpush1.xpose.msra.mxu0 0.0
    %3253 = vmatprep.subr.mxu0 0.0
    %3254 = vmatpush1.xpose.msra.mxu0 0.0
    %3255 = vmatprep.subr.mxu0 0.0
    %3256 = vmatpush1.xpose.msra.mxu0 0.0
    %3257 = vmatprep.subr.mxu0 0.0
    %3258 = vmatpush1.xpose.msra.mxu0 0.0
    %3259 = vmatprep.subr.mxu0 0.0
    %3260 = vmatpush1.xpose.msra.mxu0 0.0
    %3261 = vmatprep.subr.mxu0 0.0
    %3262 = vmatpush1.xpose.msra.mxu0 0.0
    %3263 = vmatprep.subr.mxu0 0.0
    %3264 = vmatpush1.xpose.msra.mxu0 0.0
    %3265 = vmatprep.subr.mxu0 0.0
    %3266 = vmatpush1.xpose.msra.mxu0 0.0
    %3267 = vmatprep.subr.mxu0 0.0
    %3268 = vmatpush1.xpose.msra.mxu0 0.0
    %3269 = vmatprep.subr.mxu0 0.0
    %3270 = vmatpush1.xpose.msra.mxu0 0.0
    %3271 = vmatprep.subr.mxu0 0.0
    %3272 = vmatpush1.xpose.msra.mxu0 0.0
    %3273 = vmatprep.subr.mxu0 0.0
    %3274 = vmatpush1.xpose.msra.mxu0 0.0
    %3275 = vmatprep.subr.mxu0 0.0
    %3276 = vmatpush1.xpose.msra.mxu0 0.0
    %3277 = vmatprep.subr.mxu0 0.0
    %3278 = vmatpush1.xpose.msra.mxu0 0.0
    %3279 = vmatprep.subr.mxu0 0.0
    %3280 = vmatpush1.xpose.msra.mxu0 0.0
    %3281 = vmatprep.subr.mxu0 0.0
    %3282 = vmatpush1.xpose.msra.mxu0 0.0
    %3283 = vmatprep.subr.mxu0 0.0
    %3284 = vmatpush1.xpose.msra.mxu0 0.0
    %3285 = vmatprep.subr.mxu0 0.0
    %3286 = vmatpush1.xpose.msra.mxu0 0.0
    %3287 = vmatprep.subr.mxu0 0.0
    %3288 = vmatpush1.xpose.msra.mxu0 0.0
    %3289 = vmatprep.subr.mxu0 0.0
    %3290 = vmatpush1.xpose.msra.mxu0 0.0
    %3291 = vmatprep.subr.mxu0 0.0
    %3292 = vmatpush1.xpose.msra.mxu0 0.0
    %3293 = vmatprep.mubr.f32.mxu0 0.0
    %v3294 = vand.u32 %v2922, 4294901760
    %3295 = vmatmul.mubr.f32.gmra.mrb[0].mxu0 %v3294
    %v3296 = vpop.f32.mrb[0].mxu0
    %v3297 = vadd.f32 %v3223, %v3296
    %v3298 = vpop.f32.mrb[0].mxu0
    %3299 = vdwg.mxu0
    %3300 = vmatprep.subr.mxu0 0.0
    %v3301 = vand.u32 %v2924, 4294901760
    %3302 = vmatpush1.xpose.msra.mxu0 %v3301
    %3303 = vmatprep.subr.mxu0 0.0
    %3304 = vmatpush1.xpose.msra.mxu0 0.0
    %3305 = vmatprep.subr.mxu0 0.0
    %3306 = vmatpush1.xpose.msra.mxu0 0.0
    %3307 = vmatprep.subr.mxu0 0.0
    %3308 = vmatpush1.xpose.msra.mxu0 0.0
    %3309 = vmatprep.subr.mxu0 0.0
    %3310 = vmatpush1.xpose.msra.mxu0 0.0
    %3311 = vmatprep.subr.mxu0 0.0
    %3312 = vmatpush1.xpose.msra.mxu0 0.0
    %3313 = vmatprep.subr.mxu0 0.0
    %3314 = vmatpush1.xpose.msra.mxu0 0.0
    %3315 = vmatprep.subr.mxu0 0.0
    %3316 = vmatpush1.xpose.msra.mxu0 0.0
    %3317 = vmatprep.subr.mxu0 0.0
    %3318 = vmatpush1.xpose.msra.mxu0 0.0
    %3319 = vmatprep.subr.mxu0 0.0
    %3320 = vmatpush1.xpose.msra.mxu0 0.0
    %3321 = vmatprep.subr.mxu0 0.0
    %3322 = vmatpush1.xpose.msra.mxu0 0.0
    %3323 = vmatprep.subr.mxu0 0.0
    %3324 = vmatpush1.xpose.msra.mxu0 0.0
    %3325 = vmatprep.subr.mxu0 0.0
    %3326 = vmatpush1.xpose.msra.mxu0 0.0
    %3327 = vmatprep.subr.mxu0 0.0
    %3328 = vmatpush1.xpose.msra.mxu0 0.0
    %3329 = vmatprep.subr.mxu0 0.0
    %3330 = vmatpush1.xpose.msra.mxu0 0.0
    %3331 = vmatprep.subr.mxu0 0.0
    %3332 = vmatpush1.xpose.msra.mxu0 0.0
    %3333 = vmatprep.subr.mxu0 0.0
    %3334 = vmatpush1.xpose.msra.mxu0 0.0
    %3335 = vmatprep.subr.mxu0 0.0
    %3336 = vmatpush1.xpose.msra.mxu0 0.0
    %3337 = vmatprep.subr.mxu0 0.0
    %3338 = vmatpush1.xpose.msra.mxu0 0.0
    %3339 = vmatprep.subr.mxu0 0.0
    %3340 = vmatpush1.xpose.msra.mxu0 0.0
    %3341 = vmatprep.subr.mxu0 0.0
    %3342 = vmatpush1.xpose.msra.mxu0 0.0
    %3343 = vmatprep.subr.mxu0 0.0
    %3344 = vmatpush1.xpose.msra.mxu0 0.0
    %3345 = vmatprep.subr.mxu0 0.0
    %3346 = vmatpush1.xpose.msra.mxu0 0.0
    %3347 = vmatprep.subr.mxu0 0.0
    %3348 = vmatpush1.xpose.msra.mxu0 0.0
    %3349 = vmatprep.subr.mxu0 0.0
    %3350 = vmatpush1.xpose.msra.mxu0 0.0
    %3351 = vmatprep.subr.mxu0 0.0
    %3352 = vmatpush1.xpose.msra.mxu0 0.0
    %3353 = vmatprep.subr.mxu0 0.0
    %3354 = vmatpush1.xpose.msra.mxu0 0.0
    %3355 = vmatprep.subr.mxu0 0.0
    %3356 = vmatpush1.xpose.msra.mxu0 0.0
    %3357 = vmatprep.subr.mxu0 0.0
    %3358 = vmatpush1.xpose.msra.mxu0 0.0
    %3359 = vmatprep.subr.mxu0 0.0
    %3360 = vmatpush1.xpose.msra.mxu0 0.0
    %3361 = vmatprep.subr.mxu0 0.0
    %3362 = vmatpush1.xpose.msra.mxu0 0.0
    %3363 = vmatprep.subr.mxu0 0.0
    %3364 = vmatpush1.xpose.msra.mxu0 0.0
    %3365 = vmatprep.mubr.f32.mxu0 0.0
    %v3366 = vand.u32 %v2922, 4294901760
    %3367 = vmatmul.mubr.f32.gmra.mrb[0].mxu0 %v3366
    %v3368 = vpop.f32.mrb[0].mxu0
    %v3369 = vadd.f32 %v3297, %v3368
    %v3370 = vpop.f32.mrb[0].mxu0
    %3371 = vdwg.mxu0
    %3372 = vrot.lane.b32.xlu0 %v568, 112
    %v3373 = vpop.permute.xlu0 %3372
    %3374 = vrot.lane.b32.xlu0 %v568, 48
    %v3375 = vpop.permute.xlu0 %3374
    %v3376 = vsel %vm1106, %v3373, 0
    %v3378 = vsel %vm1106, %v3375, 0
    %3380 = vmatprep.subr.mxu0 0.0
    %v3381 = vand.u32 %v3378, 4294901760
    %3382 = vmatpush1.xpose.msra.mxu0 %v3381
    %3383 = vmatprep.subr.mxu0 0.0
    %3384 = vmatpush1.xpose.msra.mxu0 0.0
    %3385 = vmatprep.subr.mxu0 0.0
    %3386 = vmatpush1.xpose.msra.mxu0 0.0
    %3387 = vmatprep.subr.mxu0 0.0
    %3388 = vmatpush1.xpose.msra.mxu0 0.0
    %3389 = vmatprep.subr.mxu0 0.0
    %3390 = vmatpush1.xpose.msra.mxu0 0.0
    %3391 = vmatprep.subr.mxu0 0.0
    %3392 = vmatpush1.xpose.msra.mxu0 0.0
    %3393 = vmatprep.subr.mxu0 0.0
    %3394 = vmatpush1.xpose.msra.mxu0 0.0
    %3395 = vmatprep.subr.mxu0 0.0
    %3396 = vmatpush1.xpose.msra.mxu0 0.0
    %3397 = vmatprep.subr.mxu0 0.0
    %3398 = vmatpush1.xpose.msra.mxu0 0.0
    %3399 = vmatprep.subr.mxu0 0.0
    %3400 = vmatpush1.xpose.msra.mxu0 0.0
    %3401 = vmatprep.subr.mxu0 0.0
    %3402 = vmatpush1.xpose.msra.mxu0 0.0
    %3403 = vmatprep.subr.mxu0 0.0
    %3404 = vmatpush1.xpose.msra.mxu0 0.0
    %3405 = vmatprep.subr.mxu0 0.0
    %3406 = vmatpush1.xpose.msra.mxu0 0.0
    %3407 = vmatprep.subr.mxu0 0.0
    %3408 = vmatpush1.xpose.msra.mxu0 0.0
    %3409 = vmatprep.subr.mxu0 0.0
    %3410 = vmatpush1.xpose.msra.mxu0 0.0
    %3411 = vmatprep.subr.mxu0 0.0
    %3412 = vmatpush1.xpose.msra.mxu0 0.0
    %3413 = vmatprep.subr.mxu0 0.0
    %3414 = vmatpush1.xpose.msra.mxu0 0.0
    %3415 = vmatprep.subr.mxu0 0.0
    %3416 = vmatpush1.xpose.msra.mxu0 0.0
    %3417 = vmatprep.subr.mxu0 0.0
    %3418 = vmatpush1.xpose.msra.mxu0 0.0
    %3419 = vmatprep.subr.mxu0 0.0
    %3420 = vmatpush1.xpose.msra.mxu0 0.0
    %3421 = vmatprep.subr.mxu0 0.0
    %3422 = vmatpush1.xpose.msra.mxu0 0.0
    %3423 = vmatprep.subr.mxu0 0.0
    %3424 = vmatpush1.xpose.msra.mxu0 0.0
    %3425 = vmatprep.subr.mxu0 0.0
    %3426 = vmatpush1.xpose.msra.mxu0 0.0
    %3427 = vmatprep.subr.mxu0 0.0
    %3428 = vmatpush1.xpose.msra.mxu0 0.0
    %3429 = vmatprep.subr.mxu0 0.0
    %3430 = vmatpush1.xpose.msra.mxu0 0.0
    %3431 = vmatprep.subr.mxu0 0.0
    %3432 = vmatpush1.xpose.msra.mxu0 0.0
    %3433 = vmatprep.subr.mxu0 0.0
    %3434 = vmatpush1.xpose.msra.mxu0 0.0
    %3435 = vmatprep.subr.mxu0 0.0
    %3436 = vmatpush1.xpose.msra.mxu0 0.0
    %3437 = vmatprep.subr.mxu0 0.0
    %3438 = vmatpush1.xpose.msra.mxu0 0.0
    %3439 = vmatprep.subr.mxu0 0.0
    %3440 = vmatpush1.xpose.msra.mxu0 0.0
    %3441 = vmatprep.subr.mxu0 0.0
    %3442 = vmatpush1.xpose.msra.mxu0 0.0
    %3443 = vmatprep.subr.mxu0 0.0
    %3444 = vmatpush1.xpose.msra.mxu0 0.0
    %3445 = vmatprep.mubr.f32.mxu0 0.0
    %v3446 = vand.u32 %v3376, 4294901760
    %v3447 = vsub.f32 %v3376, %v3446
    %v3448 = vand.u32 %v3447, 4294901760
    %v3449 = vsub.f32 %v3447, %v3448
    %v3450 = vand.u32 %v3449, 4294901760
    %3451 = vmatmul.mubr.f32.gmra.mrb[0].mxu0 %v3450
    %v3452 = vpop.f32.mrb[0].mxu0
    %v3453 = vadd.f32 0.0, %v3452
    %v3454 = vpop.f32.mrb[0].mxu0
    %3455 = vdwg.mxu0
    %3456 = vmatprep.subr.mxu0 0.0
    %v3457 = vand.u32 %v3378, 4294901760
    %v3458 = vsub.f32 %v3378, %v3457
    %v3459 = vand.u32 %v3458, 4294901760
    %v3460 = vsub.f32 %v3458, %v3459
    %v3461 = vand.u32 %v3460, 4294901760
    %3462 = vmatpush1.xpose.msra.mxu0 %v3461
    %3463 = vmatprep.subr.mxu0 0.0
    %3464 = vmatpush1.xpose.msra.mxu0 0.0
    %3465 = vmatprep.subr.mxu0 0.0
    %3466 = vmatpush1.xpose.msra.mxu0 0.0
    %3467 = vmatprep.subr.mxu0 0.0
    %3468 = vmatpush1.xpose.msra.mxu0 0.0
    %3469 = vmatprep.subr.mxu0 0.0
    %3470 = vmatpush1.xpose.msra.mxu0 0.0
    %3471 = vmatprep.subr.mxu0 0.0
    %3472 = vmatpush1.xpose.msra.mxu0 0.0
    %3473 = vmatprep.subr.mxu0 0.0
    %3474 = vmatpush1.xpose.msra.mxu0 0.0
    %3475 = vmatprep.subr.mxu0 0.0
    %3476 = vmatpush1.xpose.msra.mxu0 0.0
    %3477 = vmatprep.subr.mxu0 0.0
    %3478 = vmatpush1.xpose.msra.mxu0 0.0
    %3479 = vmatprep.subr.mxu0 0.0
    %3480 = vmatpush1.xpose.msra.mxu0 0.0
    %3481 = vmatprep.subr.mxu0 0.0
    %3482 = vmatpush1.xpose.msra.mxu0 0.0
    %3483 = vmatprep.subr.mxu0 0.0
    %3484 = vmatpush1.xpose.msra.mxu0 0.0
    %3485 = vmatprep.subr.mxu0 0.0
    %3486 = vmatpush1.xpose.msra.mxu0 0.0
    %3487 = vmatprep.subr.mxu0 0.0
    %3488 = vmatpush1.xpose.msra.mxu0 0.0
    %3489 = vmatprep.subr.mxu0 0.0
    %3490 = vmatpush1.xpose.msra.mxu0 0.0
    %3491 = vmatprep.subr.mxu0 0.0
    %3492 = vmatpush1.xpose.msra.mxu0 0.0
    %3493 = vmatprep.subr.mxu0 0.0
    %3494 = vmatpush1.xpose.msra.mxu0 0.0
    %3495 = vmatprep.subr.mxu0 0.0
    %3496 = vmatpush1.xpose.msra.mxu0 0.0
    %3497 = vmatprep.subr.mxu0 0.0
    %3498 = vmatpush1.xpose.msra.mxu0 0.0
    %3499 = vmatprep.subr.mxu0 0.0
    %3500 = vmatpush1.xpose.msra.mxu0 0.0
    %3501 = vmatprep.subr.mxu0 0.0
    %3502 = vmatpush1.xpose.msra.mxu0 0.0
    %3503 = vmatprep.subr.mxu0 0.0
    %3504 = vmatpush1.xpose.msra.mxu0 0.0
    %3505 = vmatprep.subr.mxu0 0.0
    %3506 = vmatpush1.xpose.msra.mxu0 0.0
    %3507 = vmatprep.subr.mxu0 0.0
    %3508 = vmatpush1.xpose.msra.mxu0 0.0
    %3509 = vmatprep.subr.mxu0 0.0
    %3510 = vmatpush1.xpose.msra.mxu0 0.0
    %3511 = vmatprep.subr.mxu0 0.0
    %3512 = vmatpush1.xpose.msra.mxu0 0.0
    %3513 = vmatprep.subr.mxu0 0.0
    %3514 = vmatpush1.xpose.msra.mxu0 0.0
    %3515 = vmatprep.subr.mxu0 0.0
    %3516 = vmatpush1.xpose.msra.mxu0 0.0
    %3517 = vmatprep.subr.mxu0 0.0
    %3518 = vmatpush1.xpose.msra.mxu0 0.0
    %3519 = vmatprep.subr.mxu0 0.0
    %3520 = vmatpush1.xpose.msra.mxu0 0.0
    %3521 = vmatprep.subr.mxu0 0.0
    %3522 = vmatpush1.xpose.msra.mxu0 0.0
    %3523 = vmatprep.subr.mxu0 0.0
    %3524 = vmatpush1.xpose.msra.mxu0 0.0
    %3525 = vmatprep.mubr.f32.mxu0 0.0
    %v3526 = vand.u32 %v3376, 4294901760
    %3527 = vmatmul.mubr.f32.gmra.mrb[0].mxu0 %v3526
    %v3528 = vpop.f32.mrb[0].mxu0
    %v3529 = vadd.f32 %v3453, %v3528
    %v3530 = vpop.f32.mrb[0].mxu0
    %3531 = vdwg.mxu0
    %3532 = vmatprep.subr.mxu0 0.0
    %v3533 = vand.u32 %v3378, 4294901760
    %v3534 = vsub.f32 %v3378, %v3533
    %3535 = vmatpush1.xpose.msra.mxu0 %v3534
    %3536 = vmatprep.subr.mxu0 0.0
    %3537 = vmatpush1.xpose.msra.mxu0 0.0
    %3538 = vmatprep.subr.mxu0 0.0
    %3539 = vmatpush1.xpose.msra.mxu0 0.0
    %3540 = vmatprep.subr.mxu0 0.0
    %3541 = vmatpush1.xpose.msra.mxu0 0.0
    %3542 = vmatprep.subr.mxu0 0.0
    %3543 = vmatpush1.xpose.msra.mxu0 0.0
    %3544 = vmatprep.subr.mxu0 0.0
    %3545 = vmatpush1.xpose.msra.mxu0 0.0
    %3546 = vmatprep.subr.mxu0 0.0
    %3547 = vmatpush1.xpose.msra.mxu0 0.0
    %3548 = vmatprep.subr.mxu0 0.0
    %3549 = vmatpush1.xpose.msra.mxu0 0.0
    %3550 = vmatprep.subr.mxu0 0.0
    %3551 = vmatpush1.xpose.msra.mxu0 0.0
    %3552 = vmatprep.subr.mxu0 0.0
    %3553 = vmatpush1.xpose.msra.mxu0 0.0
    %3554 = vmatprep.subr.mxu0 0.0
    %3555 = vmatpush1.xpose.msra.mxu0 0.0
    %3556 = vmatprep.subr.mxu0 0.0
    %3557 = vmatpush1.xpose.msra.mxu0 0.0
    %3558 = vmatprep.subr.mxu0 0.0
    %3559 = vmatpush1.xpose.msra.mxu0 0.0
    %3560 = vmatprep.subr.mxu0 0.0
    %3561 = vmatpush1.xpose.msra.mxu0 0.0
    %3562 = vmatprep.subr.mxu0 0.0
    %3563 = vmatpush1.xpose.msra.mxu0 0.0
    %3564 = vmatprep.subr.mxu0 0.0
    %3565 = vmatpush1.xpose.msra.mxu0 0.0
    %3566 = vmatprep.subr.mxu0 0.0
    %3567 = vmatpush1.xpose.msra.mxu0 0.0
    %3568 = vmatprep.subr.mxu0 0.0
    %3569 = vmatpush1.xpose.msra.mxu0 0.0
    %3570 = vmatprep.subr.mxu0 0.0
    %3571 = vmatpush1.xpose.msra.mxu0 0.0
    %3572 = vmatprep.subr.mxu0 0.0
    %3573 = vmatpush1.xpose.msra.mxu0 0.0
    %3574 = vmatprep.subr.mxu0 0.0
    %3575 = vmatpush1.xpose.msra.mxu0 0.0
    %3576 = vmatprep.subr.mxu0 0.0
    %3577 = vmatpush1.xpose.msra.mxu0 0.0
    %3578 = vmatprep.subr.mxu0 0.0
    %3579 = vmatpush1.xpose.msra.mxu0 0.0
    %3580 = vmatprep.subr.mxu0 0.0
    %3581 = vmatpush1.xpose.msra.mxu0 0.0
    %3582 = vmatprep.subr.mxu0 0.0
    %3583 = vmatpush1.xpose.msra.mxu0 0.0
    %3584 = vmatprep.subr.mxu0 0.0
    %3585 = vmatpush1.xpose.msra.mxu0 0.0
    %3586 = vmatprep.subr.mxu0 0.0
    %3587 = vmatpush1.xpose.msra.mxu0 0.0
    %3588 = vmatprep.subr.mxu0 0.0
    %3589 = vmatpush1.xpose.msra.mxu0 0.0
    %3590 = vmatprep.subr.mxu0 0.0
    %3591 = vmatpush1.xpose.msra.mxu0 0.0
    %3592 = vmatprep.subr.mxu0 0.0
    %3593 = vmatpush1.xpose.msra.mxu0 0.0
    %3594 = vmatprep.subr.mxu0 0.0
    %3595 = vmatpush1.xpose.msra.mxu0 0.0
    %3596 = vmatprep.subr.mxu0 0.0
    %3597 = vmatpush1.xpose.msra.mxu0 0.0
    %3598 = vmatprep.mubr.f32.mxu0 0.0
    %v3599 = vand.u32 %v3376, 4294901760
    %v3600 = vsub.f32 %v3376, %v3599
    %3601 = vmatmul.mubr.f32.gmra.mrb[0].mxu0 %v3600
    %v3602 = vpop.f32.mrb[0].mxu0
    %v3603 = vadd.f32 %v3529, %v3602
    %v3604 = vpop.f32.mrb[0].mxu0
    %3605 = vdwg.mxu0
    %3606 = vmatprep.subr.mxu0 0.0
    %v3607 = vand.u32 %v3378, 4294901760
    %3608 = vmatpush1.xpose.msra.mxu0 %v3607
    %3609 = vmatprep.subr.mxu0 0.0
    %3610 = vmatpush1.xpose.msra.mxu0 0.0
    %3611 = vmatprep.subr.mxu0 0.0
    %3612 = vmatpush1.xpose.msra.mxu0 0.0
    %3613 = vmatprep.subr.mxu0 0.0
    %3614 = vmatpush1.xpose.msra.mxu0 0.0
    %3615 = vmatprep.subr.mxu0 0.0
    %3616 = vmatpush1.xpose.msra.mxu0 0.0
    %3617 = vmatprep.subr.mxu0 0.0
    %3618 = vmatpush1.xpose.msra.mxu0 0.0
    %3619 = vmatprep.subr.mxu0 0.0
    %3620 = vmatpush1.xpose.msra.mxu0 0.0
    %3621 = vmatprep.subr.mxu0 0.0
    %3622 = vmatpush1.xpose.msra.mxu0 0.0
    %3623 = vmatprep.subr.mxu0 0.0
    %3624 = vmatpush1.xpose.msra.mxu0 0.0
    %3625 = vmatprep.subr.mxu0 0.0
    %3626 = vmatpush1.xpose.msra.mxu0 0.0
    %3627 = vmatprep.subr.mxu0 0.0
    %3628 = vmatpush1.xpose.msra.mxu0 0.0
    %3629 = vmatprep.subr.mxu0 0.0
    %3630 = vmatpush1.xpose.msra.mxu0 0.0
    %3631 = vmatprep.subr.mxu0 0.0
    %3632 = vmatpush1.xpose.msra.mxu0 0.0
    %3633 = vmatprep.subr.mxu0 0.0
    %3634 = vmatpush1.xpose.msra.mxu0 0.0
    %3635 = vmatprep.subr.mxu0 0.0
    %3636 = vmatpush1.xpose.msra.mxu0 0.0
    %3637 = vmatprep.subr.mxu0 0.0
    %3638 = vmatpush1.xpose.msra.mxu0 0.0
    %3639 = vmatprep.subr.mxu0 0.0
    %3640 = vmatpush1.xpose.msra.mxu0 0.0
    %3641 = vmatprep.subr.mxu0 0.0
    %3642 = vmatpush1.xpose.msra.mxu0 0.0
    %3643 = vmatprep.subr.mxu0 0.0
    %3644 = vmatpush1.xpose.msra.mxu0 0.0
    %3645 = vmatprep.subr.mxu0 0.0
    %3646 = vmatpush1.xpose.msra.mxu0 0.0
    %3647 = vmatprep.subr.mxu0 0.0
    %3648 = vmatpush1.xpose.msra.mxu0 0.0
    %3649 = vmatprep.subr.mxu0 0.0
    %3650 = vmatpush1.xpose.msra.mxu0 0.0
    %3651 = vmatprep.subr.mxu0 0.0
    %3652 = vmatpush1.xpose.msra.mxu0 0.0
    %3653 = vmatprep.subr.mxu0 0.0
    %3654 = vmatpush1.xpose.msra.mxu0 0.0
    %3655 = vmatprep.subr.mxu0 0.0
    %3656 = vmatpush1.xpose.msra.mxu0 0.0
    %3657 = vmatprep.subr.mxu0 0.0
    %3658 = vmatpush1.xpose.msra.mxu0 0.0
    %3659 = vmatprep.subr.mxu0 0.0
    %3660 = vmatpush1.xpose.msra.mxu0 0.0
    %3661 = vmatprep.subr.mxu0 0.0
    %3662 = vmatpush1.xpose.msra.mxu0 0.0
    %3663 = vmatprep.subr.mxu0 0.0
    %3664 = vmatpush1.xpose.msra.mxu0 0.0
    %3665 = vmatprep.subr.mxu0 0.0
    %3666 = vmatpush1.xpose.msra.mxu0 0.0
    %3667 = vmatprep.subr.mxu0 0.0
    %3668 = vmatpush1.xpose.msra.mxu0 0.0
    %3669 = vmatprep.subr.mxu0 0.0
    %3670 = vmatpush1.xpose.msra.mxu0 0.0
    %3671 = vmatprep.mubr.f32.mxu0 0.0
    %v3672 = vand.u32 %v3376, 4294901760
    %v3673 = vsub.f32 %v3376, %v3672
    %v3674 = vand.u32 %v3673, 4294901760
    %3675 = vmatmul.mubr.f32.gmra.mrb[0].mxu0 %v3674
    %v3676 = vpop.f32.mrb[0].mxu0
    %v3677 = vadd.f32 %v3603, %v3676
    %v3678 = vpop.f32.mrb[0].mxu0
    %3679 = vdwg.mxu0
    %3680 = vmatprep.subr.mxu0 0.0
    %v3681 = vand.u32 %v3378, 4294901760
    %v3682 = vsub.f32 %v3378, %v3681
    %v3683 = vand.u32 %v3682, 4294901760
    %3684 = vmatpush1.xpose.msra.mxu0 %v3683
    %3685 = vmatprep.subr.mxu0 0.0
    %3686 = vmatpush1.xpose.msra.mxu0 0.0
    %3687 = vmatprep.subr.mxu0 0.0
    %3688 = vmatpush1.xpose.msra.mxu0 0.0
    %3689 = vmatprep.subr.mxu0 0.0
    %3690 = vmatpush1.xpose.msra.mxu0 0.0
    %3691 = vmatprep.subr.mxu0 0.0
    %3692 = vmatpush1.xpose.msra.mxu0 0.0
    %3693 = vmatprep.subr.mxu0 0.0
    %3694 = vmatpush1.xpose.msra.mxu0 0.0
    %3695 = vmatprep.subr.mxu0 0.0
    %3696 = vmatpush1.xpose.msra.mxu0 0.0
    %3697 = vmatprep.subr.mxu0 0.0
    %3698 = vmatpush1.xpose.msra.mxu0 0.0
    %3699 = vmatprep.subr.mxu0 0.0
    %3700 = vmatpush1.xpose.msra.mxu0 0.0
    %3701 = vmatprep.subr.mxu0 0.0
    %3702 = vmatpush1.xpose.msra.mxu0 0.0
    %3703 = vmatprep.subr.mxu0 0.0
    %3704 = vmatpush1.xpose.msra.mxu0 0.0
    %3705 = vmatprep.subr.mxu0 0.0
    %3706 = vmatpush1.xpose.msra.mxu0 0.0
    %3707 = vmatprep.subr.mxu0 0.0
    %3708 = vmatpush1.xpose.msra.mxu0 0.0
    %3709 = vmatprep.subr.mxu0 0.0
    %3710 = vmatpush1.xpose.msra.mxu0 0.0
    %3711 = vmatprep.subr.mxu0 0.0
    %3712 = vmatpush1.xpose.msra.mxu0 0.0
    %3713 = vmatprep.subr.mxu0 0.0
    %3714 = vmatpush1.xpose.msra.mxu0 0.0
    %3715 = vmatprep.subr.mxu0 0.0
    %3716 = vmatpush1.xpose.msra.mxu0 0.0
    %3717 = vmatprep.subr.mxu0 0.0
    %3718 = vmatpush1.xpose.msra.mxu0 0.0
    %3719 = vmatprep.subr.mxu0 0.0
    %3720 = vmatpush1.xpose.msra.mxu0 0.0
    %3721 = vmatprep.subr.mxu0 0.0
    %3722 = vmatpush1.xpose.msra.mxu0 0.0
    %3723 = vmatprep.subr.mxu0 0.0
    %3724 = vmatpush1.xpose.msra.mxu0 0.0
    %3725 = vmatprep.subr.mxu0 0.0
    %3726 = vmatpush1.xpose.msra.mxu0 0.0
    %3727 = vmatprep.subr.mxu0 0.0
    %3728 = vmatpush1.xpose.msra.mxu0 0.0
    %3729 = vmatprep.subr.mxu0 0.0
    %3730 = vmatpush1.xpose.msra.mxu0 0.0
    %3731 = vmatprep.subr.mxu0 0.0
    %3732 = vmatpush1.xpose.msra.mxu0 0.0
    %3733 = vmatprep.subr.mxu0 0.0
    %3734 = vmatpush1.xpose.msra.mxu0 0.0
    %3735 = vmatprep.subr.mxu0 0.0
    %3736 = vmatpush1.xpose.msra.mxu0 0.0
    %3737 = vmatprep.subr.mxu0 0.0
    %3738 = vmatpush1.xpose.msra.mxu0 0.0
    %3739 = vmatprep.subr.mxu0 0.0
    %3740 = vmatpush1.xpose.msra.mxu0 0.0
    %3741 = vmatprep.subr.mxu0 0.0
    %3742 = vmatpush1.xpose.msra.mxu0 0.0
    %3743 = vmatprep.subr.mxu0 0.0
    %3744 = vmatpush1.xpose.msra.mxu0 0.0
    %3745 = vmatprep.subr.mxu0 0.0
    %3746 = vmatpush1.xpose.msra.mxu0 0.0
    %3747 = vmatprep.mubr.f32.mxu0 0.0
    %v3748 = vand.u32 %v3376, 4294901760
    %3749 = vmatmul.mubr.f32.gmra.mrb[0].mxu0 %v3748
    %v3750 = vpop.f32.mrb[0].mxu0
    %v3751 = vadd.f32 %v3677, %v3750
    %v3752 = vpop.f32.mrb[0].mxu0
    %3753 = vdwg.mxu0
    %3754 = vmatprep.subr.mxu0 0.0
    %v3755 = vand.u32 %v3378, 4294901760
    %3756 = vmatpush1.xpose.msra.mxu0 %v3755
    %3757 = vmatprep.subr.mxu0 0.0
    %3758 = vmatpush1.xpose.msra.mxu0 0.0
    %3759 = vmatprep.subr.mxu0 0.0
    %3760 = vmatpush1.xpose.msra.mxu0 0.0
    %3761 = vmatprep.subr.mxu0 0.0
    %3762 = vmatpush1.xpose.msra.mxu0 0.0
    %3763 = vmatprep.subr.mxu0 0.0
    %3764 = vmatpush1.xpose.msra.mxu0 0.0
    %3765 = vmatprep.subr.mxu0 0.0
    %3766 = vmatpush1.xpose.msra.mxu0 0.0
    %3767 = vmatprep.subr.mxu0 0.0
    %3768 = vmatpush1.xpose.msra.mxu0 0.0
    %3769 = vmatprep.subr.mxu0 0.0
    %3770 = vmatpush1.xpose.msra.mxu0 0.0
    %3771 = vmatprep.subr.mxu0 0.0
    %3772 = vmatpush1.xpose.msra.mxu0 0.0
    %3773 = vmatprep.subr.mxu0 0.0
    %3774 = vmatpush1.xpose.msra.mxu0 0.0
    %3775 = vmatprep.subr.mxu0 0.0
    %3776 = vmatpush1.xpose.msra.mxu0 0.0
    %3777 = vmatprep.subr.mxu0 0.0
    %3778 = vmatpush1.xpose.msra.mxu0 0.0
    %3779 = vmatprep.subr.mxu0 0.0
    %3780 = vmatpush1.xpose.msra.mxu0 0.0
    %3781 = vmatprep.subr.mxu0 0.0
    %3782 = vmatpush1.xpose.msra.mxu0 0.0
    %3783 = vmatprep.subr.mxu0 0.0
    %3784 = vmatpush1.xpose.msra.mxu0 0.0
    %3785 = vmatprep.subr.mxu0 0.0
    %3786 = vmatpush1.xpose.msra.mxu0 0.0
    %3787 = vmatprep.subr.mxu0 0.0
    %3788 = vmatpush1.xpose.msra.mxu0 0.0
    %3789 = vmatprep.subr.mxu0 0.0
    %3790 = vmatpush1.xpose.msra.mxu0 0.0
    %3791 = vmatprep.subr.mxu0 0.0
    %3792 = vmatpush1.xpose.msra.mxu0 0.0
    %3793 = vmatprep.subr.mxu0 0.0
    %3794 = vmatpush1.xpose.msra.mxu0 0.0
    %3795 = vmatprep.subr.mxu0 0.0
    %3796 = vmatpush1.xpose.msra.mxu0 0.0
    %3797 = vmatprep.subr.mxu0 0.0
    %3798 = vmatpush1.xpose.msra.mxu0 0.0
    %3799 = vmatprep.subr.mxu0 0.0
    %3800 = vmatpush1.xpose.msra.mxu0 0.0
    %3801 = vmatprep.subr.mxu0 0.0
    %3802 = vmatpush1.xpose.msra.mxu0 0.0
    %3803 = vmatprep.subr.mxu0 0.0
    %3804 = vmatpush1.xpose.msra.mxu0 0.0
    %3805 = vmatprep.subr.mxu0 0.0
    %3806 = vmatpush1.xpose.msra.mxu0 0.0
    %3807 = vmatprep.subr.mxu0 0.0
    %3808 = vmatpush1.xpose.msra.mxu0 0.0
    %3809 = vmatprep.subr.mxu0 0.0
    %3810 = vmatpush1.xpose.msra.mxu0 0.0
    %3811 = vmatprep.subr.mxu0 0.0
    %3812 = vmatpush1.xpose.msra.mxu0 0.0
    %3813 = vmatprep.subr.mxu0 0.0
    %3814 = vmatpush1.xpose.msra.mxu0 0.0
    %3815 = vmatprep.subr.mxu0 0.0
    %3816 = vmatpush1.xpose.msra.mxu0 0.0
    %3817 = vmatprep.subr.mxu0 0.0
    %3818 = vmatpush1.xpose.msra.mxu0 0.0
    %3819 = vmatprep.mubr.f32.mxu0 0.0
    %v3820 = vand.u32 %v3376, 4294901760
    %3821 = vmatmul.mubr.f32.gmra.mrb[0].mxu0 %v3820
    %v3822 = vpop.f32.mrb[0].mxu0
    %v3823 = vadd.f32 %v3751, %v3822
    %v3824 = vpop.f32.mrb[0].mxu0
    %3825 = vdwg.mxu0
    %3826 = vrot.lane.b32.xlu0 %v568, 96
    %v3827 = vpop.permute.xlu0 %3826
    %3828 = vrot.lane.b32.xlu0 %v568, 32
    %v3829 = vpop.permute.xlu0 %3828
    %v3830 = vsel %vm1106, %v3827, 0
    %v3832 = vsel %vm1106, %v3829, 0
    %3834 = vmatprep.subr.mxu0 0.0
    %v3835 = vand.u32 %v3832, 4294901760
    %3836 = vmatpush1.xpose.msra.mxu0 %v3835
    %3837 = vmatprep.subr.mxu0 0.0
    %3838 = vmatpush1.xpose.msra.mxu0 0.0
    %3839 = vmatprep.subr.mxu0 0.0
    %3840 = vmatpush1.xpose.msra.mxu0 0.0
    %3841 = vmatprep.subr.mxu0 0.0
    %3842 = vmatpush1.xpose.msra.mxu0 0.0
    %3843 = vmatprep.subr.mxu0 0.0
    %3844 = vmatpush1.xpose.msra.mxu0 0.0
    %3845 = vmatprep.subr.mxu0 0.0
    %3846 = vmatpush1.xpose.msra.mxu0 0.0
    %3847 = vmatprep.subr.mxu0 0.0
    %3848 = vmatpush1.xpose.msra.mxu0 0.0
    %3849 = vmatprep.subr.mxu0 0.0
    %3850 = vmatpush1.xpose.msra.mxu0 0.0
    %3851 = vmatprep.subr.mxu0 0.0
    %3852 = vmatpush1.xpose.msra.mxu0 0.0
    %3853 = vmatprep.subr.mxu0 0.0
    %3854 = vmatpush1.xpose.msra.mxu0 0.0
    %3855 = vmatprep.subr.mxu0 0.0
    %3856 = vmatpush1.xpose.msra.mxu0 0.0
    %3857 = vmatprep.subr.mxu0 0.0
    %3858 = vmatpush1.xpose.msra.mxu0 0.0
    %3859 = vmatprep.subr.mxu0 0.0
    %3860 = vmatpush1.xpose.msra.mxu0 0.0
    %3861 = vmatprep.subr.mxu0 0.0
    %3862 = vmatpush1.xpose.msra.mxu0 0.0
    %3863 = vmatprep.subr.mxu0 0.0
    %3864 = vmatpush1.xpose.msra.mxu0 0.0
    %3865 = vmatprep.subr.mxu0 0.0
    %3866 = vmatpush1.xpose.msra.mxu0 0.0
    %3867 = vmatprep.subr.mxu0 0.0
    %3868 = vmatpush1.xpose.msra.mxu0 0.0
    %3869 = vmatprep.subr.mxu0 0.0
    %3870 = vmatpush1.xpose.msra.mxu0 0.0
    %3871 = vmatprep.subr.mxu0 0.0
    %3872 = vmatpush1.xpose.msra.mxu0 0.0
    %3873 = vmatprep.subr.mxu0 0.0
    %3874 = vmatpush1.xpose.msra.mxu0 0.0
    %3875 = vmatprep.subr.mxu0 0.0
    %3876 = vmatpush1.xpose.msra.mxu0 0.0
    %3877 = vmatprep.subr.mxu0 0.0
    %3878 = vmatpush1.xpose.msra.mxu0 0.0
    %3879 = vmatprep.subr.mxu0 0.0
    %3880 = vmatpush1.xpose.msra.mxu0 0.0
    %3881 = vmatprep.subr.mxu0 0.0
    %3882 = vmatpush1.xpose.msra.mxu0 0.0
    %3883 = vmatprep.subr.mxu0 0.0
    %3884 = vmatpush1.xpose.msra.mxu0 0.0
    %3885 = vmatprep.subr.mxu0 0.0
    %3886 = vmatpush1.xpose.msra.mxu0 0.0
    %3887 = vmatprep.subr.mxu0 0.0
    %3888 = vmatpush1.xpose.msra.mxu0 0.0
    %3889 = vmatprep.subr.mxu0 0.0
    %3890 = vmatpush1.xpose.msra.mxu0 0.0
    %3891 = vmatprep.subr.mxu0 0.0
    %3892 = vmatpush1.xpose.msra.mxu0 0.0
    %3893 = vmatprep.subr.mxu0 0.0
    %3894 = vmatpush1.xpose.msra.mxu0 0.0
    %3895 = vmatprep.subr.mxu0 0.0
    %3896 = vmatpush1.xpose.msra.mxu0 0.0
    %3897 = vmatprep.subr.mxu0 0.0
    %3898 = vmatpush1.xpose.msra.mxu0 0.0
    %3899 = vmatprep.mubr.f32.mxu0 0.0
    %v3900 = vand.u32 %v3830, 4294901760
    %v3901 = vsub.f32 %v3830, %v3900
    %v3902 = vand.u32 %v3901, 4294901760
    %v3903 = vsub.f32 %v3901, %v3902
    %v3904 = vand.u32 %v3903, 4294901760
    %3905 = vmatmul.mubr.f32.gmra.mrb[0].mxu0 %v3904
    %v3906 = vpop.f32.mrb[0].mxu0
    %v3907 = vadd.f32 0.0, %v3906
    %v3908 = vpop.f32.mrb[0].mxu0
    %3909 = vdwg.mxu0
    %3910 = vmatprep.subr.mxu0 0.0
    %v3911 = vand.u32 %v3832, 4294901760
    %v3912 = vsub.f32 %v3832, %v3911
    %v3913 = vand.u32 %v3912, 4294901760
    %v3914 = vsub.f32 %v3912, %v3913
    %v3915 = vand.u32 %v3914, 4294901760
    %3916 = vmatpush1.xpose.msra.mxu0 %v3915
    %3917 = vmatprep.subr.mxu0 0.0
    %3918 = vmatpush1.xpose.msra.mxu0 0.0
    %3919 = vmatprep.subr.mxu0 0.0
    %3920 = vmatpush1.xpose.msra.mxu0 0.0
    %3921 = vmatprep.subr.mxu0 0.0
    %3922 = vmatpush1.xpose.msra.mxu0 0.0
    %3923 = vmatprep.subr.mxu0 0.0
    %3924 = vmatpush1.xpose.msra.mxu0 0.0
    %3925 = vmatprep.subr.mxu0 0.0
    %3926 = vmatpush1.xpose.msra.mxu0 0.0
    %3927 = vmatprep.subr.mxu0 0.0
    %3928 = vmatpush1.xpose.msra.mxu0 0.0
    %3929 = vmatprep.subr.mxu0 0.0
    %3930 = vmatpush1.xpose.msra.mxu0 0.0
    %3931 = vmatprep.subr.mxu0 0.0
    %3932 = vmatpush1.xpose.msra.mxu0 0.0
    %3933 = vmatprep.subr.mxu0 0.0
    %3934 = vmatpush1.xpose.msra.mxu0 0.0
    %3935 = vmatprep.subr.mxu0 0.0
    %3936 = vmatpush1.xpose.msra.mxu0 0.0
    %3937 = vmatprep.subr.mxu0 0.0
    %3938 = vmatpush1.xpose.msra.mxu0 0.0
    %3939 = vmatprep.subr.mxu0 0.0
    %3940 = vmatpush1.xpose.msra.mxu0 0.0
    %3941 = vmatprep.subr.mxu0 0.0
    %3942 = vmatpush1.xpose.msra.mxu0 0.0
    %3943 = vmatprep.subr.mxu0 0.0
    %3944 = vmatpush1.xpose.msra.mxu0 0.0
    %3945 = vmatprep.subr.mxu0 0.0
    %3946 = vmatpush1.xpose.msra.mxu0 0.0
    %3947 = vmatprep.subr.mxu0 0.0
    %3948 = vmatpush1.xpose.msra.mxu0 0.0
    %3949 = vmatprep.subr.mxu0 0.0
    %3950 = vmatpush1.xpose.msra.mxu0 0.0
    %3951 = vmatprep.subr.mxu0 0.0
    %3952 = vmatpush1.xpose.msra.mxu0 0.0
    %3953 = vmatprep.subr.mxu0 0.0
    %3954 = vmatpush1.xpose.msra.mxu0 0.0
    %3955 = vmatprep.subr.mxu0 0.0
    %3956 = vmatpush1.xpose.msra.mxu0 0.0
    %3957 = vmatprep.subr.mxu0 0.0
    %3958 = vmatpush1.xpose.msra.mxu0 0.0
    %3959 = vmatprep.subr.mxu0 0.0
    %3960 = vmatpush1.xpose.msra.mxu0 0.0
    %3961 = vmatprep.subr.mxu0 0.0
    %3962 = vmatpush1.xpose.msra.mxu0 0.0
    %3963 = vmatprep.subr.mxu0 0.0
    %3964 = vmatpush1.xpose.msra.mxu0 0.0
    %3965 = vmatprep.subr.mxu0 0.0
    %3966 = vmatpush1.xpose.msra.mxu0 0.0
    %3967 = vmatprep.subr.mxu0 0.0
    %3968 = vmatpush1.xpose.msra.mxu0 0.0
    %3969 = vmatprep.subr.mxu0 0.0
    %3970 = vmatpush1.xpose.msra.mxu0 0.0
    %3971 = vmatprep.subr.mxu0 0.0
    %3972 = vmatpush1.xpose.msra.mxu0 0.0
    %3973 = vmatprep.subr.mxu0 0.0
    %3974 = vmatpush1.xpose.msra.mxu0 0.0
    %3975 = vmatprep.subr.mxu0 0.0
    %3976 = vmatpush1.xpose.msra.mxu0 0.0
    %3977 = vmatprep.subr.mxu0 0.0
    %3978 = vmatpush1.xpose.msra.mxu0 0.0
    %3979 = vmatprep.mubr.f32.mxu0 0.0
    %v3980 = vand.u32 %v3830, 4294901760
    %3981 = vmatmul.mubr.f32.gmra.mrb[0].mxu0 %v3980
    %v3982 = vpop.f32.mrb[0].mxu0
    %v3983 = vadd.f32 %v3907, %v3982
    %v3984 = vpop.f32.mrb[0].mxu0
    %3985 = vdwg.mxu0
    %3986 = vmatprep.subr.mxu0 0.0
    %v3987 = vand.u32 %v3832, 4294901760
    %v3988 = vsub.f32 %v3832, %v3987
    %3989 = vmatpush1.xpose.msra.mxu0 %v3988
    %3990 = vmatprep.subr.mxu0 0.0
    %3991 = vmatpush1.xpose.msra.mxu0 0.0
    %3992 = vmatprep.subr.mxu0 0.0
    %3993 = vmatpush1.xpose.msra.mxu0 0.0
    %3994 = vmatprep.subr.mxu0 0.0
    %3995 = vmatpush1.xpose.msra.mxu0 0.0
    %3996 = vmatprep.subr.mxu0 0.0
    %3997 = vmatpush1.xpose.msra.mxu0 0.0
    %3998 = vmatprep.subr.mxu0 0.0
    %3999 = vmatpush1.xpose.msra.mxu0 0.0
    %4000 = vmatprep.subr.mxu0 0.0
    %4001 = vmatpush1.xpose.msra.mxu0 0.0
    %4002 = vmatprep.subr.mxu0 0.0
    %4003 = vmatpush1.xpose.msra.mxu0 0.0
    %4004 = vmatprep.subr.mxu0 0.0
    %4005 = vmatpush1.xpose.msra.mxu0 0.0
    %4006 = vmatprep.subr.mxu0 0.0
    %4007 = vmatpush1.xpose.msra.mxu0 0.0
    %4008 = vmatprep.subr.mxu0 0.0
    %4009 = vmatpush1.xpose.msra.mxu0 0.0
    %4010 = vmatprep.subr.mxu0 0.0
    %4011 = vmatpush1.xpose.msra.mxu0 0.0
    %4012 = vmatprep.subr.mxu0 0.0
    %4013 = vmatpush1.xpose.msra.mxu0 0.0
    %4014 = vmatprep.subr.mxu0 0.0
    %4015 = vmatpush1.xpose.msra.mxu0 0.0
    %4016 = vmatprep.subr.mxu0 0.0
    %4017 = vmatpush1.xpose.msra.mxu0 0.0
    %4018 = vmatprep.subr.mxu0 0.0
    %4019 = vmatpush1.xpose.msra.mxu0 0.0
    %4020 = vmatprep.subr.mxu0 0.0
    %4021 = vmatpush1.xpose.msra.mxu0 0.0
    %4022 = vmatprep.subr.mxu0 0.0
    %4023 = vmatpush1.xpose.msra.mxu0 0.0
    %4024 = vmatprep.subr.mxu0 0.0
    %4025 = vmatpush1.xpose.msra.mxu0 0.0
    %4026 = vmatprep.subr.mxu0 0.0
    %4027 = vmatpush1.xpose.msra.mxu0 0.0
    %4028 = vmatprep.subr.mxu0 0.0
    %4029 = vmatpush1.xpose.msra.mxu0 0.0
    %4030 = vmatprep.subr.mxu0 0.0
    %4031 = vmatpush1.xpose.msra.mxu0 0.0
    %4032 = vmatprep.subr.mxu0 0.0
    %4033 = vmatpush1.xpose.msra.mxu0 0.0
    %4034 = vmatprep.subr.mxu0 0.0
    %4035 = vmatpush1.xpose.msra.mxu0 0.0
    %4036 = vmatprep.subr.mxu0 0.0
    %4037 = vmatpush1.xpose.msra.mxu0 0.0
    %4038 = vmatprep.subr.mxu0 0.0
    %4039 = vmatpush1.xpose.msra.mxu0 0.0
    %4040 = vmatprep.subr.mxu0 0.0
    %4041 = vmatpush1.xpose.msra.mxu0 0.0
    %4042 = vmatprep.subr.mxu0 0.0
    %4043 = vmatpush1.xpose.msra.mxu0 0.0
    %4044 = vmatprep.subr.mxu0 0.0
    %4045 = vmatpush1.xpose.msra.mxu0 0.0
    %4046 = vmatprep.subr.mxu0 0.0
    %4047 = vmatpush1.xpose.msra.mxu0 0.0
    %4048 = vmatprep.subr.mxu0 0.0
    %4049 = vmatpush1.xpose.msra.mxu0 0.0
    %4050 = vmatprep.subr.mxu0 0.0
    %4051 = vmatpush1.xpose.msra.mxu0 0.0
    %4052 = vmatprep.mubr.f32.mxu0 0.0
    %v4053 = vand.u32 %v3830, 4294901760
    %v4054 = vsub.f32 %v3830, %v4053
    %4055 = vmatmul.mubr.f32.gmra.mrb[0].mxu0 %v4054
    %v4056 = vpop.f32.mrb[0].mxu0
    %v4057 = vadd.f32 %v3983, %v4056
    %v4058 = vpop.f32.mrb[0].mxu0
    %4059 = vdwg.mxu0
    %4060 = vmatprep.subr.mxu0 0.0
    %v4061 = vand.u32 %v3832, 4294901760
    %4062 = vmatpush1.xpose.msra.mxu0 %v4061
    %4063 = vmatprep.subr.mxu0 0.0
    %4064 = vmatpush1.xpose.msra.mxu0 0.0
    %4065 = vmatprep.subr.mxu0 0.0
    %4066 = vmatpush1.xpose.msra.mxu0 0.0
    %4067 = vmatprep.subr.mxu0 0.0
    %4068 = vmatpush1.xpose.msra.mxu0 0.0
    %4069 = vmatprep.subr.mxu0 0.0
    %4070 = vmatpush1.xpose.msra.mxu0 0.0
    %4071 = vmatprep.subr.mxu0 0.0
    %4072 = vmatpush1.xpose.msra.mxu0 0.0
    %4073 = vmatprep.subr.mxu0 0.0
    %4074 = vmatpush1.xpose.msra.mxu0 0.0
    %4075 = vmatprep.subr.mxu0 0.0
    %4076 = vmatpush1.xpose.msra.mxu0 0.0
    %4077 = vmatprep.subr.mxu0 0.0
    %4078 = vmatpush1.xpose.msra.mxu0 0.0
    %4079 = vmatprep.subr.mxu0 0.0
    %4080 = vmatpush1.xpose.msra.mxu0 0.0
    %4081 = vmatprep.subr.mxu0 0.0
    %4082 = vmatpush1.xpose.msra.mxu0 0.0
    %4083 = vmatprep.subr.mxu0 0.0
    %4084 = vmatpush1.xpose.msra.mxu0 0.0
    %4085 = vmatprep.subr.mxu0 0.0
    %4086 = vmatpush1.xpose.msra.mxu0 0.0
    %4087 = vmatprep.subr.mxu0 0.0
    %4088 = vmatpush1.xpose.msra.mxu0 0.0
    %4089 = vmatprep.subr.mxu0 0.0
    %4090 = vmatpush1.xpose.msra.mxu0 0.0
    %4091 = vmatprep.subr.mxu0 0.0
    %4092 = vmatpush1.xpose.msra.mxu0 0.0
    %4093 = vmatprep.subr.mxu0 0.0
    %4094 = vmatpush1.xpose.msra.mxu0 0.0
    %4095 = vmatprep.subr.mxu0 0.0
    %4096 = vmatpush1.xpose.msra.mxu0 0.0
    %4097 = vmatprep.subr.mxu0 0.0
    %4098 = vmatpush1.xpose.msra.mxu0 0.0
    %4099 = vmatprep.subr.mxu0 0.0
    %4100 = vmatpush1.xpose.msra.mxu0 0.0
    %4101 = vmatprep.subr.mxu0 0.0
    %4102 = vmatpush1.xpose.msra.mxu0 0.0
    %4103 = vmatprep.subr.mxu0 0.0
    %4104 = vmatpush1.xpose.msra.mxu0 0.0
    %4105 = vmatprep.subr.mxu0 0.0
    %4106 = vmatpush1.xpose.msra.mxu0 0.0
    %4107 = vmatprep.subr.mxu0 0.0
    %4108 = vmatpush1.xpose.msra.mxu0 0.0
    %4109 = vmatprep.subr.mxu0 0.0
    %4110 = vmatpush1.xpose.msra.mxu0 0.0
    %4111 = vmatprep.subr.mxu0 0.0
    %4112 = vmatpush1.xpose.msra.mxu0 0.0
    %4113 = vmatprep.subr.mxu0 0.0
    %4114 = vmatpush1.xpose.msra.mxu0 0.0
    %4115 = vmatprep.subr.mxu0 0.0
    %4116 = vmatpush1.xpose.msra.mxu0 0.0
    %4117 = vmatprep.subr.mxu0 0.0
    %4118 = vmatpush1.xpose.msra.mxu0 0.0
    %4119 = vmatprep.subr.mxu0 0.0
    %4120 = vmatpush1.xpose.msra.mxu0 0.0
    %4121 = vmatprep.subr.mxu0 0.0
    %4122 = vmatpush1.xpose.msra.mxu0 0.0
    %4123 = vmatprep.subr.mxu0 0.0
    %4124 = vmatpush1.xpose.msra.mxu0 0.0
    %4125 = vmatprep.mubr.f32.mxu0 0.0
    %v4126 = vand.u32 %v3830, 4294901760
    %v4127 = vsub.f32 %v3830, %v4126
    %v4128 = vand.u32 %v4127, 4294901760
    %4129 = vmatmul.mubr.f32.gmra.mrb[0].mxu0 %v4128
    %v4130 = vpop.f32.mrb[0].mxu0
    %v4131 = vadd.f32 %v4057, %v4130
    %v4132 = vpop.f32.mrb[0].mxu0
    %4133 = vdwg.mxu0
    %4134 = vmatprep.subr.mxu0 0.0
    %v4135 = vand.u32 %v3832, 4294901760
    %v4136 = vsub.f32 %v3832, %v4135
    %v4137 = vand.u32 %v4136, 4294901760
    %4138 = vmatpush1.xpose.msra.mxu0 %v4137
    %4139 = vmatprep.subr.mxu0 0.0
    %4140 = vmatpush1.xpose.msra.mxu0 0.0
    %4141 = vmatprep.subr.mxu0 0.0
    %4142 = vmatpush1.xpose.msra.mxu0 0.0
    %4143 = vmatprep.subr.mxu0 0.0
    %4144 = vmatpush1.xpose.msra.mxu0 0.0
    %4145 = vmatprep.subr.mxu0 0.0
    %4146 = vmatpush1.xpose.msra.mxu0 0.0
    %4147 = vmatprep.subr.mxu0 0.0
    %4148 = vmatpush1.xpose.msra.mxu0 0.0
    %4149 = vmatprep.subr.mxu0 0.0
    %4150 = vmatpush1.xpose.msra.mxu0 0.0
    %4151 = vmatprep.subr.mxu0 0.0
    %4152 = vmatpush1.xpose.msra.mxu0 0.0
    %4153 = vmatprep.subr.mxu0 0.0
    %4154 = vmatpush1.xpose.msra.mxu0 0.0
    %4155 = vmatprep.subr.mxu0 0.0
    %4156 = vmatpush1.xpose.msra.mxu0 0.0
    %4157 = vmatprep.subr.mxu0 0.0
    %4158 = vmatpush1.xpose.msra.mxu0 0.0
    %4159 = vmatprep.subr.mxu0 0.0
    %4160 = vmatpush1.xpose.msra.mxu0 0.0
    %4161 = vmatprep.subr.mxu0 0.0
    %4162 = vmatpush1.xpose.msra.mxu0 0.0
    %4163 = vmatprep.subr.mxu0 0.0
    %4164 = vmatpush1.xpose.msra.mxu0 0.0
    %4165 = vmatprep.subr.mxu0 0.0
    %4166 = vmatpush1.xpose.msra.mxu0 0.0
    %4167 = vmatprep.subr.mxu0 0.0
    %4168 = vmatpush1.xpose.msra.mxu0 0.0
    %4169 = vmatprep.subr.mxu0 0.0
    %4170 = vmatpush1.xpose.msra.mxu0 0.0
    %4171 = vmatprep.subr.mxu0 0.0
    %4172 = vmatpush1.xpose.msra.mxu0 0.0
    %4173 = vmatprep.subr.mxu0 0.0
    %4174 = vmatpush1.xpose.msra.mxu0 0.0
    %4175 = vmatprep.subr.mxu0 0.0
    %4176 = vmatpush1.xpose.msra.mxu0 0.0
    %4177 = vmatprep.subr.mxu0 0.0
    %4178 = vmatpush1.xpose.msra.mxu0 0.0
    %4179 = vmatprep.subr.mxu0 0.0
    %4180 = vmatpush1.xpose.msra.mxu0 0.0
    %4181 = vmatprep.subr.mxu0 0.0
    %4182 = vmatpush1.xpose.msra.mxu0 0.0
    %4183 = vmatprep.subr.mxu0 0.0
    %4184 = vmatpush1.xpose.msra.mxu0 0.0
    %4185 = vmatprep.subr.mxu0 0.0
    %4186 = vmatpush1.xpose.msra.mxu0 0.0
    %4187 = vmatprep.subr.mxu0 0.0
    %4188 = vmatpush1.xpose.msra.mxu0 0.0
    %4189 = vmatprep.subr.mxu0 0.0
    %4190 = vmatpush1.xpose.msra.mxu0 0.0
    %4191 = vmatprep.subr.mxu0 0.0
    %4192 = vmatpush1.xpose.msra.mxu0 0.0
    %4193 = vmatprep.subr.mxu0 0.0
    %4194 = vmatpush1.xpose.msra.mxu0 0.0
    %4195 = vmatprep.subr.mxu0 0.0
    %4196 = vmatpush1.xpose.msra.mxu0 0.0
    %4197 = vmatprep.subr.mxu0 0.0
    %4198 = vmatpush1.xpose.msra.mxu0 0.0
    %4199 = vmatprep.subr.mxu0 0.0
    %4200 = vmatpush1.xpose.msra.mxu0 0.0
    %4201 = vmatprep.mubr.f32.mxu0 0.0
    %v4202 = vand.u32 %v3830, 4294901760
    %4203 = vmatmul.mubr.f32.gmra.mrb[0].mxu0 %v4202
    %v4204 = vpop.f32.mrb[0].mxu0
    %v4205 = vadd.f32 %v4131, %v4204
    %v4206 = vpop.f32.mrb[0].mxu0
    %4207 = vdwg.mxu0
    %4208 = vmatprep.subr.mxu0 0.0
    %v4209 = vand.u32 %v3832, 4294901760
    %4210 = vmatpush1.xpose.msra.mxu0 %v4209
    %4211 = vmatprep.subr.mxu0 0.0
    %4212 = vmatpush1.xpose.msra.mxu0 0.0
    %4213 = vmatprep.subr.mxu0 0.0
    %4214 = vmatpush1.xpose.msra.mxu0 0.0
    %4215 = vmatprep.subr.mxu0 0.0
    %4216 = vmatpush1.xpose.msra.mxu0 0.0
    %4217 = vmatprep.subr.mxu0 0.0
    %4218 = vmatpush1.xpose.msra.mxu0 0.0
    %4219 = vmatprep.subr.mxu0 0.0
    %4220 = vmatpush1.xpose.msra.mxu0 0.0
    %4221 = vmatprep.subr.mxu0 0.0
    %4222 = vmatpush1.xpose.msra.mxu0 0.0
    %4223 = vmatprep.subr.mxu0 0.0
    %4224 = vmatpush1.xpose.msra.mxu0 0.0
    %4225 = vmatprep.subr.mxu0 0.0
    %4226 = vmatpush1.xpose.msra.mxu0 0.0
    %4227 = vmatprep.subr.mxu0 0.0
    %4228 = vmatpush1.xpose.msra.mxu0 0.0
    %4229 = vmatprep.subr.mxu0 0.0
    %4230 = vmatpush1.xpose.msra.mxu0 0.0
    %4231 = vmatprep.subr.mxu0 0.0
    %4232 = vmatpush1.xpose.msra.mxu0 0.0
    %4233 = vmatprep.subr.mxu0 0.0
    %4234 = vmatpush1.xpose.msra.mxu0 0.0
    %4235 = vmatprep.subr.mxu0 0.0
    %4236 = vmatpush1.xpose.msra.mxu0 0.0
    %4237 = vmatprep.subr.mxu0 0.0
    %4238 = vmatpush1.xpose.msra.mxu0 0.0
    %4239 = vmatprep.subr.mxu0 0.0
    %4240 = vmatpush1.xpose.msra.mxu0 0.0
    %4241 = vmatprep.subr.mxu0 0.0
    %4242 = vmatpush1.xpose.msra.mxu0 0.0
    %4243 = vmatprep.subr.mxu0 0.0
    %4244 = vmatpush1.xpose.msra.mxu0 0.0
    %4245 = vmatprep.subr.mxu0 0.0
    %4246 = vmatpush1.xpose.msra.mxu0 0.0
    %4247 = vmatprep.subr.mxu0 0.0
    %4248 = vmatpush1.xpose.msra.mxu0 0.0
    %4249 = vmatprep.subr.mxu0 0.0
    %4250 = vmatpush1.xpose.msra.mxu0 0.0
    %4251 = vmatprep.subr.mxu0 0.0
    %4252 = vmatpush1.xpose.msra.mxu0 0.0
    %4253 = vmatprep.subr.mxu0 0.0
    %4254 = vmatpush1.xpose.msra.mxu0 0.0
    %4255 = vmatprep.subr.mxu0 0.0
    %4256 = vmatpush1.xpose.msra.mxu0 0.0
    %4257 = vmatprep.subr.mxu0 0.0
    %4258 = vmatpush1.xpose.msra.mxu0 0.0
    %4259 = vmatprep.subr.mxu0 0.0
    %4260 = vmatpush1.xpose.msra.mxu0 0.0
    %4261 = vmatprep.subr.mxu0 0.0
    %4262 = vmatpush1.xpose.msra.mxu0 0.0
    %4263 = vmatprep.subr.mxu0 0.0
    %4264 = vmatpush1.xpose.msra.mxu0 0.0
    %4265 = vmatprep.subr.mxu0 0.0
    %4266 = vmatpush1.xpose.msra.mxu0 0.0
    %4267 = vmatprep.subr.mxu0 0.0
    %4268 = vmatpush1.xpose.msra.mxu0 0.0
    %4269 = vmatprep.subr.mxu0 0.0
    %4270 = vmatpush1.xpose.msra.mxu0 0.0
    %4271 = vmatprep.subr.mxu0 0.0
    %4272 = vmatpush1.xpose.msra.mxu0 0.0
    %4273 = vmatprep.mubr.f32.mxu0 0.0
    %v4274 = vand.u32 %v3830, 4294901760
    %4275 = vmatmul.mubr.f32.gmra.mrb[0].mxu0 %v4274
    %v4276 = vpop.f32.mrb[0].mxu0
    %v4277 = vadd.f32 %v4205, %v4276
    %v4278 = vpop.f32.mrb[0].mxu0
    %4279 = vdwg.mxu0
    %4280 = vrot.lane.b32.xlu0 %v568, 80
    %v4281 = vpop.permute.xlu0 %4280
    %4282 = vrot.lane.b32.xlu0 %v568, 16
    %v4283 = vpop.permute.xlu0 %4282
    %v4284 = vsel %vm1106, %v4281, 0
    %v4286 = vsel %vm1106, %v4283, 0
    %4288 = vmatprep.subr.mxu0 0.0
    %v4289 = vand.u32 %v4286, 4294901760
    %4290 = vmatpush1.xpose.msra.mxu0 %v4289
    %4291 = vmatprep.subr.mxu0 0.0
    %4292 = vmatpush1.xpose.msra.mxu0 0.0
    %4293 = vmatprep.subr.mxu0 0.0
    %4294 = vmatpush1.xpose.msra.mxu0 0.0
    %4295 = vmatprep.subr.mxu0 0.0
    %4296 = vmatpush1.xpose.msra.mxu0 0.0
    %4297 = vmatprep.subr.mxu0 0.0
    %4298 = vmatpush1.xpose.msra.mxu0 0.0
    %4299 = vmatprep.subr.mxu0 0.0
    %4300 = vmatpush1.xpose.msra.mxu0 0.0
    %4301 = vmatprep.subr.mxu0 0.0
    %4302 = vmatpush1.xpose.msra.mxu0 0.0
    %4303 = vmatprep.subr.mxu0 0.0
    %4304 = vmatpush1.xpose.msra.mxu0 0.0
    %4305 = vmatprep.subr.mxu0 0.0
    %4306 = vmatpush1.xpose.msra.mxu0 0.0
    %4307 = vmatprep.subr.mxu0 0.0
    %4308 = vmatpush1.xpose.msra.mxu0 0.0
    %4309 = vmatprep.subr.mxu0 0.0
    %4310 = vmatpush1.xpose.msra.mxu0 0.0
    %4311 = vmatprep.subr.mxu0 0.0
    %4312 = vmatpush1.xpose.msra.mxu0 0.0
    %4313 = vmatprep.subr.mxu0 0.0
    %4314 = vmatpush1.xpose.msra.mxu0 0.0
    %4315 = vmatprep.subr.mxu0 0.0
    %4316 = vmatpush1.xpose.msra.mxu0 0.0
    %4317 = vmatprep.subr.mxu0 0.0
    %4318 = vmatpush1.xpose.msra.mxu0 0.0
    %4319 = vmatprep.subr.mxu0 0.0
    %4320 = vmatpush1.xpose.msra.mxu0 0.0
    %4321 = vmatprep.subr.mxu0 0.0
    %4322 = vmatpush1.xpose.msra.mxu0 0.0
    %4323 = vmatprep.subr.mxu0 0.0
    %4324 = vmatpush1.xpose.msra.mxu0 0.0
    %4325 = vmatprep.subr.mxu0 0.0
    %4326 = vmatpush1.xpose.msra.mxu0 0.0
    %4327 = vmatprep.subr.mxu0 0.0
    %4328 = vmatpush1.xpose.msra.mxu0 0.0
    %4329 = vmatprep.subr.mxu0 0.0
    %4330 = vmatpush1.xpose.msra.mxu0 0.0
    %4331 = vmatprep.subr.mxu0 0.0
    %4332 = vmatpush1.xpose.msra.mxu0 0.0
    %4333 = vmatprep.subr.mxu0 0.0
    %4334 = vmatpush1.xpose.msra.mxu0 0.0
    %4335 = vmatprep.subr.mxu0 0.0
    %4336 = vmatpush1.xpose.msra.mxu0 0.0
    %4337 = vmatprep.subr.mxu0 0.0
    %4338 = vmatpush1.xpose.msra.mxu0 0.0
    %4339 = vmatprep.subr.mxu0 0.0
    %4340 = vmatpush1.xpose.msra.mxu0 0.0
    %4341 = vmatprep.subr.mxu0 0.0
    %4342 = vmatpush1.xpose.msra.mxu0 0.0
    %4343 = vmatprep.subr.mxu0 0.0
    %4344 = vmatpush1.xpose.msra.mxu0 0.0
    %4345 = vmatprep.subr.mxu0 0.0
    %4346 = vmatpush1.xpose.msra.mxu0 0.0
    %4347 = vmatprep.subr.mxu0 0.0
    %4348 = vmatpush1.xpose.msra.mxu0 0.0
    %4349 = vmatprep.subr.mxu0 0.0
    %4350 = vmatpush1.xpose.msra.mxu0 0.0
    %4351 = vmatprep.subr.mxu0 0.0
    %4352 = vmatpush1.xpose.msra.mxu0 0.0
    %4353 = vmatprep.mubr.f32.mxu0 0.0
    %v4354 = vand.u32 %v4284, 4294901760
    %v4355 = vsub.f32 %v4284, %v4354
    %v4356 = vand.u32 %v4355, 4294901760
    %v4357 = vsub.f32 %v4355, %v4356
    %v4358 = vand.u32 %v4357, 4294901760
    %4359 = vmatmul.mubr.f32.gmra.mrb[0].mxu0 %v4358
    %v4360 = vpop.f32.mrb[0].mxu0
    %v4361 = vadd.f32 0.0, %v4360
    %v4362 = vpop.f32.mrb[0].mxu0
    %4363 = vdwg.mxu0
    %4364 = vmatprep.subr.mxu0 0.0
    %v4365 = vand.u32 %v4286, 4294901760
    %v4366 = vsub.f32 %v4286, %v4365
    %v4367 = vand.u32 %v4366, 4294901760
    %v4368 = vsub.f32 %v4366, %v4367
    %v4369 = vand.u32 %v4368, 4294901760
    %4370 = vmatpush1.xpose.msra.mxu0 %v4369
    %4371 = vmatprep.subr.mxu0 0.0
    %4372 = vmatpush1.xpose.msra.mxu0 0.0
    %4373 = vmatprep.subr.mxu0 0.0
    %4374 = vmatpush1.xpose.msra.mxu0 0.0
    %4375 = vmatprep.subr.mxu0 0.0
    %4376 = vmatpush1.xpose.msra.mxu0 0.0
    %4377 = vmatprep.subr.mxu0 0.0
    %4378 = vmatpush1.xpose.msra.mxu0 0.0
    %4379 = vmatprep.subr.mxu0 0.0
    %4380 = vmatpush1.xpose.msra.mxu0 0.0
    %4381 = vmatprep.subr.mxu0 0.0
    %4382 = vmatpush1.xpose.msra.mxu0 0.0
    %4383 = vmatprep.subr.mxu0 0.0
    %4384 = vmatpush1.xpose.msra.mxu0 0.0
    %4385 = vmatprep.subr.mxu0 0.0
    %4386 = vmatpush1.xpose.msra.mxu0 0.0
    %4387 = vmatprep.subr.mxu0 0.0
    %4388 = vmatpush1.xpose.msra.mxu0 0.0
    %4389 = vmatprep.subr.mxu0 0.0
    %4390 = vmatpush1.xpose.msra.mxu0 0.0
    %4391 = vmatprep.subr.mxu0 0.0
    %4392 = vmatpush1.xpose.msra.mxu0 0.0
    %4393 = vmatprep.subr.mxu0 0.0
    %4394 = vmatpush1.xpose.msra.mxu0 0.0
    %4395 = vmatprep.subr.mxu0 0.0
    %4396 = vmatpush1.xpose.msra.mxu0 0.0
    %4397 = vmatprep.subr.mxu0 0.0
    %4398 = vmatpush1.xpose.msra.mxu0 0.0
    %4399 = vmatprep.subr.mxu0 0.0
    %4400 = vmatpush1.xpose.msra.mxu0 0.0
    %4401 = vmatprep.subr.mxu0 0.0
    %4402 = vmatpush1.xpose.msra.mxu0 0.0
    %4403 = vmatprep.subr.mxu0 0.0
    %4404 = vmatpush1.xpose.msra.mxu0 0.0
    %4405 = vmatprep.subr.mxu0 0.0
    %4406 = vmatpush1.xpose.msra.mxu0 0.0
    %4407 = vmatprep.subr.mxu0 0.0
    %4408 = vmatpush1.xpose.msra.mxu0 0.0
    %4409 = vmatprep.subr.mxu0 0.0
    %4410 = vmatpush1.xpose.msra.mxu0 0.0
    %4411 = vmatprep.subr.mxu0 0.0
    %4412 = vmatpush1.xpose.msra.mxu0 0.0
    %4413 = vmatprep.subr.mxu0 0.0
    %4414 = vmatpush1.xpose.msra.mxu0 0.0
    %4415 = vmatprep.subr.mxu0 0.0
    %4416 = vmatpush1.xpose.msra.mxu0 0.0
    %4417 = vmatprep.subr.mxu0 0.0
    %4418 = vmatpush1.xpose.msra.mxu0 0.0
    %4419 = vmatprep.subr.mxu0 0.0
    %4420 = vmatpush1.xpose.msra.mxu0 0.0
    %4421 = vmatprep.subr.mxu0 0.0
    %4422 = vmatpush1.xpose.msra.mxu0 0.0
    %4423 = vmatprep.subr.mxu0 0.0
    %4424 = vmatpush1.xpose.msra.mxu0 0.0
    %4425 = vmatprep.subr.mxu0 0.0
    %4426 = vmatpush1.xpose.msra.mxu0 0.0
    %4427 = vmatprep.subr.mxu0 0.0
    %4428 = vmatpush1.xpose.msra.mxu0 0.0
    %4429 = vmatprep.subr.mxu0 0.0
    %4430 = vmatpush1.xpose.msra.mxu0 0.0
    %4431 = vmatprep.subr.mxu0 0.0
    %4432 = vmatpush1.xpose.msra.mxu0 0.0
    %4433 = vmatprep.mubr.f32.mxu0 0.0
    %v4434 = vand.u32 %v4284, 4294901760
    %4435 = vmatmul.mubr.f32.gmra.mrb[0].mxu0 %v4434
    %v4436 = vpop.f32.mrb[0].mxu0
    %v4437 = vadd.f32 %v4361, %v4436
    %v4438 = vpop.f32.mrb[0].mxu0
    %4439 = vdwg.mxu0
    %4440 = vmatprep.subr.mxu0 0.0
    %v4441 = vand.u32 %v4286, 4294901760
    %v4442 = vsub.f32 %v4286, %v4441
    %4443 = vmatpush1.xpose.msra.mxu0 %v4442
    %4444 = vmatprep.subr.mxu0 0.0
    %4445 = vmatpush1.xpose.msra.mxu0 0.0
    %4446 = vmatprep.subr.mxu0 0.0
    %4447 = vmatpush1.xpose.msra.mxu0 0.0
    %4448 = vmatprep.subr.mxu0 0.0
    %4449 = vmatpush1.xpose.msra.mxu0 0.0
    %4450 = vmatprep.subr.mxu0 0.0
    %4451 = vmatpush1.xpose.msra.mxu0 0.0
    %4452 = vmatprep.subr.mxu0 0.0
    %4453 = vmatpush1.xpose.msra.mxu0 0.0
    %4454 = vmatprep.subr.mxu0 0.0
    %4455 = vmatpush1.xpose.msra.mxu0 0.0
    %4456 = vmatprep.subr.mxu0 0.0
    %4457 = vmatpush1.xpose.msra.mxu0 0.0
    %4458 = vmatprep.subr.mxu0 0.0
    %4459 = vmatpush1.xpose.msra.mxu0 0.0
    %4460 = vmatprep.subr.mxu0 0.0
    %4461 = vmatpush1.xpose.msra.mxu0 0.0
    %4462 = vmatprep.subr.mxu0 0.0
    %4463 = vmatpush1.xpose.msra.mxu0 0.0
    %4464 = vmatprep.subr.mxu0 0.0
    %4465 = vmatpush1.xpose.msra.mxu0 0.0
    %4466 = vmatprep.subr.mxu0 0.0
    %4467 = vmatpush1.xpose.msra.mxu0 0.0
    %4468 = vmatprep.subr.mxu0 0.0
    %4469 = vmatpush1.xpose.msra.mxu0 0.0
    %4470 = vmatprep.subr.mxu0 0.0
    %4471 = vmatpush1.xpose.msra.mxu0 0.0
    %4472 = vmatprep.subr.mxu0 0.0
    %4473 = vmatpush1.xpose.msra.mxu0 0.0
    %4474 = vmatprep.subr.mxu0 0.0
    %4475 = vmatpush1.xpose.msra.mxu0 0.0
    %4476 = vmatprep.subr.mxu0 0.0
    %4477 = vmatpush1.xpose.msra.mxu0 0.0
    %4478 = vmatprep.subr.mxu0 0.0
    %4479 = vmatpush1.xpose.msra.mxu0 0.0
    %4480 = vmatprep.subr.mxu0 0.0
    %4481 = vmatpush1.xpose.msra.mxu0 0.0
    %4482 = vmatprep.subr.mxu0 0.0
    %4483 = vmatpush1.xpose.msra.mxu0 0.0
    %4484 = vmatprep.subr.mxu0 0.0
    %4485 = vmatpush1.xpose.msra.mxu0 0.0
    %4486 = vmatprep.subr.mxu0 0.0
    %4487 = vmatpush1.xpose.msra.mxu0 0.0
    %4488 = vmatprep.subr.mxu0 0.0
    %4489 = vmatpush1.xpose.msra.mxu0 0.0
    %4490 = vmatprep.subr.mxu0 0.0
    %4491 = vmatpush1.xpose.msra.mxu0 0.0
    %4492 = vmatprep.subr.mxu0 0.0
    %4493 = vmatpush1.xpose.msra.mxu0 0.0
    %4494 = vmatprep.subr.mxu0 0.0
    %4495 = vmatpush1.xpose.msra.mxu0 0.0
    %4496 = vmatprep.subr.mxu0 0.0
    %4497 = vmatpush1.xpose.msra.mxu0 0.0
    %4498 = vmatprep.subr.mxu0 0.0
    %4499 = vmatpush1.xpose.msra.mxu0 0.0
    %4500 = vmatprep.subr.mxu0 0.0
    %4501 = vmatpush1.xpose.msra.mxu0 0.0
    %4502 = vmatprep.subr.mxu0 0.0
    %4503 = vmatpush1.xpose.msra.mxu0 0.0
    %4504 = vmatprep.subr.mxu0 0.0
    %4505 = vmatpush1.xpose.msra.mxu0 0.0
    %4506 = vmatprep.mubr.f32.mxu0 0.0
    %v4507 = vand.u32 %v4284, 4294901760
    %v4508 = vsub.f32 %v4284, %v4507
    %4509 = vmatmul.mubr.f32.gmra.mrb[0].mxu0 %v4508
    %v4510 = vpop.f32.mrb[0].mxu0
    %v4511 = vadd.f32 %v4437, %v4510
    %v4512 = vpop.f32.mrb[0].mxu0
    %4513 = vdwg.mxu0
    %4514 = vmatprep.subr.mxu0 0.0
    %v4515 = vand.u32 %v4286, 4294901760
    %4516 = vmatpush1.xpose.msra.mxu0 %v4515
    %4517 = vmatprep.subr.mxu0 0.0
    %4518 = vmatpush1.xpose.msra.mxu0 0.0
    %4519 = vmatprep.subr.mxu0 0.0
    %4520 = vmatpush1.xpose.msra.mxu0 0.0
    %4521 = vmatprep.subr.mxu0 0.0
    %4522 = vmatpush1.xpose.msra.mxu0 0.0
    %4523 = vmatprep.subr.mxu0 0.0
    %4524 = vmatpush1.xpose.msra.mxu0 0.0
    %4525 = vmatprep.subr.mxu0 0.0
    %4526 = vmatpush1.xpose.msra.mxu0 0.0
    %4527 = vmatprep.subr.mxu0 0.0
    %4528 = vmatpush1.xpose.msra.mxu0 0.0
    %4529 = vmatprep.subr.mxu0 0.0
    %4530 = vmatpush1.xpose.msra.mxu0 0.0
    %4531 = vmatprep.subr.mxu0 0.0
    %4532 = vmatpush1.xpose.msra.mxu0 0.0
    %4533 = vmatprep.subr.mxu0 0.0
    %4534 = vmatpush1.xpose.msra.mxu0 0.0
    %4535 = vmatprep.subr.mxu0 0.0
    %4536 = vmatpush1.xpose.msra.mxu0 0.0
    %4537 = vmatprep.subr.mxu0 0.0
    %4538 = vmatpush1.xpose.msra.mxu0 0.0
    %4539 = vmatprep.subr.mxu0 0.0
    %4540 = vmatpush1.xpose.msra.mxu0 0.0
    %4541 = vmatprep.subr.mxu0 0.0
    %4542 = vmatpush1.xpose.msra.mxu0 0.0
    %4543 = vmatprep.subr.mxu0 0.0
    %4544 = vmatpush1.xpose.msra.mxu0 0.0
    %4545 = vmatprep.subr.mxu0 0.0
    %4546 = vmatpush1.xpose.msra.mxu0 0.0
    %4547 = vmatprep.subr.mxu0 0.0
    %4548 = vmatpush1.xpose.msra.mxu0 0.0
    %4549 = vmatprep.subr.mxu0 0.0
    %4550 = vmatpush1.xpose.msra.mxu0 0.0
    %4551 = vmatprep.subr.mxu0 0.0
    %4552 = vmatpush1.xpose.msra.mxu0 0.0
    %4553 = vmatprep.subr.mxu0 0.0
    %4554 = vmatpush1.xpose.msra.mxu0 0.0
    %4555 = vmatprep.subr.mxu0 0.0
    %4556 = vmatpush1.xpose.msra.mxu0 0.0
    %4557 = vmatprep.subr.mxu0 0.0
    %4558 = vmatpush1.xpose.msra.mxu0 0.0
    %4559 = vmatprep.subr.mxu0 0.0
    %4560 = vmatpush1.xpose.msra.mxu0 0.0
    %4561 = vmatprep.subr.mxu0 0.0
    %4562 = vmatpush1.xpose.msra.mxu0 0.0
    %4563 = vmatprep.subr.mxu0 0.0
    %4564 = vmatpush1.xpose.msra.mxu0 0.0
    %4565 = vmatprep.subr.mxu0 0.0
    %4566 = vmatpush1.xpose.msra.mxu0 0.0
    %4567 = vmatprep.subr.mxu0 0.0
    %4568 = vmatpush1.xpose.msra.mxu0 0.0
    %4569 = vmatprep.subr.mxu0 0.0
    %4570 = vmatpush1.xpose.msra.mxu0 0.0
    %4571 = vmatprep.subr.mxu0 0.0
    %4572 = vmatpush1.xpose.msra.mxu0 0.0
    %4573 = vmatprep.subr.mxu0 0.0
    %4574 = vmatpush1.xpose.msra.mxu0 0.0
    %4575 = vmatprep.subr.mxu0 0.0
    %4576 = vmatpush1.xpose.msra.mxu0 0.0
    %4577 = vmatprep.subr.mxu0 0.0
    %4578 = vmatpush1.xpose.msra.mxu0 0.0
    %4579 = vmatprep.mubr.f32.mxu0 0.0
    %v4580 = vand.u32 %v4284, 4294901760
    %v4581 = vsub.f32 %v4284, %v4580
    %v4582 = vand.u32 %v4581, 4294901760
    %4583 = vmatmul.mubr.f32.gmra.mrb[0].mxu0 %v4582
    %v4584 = vpop.f32.mrb[0].mxu0
    %v4585 = vadd.f32 %v4511, %v4584
    %v4586 = vpop.f32.mrb[0].mxu0
    %4587 = vdwg.mxu0
    %4588 = vmatprep.subr.mxu0 0.0
    %v4589 = vand.u32 %v4286, 4294901760
    %v4590 = vsub.f32 %v4286, %v4589
    %v4591 = vand.u32 %v4590, 4294901760
    %4592 = vmatpush1.xpose.msra.mxu0 %v4591
    %4593 = vmatprep.subr.mxu0 0.0
    %4594 = vmatpush1.xpose.msra.mxu0 0.0
    %4595 = vmatprep.subr.mxu0 0.0
    %4596 = vmatpush1.xpose.msra.mxu0 0.0
    %4597 = vmatprep.subr.mxu0 0.0
    %4598 = vmatpush1.xpose.msra.mxu0 0.0
    %4599 = vmatprep.subr.mxu0 0.0
    %4600 = vmatpush1.xpose.msra.mxu0 0.0
    %4601 = vmatprep.subr.mxu0 0.0
    %4602 = vmatpush1.xpose.msra.mxu0 0.0
    %4603 = vmatprep.subr.mxu0 0.0
    %4604 = vmatpush1.xpose.msra.mxu0 0.0
    %4605 = vmatprep.subr.mxu0 0.0
    %4606 = vmatpush1.xpose.msra.mxu0 0.0
    %4607 = vmatprep.subr.mxu0 0.0
    %4608 = vmatpush1.xpose.msra.mxu0 0.0
    %4609 = vmatprep.subr.mxu0 0.0
    %4610 = vmatpush1.xpose.msra.mxu0 0.0
    %4611 = vmatprep.subr.mxu0 0.0
    %4612 = vmatpush1.xpose.msra.mxu0 0.0
    %4613 = vmatprep.subr.mxu0 0.0
    %4614 = vmatpush1.xpose.msra.mxu0 0.0
    %4615 = vmatprep.subr.mxu0 0.0
    %4616 = vmatpush1.xpose.msra.mxu0 0.0
    %4617 = vmatprep.subr.mxu0 0.0
    %4618 = vmatpush1.xpose.msra.mxu0 0.0
    %4619 = vmatprep.subr.mxu0 0.0
    %4620 = vmatpush1.xpose.msra.mxu0 0.0
    %4621 = vmatprep.subr.mxu0 0.0
    %4622 = vmatpush1.xpose.msra.mxu0 0.0
    %4623 = vmatprep.subr.mxu0 0.0
    %4624 = vmatpush1.xpose.msra.mxu0 0.0
    %4625 = vmatprep.subr.mxu0 0.0
    %4626 = vmatpush1.xpose.msra.mxu0 0.0
    %4627 = vmatprep.subr.mxu0 0.0
    %4628 = vmatpush1.xpose.msra.mxu0 0.0
    %4629 = vmatprep.subr.mxu0 0.0
    %4630 = vmatpush1.xpose.msra.mxu0 0.0
    %4631 = vmatprep.subr.mxu0 0.0
    %4632 = vmatpush1.xpose.msra.mxu0 0.0
    %4633 = vmatprep.subr.mxu0 0.0
    %4634 = vmatpush1.xpose.msra.mxu0 0.0
    %4635 = vmatprep.subr.mxu0 0.0
    %4636 = vmatpush1.xpose.msra.mxu0 0.0
    %4637 = vmatprep.subr.mxu0 0.0
    %4638 = vmatpush1.xpose.msra.mxu0 0.0
    %4639 = vmatprep.subr.mxu0 0.0
    %4640 = vmatpush1.xpose.msra.mxu0 0.0
    %4641 = vmatprep.subr.mxu0 0.0
    %4642 = vmatpush1.xpose.msra.mxu0 0.0
    %4643 = vmatprep.subr.mxu0 0.0
    %4644 = vmatpush1.xpose.msra.mxu0 0.0
    %4645 = vmatprep.subr.mxu0 0.0
    %4646 = vmatpush1.xpose.msra.mxu0 0.0
    %4647 = vmatprep.subr.mxu0 0.0
    %4648 = vmatpush1.xpose.msra.mxu0 0.0
    %4649 = vmatprep.subr.mxu0 0.0
    %4650 = vmatpush1.xpose.msra.mxu0 0.0
    %4651 = vmatprep.subr.mxu0 0.0
    %4652 = vmatpush1.xpose.msra.mxu0 0.0
    %4653 = vmatprep.subr.mxu0 0.0
    %4654 = vmatpush1.xpose.msra.mxu0 0.0
    %4655 = vmatprep.mubr.f32.mxu0 0.0
    %v4656 = vand.u32 %v4284, 4294901760
    %4657 = vmatmul.mubr.f32.gmra.mrb[0].mxu0 %v4656
    %v4658 = vpop.f32.mrb[0].mxu0
    %v4659 = vadd.f32 %v4585, %v4658
    %v4660 = vpop.f32.mrb[0].mxu0
    %4661 = vdwg.mxu0
    %4662 = vmatprep.subr.mxu0 0.0
    %v4663 = vand.u32 %v4286, 4294901760
    %4664 = vmatpush1.xpose.msra.mxu0 %v4663
    %4665 = vmatprep.subr.mxu0 0.0
    %4666 = vmatpush1.xpose.msra.mxu0 0.0
    %4667 = vmatprep.subr.mxu0 0.0
    %4668 = vmatpush1.xpose.msra.mxu0 0.0
    %4669 = vmatprep.subr.mxu0 0.0
    %4670 = vmatpush1.xpose.msra.mxu0 0.0
    %4671 = vmatprep.subr.mxu0 0.0
    %4672 = vmatpush1.xpose.msra.mxu0 0.0
    %4673 = vmatprep.subr.mxu0 0.0
    %4674 = vmatpush1.xpose.msra.mxu0 0.0
    %4675 = vmatprep.subr.mxu0 0.0
    %4676 = vmatpush1.xpose.msra.mxu0 0.0
    %4677 = vmatprep.subr.mxu0 0.0
    %4678 = vmatpush1.xpose.msra.mxu0 0.0
    %4679 = vmatprep.subr.mxu0 0.0
    %4680 = vmatpush1.xpose.msra.mxu0 0.0
    %4681 = vmatprep.subr.mxu0 0.0
    %4682 = vmatpush1.xpose.msra.mxu0 0.0
    %4683 = vmatprep.subr.mxu0 0.0
    %4684 = vmatpush1.xpose.msra.mxu0 0.0
    %4685 = vmatprep.subr.mxu0 0.0
    %4686 = vmatpush1.xpose.msra.mxu0 0.0
    %4687 = vmatprep.subr.mxu0 0.0
    %4688 = vmatpush1.xpose.msra.mxu0 0.0
    %4689 = vmatprep.subr.mxu0 0.0
    %4690 = vmatpush1.xpose.msra.mxu0 0.0
    %4691 = vmatprep.subr.mxu0 0.0
    %4692 = vmatpush1.xpose.msra.mxu0 0.0
    %4693 = vmatprep.subr.mxu0 0.0
    %4694 = vmatpush1.xpose.msra.mxu0 0.0
    %4695 = vmatprep.subr.mxu0 0.0
    %4696 = vmatpush1.xpose.msra.mxu0 0.0
    %4697 = vmatprep.subr.mxu0 0.0
    %4698 = vmatpush1.xpose.msra.mxu0 0.0
    %4699 = vmatprep.subr.mxu0 0.0
    %4700 = vmatpush1.xpose.msra.mxu0 0.0
    %4701 = vmatprep.subr.mxu0 0.0
    %4702 = vmatpush1.xpose.msra.mxu0 0.0
    %4703 = vmatprep.subr.mxu0 0.0
    %4704 = vmatpush1.xpose.msra.mxu0 0.0
    %4705 = vmatprep.subr.mxu0 0.0
    %4706 = vmatpush1.xpose.msra.mxu0 0.0
    %4707 = vmatprep.subr.mxu0 0.0
    %4708 = vmatpush1.xpose.msra.mxu0 0.0
    %4709 = vmatprep.subr.mxu0 0.0
    %4710 = vmatpush1.xpose.msra.mxu0 0.0
    %4711 = vmatprep.subr.mxu0 0.0
    %4712 = vmatpush1.xpose.msra.mxu0 0.0
    %4713 = vmatprep.subr.mxu0 0.0
    %4714 = vmatpush1.xpose.msra.mxu0 0.0
    %4715 = vmatprep.subr.mxu0 0.0
    %4716 = vmatpush1.xpose.msra.mxu0 0.0
    %4717 = vmatprep.subr.mxu0 0.0
    %4718 = vmatpush1.xpose.msra.mxu0 0.0
    %4719 = vmatprep.subr.mxu0 0.0
    %4720 = vmatpush1.xpose.msra.mxu0 0.0
    %4721 = vmatprep.subr.mxu0 0.0
    %4722 = vmatpush1.xpose.msra.mxu0 0.0
    %4723 = vmatprep.subr.mxu0 0.0
    %4724 = vmatpush1.xpose.msra.mxu0 0.0
    %4725 = vmatprep.subr.mxu0 0.0
    %4726 = vmatpush1.xpose.msra.mxu0 0.0
    %4727 = vmatprep.mubr.f32.mxu0 0.0
    %v4728 = vand.u32 %v4284, 4294901760
    %4729 = vmatmul.mubr.f32.gmra.mrb[0].mxu0 %v4728
    %v4730 = vpop.f32.mrb[0].mxu0
    %v4731 = vadd.f32 %v4659, %v4730
    %v4732 = vpop.f32.mrb[0].mxu0
    %4733 = vdwg.mxu0
    %v4734 = vmul.f32 %v1554, 0.25
    %v4735 = vmul.f32 %v2008, 0.25
    %v4736 = vmul.f32 %v2462, 0.25
    %v4737 = vmul.f32 %v2916, 0.25
    %v4738 = vmul.f32 %v3369, 0.25
    %v4739 = vmul.f32 %v3823, 0.25
    %v4740 = vmul.f32 %v4277, 0.25
    %v4741 = vmul.f32 %v4731, 0.25
    %vm4742 = vcmask 64512
    %v4743 = vsel %vm4742, %v4734, -inf
    %4744 = vmax.xlane.f32.xlu0 %v4743
    %v4745 = vpop.xlane.xlu0 %4744
    %v4746 = vsel %vm4742, %v4735, -inf
    %4747 = vmax.xlane.f32.xlu0 %v4746
    %v4748 = vpop.xlane.xlu0 %4747
    %v4749 = vsel %vm4742, %v4736, -inf
    %4750 = vmax.xlane.f32.xlu0 %v4749
    %v4751 = vpop.xlane.xlu0 %4750
    %v4752 = vsel %vm4742, %v4737, -inf
    %4753 = vmax.xlane.f32.xlu0 %v4752
    %v4754 = vpop.xlane.xlu0 %4753
    %v4755 = vsel %vm4742, %v4738, -inf
    %4756 = vmax.xlane.f32.xlu0 %v4755
    %v4757 = vpop.xlane.xlu0 %4756
    %v4758 = vsel %vm4742, %v4739, -inf
    %4759 = vmax.xlane.f32.xlu0 %v4758
    %v4760 = vpop.xlane.xlu0 %4759
    %v4761 = vsel %vm4742, %v4740, -inf
    %4762 = vmax.xlane.f32.xlu0 %v4761
    %v4763 = vpop.xlane.xlu0 %4762
    %v4764 = vsel %vm4742, %v4741, -inf
    %4765 = vmax.xlane.f32.xlu0 %v4764
    %v4766 = vpop.xlane.xlu0 %4765
    %v4767 = vsub.f32 %v4734, %v4745
    %v4768 = vsub.f32 %v4735, %v4748
    %v4769 = vsub.f32 %v4736, %v4751
    %v4770 = vsub.f32 %v4737, %v4754
    %v4771 = vsub.f32 %v4738, %v4757
    %v4772 = vsub.f32 %v4739, %v4760
    %v4773 = vsub.f32 %v4740, %v4763
    %v4774 = vsub.f32 %v4741, %v4766
    %v4775 = vmul.f32 %v4767, 1.442695
    %v4776 = vpow.pop %v4775
    %v4777 = vmul.f32 %v4768, 1.442695
    %v4778 = vpow.pop %v4777
    %v4779 = vmul.f32 %v4769, 1.442695
    %v4780 = vpow.pop %v4779
    %v4781 = vmul.f32 %v4770, 1.442695
    %v4782 = vpow.pop %v4781
    %v4783 = vmul.f32 %v4771, 1.442695
    %v4784 = vpow.pop %v4783
    %v4785 = vmul.f32 %v4772, 1.442695
    %v4786 = vpow.pop %v4785
    %v4787 = vmul.f32 %v4773, 1.442695
    %v4788 = vpow.pop %v4787
    %v4789 = vmul.f32 %v4774, 1.442695
    %v4790 = vpow.pop %v4789
    %v4791 = vsel %vm4742, %v4776, 0.0
    %4792 = vadd.xlane.f32.xlu0 %v4791
    %v4793 = vpop.xlane.xlu0 %4792
    %v4794 = vsel %vm4742, %v4778, 0.0
    %4795 = vadd.xlane.f32.xlu0 %v4794
    %v4796 = vpop.xlane.xlu0 %4795
    %v4797 = vsel %vm4742, %v4780, 0.0
    %4798 = vadd.xlane.f32.xlu0 %v4797
    %v4799 = vpop.xlane.xlu0 %4798
    %v4800 = vsel %vm4742, %v4782, 0.0
    %4801 = vadd.xlane.f32.xlu0 %v4800
    %v4802 = vpop.xlane.xlu0 %4801
    %v4803 = vsel %vm4742, %v4784, 0.0
    %4804 = vadd.xlane.f32.xlu0 %v4803
    %v4805 = vpop.xlane.xlu0 %4804
    %v4806 = vsel %vm4742, %v4786, 0.0
    %4807 = vadd.xlane.f32.xlu0 %v4806
    %v4808 = vpop.xlane.xlu0 %4807
    %v4809 = vsel %vm4742, %v4788, 0.0
    %4810 = vadd.xlane.f32.xlu0 %v4809
    %v4811 = vpop.xlane.xlu0 %4810
    %v4812 = vsel %vm4742, %v4790, 0.0
    %4813 = vadd.xlane.f32.xlu0 %v4812
    %v4814 = vpop.xlane.xlu0 %4813
    %v4815 = vrcp.pop %v4793
    %v4816 = vmul.f32 %v4776, %v4815
    %v4817 = vrcp.pop %v4796
    %v4818 = vmul.f32 %v4778, %v4817
    %v4819 = vrcp.pop %v4799
    %v4820 = vmul.f32 %v4780, %v4819
    %v4821 = vrcp.pop %v4802
    %v4822 = vmul.f32 %v4782, %v4821
    %v4823 = vrcp.pop %v4805
    %v4824 = vmul.f32 %v4784, %v4823
    %v4825 = vrcp.pop %v4808
    %v4826 = vmul.f32 %v4786, %v4825
    %v4827 = vrcp.pop %v4811
    %v4828 = vmul.f32 %v4788, %v4827
    %v4829 = vrcp.pop %v4814
    %v4830 = vmul.f32 %v4790, %v4829
    %v4831 = vld [vmem:[%s3] sm:$0xff]
    %v4832 = vld [vmem:[%s3 + $0x8] sm:$0xff]
    %v4833 = vld [vmem:[%s3 + $0x10] sm:$0xff]
    %v4834 = vld [vmem:[%s3 + $0x18] sm:$0xff]
    %v4835 = vld [vmem:[%s3 + $0x20] sm:$0xff]
    %v4836 = vld [vmem:[%s3 + $0x28] sm:$0xff]
    %v4837 = vld [vmem:[%s3 + $0x30] sm:$0xff]
    %v4838 = vld [vmem:[%s3 + $0x38] sm:$0xff]
    %vm4839 = vcmask 523264
    %v4841 = vsel %vm4839, %v4831, 0
    %v4844 = vsel %vm4839, %v4832, 0
    %v4847 = vsel %vm4839, %v4833, 0
    %v4850 = vsel %vm4839, %v4834, 0
    %v4853 = vsel %vm4839, %v4835, 0
    %v4856 = vsel %vm4839, %v4836, 0
    %v4859 = vsel %vm4839, %v4837, 0
    %v4862 = vsel %vm4839, %v4838, 0
    %4864 = vmatprep.subr.mxu0 0.0
    %v4865 = vand.u32 %v4816, 4294901760
    %4866 = vmatpush1.msra.mxu0 %v4865
    %4867 = vmatprep.subr.mxu0 0.0
    %v4868 = vand.u32 %v4818, 4294901760
    %4869 = vmatpush1.msra.mxu0 %v4868
    %4870 = vmatprep.subr.mxu0 0.0
    %v4871 = vand.u32 %v4820, 4294901760
    %4872 = vmatpush1.msra.mxu0 %v4871
    %4873 = vmatprep.subr.mxu0 0.0
    %v4874 = vand.u32 %v4822, 4294901760
    %4875 = vmatpush1.msra.mxu0 %v4874
    %4876 = vmatprep.subr.mxu0 0.0
    %v4877 = vand.u32 %v4824, 4294901760
    %4878 = vmatpush1.msra.mxu0 %v4877
    %4879 = vmatprep.subr.mxu0 0.0
    %v4880 = vand.u32 %v4826, 4294901760
    %4881 = vmatpush1.msra.mxu0 %v4880
    %4882 = vmatprep.subr.mxu0 0.0
    %v4883 = vand.u32 %v4828, 4294901760
    %4884 = vmatpush1.msra.mxu0 %v4883
    %4885 = vmatprep.subr.mxu0 0.0
    %v4886 = vand.u32 %v4830, 4294901760
    %4887 = vmatpush1.msra.mxu0 %v4886
    %4888 = vmatprep.subr.mxu0 0.0
    %4889 = vmatpush1.msra.mxu0 0.0
    %4890 = vmatprep.subr.mxu0 0.0
    %4891 = vmatpush1.msra.mxu0 0.0
    %4892 = vmatprep.subr.mxu0 0.0
    %4893 = vmatpush1.msra.mxu0 0.0
    %4894 = vmatprep.subr.mxu0 0.0
    %4895 = vmatpush1.msra.mxu0 0.0
    %4896 = vmatprep.subr.mxu0 0.0
    %4897 = vmatpush1.msra.mxu0 0.0
    %4898 = vmatprep.subr.mxu0 0.0
    %4899 = vmatpush1.msra.mxu0 0.0
    %4900 = vmatprep.subr.mxu0 0.0
    %4901 = vmatpush1.msra.mxu0 0.0
    %4902 = vmatprep.subr.mxu0 0.0
    %4903 = vmatpush1.msra.mxu0 0.0
    %4904 = vmatprep.subr.mxu0 0.0
    %4905 = vmatpush1.msra.mxu0 0.0
    %4906 = vmatprep.subr.mxu0 0.0
    %4907 = vmatpush1.msra.mxu0 0.0
    %4908 = vmatprep.subr.mxu0 0.0
    %4909 = vmatpush1.msra.mxu0 0.0
    %4910 = vmatprep.subr.mxu0 0.0
    %4911 = vmatpush1.msra.mxu0 0.0
    %4912 = vmatprep.subr.mxu0 0.0
    %4913 = vmatpush1.msra.mxu0 0.0
    %4914 = vmatprep.subr.mxu0 0.0
    %4915 = vmatpush1.msra.mxu0 0.0
    %4916 = vmatprep.subr.mxu0 0.0
    %4917 = vmatpush1.msra.mxu0 0.0
    %4918 = vmatprep.subr.mxu0 0.0
    %4919 = vmatpush1.msra.mxu0 0.0
    %4920 = vmatprep.subr.mxu0 0.0
    %4921 = vmatpush1.msra.mxu0 0.0
    %4922 = vmatprep.subr.mxu0 0.0
    %4923 = vmatpush1.msra.mxu0 0.0
    %4924 = vmatprep.subr.mxu0 0.0
    %4925 = vmatpush1.msra.mxu0 0.0
    %4926 = vmatprep.subr.mxu0 0.0
    %4927 = vmatpush1.msra.mxu0 0.0
    %4928 = vmatprep.subr.mxu0 0.0
    %4929 = vmatpush1.msra.mxu0 0.0
    %4930 = vmatprep.subr.mxu0 0.0
    %4931 = vmatpush1.msra.mxu0 0.0
    %4932 = vmatprep.subr.mxu0 0.0
    %4933 = vmatpush1.msra.mxu0 0.0
    %4934 = vmatprep.subr.mxu0 0.0
    %4935 = vmatpush1.msra.mxu0 0.0
    %4936 = vmatprep.mubr.f32.mxu0 0.0
    %v4937 = vand.u32 %v4841, 4294901760
    %v4938 = vsub.f32 %v4841, %v4937
    %v4939 = vand.u32 %v4938, 4294901760
    %v4940 = vsub.f32 %v4938, %v4939
    %v4941 = vand.u32 %v4940, 4294901760
    %4942 = vmatmul.mubr.f32.gmra.mrb[0].mxu0 %v4941
    %v4943 = vpop.f32.mrb[0].mxu0
    %v4944 = vadd.f32 0.0, %v4943
    %v4945 = vpop.f32.mrb[0].mxu0
    %4946 = vmatprep.mubr.f32.mxu0 0.0
    %v4947 = vand.u32 %v4844, 4294901760
    %v4948 = vsub.f32 %v4844, %v4947
    %v4949 = vand.u32 %v4948, 4294901760
    %v4950 = vsub.f32 %v4948, %v4949
    %v4951 = vand.u32 %v4950, 4294901760
    %4952 = vmatmul.mubr.f32.gmra.mrb[0].mxu0 %v4951
    %v4953 = vpop.f32.mrb[0].mxu0
    %v4954 = vadd.f32 0.0, %v4953
    %v4955 = vpop.f32.mrb[0].mxu0
    %4956 = vmatprep.mubr.f32.mxu0 0.0
    %v4957 = vand.u32 %v4847, 4294901760
    %v4958 = vsub.f32 %v4847, %v4957
    %v4959 = vand.u32 %v4958, 4294901760
    %v4960 = vsub.f32 %v4958, %v4959
    %v4961 = vand.u32 %v4960, 4294901760
    %4962 = vmatmul.mubr.f32.gmra.mrb[0].mxu0 %v4961
    %v4963 = vpop.f32.mrb[0].mxu0
    %v4964 = vadd.f32 0.0, %v4963
    %v4965 = vpop.f32.mrb[0].mxu0
    %4966 = vmatprep.mubr.f32.mxu0 0.0
    %v4967 = vand.u32 %v4850, 4294901760
    %v4968 = vsub.f32 %v4850, %v4967
    %v4969 = vand.u32 %v4968, 4294901760
    %v4970 = vsub.f32 %v4968, %v4969
    %v4971 = vand.u32 %v4970, 4294901760
    %4972 = vmatmul.mubr.f32.gmra.mrb[0].mxu0 %v4971
    %v4973 = vpop.f32.mrb[0].mxu0
    %v4974 = vadd.f32 0.0, %v4973
    %v4975 = vpop.f32.mrb[0].mxu0
    %4976 = vmatprep.mubr.f32.mxu0 0.0
    %v4977 = vand.u32 %v4853, 4294901760
    %v4978 = vsub.f32 %v4853, %v4977
    %v4979 = vand.u32 %v4978, 4294901760
    %v4980 = vsub.f32 %v4978, %v4979
    %v4981 = vand.u32 %v4980, 4294901760
    %4982 = vmatmul.mubr.f32.gmra.mrb[0].mxu0 %v4981
    %v4983 = vpop.f32.mrb[0].mxu0
    %v4984 = vadd.f32 0.0, %v4983
    %v4985 = vpop.f32.mrb[0].mxu0
    %4986 = vmatprep.mubr.f32.mxu0 0.0
    %v4987 = vand.u32 %v4856, 4294901760
    %v4988 = vsub.f32 %v4856, %v4987
    %v4989 = vand.u32 %v4988, 4294901760
    %v4990 = vsub.f32 %v4988, %v4989
    %v4991 = vand.u32 %v4990, 4294901760
    %4992 = vmatmul.mubr.f32.gmra.mrb[0].mxu0 %v4991
    %v4993 = vpop.f32.mrb[0].mxu0
    %v4994 = vadd.f32 0.0, %v4993
    %v4995 = vpop.f32.mrb[0].mxu0
    %4996 = vmatprep.mubr.f32.mxu0 0.0
    %v4997 = vand.u32 %v4859, 4294901760
    %v4998 = vsub.f32 %v4859, %v4997
    %v4999 = vand.u32 %v4998, 4294901760
    %v5000 = vsub.f32 %v4998, %v4999
    %v5001 = vand.u32 %v5000, 4294901760
    %5002 = vmatmul.mubr.f32.gmra.mrb[0].mxu0 %v5001
    %v5003 = vpop.f32.mrb[0].mxu0
    %v5004 = vadd.f32 0.0, %v5003
    %v5005 = vpop.f32.mrb[0].mxu0
    %5006 = vmatprep.mubr.f32.mxu0 0.0
    %v5007 = vand.u32 %v4862, 4294901760
    %v5008 = vsub.f32 %v4862, %v5007
    %v5009 = vand.u32 %v5008, 4294901760
    %v5010 = vsub.f32 %v5008, %v5009
    %v5011 = vand.u32 %v5010, 4294901760
    %5012 = vmatmul.mubr.f32.gmra.mrb[0].mxu0 %v5011
    %v5013 = vpop.f32.mrb[0].mxu0
    %v5014 = vadd.f32 0.0, %v5013
    %v5015 = vpop.f32.mrb[0].mxu0
    %5016 = vdwg.mxu0
    %5017 = vmatprep.subr.mxu0 0.0
    %v5018 = vand.u32 %v4816, 4294901760
    %v5019 = vsub.f32 %v4816, %v5018
    %v5020 = vand.u32 %v5019, 4294901760
    %v5021 = vsub.f32 %v5019, %v5020
    %v5022 = vand.u32 %v5021, 4294901760
    %5023 = vmatpush1.msra.mxu0 %v5022
    %5024 = vmatprep.subr.mxu0 0.0
    %v5025 = vand.u32 %v4818, 4294901760
    %v5026 = vsub.f32 %v4818, %v5025
    %v5027 = vand.u32 %v5026, 4294901760
    %v5028 = vsub.f32 %v5026, %v5027
    %v5029 = vand.u32 %v5028, 4294901760
    %5030 = vmatpush1.msra.mxu0 %v5029
    %5031 = vmatprep.subr.mxu0 0.0
    %v5032 = vand.u32 %v4820, 4294901760
    %v5033 = vsub.f32 %v4820, %v5032
    %v5034 = vand.u32 %v5033, 4294901760
    %v5035 = vsub.f32 %v5033, %v5034
    %v5036 = vand.u32 %v5035, 4294901760
    %5037 = vmatpush1.msra.mxu0 %v5036
    %5038 = vmatprep.subr.mxu0 0.0
    %v5039 = vand.u32 %v4822, 4294901760
    %v5040 = vsub.f32 %v4822, %v5039
    %v5041 = vand.u32 %v5040, 4294901760
    %v5042 = vsub.f32 %v5040, %v5041
    %v5043 = vand.u32 %v5042, 4294901760
    %5044 = vmatpush1.msra.mxu0 %v5043
    %5045 = vmatprep.subr.mxu0 0.0
    %v5046 = vand.u32 %v4824, 4294901760
    %v5047 = vsub.f32 %v4824, %v5046
    %v5048 = vand.u32 %v5047, 4294901760
    %v5049 = vsub.f32 %v5047, %v5048
    %v5050 = vand.u32 %v5049, 4294901760
    %5051 = vmatpush1.msra.mxu0 %v5050
    %5052 = vmatprep.subr.mxu0 0.0
    %v5053 = vand.u32 %v4826, 4294901760
    %v5054 = vsub.f32 %v4826, %v5053
    %v5055 = vand.u32 %v5054, 4294901760
    %v5056 = vsub.f32 %v5054, %v5055
    %v5057 = vand.u32 %v5056, 4294901760
    %5058 = vmatpush1.msra.mxu0 %v5057
    %5059 = vmatprep.subr.mxu0 0.0
    %v5060 = vand.u32 %v4828, 4294901760
    %v5061 = vsub.f32 %v4828, %v5060
    %v5062 = vand.u32 %v5061, 4294901760
    %v5063 = vsub.f32 %v5061, %v5062
    %v5064 = vand.u32 %v5063, 4294901760
    %5065 = vmatpush1.msra.mxu0 %v5064
    %5066 = vmatprep.subr.mxu0 0.0
    %v5067 = vand.u32 %v4830, 4294901760
    %v5068 = vsub.f32 %v4830, %v5067
    %v5069 = vand.u32 %v5068, 4294901760
    %v5070 = vsub.f32 %v5068, %v5069
    %v5071 = vand.u32 %v5070, 4294901760
    %5072 = vmatpush1.msra.mxu0 %v5071
    %5073 = vmatprep.subr.mxu0 0.0
    %5074 = vmatpush1.msra.mxu0 0.0
    %5075 = vmatprep.subr.mxu0 0.0
    %5076 = vmatpush1.msra.mxu0 0.0
    %5077 = vmatprep.subr.mxu0 0.0
    %5078 = vmatpush1.msra.mxu0 0.0
    %5079 = vmatprep.subr.mxu0 0.0
    %5080 = vmatpush1.msra.mxu0 0.0
    %5081 = vmatprep.subr.mxu0 0.0
    %5082 = vmatpush1.msra.mxu0 0.0
    %5083 = vmatprep.subr.mxu0 0.0
    %5084 = vmatpush1.msra.mxu0 0.0
    %5085 = vmatprep.subr.mxu0 0.0
    %5086 = vmatpush1.msra.mxu0 0.0
    %5087 = vmatprep.subr.mxu0 0.0
    %5088 = vmatpush1.msra.mxu0 0.0
    %5089 = vmatprep.subr.mxu0 0.0
    %5090 = vmatpush1.msra.mxu0 0.0
    %5091 = vmatprep.subr.mxu0 0.0
    %5092 = vmatpush1.msra.mxu0 0.0
    %5093 = vmatprep.subr.mxu0 0.0
    %5094 = vmatpush1.msra.mxu0 0.0
    %5095 = vmatprep.subr.mxu0 0.0
    %5096 = vmatpush1.msra.mxu0 0.0
    %5097 = vmatprep.subr.mxu0 0.0
    %5098 = vmatpush1.msra.mxu0 0.0
    %5099 = vmatprep.subr.mxu0 0.0
    %5100 = vmatpush1.msra.mxu0 0.0
    %5101 = vmatprep.subr.mxu0 0.0
    %5102 = vmatpush1.msra.mxu0 0.0
    %5103 = vmatprep.subr.mxu0 0.0
    %5104 = vmatpush1.msra.mxu0 0.0
    %5105 = vmatprep.subr.mxu0 0.0
    %5106 = vmatpush1.msra.mxu0 0.0
    %5107 = vmatprep.subr.mxu0 0.0
    %5108 = vmatpush1.msra.mxu0 0.0
    %5109 = vmatprep.subr.mxu0 0.0
    %5110 = vmatpush1.msra.mxu0 0.0
    %5111 = vmatprep.subr.mxu0 0.0
    %5112 = vmatpush1.msra.mxu0 0.0
    %5113 = vmatprep.subr.mxu0 0.0
    %5114 = vmatpush1.msra.mxu0 0.0
    %5115 = vmatprep.subr.mxu0 0.0
    %5116 = vmatpush1.msra.mxu0 0.0
    %5117 = vmatprep.subr.mxu0 0.0
    %5118 = vmatpush1.msra.mxu0 0.0
    %5119 = vmatprep.subr.mxu0 0.0
    %5120 = vmatpush1.msra.mxu0 0.0
    %5121 = vmatprep.mubr.f32.mxu0 0.0
    %v5122 = vand.u32 %v4841, 4294901760
    %5123 = vmatmul.mubr.f32.gmra.mrb[0].mxu0 %v5122
    %v5124 = vpop.f32.mrb[0].mxu0
    %v5125 = vadd.f32 %v4944, %v5124
    %v5126 = vpop.f32.mrb[0].mxu0
    %5127 = vmatprep.mubr.f32.mxu0 0.0
    %v5128 = vand.u32 %v4844, 4294901760
    %5129 = vmatmul.mubr.f32.gmra.mrb[0].mxu0 %v5128
    %v5130 = vpop.f32.mrb[0].mxu0
    %v5131 = vadd.f32 %v4954, %v5130
    %v5132 = vpop.f32.mrb[0].mxu0
    %5133 = vmatprep.mubr.f32.mxu0 0.0
    %v5134 = vand.u32 %v4847, 4294901760
    %5135 = vmatmul.mubr.f32.gmra.mrb[0].mxu0 %v5134
    %v5136 = vpop.f32.mrb[0].mxu0
    %v5137 = vadd.f32 %v4964, %v5136
    %v5138 = vpop.f32.mrb[0].mxu0
    %5139 = vmatprep.mubr.f32.mxu0 0.0
    %v5140 = vand.u32 %v4850, 4294901760
    %5141 = vmatmul.mubr.f32.gmra.mrb[0].mxu0 %v5140
    %v5142 = vpop.f32.mrb[0].mxu0
    %v5143 = vadd.f32 %v4974, %v5142
    %v5144 = vpop.f32.mrb[0].mxu0
    %5145 = vmatprep.mubr.f32.mxu0 0.0
    %v5146 = vand.u32 %v4853, 4294901760
    %5147 = vmatmul.mubr.f32.gmra.mrb[0].mxu0 %v5146
    %v5148 = vpop.f32.mrb[0].mxu0
    %v5149 = vadd.f32 %v4984, %v5148
    %v5150 = vpop.f32.mrb[0].mxu0
    %5151 = vmatprep.mubr.f32.mxu0 0.0
    %v5152 = vand.u32 %v4856, 4294901760
    %5153 = vmatmul.mubr.f32.gmra.mrb[0].mxu0 %v5152
    %v5154 = vpop.f32.mrb[0].mxu0
    %v5155 = vadd.f32 %v4994, %v5154
    %v5156 = vpop.f32.mrb[0].mxu0
    %5157 = vmatprep.mubr.f32.mxu0 0.0
    %v5158 = vand.u32 %v4859, 4294901760
    %5159 = vmatmul.mubr.f32.gmra.mrb[0].mxu0 %v5158
    %v5160 = vpop.f32.mrb[0].mxu0
    %v5161 = vadd.f32 %v5004, %v5160
    %v5162 = vpop.f32.mrb[0].mxu0
    %5163 = vmatprep.mubr.f32.mxu0 0.0
    %v5164 = vand.u32 %v4862, 4294901760
    %5165 = vmatmul.mubr.f32.gmra.mrb[0].mxu0 %v5164
    %v5166 = vpop.f32.mrb[0].mxu0
    %v5167 = vadd.f32 %v5014, %v5166
    %v5168 = vpop.f32.mrb[0].mxu0
    %5169 = vdwg.mxu0
    %5170 = vmatprep.subr.mxu0 0.0
    %v5171 = vand.u32 %v4816, 4294901760
    %v5172 = vsub.f32 %v4816, %v5171
    %5173 = vmatpush1.msra.mxu0 %v5172
    %5174 = vmatprep.subr.mxu0 0.0
    %v5175 = vand.u32 %v4818, 4294901760
    %v5176 = vsub.f32 %v4818, %v5175
    %5177 = vmatpush1.msra.mxu0 %v5176
    %5178 = vmatprep.subr.mxu0 0.0
    %v5179 = vand.u32 %v4820, 4294901760
    %v5180 = vsub.f32 %v4820, %v5179
    %5181 = vmatpush1.msra.mxu0 %v5180
    %5182 = vmatprep.subr.mxu0 0.0
    %v5183 = vand.u32 %v4822, 4294901760
    %v5184 = vsub.f32 %v4822, %v5183
    %5185 = vmatpush1.msra.mxu0 %v5184
    %5186 = vmatprep.subr.mxu0 0.0
    %v5187 = vand.u32 %v4824, 4294901760
    %v5188 = vsub.f32 %v4824, %v5187
    %5189 = vmatpush1.msra.mxu0 %v5188
    %5190 = vmatprep.subr.mxu0 0.0
    %v5191 = vand.u32 %v4826, 4294901760
    %v5192 = vsub.f32 %v4826, %v5191
    %5193 = vmatpush1.msra.mxu0 %v5192
    %5194 = vmatprep.subr.mxu0 0.0
    %v5195 = vand.u32 %v4828, 4294901760
    %v5196 = vsub.f32 %v4828, %v5195
    %5197 = vmatpush1.msra.mxu0 %v5196
    %5198 = vmatprep.subr.mxu0 0.0
    %v5199 = vand.u32 %v4830, 4294901760
    %v5200 = vsub.f32 %v4830, %v5199
    %5201 = vmatpush1.msra.mxu0 %v5200
    %5202 = vmatprep.subr.mxu0 0.0
    %5203 = vmatpush1.msra.mxu0 0.0
    %5204 = vmatprep.subr.mxu0 0.0
    %5205 = vmatpush1.msra.mxu0 0.0
    %5206 = vmatprep.subr.mxu0 0.0
    %5207 = vmatpush1.msra.mxu0 0.0
    %5208 = vmatprep.subr.mxu0 0.0
    %5209 = vmatpush1.msra.mxu0 0.0
    %5210 = vmatprep.subr.mxu0 0.0
    %5211 = vmatpush1.msra.mxu0 0.0
    %5212 = vmatprep.subr.mxu0 0.0
    %5213 = vmatpush1.msra.mxu0 0.0
    %5214 = vmatprep.subr.mxu0 0.0
    %5215 = vmatpush1.msra.mxu0 0.0
    %5216 = vmatprep.subr.mxu0 0.0
    %5217 = vmatpush1.msra.mxu0 0.0
    %5218 = vmatprep.subr.mxu0 0.0
    %5219 = vmatpush1.msra.mxu0 0.0
    %5220 = vmatprep.subr.mxu0 0.0
    %5221 = vmatpush1.msra.mxu0 0.0
    %5222 = vmatprep.subr.mxu0 0.0
    %5223 = vmatpush1.msra.mxu0 0.0
    %5224 = vmatprep.subr.mxu0 0.0
    %5225 = vmatpush1.msra.mxu0 0.0
    %5226 = vmatprep.subr.mxu0 0.0
    %5227 = vmatpush1.msra.mxu0 0.0
    %5228 = vmatprep.subr.mxu0 0.0
    %5229 = vmatpush1.msra.mxu0 0.0
    %5230 = vmatprep.subr.mxu0 0.0
    %5231 = vmatpush1.msra.mxu0 0.0
    %5232 = vmatprep.subr.mxu0 0.0
    %5233 = vmatpush1.msra.mxu0 0.0
    %5234 = vmatprep.subr.mxu0 0.0
    %5235 = vmatpush1.msra.mxu0 0.0
    %5236 = vmatprep.subr.mxu0 0.0
    %5237 = vmatpush1.msra.mxu0 0.0
    %5238 = vmatprep.subr.mxu0 0.0
    %5239 = vmatpush1.msra.mxu0 0.0
    %5240 = vmatprep.subr.mxu0 0.0
    %5241 = vmatpush1.msra.mxu0 0.0
    %5242 = vmatprep.subr.mxu0 0.0
    %5243 = vmatpush1.msra.mxu0 0.0
    %5244 = vmatprep.subr.mxu0 0.0
    %5245 = vmatpush1.msra.mxu0 0.0
    %5246 = vmatprep.subr.mxu0 0.0
    %5247 = vmatpush1.msra.mxu0 0.0
    %5248 = vmatprep.subr.mxu0 0.0
    %5249 = vmatpush1.msra.mxu0 0.0
    %5250 = vmatprep.mubr.f32.mxu0 0.0
    %v5251 = vand.u32 %v4841, 4294901760
    %v5252 = vsub.f32 %v4841, %v5251
    %5253 = vmatmul.mubr.f32.gmra.mrb[0].mxu0 %v5252
    %v5254 = vpop.f32.mrb[0].mxu0
    %v5255 = vadd.f32 %v5125, %v5254
    %v5256 = vpop.f32.mrb[0].mxu0
    %5257 = vmatprep.mubr.f32.mxu0 0.0
    %v5258 = vand.u32 %v4844, 4294901760
    %v5259 = vsub.f32 %v4844, %v5258
    %5260 = vmatmul.mubr.f32.gmra.mrb[0].mxu0 %v5259
    %v5261 = vpop.f32.mrb[0].mxu0
    %v5262 = vadd.f32 %v5131, %v5261
    %v5263 = vpop.f32.mrb[0].mxu0
    %5264 = vmatprep.mubr.f32.mxu0 0.0
    %v5265 = vand.u32 %v4847, 4294901760
    %v5266 = vsub.f32 %v4847, %v5265
    %5267 = vmatmul.mubr.f32.gmra.mrb[0].mxu0 %v5266
    %v5268 = vpop.f32.mrb[0].mxu0
    %v5269 = vadd.f32 %v5137, %v5268
    %v5270 = vpop.f32.mrb[0].mxu0
    %5271 = vmatprep.mubr.f32.mxu0 0.0
    %v5272 = vand.u32 %v4850, 4294901760
    %v5273 = vsub.f32 %v4850, %v5272
    %5274 = vmatmul.mubr.f32.gmra.mrb[0].mxu0 %v5273
    %v5275 = vpop.f32.mrb[0].mxu0
    %v5276 = vadd.f32 %v5143, %v5275
    %v5277 = vpop.f32.mrb[0].mxu0
    %5278 = vmatprep.mubr.f32.mxu0 0.0
    %v5279 = vand.u32 %v4853, 4294901760
    %v5280 = vsub.f32 %v4853, %v5279
    %5281 = vmatmul.mubr.f32.gmra.mrb[0].mxu0 %v5280
    %v5282 = vpop.f32.mrb[0].mxu0
    %v5283 = vadd.f32 %v5149, %v5282
    %v5284 = vpop.f32.mrb[0].mxu0
    %5285 = vmatprep.mubr.f32.mxu0 0.0
    %v5286 = vand.u32 %v4856, 4294901760
    %v5287 = vsub.f32 %v4856, %v5286
    %5288 = vmatmul.mubr.f32.gmra.mrb[0].mxu0 %v5287
    %v5289 = vpop.f32.mrb[0].mxu0
    %v5290 = vadd.f32 %v5155, %v5289
    %v5291 = vpop.f32.mrb[0].mxu0
    %5292 = vmatprep.mubr.f32.mxu0 0.0
    %v5293 = vand.u32 %v4859, 4294901760
    %v5294 = vsub.f32 %v4859, %v5293
    %5295 = vmatmul.mubr.f32.gmra.mrb[0].mxu0 %v5294
    %v5296 = vpop.f32.mrb[0].mxu0
    %v5297 = vadd.f32 %v5161, %v5296
    %v5298 = vpop.f32.mrb[0].mxu0
    %5299 = vmatprep.mubr.f32.mxu0 0.0
    %v5300 = vand.u32 %v4862, 4294901760
    %v5301 = vsub.f32 %v4862, %v5300
    %5302 = vmatmul.mubr.f32.gmra.mrb[0].mxu0 %v5301
    %v5303 = vpop.f32.mrb[0].mxu0
    %v5304 = vadd.f32 %v5167, %v5303
    %v5305 = vpop.f32.mrb[0].mxu0
    %5306 = vdwg.mxu0
    %5307 = vmatprep.subr.mxu0 0.0
    %v5308 = vand.u32 %v4816, 4294901760
    %5309 = vmatpush1.msra.mxu0 %v5308
    %5310 = vmatprep.subr.mxu0 0.0
    %v5311 = vand.u32 %v4818, 4294901760
    %5312 = vmatpush1.msra.mxu0 %v5311
    %5313 = vmatprep.subr.mxu0 0.0
    %v5314 = vand.u32 %v4820, 4294901760
    %5315 = vmatpush1.msra.mxu0 %v5314
    %5316 = vmatprep.subr.mxu0 0.0
    %v5317 = vand.u32 %v4822, 4294901760
    %5318 = vmatpush1.msra.mxu0 %v5317
    %5319 = vmatprep.subr.mxu0 0.0
    %v5320 = vand.u32 %v4824, 4294901760
    %5321 = vmatpush1.msra.mxu0 %v5320
    %5322 = vmatprep.subr.mxu0 0.0
    %v5323 = vand.u32 %v4826, 4294901760
    %5324 = vmatpush1.msra.mxu0 %v5323
    %5325 = vmatprep.subr.mxu0 0.0
    %v5326 = vand.u32 %v4828, 4294901760
    %5327 = vmatpush1.msra.mxu0 %v5326
    %5328 = vmatprep.subr.mxu0 0.0
    %v5329 = vand.u32 %v4830, 4294901760
    %5330 = vmatpush1.msra.mxu0 %v5329
    %5331 = vmatprep.subr.mxu0 0.0
    %5332 = vmatpush1.msra.mxu0 0.0
    %5333 = vmatprep.subr.mxu0 0.0
    %5334 = vmatpush1.msra.mxu0 0.0
    %5335 = vmatprep.subr.mxu0 0.0
    %5336 = vmatpush1.msra.mxu0 0.0
    %5337 = vmatprep.subr.mxu0 0.0
    %5338 = vmatpush1.msra.mxu0 0.0
    %5339 = vmatprep.subr.mxu0 0.0
    %5340 = vmatpush1.msra.mxu0 0.0
    %5341 = vmatprep.subr.mxu0 0.0
    %5342 = vmatpush1.msra.mxu0 0.0
    %5343 = vmatprep.subr.mxu0 0.0
    %5344 = vmatpush1.msra.mxu0 0.0
    %5345 = vmatprep.subr.mxu0 0.0
    %5346 = vmatpush1.msra.mxu0 0.0
    %5347 = vmatprep.subr.mxu0 0.0
    %5348 = vmatpush1.msra.mxu0 0.0
    %5349 = vmatprep.subr.mxu0 0.0
    %5350 = vmatpush1.msra.mxu0 0.0
    %5351 = vmatprep.subr.mxu0 0.0
    %5352 = vmatpush1.msra.mxu0 0.0
    %5353 = vmatprep.subr.mxu0 0.0
    %5354 = vmatpush1.msra.mxu0 0.0
    %5355 = vmatprep.subr.mxu0 0.0
    %5356 = vmatpush1.msra.mxu0 0.0
    %5357 = vmatprep.subr.mxu0 0.0
    %5358 = vmatpush1.msra.mxu0 0.0
    %5359 = vmatprep.subr.mxu0 0.0
    %5360 = vmatpush1.msra.mxu0 0.0
    %5361 = vmatprep.subr.mxu0 0.0
    %5362 = vmatpush1.msra.mxu0 0.0
    %5363 = vmatprep.subr.mxu0 0.0
    %5364 = vmatpush1.msra.mxu0 0.0
    %5365 = vmatprep.subr.mxu0 0.0
    %5366 = vmatpush1.msra.mxu0 0.0
    %5367 = vmatprep.subr.mxu0 0.0
    %5368 = vmatpush1.msra.mxu0 0.0
    %5369 = vmatprep.subr.mxu0 0.0
    %5370 = vmatpush1.msra.mxu0 0.0
    %5371 = vmatprep.subr.mxu0 0.0
    %5372 = vmatpush1.msra.mxu0 0.0
    %5373 = vmatprep.subr.mxu0 0.0
    %5374 = vmatpush1.msra.mxu0 0.0
    %5375 = vmatprep.subr.mxu0 0.0
    %5376 = vmatpush1.msra.mxu0 0.0
    %5377 = vmatprep.subr.mxu0 0.0
    %5378 = vmatpush1.msra.mxu0 0.0
    %5379 = vmatprep.mubr.f32.mxu0 0.0
    %v5380 = vand.u32 %v4841, 4294901760
    %v5381 = vsub.f32 %v4841, %v5380
    %v5382 = vand.u32 %v5381, 4294901760
    %5383 = vmatmul.mubr.f32.gmra.mrb[0].mxu0 %v5382
    %v5384 = vpop.f32.mrb[0].mxu0
    %v5385 = vadd.f32 %v5255, %v5384
    %v5386 = vpop.f32.mrb[0].mxu0
    %5387 = vmatprep.mubr.f32.mxu0 0.0
    %v5388 = vand.u32 %v4844, 4294901760
    %v5389 = vsub.f32 %v4844, %v5388
    %v5390 = vand.u32 %v5389, 4294901760
    %5391 = vmatmul.mubr.f32.gmra.mrb[0].mxu0 %v5390
    %v5392 = vpop.f32.mrb[0].mxu0
    %v5393 = vadd.f32 %v5262, %v5392
    %v5394 = vpop.f32.mrb[0].mxu0
    %5395 = vmatprep.mubr.f32.mxu0 0.0
    %v5396 = vand.u32 %v4847, 4294901760
    %v5397 = vsub.f32 %v4847, %v5396
    %v5398 = vand.u32 %v5397, 4294901760
    %5399 = vmatmul.mubr.f32.gmra.mrb[0].mxu0 %v5398
    %v5400 = vpop.f32.mrb[0].mxu0
    %v5401 = vadd.f32 %v5269, %v5400
    %v5402 = vpop.f32.mrb[0].mxu0
    %5403 = vmatprep.mubr.f32.mxu0 0.0
    %v5404 = vand.u32 %v4850, 4294901760
    %v5405 = vsub.f32 %v4850, %v5404
    %v5406 = vand.u32 %v5405, 4294901760
    %5407 = vmatmul.mubr.f32.gmra.mrb[0].mxu0 %v5406
    %v5408 = vpop.f32.mrb[0].mxu0
    %v5409 = vadd.f32 %v5276, %v5408
    %v5410 = vpop.f32.mrb[0].mxu0
    %5411 = vmatprep.mubr.f32.mxu0 0.0
    %v5412 = vand.u32 %v4853, 4294901760
    %v5413 = vsub.f32 %v4853, %v5412
    %v5414 = vand.u32 %v5413, 4294901760
    %5415 = vmatmul.mubr.f32.gmra.mrb[0].mxu0 %v5414
    %v5416 = vpop.f32.mrb[0].mxu0
    %v5417 = vadd.f32 %v5283, %v5416
    %v5418 = vpop.f32.mrb[0].mxu0
    %5419 = vmatprep.mubr.f32.mxu0 0.0
    %v5420 = vand.u32 %v4856, 4294901760
    %v5421 = vsub.f32 %v4856, %v5420
    %v5422 = vand.u32 %v5421, 4294901760
    %5423 = vmatmul.mubr.f32.gmra.mrb[0].mxu0 %v5422
    %v5424 = vpop.f32.mrb[0].mxu0
    %v5425 = vadd.f32 %v5290, %v5424
    %v5426 = vpop.f32.mrb[0].mxu0
    %5427 = vmatprep.mubr.f32.mxu0 0.0
    %v5428 = vand.u32 %v4859, 4294901760
    %v5429 = vsub.f32 %v4859, %v5428
    %v5430 = vand.u32 %v5429, 4294901760
    %5431 = vmatmul.mubr.f32.gmra.mrb[0].mxu0 %v5430
    %v5432 = vpop.f32.mrb[0].mxu0
    %v5433 = vadd.f32 %v5297, %v5432
    %v5434 = vpop.f32.mrb[0].mxu0
    %5435 = vmatprep.mubr.f32.mxu0 0.0
    %v5436 = vand.u32 %v4862, 4294901760
    %v5437 = vsub.f32 %v4862, %v5436
    %v5438 = vand.u32 %v5437, 4294901760
    %5439 = vmatmul.mubr.f32.gmra.mrb[0].mxu0 %v5438
    %v5440 = vpop.f32.mrb[0].mxu0
    %v5441 = vadd.f32 %v5304, %v5440
    %v5442 = vpop.f32.mrb[0].mxu0
    %5443 = vdwg.mxu0
    %5444 = vmatprep.subr.mxu0 0.0
    %v5445 = vand.u32 %v4816, 4294901760
    %v5446 = vsub.f32 %v4816, %v5445
    %v5447 = vand.u32 %v5446, 4294901760
    %5448 = vmatpush1.msra.mxu0 %v5447
    %5449 = vmatprep.subr.mxu0 0.0
    %v5450 = vand.u32 %v4818, 4294901760
    %v5451 = vsub.f32 %v4818, %v5450
    %v5452 = vand.u32 %v5451, 4294901760
    %5453 = vmatpush1.msra.mxu0 %v5452
    %5454 = vmatprep.subr.mxu0 0.0
    %v5455 = vand.u32 %v4820, 4294901760
    %v5456 = vsub.f32 %v4820, %v5455
    %v5457 = vand.u32 %v5456, 4294901760
    %5458 = vmatpush1.msra.mxu0 %v5457
    %5459 = vmatprep.subr.mxu0 0.0
    %v5460 = vand.u32 %v4822, 4294901760
    %v5461 = vsub.f32 %v4822, %v5460
    %v5462 = vand.u32 %v5461, 4294901760
    %5463 = vmatpush1.msra.mxu0 %v5462
    %5464 = vmatprep.subr.mxu0 0.0
    %v5465 = vand.u32 %v4824, 4294901760
    %v5466 = vsub.f32 %v4824, %v5465
    %v5467 = vand.u32 %v5466, 4294901760
    %5468 = vmatpush1.msra.mxu0 %v5467
    %5469 = vmatprep.subr.mxu0 0.0
    %v5470 = vand.u32 %v4826, 4294901760
    %v5471 = vsub.f32 %v4826, %v5470
    %v5472 = vand.u32 %v5471, 4294901760
    %5473 = vmatpush1.msra.mxu0 %v5472
    %5474 = vmatprep.subr.mxu0 0.0
    %v5475 = vand.u32 %v4828, 4294901760
    %v5476 = vsub.f32 %v4828, %v5475
    %v5477 = vand.u32 %v5476, 4294901760
    %5478 = vmatpush1.msra.mxu0 %v5477
    %5479 = vmatprep.subr.mxu0 0.0
    %v5480 = vand.u32 %v4830, 4294901760
    %v5481 = vsub.f32 %v4830, %v5480
    %v5482 = vand.u32 %v5481, 4294901760
    %5483 = vmatpush1.msra.mxu0 %v5482
    %5484 = vmatprep.subr.mxu0 0.0
    %5485 = vmatpush1.msra.mxu0 0.0
    %5486 = vmatprep.subr.mxu0 0.0
    %5487 = vmatpush1.msra.mxu0 0.0
    %5488 = vmatprep.subr.mxu0 0.0
    %5489 = vmatpush1.msra.mxu0 0.0
    %5490 = vmatprep.subr.mxu0 0.0
    %5491 = vmatpush1.msra.mxu0 0.0
    %5492 = vmatprep.subr.mxu0 0.0
    %5493 = vmatpush1.msra.mxu0 0.0
    %5494 = vmatprep.subr.mxu0 0.0
    %5495 = vmatpush1.msra.mxu0 0.0
    %5496 = vmatprep.subr.mxu0 0.0
    %5497 = vmatpush1.msra.mxu0 0.0
    %5498 = vmatprep.subr.mxu0 0.0
    %5499 = vmatpush1.msra.mxu0 0.0
    %5500 = vmatprep.subr.mxu0 0.0
    %5501 = vmatpush1.msra.mxu0 0.0
    %5502 = vmatprep.subr.mxu0 0.0
    %5503 = vmatpush1.msra.mxu0 0.0
    %5504 = vmatprep.subr.mxu0 0.0
    %5505 = vmatpush1.msra.mxu0 0.0
    %5506 = vmatprep.subr.mxu0 0.0
    %5507 = vmatpush1.msra.mxu0 0.0
    %5508 = vmatprep.subr.mxu0 0.0
    %5509 = vmatpush1.msra.mxu0 0.0
    %5510 = vmatprep.subr.mxu0 0.0
    %5511 = vmatpush1.msra.mxu0 0.0
    %5512 = vmatprep.subr.mxu0 0.0
    %5513 = vmatpush1.msra.mxu0 0.0
    %5514 = vmatprep.subr.mxu0 0.0
    %5515 = vmatpush1.msra.mxu0 0.0
    %5516 = vmatprep.subr.mxu0 0.0
    %5517 = vmatpush1.msra.mxu0 0.0
    %5518 = vmatprep.subr.mxu0 0.0
    %5519 = vmatpush1.msra.mxu0 0.0
    %5520 = vmatprep.subr.mxu0 0.0
    %5521 = vmatpush1.msra.mxu0 0.0
    %5522 = vmatprep.subr.mxu0 0.0
    %5523 = vmatpush1.msra.mxu0 0.0
    %5524 = vmatprep.subr.mxu0 0.0
    %5525 = vmatpush1.msra.mxu0 0.0
    %5526 = vmatprep.subr.mxu0 0.0
    %5527 = vmatpush1.msra.mxu0 0.0
    %5528 = vmatprep.subr.mxu0 0.0
    %5529 = vmatpush1.msra.mxu0 0.0
    %5530 = vmatprep.subr.mxu0 0.0
    %5531 = vmatpush1.msra.mxu0 0.0
    %5532 = vmatprep.mubr.f32.mxu0 0.0
    %v5533 = vand.u32 %v4841, 4294901760
    %5534 = vmatmul.mubr.f32.gmra.mrb[0].mxu0 %v5533
    %v5535 = vpop.f32.mrb[0].mxu0
    %v5536 = vadd.f32 %v5385, %v5535
    %v5537 = vpop.f32.mrb[0].mxu0
    %5538 = vmatprep.mubr.f32.mxu0 0.0
    %v5539 = vand.u32 %v4844, 4294901760
    %5540 = vmatmul.mubr.f32.gmra.mrb[0].mxu0 %v5539
    %v5541 = vpop.f32.mrb[0].mxu0
    %v5542 = vadd.f32 %v5393, %v5541
    %v5543 = vpop.f32.mrb[0].mxu0
    %5544 = vmatprep.mubr.f32.mxu0 0.0
    %v5545 = vand.u32 %v4847, 4294901760
    %5546 = vmatmul.mubr.f32.gmra.mrb[0].mxu0 %v5545
    %v5547 = vpop.f32.mrb[0].mxu0
    %v5548 = vadd.f32 %v5401, %v5547
    %v5549 = vpop.f32.mrb[0].mxu0
    %5550 = vmatprep.mubr.f32.mxu0 0.0
    %v5551 = vand.u32 %v4850, 4294901760
    %5552 = vmatmul.mubr.f32.gmra.mrb[0].mxu0 %v5551
    %v5553 = vpop.f32.mrb[0].mxu0
    %v5554 = vadd.f32 %v5409, %v5553
    %v5555 = vpop.f32.mrb[0].mxu0
    %5556 = vmatprep.mubr.f32.mxu0 0.0
    %v5557 = vand.u32 %v4853, 4294901760
    %5558 = vmatmul.mubr.f32.gmra.mrb[0].mxu0 %v5557
    %v5559 = vpop.f32.mrb[0].mxu0
    %v5560 = vadd.f32 %v5417, %v5559
    %v5561 = vpop.f32.mrb[0].mxu0
    %5562 = vmatprep.mubr.f32.mxu0 0.0
    %v5563 = vand.u32 %v4856, 4294901760
    %5564 = vmatmul.mubr.f32.gmra.mrb[0].mxu0 %v5563
    %v5565 = vpop.f32.mrb[0].mxu0
    %v5566 = vadd.f32 %v5425, %v5565
    %v5567 = vpop.f32.mrb[0].mxu0
    %5568 = vmatprep.mubr.f32.mxu0 0.0
    %v5569 = vand.u32 %v4859, 4294901760
    %5570 = vmatmul.mubr.f32.gmra.mrb[0].mxu0 %v5569
    %v5571 = vpop.f32.mrb[0].mxu0
    %v5572 = vadd.f32 %v5433, %v5571
    %v5573 = vpop.f32.mrb[0].mxu0
    %5574 = vmatprep.mubr.f32.mxu0 0.0
    %v5575 = vand.u32 %v4862, 4294901760
    %5576 = vmatmul.mubr.f32.gmra.mrb[0].mxu0 %v5575
    %v5577 = vpop.f32.mrb[0].mxu0
    %v5578 = vadd.f32 %v5441, %v5577
    %v5579 = vpop.f32.mrb[0].mxu0
    %5580 = vdwg.mxu0
    %5581 = vmatprep.subr.mxu0 0.0
    %v5582 = vand.u32 %v4816, 4294901760
    %5583 = vmatpush1.msra.mxu0 %v5582
    %5584 = vmatprep.subr.mxu0 0.0
    %v5585 = vand.u32 %v4818, 4294901760
    %5586 = vmatpush1.msra.mxu0 %v5585
    %5587 = vmatprep.subr.mxu0 0.0
    %v5588 = vand.u32 %v4820, 4294901760
    %5589 = vmatpush1.msra.mxu0 %v5588
    %5590 = vmatprep.subr.mxu0 0.0
    %v5591 = vand.u32 %v4822, 4294901760
    %5592 = vmatpush1.msra.mxu0 %v5591
    %5593 = vmatprep.subr.mxu0 0.0
    %v5594 = vand.u32 %v4824, 4294901760
    %5595 = vmatpush1.msra.mxu0 %v5594
    %5596 = vmatprep.subr.mxu0 0.0
    %v5597 = vand.u32 %v4826, 4294901760
    %5598 = vmatpush1.msra.mxu0 %v5597
    %5599 = vmatprep.subr.mxu0 0.0
    %v5600 = vand.u32 %v4828, 4294901760
    %5601 = vmatpush1.msra.mxu0 %v5600
    %5602 = vmatprep.subr.mxu0 0.0
    %v5603 = vand.u32 %v4830, 4294901760
    %5604 = vmatpush1.msra.mxu0 %v5603
    %5605 = vmatprep.subr.mxu0 0.0
    %5606 = vmatpush1.msra.mxu0 0.0
    %5607 = vmatprep.subr.mxu0 0.0
    %5608 = vmatpush1.msra.mxu0 0.0
    %5609 = vmatprep.subr.mxu0 0.0
    %5610 = vmatpush1.msra.mxu0 0.0
    %5611 = vmatprep.subr.mxu0 0.0
    %5612 = vmatpush1.msra.mxu0 0.0
    %5613 = vmatprep.subr.mxu0 0.0
    %5614 = vmatpush1.msra.mxu0 0.0
    %5615 = vmatprep.subr.mxu0 0.0
    %5616 = vmatpush1.msra.mxu0 0.0
    %5617 = vmatprep.subr.mxu0 0.0
    %5618 = vmatpush1.msra.mxu0 0.0
    %5619 = vmatprep.subr.mxu0 0.0
    %5620 = vmatpush1.msra.mxu0 0.0
    %5621 = vmatprep.subr.mxu0 0.0
    %5622 = vmatpush1.msra.mxu0 0.0
    %5623 = vmatprep.subr.mxu0 0.0
    %5624 = vmatpush1.msra.mxu0 0.0
    %5625 = vmatprep.subr.mxu0 0.0
    %5626 = vmatpush1.msra.mxu0 0.0
    %5627 = vmatprep.subr.mxu0 0.0
    %5628 = vmatpush1.msra.mxu0 0.0
    %5629 = vmatprep.subr.mxu0 0.0
    %5630 = vmatpush1.msra.mxu0 0.0
    %5631 = vmatprep.subr.mxu0 0.0
    %5632 = vmatpush1.msra.mxu0 0.0
    %5633 = vmatprep.subr.mxu0 0.0
    %5634 = vmatpush1.msra.mxu0 0.0
    %5635 = vmatprep.subr.mxu0 0.0
    %5636 = vmatpush1.msra.mxu0 0.0
    %5637 = vmatprep.subr.mxu0 0.0
    %5638 = vmatpush1.msra.mxu0 0.0
    %5639 = vmatprep.subr.mxu0 0.0
    %5640 = vmatpush1.msra.mxu0 0.0
    %5641 = vmatprep.subr.mxu0 0.0
    %5642 = vmatpush1.msra.mxu0 0.0
    %5643 = vmatprep.subr.mxu0 0.0
    %5644 = vmatpush1.msra.mxu0 0.0
    %5645 = vmatprep.subr.mxu0 0.0
    %5646 = vmatpush1.msra.mxu0 0.0
    %5647 = vmatprep.subr.mxu0 0.0
    %5648 = vmatpush1.msra.mxu0 0.0
    %5649 = vmatprep.subr.mxu0 0.0
    %5650 = vmatpush1.msra.mxu0 0.0
    %5651 = vmatprep.subr.mxu0 0.0
    %5652 = vmatpush1.msra.mxu0 0.0
    %5653 = vmatprep.mubr.f32.mxu0 0.0
    %v5654 = vand.u32 %v4841, 4294901760
    %5655 = vmatmul.mubr.f32.gmra.mrb[0].mxu0 %v5654
    %v5656 = vpop.f32.mrb[0].mxu0
    %v5657 = vadd.f32 %v5536, %v5656
    %v5658 = vpop.f32.mrb[0].mxu0
    %5659 = vmatprep.mubr.f32.mxu0 0.0
    %v5660 = vand.u32 %v4844, 4294901760
    %5661 = vmatmul.mubr.f32.gmra.mrb[0].mxu0 %v5660
    %v5662 = vpop.f32.mrb[0].mxu0
    %v5663 = vadd.f32 %v5542, %v5662
    %v5664 = vpop.f32.mrb[0].mxu0
    %5665 = vmatprep.mubr.f32.mxu0 0.0
    %v5666 = vand.u32 %v4847, 4294901760
    %5667 = vmatmul.mubr.f32.gmra.mrb[0].mxu0 %v5666
    %v5668 = vpop.f32.mrb[0].mxu0
    %v5669 = vadd.f32 %v5548, %v5668
    %v5670 = vpop.f32.mrb[0].mxu0
    %5671 = vmatprep.mubr.f32.mxu0 0.0
    %v5672 = vand.u32 %v4850, 4294901760
    %5673 = vmatmul.mubr.f32.gmra.mrb[0].mxu0 %v5672
    %v5674 = vpop.f32.mrb[0].mxu0
    %v5675 = vadd.f32 %v5554, %v5674
    %v5676 = vpop.f32.mrb[0].mxu0
    %5677 = vmatprep.mubr.f32.mxu0 0.0
    %v5678 = vand.u32 %v4853, 4294901760
    %5679 = vmatmul.mubr.f32.gmra.mrb[0].mxu0 %v5678
    %v5680 = vpop.f32.mrb[0].mxu0
    %v5681 = vadd.f32 %v5560, %v5680
    %v5682 = vpop.f32.mrb[0].mxu0
    %5683 = vmatprep.mubr.f32.mxu0 0.0
    %v5684 = vand.u32 %v4856, 4294901760
    %5685 = vmatmul.mubr.f32.gmra.mrb[0].mxu0 %v5684
    %v5686 = vpop.f32.mrb[0].mxu0
    %v5687 = vadd.f32 %v5566, %v5686
    %v5688 = vpop.f32.mrb[0].mxu0
    %5689 = vmatprep.mubr.f32.mxu0 0.0
    %v5690 = vand.u32 %v4859, 4294901760
    %5691 = vmatmul.mubr.f32.gmra.mrb[0].mxu0 %v5690
    %v5692 = vpop.f32.mrb[0].mxu0
    %v5693 = vadd.f32 %v5572, %v5692
    %v5694 = vpop.f32.mrb[0].mxu0
    %5695 = vmatprep.mubr.f32.mxu0 0.0
    %v5696 = vand.u32 %v4862, 4294901760
    %5697 = vmatmul.mubr.f32.gmra.mrb[0].mxu0 %v5696
    %v5698 = vpop.f32.mrb[0].mxu0
    %v5699 = vadd.f32 %v5578, %v5698
    %v5700 = vpop.f32.mrb[0].mxu0
    %5701 = vdwg.mxu0
    %v5702 = vld [vmem:[%s4] sm:$0xff]
    %v5703 = vld [vmem:[%s4 + $0x8] sm:$0xff]
    %v5704 = vld [vmem:[%s4 + $0x10] sm:$0xff]
    %v5705 = vld [vmem:[%s4 + $0x18] sm:$0xff]
    %v5706 = vld [vmem:[%s4 + $0x20] sm:$0xff]
    %v5707 = vld [vmem:[%s4 + $0x28] sm:$0xff]
    %v5708 = vld [vmem:[%s4 + $0x30] sm:$0xff]
    %v5709 = vld [vmem:[%s4 + $0x38] sm:$0xff]
    %v5710 = vmul.f32 %v5657, %v5657
    %v5711 = vmul.f32 %v5663, %v5663
    %v5712 = vmul.f32 %v5669, %v5669
    %v5713 = vmul.f32 %v5675, %v5675
    %v5714 = vmul.f32 %v5681, %v5681
    %v5715 = vmul.f32 %v5687, %v5687
    %v5716 = vmul.f32 %v5693, %v5693
    %v5717 = vmul.f32 %v5699, %v5699
    %v5719 = vsel %vm4839, %v5702, 0
    %v5722 = vsel %vm4839, %v5703, 0
    %v5725 = vsel %vm4839, %v5704, 0
    %v5728 = vsel %vm4839, %v5705, 0
    %v5731 = vsel %vm4839, %v5706, 0
    %v5734 = vsel %vm4839, %v5707, 0
    %v5737 = vsel %vm4839, %v5708, 0
    %v5740 = vsel %vm4839, %v5709, 0
    %5742 = vmatprep.subr.mxu0 0.0
    %v5743 = vand.u32 %v5710, 4294901760
    %5744 = vmatpush1.msra.mxu0 %v5743
    %5745 = vmatprep.subr.mxu0 0.0
    %v5746 = vand.u32 %v5711, 4294901760
    %5747 = vmatpush1.msra.mxu0 %v5746
    %5748 = vmatprep.subr.mxu0 0.0
    %v5749 = vand.u32 %v5712, 4294901760
    %5750 = vmatpush1.msra.mxu0 %v5749
    %5751 = vmatprep.subr.mxu0 0.0
    %v5752 = vand.u32 %v5713, 4294901760
    %5753 = vmatpush1.msra.mxu0 %v5752
    %5754 = vmatprep.subr.mxu0 0.0
    %v5755 = vand.u32 %v5714, 4294901760
    %5756 = vmatpush1.msra.mxu0 %v5755
    %5757 = vmatprep.subr.mxu0 0.0
    %v5758 = vand.u32 %v5715, 4294901760
    %5759 = vmatpush1.msra.mxu0 %v5758
    %5760 = vmatprep.subr.mxu0 0.0
    %v5761 = vand.u32 %v5716, 4294901760
    %5762 = vmatpush1.msra.mxu0 %v5761
    %5763 = vmatprep.subr.mxu0 0.0
    %v5764 = vand.u32 %v5717, 4294901760
    %5765 = vmatpush1.msra.mxu0 %v5764
    %5766 = vmatprep.subr.mxu0 0.0
    %5767 = vmatpush1.msra.mxu0 0.0
    %5768 = vmatprep.subr.mxu0 0.0
    %5769 = vmatpush1.msra.mxu0 0.0
    %5770 = vmatprep.subr.mxu0 0.0
    %5771 = vmatpush1.msra.mxu0 0.0
    %5772 = vmatprep.subr.mxu0 0.0
    %5773 = vmatpush1.msra.mxu0 0.0
    %5774 = vmatprep.subr.mxu0 0.0
    %5775 = vmatpush1.msra.mxu0 0.0
    %5776 = vmatprep.subr.mxu0 0.0
    %5777 = vmatpush1.msra.mxu0 0.0
    %5778 = vmatprep.subr.mxu0 0.0
    %5779 = vmatpush1.msra.mxu0 0.0
    %5780 = vmatprep.subr.mxu0 0.0
    %5781 = vmatpush1.msra.mxu0 0.0
    %5782 = vmatprep.subr.mxu0 0.0
    %5783 = vmatpush1.msra.mxu0 0.0
    %5784 = vmatprep.subr.mxu0 0.0
    %5785 = vmatpush1.msra.mxu0 0.0
    %5786 = vmatprep.subr.mxu0 0.0
    %5787 = vmatpush1.msra.mxu0 0.0
    %5788 = vmatprep.subr.mxu0 0.0
    %5789 = vmatpush1.msra.mxu0 0.0
    %5790 = vmatprep.subr.mxu0 0.0
    %5791 = vmatpush1.msra.mxu0 0.0
    %5792 = vmatprep.subr.mxu0 0.0
    %5793 = vmatpush1.msra.mxu0 0.0
    %5794 = vmatprep.subr.mxu0 0.0
    %5795 = vmatpush1.msra.mxu0 0.0
    %5796 = vmatprep.subr.mxu0 0.0
    %5797 = vmatpush1.msra.mxu0 0.0
    %5798 = vmatprep.subr.mxu0 0.0
    %5799 = vmatpush1.msra.mxu0 0.0
    %5800 = vmatprep.subr.mxu0 0.0
    %5801 = vmatpush1.msra.mxu0 0.0
    %5802 = vmatprep.subr.mxu0 0.0
    %5803 = vmatpush1.msra.mxu0 0.0
    %5804 = vmatprep.subr.mxu0 0.0
    %5805 = vmatpush1.msra.mxu0 0.0
    %5806 = vmatprep.subr.mxu0 0.0
    %5807 = vmatpush1.msra.mxu0 0.0
    %5808 = vmatprep.subr.mxu0 0.0
    %5809 = vmatpush1.msra.mxu0 0.0
    %5810 = vmatprep.subr.mxu0 0.0
    %5811 = vmatpush1.msra.mxu0 0.0
    %5812 = vmatprep.subr.mxu0 0.0
    %5813 = vmatpush1.msra.mxu0 0.0
    %5814 = vmatprep.mubr.f32.mxu0 0.0
    %v5815 = vand.u32 %v5719, 4294901760
    %v5816 = vsub.f32 %v5719, %v5815
    %v5817 = vand.u32 %v5816, 4294901760
    %v5818 = vsub.f32 %v5816, %v5817
    %v5819 = vand.u32 %v5818, 4294901760
    %5820 = vmatmul.mubr.f32.gmra.mrb[0].mxu0 %v5819
    %v5821 = vpop.f32.mrb[0].mxu0
    %v5822 = vadd.f32 0.0, %v5821
    %v5823 = vpop.f32.mrb[0].mxu0
    %5824 = vmatprep.mubr.f32.mxu0 0.0
    %v5825 = vand.u32 %v5722, 4294901760
    %v5826 = vsub.f32 %v5722, %v5825
    %v5827 = vand.u32 %v5826, 4294901760
    %v5828 = vsub.f32 %v5826, %v5827
    %v5829 = vand.u32 %v5828, 4294901760
    %5830 = vmatmul.mubr.f32.gmra.mrb[0].mxu0 %v5829
    %v5831 = vpop.f32.mrb[0].mxu0
    %v5832 = vadd.f32 0.0, %v5831
    %v5833 = vpop.f32.mrb[0].mxu0
    %5834 = vmatprep.mubr.f32.mxu0 0.0
    %v5835 = vand.u32 %v5725, 4294901760
    %v5836 = vsub.f32 %v5725, %v5835
    %v5837 = vand.u32 %v5836, 4294901760
    %v5838 = vsub.f32 %v5836, %v5837
    %v5839 = vand.u32 %v5838, 4294901760
    %5840 = vmatmul.mubr.f32.gmra.mrb[0].mxu0 %v5839
    %v5841 = vpop.f32.mrb[0].mxu0
    %v5842 = vadd.f32 0.0, %v5841
    %v5843 = vpop.f32.mrb[0].mxu0
    %5844 = vmatprep.mubr.f32.mxu0 0.0
    %v5845 = vand.u32 %v5728, 4294901760
    %v5846 = vsub.f32 %v5728, %v5845
    %v5847 = vand.u32 %v5846, 4294901760
    %v5848 = vsub.f32 %v5846, %v5847
    %v5849 = vand.u32 %v5848, 4294901760
    %5850 = vmatmul.mubr.f32.gmra.mrb[0].mxu0 %v5849
    %v5851 = vpop.f32.mrb[0].mxu0
    %v5852 = vadd.f32 0.0, %v5851
    %v5853 = vpop.f32.mrb[0].mxu0
    %5854 = vmatprep.mubr.f32.mxu0 0.0
    %v5855 = vand.u32 %v5731, 4294901760
    %v5856 = vsub.f32 %v5731, %v5855
    %v5857 = vand.u32 %v5856, 4294901760
    %v5858 = vsub.f32 %v5856, %v5857
    %v5859 = vand.u32 %v5858, 4294901760
    %5860 = vmatmul.mubr.f32.gmra.mrb[0].mxu0 %v5859
    %v5861 = vpop.f32.mrb[0].mxu0
    %v5862 = vadd.f32 0.0, %v5861
    %v5863 = vpop.f32.mrb[0].mxu0
    %5864 = vmatprep.mubr.f32.mxu0 0.0
    %v5865 = vand.u32 %v5734, 4294901760
    %v5866 = vsub.f32 %v5734, %v5865
    %v5867 = vand.u32 %v5866, 4294901760
    %v5868 = vsub.f32 %v5866, %v5867
    %v5869 = vand.u32 %v5868, 4294901760
    %5870 = vmatmul.mubr.f32.gmra.mrb[0].mxu0 %v5869
    %v5871 = vpop.f32.mrb[0].mxu0
    %v5872 = vadd.f32 0.0, %v5871
    %v5873 = vpop.f32.mrb[0].mxu0
    %5874 = vmatprep.mubr.f32.mxu0 0.0
    %v5875 = vand.u32 %v5737, 4294901760
    %v5876 = vsub.f32 %v5737, %v5875
    %v5877 = vand.u32 %v5876, 4294901760
    %v5878 = vsub.f32 %v5876, %v5877
    %v5879 = vand.u32 %v5878, 4294901760
    %5880 = vmatmul.mubr.f32.gmra.mrb[0].mxu0 %v5879
    %v5881 = vpop.f32.mrb[0].mxu0
    %v5882 = vadd.f32 0.0, %v5881
    %v5883 = vpop.f32.mrb[0].mxu0
    %5884 = vmatprep.mubr.f32.mxu0 0.0
    %v5885 = vand.u32 %v5740, 4294901760
    %v5886 = vsub.f32 %v5740, %v5885
    %v5887 = vand.u32 %v5886, 4294901760
    %v5888 = vsub.f32 %v5886, %v5887
    %v5889 = vand.u32 %v5888, 4294901760
    %5890 = vmatmul.mubr.f32.gmra.mrb[0].mxu0 %v5889
    %v5891 = vpop.f32.mrb[0].mxu0
    %v5892 = vadd.f32 0.0, %v5891
    %v5893 = vpop.f32.mrb[0].mxu0
    %5894 = vdwg.mxu0
    %5895 = vmatprep.subr.mxu0 0.0
    %v5896 = vand.u32 %v5710, 4294901760
    %v5897 = vsub.f32 %v5710, %v5896
    %v5898 = vand.u32 %v5897, 4294901760
    %v5899 = vsub.f32 %v5897, %v5898
    %v5900 = vand.u32 %v5899, 4294901760
    %5901 = vmatpush1.msra.mxu0 %v5900
    %5902 = vmatprep.subr.mxu0 0.0
    %v5903 = vand.u32 %v5711, 4294901760
    %v5904 = vsub.f32 %v5711, %v5903
    %v5905 = vand.u32 %v5904, 4294901760
    %v5906 = vsub.f32 %v5904, %v5905
    %v5907 = vand.u32 %v5906, 4294901760
    %5908 = vmatpush1.msra.mxu0 %v5907
    %5909 = vmatprep.subr.mxu0 0.0
    %v5910 = vand.u32 %v5712, 4294901760
    %v5911 = vsub.f32 %v5712, %v5910
    %v5912 = vand.u32 %v5911, 4294901760
    %v5913 = vsub.f32 %v5911, %v5912
    %v5914 = vand.u32 %v5913, 4294901760
    %5915 = vmatpush1.msra.mxu0 %v5914
    %5916 = vmatprep.subr.mxu0 0.0
    %v5917 = vand.u32 %v5713, 4294901760
    %v5918 = vsub.f32 %v5713, %v5917
    %v5919 = vand.u32 %v5918, 4294901760
    %v5920 = vsub.f32 %v5918, %v5919
    %v5921 = vand.u32 %v5920, 4294901760
    %5922 = vmatpush1.msra.mxu0 %v5921
    %5923 = vmatprep.subr.mxu0 0.0
    %v5924 = vand.u32 %v5714, 4294901760
    %v5925 = vsub.f32 %v5714, %v5924
    %v5926 = vand.u32 %v5925, 4294901760
    %v5927 = vsub.f32 %v5925, %v5926
    %v5928 = vand.u32 %v5927, 4294901760
    %5929 = vmatpush1.msra.mxu0 %v5928
    %5930 = vmatprep.subr.mxu0 0.0
    %v5931 = vand.u32 %v5715, 4294901760
    %v5932 = vsub.f32 %v5715, %v5931
    %v5933 = vand.u32 %v5932, 4294901760
    %v5934 = vsub.f32 %v5932, %v5933
    %v5935 = vand.u32 %v5934, 4294901760
    %5936 = vmatpush1.msra.mxu0 %v5935
    %5937 = vmatprep.subr.mxu0 0.0
    %v5938 = vand.u32 %v5716, 4294901760
    %v5939 = vsub.f32 %v5716, %v5938
    %v5940 = vand.u32 %v5939, 4294901760
    %v5941 = vsub.f32 %v5939, %v5940
    %v5942 = vand.u32 %v5941, 4294901760
    %5943 = vmatpush1.msra.mxu0 %v5942
    %5944 = vmatprep.subr.mxu0 0.0
    %v5945 = vand.u32 %v5717, 4294901760
    %v5946 = vsub.f32 %v5717, %v5945
    %v5947 = vand.u32 %v5946, 4294901760
    %v5948 = vsub.f32 %v5946, %v5947
    %v5949 = vand.u32 %v5948, 4294901760
    %5950 = vmatpush1.msra.mxu0 %v5949
    %5951 = vmatprep.subr.mxu0 0.0
    %5952 = vmatpush1.msra.mxu0 0.0
    %5953 = vmatprep.subr.mxu0 0.0
    %5954 = vmatpush1.msra.mxu0 0.0
    %5955 = vmatprep.subr.mxu0 0.0
    %5956 = vmatpush1.msra.mxu0 0.0
    %5957 = vmatprep.subr.mxu0 0.0
    %5958 = vmatpush1.msra.mxu0 0.0
    %5959 = vmatprep.subr.mxu0 0.0
    %5960 = vmatpush1.msra.mxu0 0.0
    %5961 = vmatprep.subr.mxu0 0.0
    %5962 = vmatpush1.msra.mxu0 0.0
    %5963 = vmatprep.subr.mxu0 0.0
    %5964 = vmatpush1.msra.mxu0 0.0
    %5965 = vmatprep.subr.mxu0 0.0
    %5966 = vmatpush1.msra.mxu0 0.0
    %5967 = vmatprep.subr.mxu0 0.0
    %5968 = vmatpush1.msra.mxu0 0.0
    %5969 = vmatprep.subr.mxu0 0.0
    %5970 = vmatpush1.msra.mxu0 0.0
    %5971 = vmatprep.subr.mxu0 0.0
    %5972 = vmatpush1.msra.mxu0 0.0
    %5973 = vmatprep.subr.mxu0 0.0
    %5974 = vmatpush1.msra.mxu0 0.0
    %5975 = vmatprep.subr.mxu0 0.0
    %5976 = vmatpush1.msra.mxu0 0.0
    %5977 = vmatprep.subr.mxu0 0.0
    %5978 = vmatpush1.msra.mxu0 0.0
    %5979 = vmatprep.subr.mxu0 0.0
    %5980 = vmatpush1.msra.mxu0 0.0
    %5981 = vmatprep.subr.mxu0 0.0
    %5982 = vmatpush1.msra.mxu0 0.0
    %5983 = vmatprep.subr.mxu0 0.0
    %5984 = vmatpush1.msra.mxu0 0.0
    %5985 = vmatprep.subr.mxu0 0.0
    %5986 = vmatpush1.msra.mxu0 0.0
    %5987 = vmatprep.subr.mxu0 0.0
    %5988 = vmatpush1.msra.mxu0 0.0
    %5989 = vmatprep.subr.mxu0 0.0
    %5990 = vmatpush1.msra.mxu0 0.0
    %5991 = vmatprep.subr.mxu0 0.0
    %5992 = vmatpush1.msra.mxu0 0.0
    %5993 = vmatprep.subr.mxu0 0.0
    %5994 = vmatpush1.msra.mxu0 0.0
    %5995 = vmatprep.subr.mxu0 0.0
    %5996 = vmatpush1.msra.mxu0 0.0
    %5997 = vmatprep.subr.mxu0 0.0
    %5998 = vmatpush1.msra.mxu0 0.0
    %5999 = vmatprep.mubr.f32.mxu0 0.0
    %v6000 = vand.u32 %v5719, 4294901760
    %6001 = vmatmul.mubr.f32.gmra.mrb[0].mxu0 %v6000
    %v6002 = vpop.f32.mrb[0].mxu0
    %v6003 = vadd.f32 %v5822, %v6002
    %v6004 = vpop.f32.mrb[0].mxu0
    %6005 = vmatprep.mubr.f32.mxu0 0.0
    %v6006 = vand.u32 %v5722, 4294901760
    %6007 = vmatmul.mubr.f32.gmra.mrb[0].mxu0 %v6006
    %v6008 = vpop.f32.mrb[0].mxu0
    %v6009 = vadd.f32 %v5832, %v6008
    %v6010 = vpop.f32.mrb[0].mxu0
    %6011 = vmatprep.mubr.f32.mxu0 0.0
    %v6012 = vand.u32 %v5725, 4294901760
    %6013 = vmatmul.mubr.f32.gmra.mrb[0].mxu0 %v6012
    %v6014 = vpop.f32.mrb[0].mxu0
    %v6015 = vadd.f32 %v5842, %v6014
    %v6016 = vpop.f32.mrb[0].mxu0
    %6017 = vmatprep.mubr.f32.mxu0 0.0
    %v6018 = vand.u32 %v5728, 4294901760
    %6019 = vmatmul.mubr.f32.gmra.mrb[0].mxu0 %v6018
    %v6020 = vpop.f32.mrb[0].mxu0
    %v6021 = vadd.f32 %v5852, %v6020
    %v6022 = vpop.f32.mrb[0].mxu0
    %6023 = vmatprep.mubr.f32.mxu0 0.0
    %v6024 = vand.u32 %v5731, 4294901760
    %6025 = vmatmul.mubr.f32.gmra.mrb[0].mxu0 %v6024
    %v6026 = vpop.f32.mrb[0].mxu0
    %v6027 = vadd.f32 %v5862, %v6026
    %v6028 = vpop.f32.mrb[0].mxu0
    %6029 = vmatprep.mubr.f32.mxu0 0.0
    %v6030 = vand.u32 %v5734, 4294901760
    %6031 = vmatmul.mubr.f32.gmra.mrb[0].mxu0 %v6030
    %v6032 = vpop.f32.mrb[0].mxu0
    %v6033 = vadd.f32 %v5872, %v6032
    %v6034 = vpop.f32.mrb[0].mxu0
    %6035 = vmatprep.mubr.f32.mxu0 0.0
    %v6036 = vand.u32 %v5737, 4294901760
    %6037 = vmatmul.mubr.f32.gmra.mrb[0].mxu0 %v6036
    %v6038 = vpop.f32.mrb[0].mxu0
    %v6039 = vadd.f32 %v5882, %v6038
    %v6040 = vpop.f32.mrb[0].mxu0
    %6041 = vmatprep.mubr.f32.mxu0 0.0
    %v6042 = vand.u32 %v5740, 4294901760
    %6043 = vmatmul.mubr.f32.gmra.mrb[0].mxu0 %v6042
    %v6044 = vpop.f32.mrb[0].mxu0
    %v6045 = vadd.f32 %v5892, %v6044
    %v6046 = vpop.f32.mrb[0].mxu0
    %6047 = vdwg.mxu0
    %6048 = vmatprep.subr.mxu0 0.0
    %v6049 = vand.u32 %v5710, 4294901760
    %v6050 = vsub.f32 %v5710, %v6049
    %6051 = vmatpush1.msra.mxu0 %v6050
    %6052 = vmatprep.subr.mxu0 0.0
    %v6053 = vand.u32 %v5711, 4294901760
    %v6054 = vsub.f32 %v5711, %v6053
    %6055 = vmatpush1.msra.mxu0 %v6054
    %6056 = vmatprep.subr.mxu0 0.0
    %v6057 = vand.u32 %v5712, 4294901760
    %v6058 = vsub.f32 %v5712, %v6057
    %6059 = vmatpush1.msra.mxu0 %v6058
    %6060 = vmatprep.subr.mxu0 0.0
    %v6061 = vand.u32 %v5713, 4294901760
    %v6062 = vsub.f32 %v5713, %v6061
    %6063 = vmatpush1.msra.mxu0 %v6062
    %6064 = vmatprep.subr.mxu0 0.0
    %v6065 = vand.u32 %v5714, 4294901760
    %v6066 = vsub.f32 %v5714, %v6065
    %6067 = vmatpush1.msra.mxu0 %v6066
    %6068 = vmatprep.subr.mxu0 0.0
    %v6069 = vand.u32 %v5715, 4294901760
    %v6070 = vsub.f32 %v5715, %v6069
    %6071 = vmatpush1.msra.mxu0 %v6070
    %6072 = vmatprep.subr.mxu0 0.0
    %v6073 = vand.u32 %v5716, 4294901760
    %v6074 = vsub.f32 %v5716, %v6073
    %6075 = vmatpush1.msra.mxu0 %v6074
    %6076 = vmatprep.subr.mxu0 0.0
    %v6077 = vand.u32 %v5717, 4294901760
    %v6078 = vsub.f32 %v5717, %v6077
    %6079 = vmatpush1.msra.mxu0 %v6078
    %6080 = vmatprep.subr.mxu0 0.0
    %6081 = vmatpush1.msra.mxu0 0.0
    %6082 = vmatprep.subr.mxu0 0.0
    %6083 = vmatpush1.msra.mxu0 0.0
    %6084 = vmatprep.subr.mxu0 0.0
    %6085 = vmatpush1.msra.mxu0 0.0
    %6086 = vmatprep.subr.mxu0 0.0
    %6087 = vmatpush1.msra.mxu0 0.0
    %6088 = vmatprep.subr.mxu0 0.0
    %6089 = vmatpush1.msra.mxu0 0.0
    %6090 = vmatprep.subr.mxu0 0.0
    %6091 = vmatpush1.msra.mxu0 0.0
    %6092 = vmatprep.subr.mxu0 0.0
    %6093 = vmatpush1.msra.mxu0 0.0
    %6094 = vmatprep.subr.mxu0 0.0
    %6095 = vmatpush1.msra.mxu0 0.0
    %6096 = vmatprep.subr.mxu0 0.0
    %6097 = vmatpush1.msra.mxu0 0.0
    %6098 = vmatprep.subr.mxu0 0.0
    %6099 = vmatpush1.msra.mxu0 0.0
    %6100 = vmatprep.subr.mxu0 0.0
    %6101 = vmatpush1.msra.mxu0 0.0
    %6102 = vmatprep.subr.mxu0 0.0
    %6103 = vmatpush1.msra.mxu0 0.0
    %6104 = vmatprep.subr.mxu0 0.0
    %6105 = vmatpush1.msra.mxu0 0.0
    %6106 = vmatprep.subr.mxu0 0.0
    %6107 = vmatpush1.msra.mxu0 0.0
    %6108 = vmatprep.subr.mxu0 0.0
    %6109 = vmatpush1.msra.mxu0 0.0
    %6110 = vmatprep.subr.mxu0 0.0
    %6111 = vmatpush1.msra.mxu0 0.0
    %6112 = vmatprep.subr.mxu0 0.0
    %6113 = vmatpush1.msra.mxu0 0.0
    %6114 = vmatprep.subr.mxu0 0.0
    %6115 = vmatpush1.msra.mxu0 0.0
    %6116 = vmatprep.subr.mxu0 0.0
    %6117 = vmatpush1.msra.mxu0 0.0
    %6118 = vmatprep.subr.mxu0 0.0
    %6119 = vmatpush1.msra.mxu0 0.0
    %6120 = vmatprep.subr.mxu0 0.0
    %6121 = vmatpush1.msra.mxu0 0.0
    %6122 = vmatprep.subr.mxu0 0.0
    %6123 = vmatpush1.msra.mxu0 0.0
    %6124 = vmatprep.subr.mxu0 0.0
    %6125 = vmatpush1.msra.mxu0 0.0
    %6126 = vmatprep.subr.mxu0 0.0
    %6127 = vmatpush1.msra.mxu0 0.0
    %6128 = vmatprep.mubr.f32.mxu0 0.0
    %v6129 = vand.u32 %v5719, 4294901760
    %v6130 = vsub.f32 %v5719, %v6129
    %6131 = vmatmul.mubr.f32.gmra.mrb[0].mxu0 %v6130
    %v6132 = vpop.f32.mrb[0].mxu0
    %v6133 = vadd.f32 %v6003, %v6132
    %v6134 = vpop.f32.mrb[0].mxu0
    %6135 = vmatprep.mubr.f32.mxu0 0.0
    %v6136 = vand.u32 %v5722, 4294901760
    %v6137 = vsub.f32 %v5722, %v6136
    %6138 = vmatmul.mubr.f32.gmra.mrb[0].mxu0 %v6137
    %v6139 = vpop.f32.mrb[0].mxu0
    %v6140 = vadd.f32 %v6009, %v6139
    %v6141 = vpop.f32.mrb[0].mxu0
    %6142 = vmatprep.mubr.f32.mxu0 0.0
    %v6143 = vand.u32 %v5725, 4294901760
    %v6144 = vsub.f32 %v5725, %v6143
    %6145 = vmatmul.mubr.f32.gmra.mrb[0].mxu0 %v6144
    %v6146 = vpop.f32.mrb[0].mxu0
    %v6147 = vadd.f32 %v6015, %v6146
    %v6148 = vpop.f32.mrb[0].mxu0
    %6149 = vmatprep.mubr.f32.mxu0 0.0
    %v6150 = vand.u32 %v5728, 4294901760
    %v6151 = vsub.f32 %v5728, %v6150
    %6152 = vmatmul.mubr.f32.gmra.mrb[0].mxu0 %v6151
    %v6153 = vpop.f32.mrb[0].mxu0
    %v6154 = vadd.f32 %v6021, %v6153
    %v6155 = vpop.f32.mrb[0].mxu0
    %6156 = vmatprep.mubr.f32.mxu0 0.0
    %v6157 = vand.u32 %v5731, 4294901760
    %v6158 = vsub.f32 %v5731, %v6157
    %6159 = vmatmul.mubr.f32.gmra.mrb[0].mxu0 %v6158
    %v6160 = vpop.f32.mrb[0].mxu0
    %v6161 = vadd.f32 %v6027, %v6160
    %v6162 = vpop.f32.mrb[0].mxu0
    %6163 = vmatprep.mubr.f32.mxu0 0.0
    %v6164 = vand.u32 %v5734, 4294901760
    %v6165 = vsub.f32 %v5734, %v6164
    %6166 = vmatmul.mubr.f32.gmra.mrb[0].mxu0 %v6165
    %v6167 = vpop.f32.mrb[0].mxu0
    %v6168 = vadd.f32 %v6033, %v6167
    %v6169 = vpop.f32.mrb[0].mxu0
    %6170 = vmatprep.mubr.f32.mxu0 0.0
    %v6171 = vand.u32 %v5737, 4294901760
    %v6172 = vsub.f32 %v5737, %v6171
    %6173 = vmatmul.mubr.f32.gmra.mrb[0].mxu0 %v6172
    %v6174 = vpop.f32.mrb[0].mxu0
    %v6175 = vadd.f32 %v6039, %v6174
    %v6176 = vpop.f32.mrb[0].mxu0
    %6177 = vmatprep.mubr.f32.mxu0 0.0
    %v6178 = vand.u32 %v5740, 4294901760
    %v6179 = vsub.f32 %v5740, %v6178
    %6180 = vmatmul.mubr.f32.gmra.mrb[0].mxu0 %v6179
    %v6181 = vpop.f32.mrb[0].mxu0
    %v6182 = vadd.f32 %v6045, %v6181
    %v6183 = vpop.f32.mrb[0].mxu0
    %6184 = vdwg.mxu0
    %6185 = vmatprep.subr.mxu0 0.0
    %v6186 = vand.u32 %v5710, 4294901760
    %6187 = vmatpush1.msra.mxu0 %v6186
    %6188 = vmatprep.subr.mxu0 0.0
    %v6189 = vand.u32 %v5711, 4294901760
    %6190 = vmatpush1.msra.mxu0 %v6189
    %6191 = vmatprep.subr.mxu0 0.0
    %v6192 = vand.u32 %v5712, 4294901760
    %6193 = vmatpush1.msra.mxu0 %v6192
    %6194 = vmatprep.subr.mxu0 0.0
    %v6195 = vand.u32 %v5713, 4294901760
    %6196 = vmatpush1.msra.mxu0 %v6195
    %6197 = vmatprep.subr.mxu0 0.0
    %v6198 = vand.u32 %v5714, 4294901760
    %6199 = vmatpush1.msra.mxu0 %v6198
    %6200 = vmatprep.subr.mxu0 0.0
    %v6201 = vand.u32 %v5715, 4294901760
    %6202 = vmatpush1.msra.mxu0 %v6201
    %6203 = vmatprep.subr.mxu0 0.0
    %v6204 = vand.u32 %v5716, 4294901760
    %6205 = vmatpush1.msra.mxu0 %v6204
    %6206 = vmatprep.subr.mxu0 0.0
    %v6207 = vand.u32 %v5717, 4294901760
    %6208 = vmatpush1.msra.mxu0 %v6207
    %6209 = vmatprep.subr.mxu0 0.0
    %6210 = vmatpush1.msra.mxu0 0.0
    %6211 = vmatprep.subr.mxu0 0.0
    %6212 = vmatpush1.msra.mxu0 0.0
    %6213 = vmatprep.subr.mxu0 0.0
    %6214 = vmatpush1.msra.mxu0 0.0
    %6215 = vmatprep.subr.mxu0 0.0
    %6216 = vmatpush1.msra.mxu0 0.0
    %6217 = vmatprep.subr.mxu0 0.0
    %6218 = vmatpush1.msra.mxu0 0.0
    %6219 = vmatprep.subr.mxu0 0.0
    %6220 = vmatpush1.msra.mxu0 0.0
    %6221 = vmatprep.subr.mxu0 0.0
    %6222 = vmatpush1.msra.mxu0 0.0
    %6223 = vmatprep.subr.mxu0 0.0
    %6224 = vmatpush1.msra.mxu0 0.0
    %6225 = vmatprep.subr.mxu0 0.0
    %6226 = vmatpush1.msra.mxu0 0.0
    %6227 = vmatprep.subr.mxu0 0.0
    %6228 = vmatpush1.msra.mxu0 0.0
    %6229 = vmatprep.subr.mxu0 0.0
    %6230 = vmatpush1.msra.mxu0 0.0
    %6231 = vmatprep.subr.mxu0 0.0
    %6232 = vmatpush1.msra.mxu0 0.0
    %6233 = vmatprep.subr.mxu0 0.0
    %6234 = vmatpush1.msra.mxu0 0.0
    %6235 = vmatprep.subr.mxu0 0.0
    %6236 = vmatpush1.msra.mxu0 0.0
    %6237 = vmatprep.subr.mxu0 0.0
    %6238 = vmatpush1.msra.mxu0 0.0
    %6239 = vmatprep.subr.mxu0 0.0
    %6240 = vmatpush1.msra.mxu0 0.0
    %6241 = vmatprep.subr.mxu0 0.0
    %6242 = vmatpush1.msra.mxu0 0.0
    %6243 = vmatprep.subr.mxu0 0.0
    %6244 = vmatpush1.msra.mxu0 0.0
    %6245 = vmatprep.subr.mxu0 0.0
    %6246 = vmatpush1.msra.mxu0 0.0
    %6247 = vmatprep.subr.mxu0 0.0
    %6248 = vmatpush1.msra.mxu0 0.0
    %6249 = vmatprep.subr.mxu0 0.0
    %6250 = vmatpush1.msra.mxu0 0.0
    %6251 = vmatprep.subr.mxu0 0.0
    %6252 = vmatpush1.msra.mxu0 0.0
    %6253 = vmatprep.subr.mxu0 0.0
    %6254 = vmatpush1.msra.mxu0 0.0
    %6255 = vmatprep.subr.mxu0 0.0
    %6256 = vmatpush1.msra.mxu0 0.0
    %6257 = vmatprep.mubr.f32.mxu0 0.0
    %v6258 = vand.u32 %v5719, 4294901760
    %v6259 = vsub.f32 %v5719, %v6258
    %v6260 = vand.u32 %v6259, 4294901760
    %6261 = vmatmul.mubr.f32.gmra.mrb[0].mxu0 %v6260
    %v6262 = vpop.f32.mrb[0].mxu0
    %v6263 = vadd.f32 %v6133, %v6262
    %v6264 = vpop.f32.mrb[0].mxu0
    %6265 = vmatprep.mubr.f32.mxu0 0.0
    %v6266 = vand.u32 %v5722, 4294901760
    %v6267 = vsub.f32 %v5722, %v6266
    %v6268 = vand.u32 %v6267, 4294901760
    %6269 = vmatmul.mubr.f32.gmra.mrb[0].mxu0 %v6268
    %v6270 = vpop.f32.mrb[0].mxu0
    %v6271 = vadd.f32 %v6140, %v6270
    %v6272 = vpop.f32.mrb[0].mxu0
    %6273 = vmatprep.mubr.f32.mxu0 0.0
    %v6274 = vand.u32 %v5725, 4294901760
    %v6275 = vsub.f32 %v5725, %v6274
    %v6276 = vand.u32 %v6275, 4294901760
    %6277 = vmatmul.mubr.f32.gmra.mrb[0].mxu0 %v6276
    %v6278 = vpop.f32.mrb[0].mxu0
    %v6279 = vadd.f32 %v6147, %v6278
    %v6280 = vpop.f32.mrb[0].mxu0
    %6281 = vmatprep.mubr.f32.mxu0 0.0
    %v6282 = vand.u32 %v5728, 4294901760
    %v6283 = vsub.f32 %v5728, %v6282
    %v6284 = vand.u32 %v6283, 4294901760
    %6285 = vmatmul.mubr.f32.gmra.mrb[0].mxu0 %v6284
    %v6286 = vpop.f32.mrb[0].mxu0
    %v6287 = vadd.f32 %v6154, %v6286
    %v6288 = vpop.f32.mrb[0].mxu0
    %6289 = vmatprep.mubr.f32.mxu0 0.0
    %v6290 = vand.u32 %v5731, 4294901760
    %v6291 = vsub.f32 %v5731, %v6290
    %v6292 = vand.u32 %v6291, 4294901760
    %6293 = vmatmul.mubr.f32.gmra.mrb[0].mxu0 %v6292
    %v6294 = vpop.f32.mrb[0].mxu0
    %v6295 = vadd.f32 %v6161, %v6294
    %v6296 = vpop.f32.mrb[0].mxu0
    %6297 = vmatprep.mubr.f32.mxu0 0.0
    %v6298 = vand.u32 %v5734, 4294901760
    %v6299 = vsub.f32 %v5734, %v6298
    %v6300 = vand.u32 %v6299, 4294901760
    %6301 = vmatmul.mubr.f32.gmra.mrb[0].mxu0 %v6300
    %v6302 = vpop.f32.mrb[0].mxu0
    %v6303 = vadd.f32 %v6168, %v6302
    %v6304 = vpop.f32.mrb[0].mxu0
    %6305 = vmatprep.mubr.f32.mxu0 0.0
    %v6306 = vand.u32 %v5737, 4294901760
    %v6307 = vsub.f32 %v5737, %v6306
    %v6308 = vand.u32 %v6307, 4294901760
    %6309 = vmatmul.mubr.f32.gmra.mrb[0].mxu0 %v6308
    %v6310 = vpop.f32.mrb[0].mxu0
    %v6311 = vadd.f32 %v6175, %v6310
    %v6312 = vpop.f32.mrb[0].mxu0
    %6313 = vmatprep.mubr.f32.mxu0 0.0
    %v6314 = vand.u32 %v5740, 4294901760
    %v6315 = vsub.f32 %v5740, %v6314
    %v6316 = vand.u32 %v6315, 4294901760
    %6317 = vmatmul.mubr.f32.gmra.mrb[0].mxu0 %v6316
    %v6318 = vpop.f32.mrb[0].mxu0
    %v6319 = vadd.f32 %v6182, %v6318
    %v6320 = vpop.f32.mrb[0].mxu0
    %6321 = vdwg.mxu0
    %6322 = vmatprep.subr.mxu0 0.0
    %v6323 = vand.u32 %v5710, 4294901760
    %v6324 = vsub.f32 %v5710, %v6323
    %v6325 = vand.u32 %v6324, 4294901760
    %6326 = vmatpush1.msra.mxu0 %v6325
    %6327 = vmatprep.subr.mxu0 0.0
    %v6328 = vand.u32 %v5711, 4294901760
    %v6329 = vsub.f32 %v5711, %v6328
    %v6330 = vand.u32 %v6329, 4294901760
    %6331 = vmatpush1.msra.mxu0 %v6330
    %6332 = vmatprep.subr.mxu0 0.0
    %v6333 = vand.u32 %v5712, 4294901760
    %v6334 = vsub.f32 %v5712, %v6333
    %v6335 = vand.u32 %v6334, 4294901760
    %6336 = vmatpush1.msra.mxu0 %v6335
    %6337 = vmatprep.subr.mxu0 0.0
    %v6338 = vand.u32 %v5713, 4294901760
    %v6339 = vsub.f32 %v5713, %v6338
    %v6340 = vand.u32 %v6339, 4294901760
    %6341 = vmatpush1.msra.mxu0 %v6340
    %6342 = vmatprep.subr.mxu0 0.0
    %v6343 = vand.u32 %v5714, 4294901760
    %v6344 = vsub.f32 %v5714, %v6343
    %v6345 = vand.u32 %v6344, 4294901760
    %6346 = vmatpush1.msra.mxu0 %v6345
    %6347 = vmatprep.subr.mxu0 0.0
    %v6348 = vand.u32 %v5715, 4294901760
    %v6349 = vsub.f32 %v5715, %v6348
    %v6350 = vand.u32 %v6349, 4294901760
    %6351 = vmatpush1.msra.mxu0 %v6350
    %6352 = vmatprep.subr.mxu0 0.0
    %v6353 = vand.u32 %v5716, 4294901760
    %v6354 = vsub.f32 %v5716, %v6353
    %v6355 = vand.u32 %v6354, 4294901760
    %6356 = vmatpush1.msra.mxu0 %v6355
    %6357 = vmatprep.subr.mxu0 0.0
    %v6358 = vand.u32 %v5717, 4294901760
    %v6359 = vsub.f32 %v5717, %v6358
    %v6360 = vand.u32 %v6359, 4294901760
    %6361 = vmatpush1.msra.mxu0 %v6360
    %6362 = vmatprep.subr.mxu0 0.0
    %6363 = vmatpush1.msra.mxu0 0.0
    %6364 = vmatprep.subr.mxu0 0.0
    %6365 = vmatpush1.msra.mxu0 0.0
    %6366 = vmatprep.subr.mxu0 0.0
    %6367 = vmatpush1.msra.mxu0 0.0
    %6368 = vmatprep.subr.mxu0 0.0
    %6369 = vmatpush1.msra.mxu0 0.0
    %6370 = vmatprep.subr.mxu0 0.0
    %6371 = vmatpush1.msra.mxu0 0.0
    %6372 = vmatprep.subr.mxu0 0.0
    %6373 = vmatpush1.msra.mxu0 0.0
    %6374 = vmatprep.subr.mxu0 0.0
    %6375 = vmatpush1.msra.mxu0 0.0
    %6376 = vmatprep.subr.mxu0 0.0
    %6377 = vmatpush1.msra.mxu0 0.0
    %6378 = vmatprep.subr.mxu0 0.0
    %6379 = vmatpush1.msra.mxu0 0.0
    %6380 = vmatprep.subr.mxu0 0.0
    %6381 = vmatpush1.msra.mxu0 0.0
    %6382 = vmatprep.subr.mxu0 0.0
    %6383 = vmatpush1.msra.mxu0 0.0
    %6384 = vmatprep.subr.mxu0 0.0
    %6385 = vmatpush1.msra.mxu0 0.0
    %6386 = vmatprep.subr.mxu0 0.0
    %6387 = vmatpush1.msra.mxu0 0.0
    %6388 = vmatprep.subr.mxu0 0.0
    %6389 = vmatpush1.msra.mxu0 0.0
    %6390 = vmatprep.subr.mxu0 0.0
    %6391 = vmatpush1.msra.mxu0 0.0
    %6392 = vmatprep.subr.mxu0 0.0
    %6393 = vmatpush1.msra.mxu0 0.0
    %6394 = vmatprep.subr.mxu0 0.0
    %6395 = vmatpush1.msra.mxu0 0.0
    %6396 = vmatprep.subr.mxu0 0.0
    %6397 = vmatpush1.msra.mxu0 0.0
    %6398 = vmatprep.subr.mxu0 0.0
    %6399 = vmatpush1.msra.mxu0 0.0
    %6400 = vmatprep.subr.mxu0 0.0
    %6401 = vmatpush1.msra.mxu0 0.0
    %6402 = vmatprep.subr.mxu0 0.0
    %6403 = vmatpush1.msra.mxu0 0.0
    %6404 = vmatprep.subr.mxu0 0.0
    %6405 = vmatpush1.msra.mxu0 0.0
    %6406 = vmatprep.subr.mxu0 0.0
    %6407 = vmatpush1.msra.mxu0 0.0
    %6408 = vmatprep.subr.mxu0 0.0
    %6409 = vmatpush1.msra.mxu0 0.0
    %6410 = vmatprep.mubr.f32.mxu0 0.0
    %v6411 = vand.u32 %v5719, 4294901760
    %6412 = vmatmul.mubr.f32.gmra.mrb[0].mxu0 %v6411
    %v6413 = vpop.f32.mrb[0].mxu0
    %v6414 = vadd.f32 %v6263, %v6413
    %v6415 = vpop.f32.mrb[0].mxu0
    %6416 = vmatprep.mubr.f32.mxu0 0.0
    %v6417 = vand.u32 %v5722, 4294901760
    %6418 = vmatmul.mubr.f32.gmra.mrb[0].mxu0 %v6417
    %v6419 = vpop.f32.mrb[0].mxu0
    %v6420 = vadd.f32 %v6271, %v6419
    %v6421 = vpop.f32.mrb[0].mxu0
    %6422 = vmatprep.mubr.f32.mxu0 0.0
    %v6423 = vand.u32 %v5725, 4294901760
    %6424 = vmatmul.mubr.f32.gmra.mrb[0].mxu0 %v6423
    %v6425 = vpop.f32.mrb[0].mxu0
    %v6426 = vadd.f32 %v6279, %v6425
    %v6427 = vpop.f32.mrb[0].mxu0
    %6428 = vmatprep.mubr.f32.mxu0 0.0
    %v6429 = vand.u32 %v5728, 4294901760
    %6430 = vmatmul.mubr.f32.gmra.mrb[0].mxu0 %v6429
    %v6431 = vpop.f32.mrb[0].mxu0
    %v6432 = vadd.f32 %v6287, %v6431
    %v6433 = vpop.f32.mrb[0].mxu0
    %6434 = vmatprep.mubr.f32.mxu0 0.0
    %v6435 = vand.u32 %v5731, 4294901760
    %6436 = vmatmul.mubr.f32.gmra.mrb[0].mxu0 %v6435
    %v6437 = vpop.f32.mrb[0].mxu0
    %v6438 = vadd.f32 %v6295, %v6437
    %v6439 = vpop.f32.mrb[0].mxu0
    %6440 = vmatprep.mubr.f32.mxu0 0.0
    %v6441 = vand.u32 %v5734, 4294901760
    %6442 = vmatmul.mubr.f32.gmra.mrb[0].mxu0 %v6441
    %v6443 = vpop.f32.mrb[0].mxu0
    %v6444 = vadd.f32 %v6303, %v6443
    %v6445 = vpop.f32.mrb[0].mxu0
    %6446 = vmatprep.mubr.f32.mxu0 0.0
    %v6447 = vand.u32 %v5737, 4294901760
    %6448 = vmatmul.mubr.f32.gmra.mrb[0].mxu0 %v6447
    %v6449 = vpop.f32.mrb[0].mxu0
    %v6450 = vadd.f32 %v6311, %v6449
    %v6451 = vpop.f32.mrb[0].mxu0
    %6452 = vmatprep.mubr.f32.mxu0 0.0
    %v6453 = vand.u32 %v5740, 4294901760
    %6454 = vmatmul.mubr.f32.gmra.mrb[0].mxu0 %v6453
    %v6455 = vpop.f32.mrb[0].mxu0
    %v6456 = vadd.f32 %v6319, %v6455
    %v6457 = vpop.f32.mrb[0].mxu0
    %6458 = vdwg.mxu0
    %6459 = vmatprep.subr.mxu0 0.0
    %v6460 = vand.u32 %v5710, 4294901760
    %6461 = vmatpush1.msra.mxu0 %v6460
    %6462 = vmatprep.subr.mxu0 0.0
    %v6463 = vand.u32 %v5711, 4294901760
    %6464 = vmatpush1.msra.mxu0 %v6463
    %6465 = vmatprep.subr.mxu0 0.0
    %v6466 = vand.u32 %v5712, 4294901760
    %6467 = vmatpush1.msra.mxu0 %v6466
    %6468 = vmatprep.subr.mxu0 0.0
    %v6469 = vand.u32 %v5713, 4294901760
    %6470 = vmatpush1.msra.mxu0 %v6469
    %6471 = vmatprep.subr.mxu0 0.0
    %v6472 = vand.u32 %v5714, 4294901760
    %6473 = vmatpush1.msra.mxu0 %v6472
    %6474 = vmatprep.subr.mxu0 0.0
    %v6475 = vand.u32 %v5715, 4294901760
    %6476 = vmatpush1.msra.mxu0 %v6475
    %6477 = vmatprep.subr.mxu0 0.0
    %v6478 = vand.u32 %v5716, 4294901760
    %6479 = vmatpush1.msra.mxu0 %v6478
    %6480 = vmatprep.subr.mxu0 0.0
    %v6481 = vand.u32 %v5717, 4294901760
    %6482 = vmatpush1.msra.mxu0 %v6481
    %6483 = vmatprep.subr.mxu0 0.0
    %6484 = vmatpush1.msra.mxu0 0.0
    %6485 = vmatprep.subr.mxu0 0.0
    %6486 = vmatpush1.msra.mxu0 0.0
    %6487 = vmatprep.subr.mxu0 0.0
    %6488 = vmatpush1.msra.mxu0 0.0
    %6489 = vmatprep.subr.mxu0 0.0
    %6490 = vmatpush1.msra.mxu0 0.0
    %6491 = vmatprep.subr.mxu0 0.0
    %6492 = vmatpush1.msra.mxu0 0.0
    %6493 = vmatprep.subr.mxu0 0.0
    %6494 = vmatpush1.msra.mxu0 0.0
    %6495 = vmatprep.subr.mxu0 0.0
    %6496 = vmatpush1.msra.mxu0 0.0
    %6497 = vmatprep.subr.mxu0 0.0
    %6498 = vmatpush1.msra.mxu0 0.0
    %6499 = vmatprep.subr.mxu0 0.0
    %6500 = vmatpush1.msra.mxu0 0.0
    %6501 = vmatprep.subr.mxu0 0.0
    %6502 = vmatpush1.msra.mxu0 0.0
    %6503 = vmatprep.subr.mxu0 0.0
    %6504 = vmatpush1.msra.mxu0 0.0
    %6505 = vmatprep.subr.mxu0 0.0
    %6506 = vmatpush1.msra.mxu0 0.0
    %6507 = vmatprep.subr.mxu0 0.0
    %6508 = vmatpush1.msra.mxu0 0.0
    %6509 = vmatprep.subr.mxu0 0.0
    %6510 = vmatpush1.msra.mxu0 0.0
    %6511 = vmatprep.subr.mxu0 0.0
    %6512 = vmatpush1.msra.mxu0 0.0
    %6513 = vmatprep.subr.mxu0 0.0
    %6514 = vmatpush1.msra.mxu0 0.0
    %6515 = vmatprep.subr.mxu0 0.0
    %6516 = vmatpush1.msra.mxu0 0.0
    %6517 = vmatprep.subr.mxu0 0.0
    %6518 = vmatpush1.msra.mxu0 0.0
    %6519 = vmatprep.subr.mxu0 0.0
    %6520 = vmatpush1.msra.mxu0 0.0
    %6521 = vmatprep.subr.mxu0 0.0
    %6522 = vmatpush1.msra.mxu0 0.0
    %6523 = vmatprep.subr.mxu0 0.0
    %6524 = vmatpush1.msra.mxu0 0.0
    %6525 = vmatprep.subr.mxu0 0.0
    %6526 = vmatpush1.msra.mxu0 0.0
    %6527 = vmatprep.subr.mxu0 0.0
    %6528 = vmatpush1.msra.mxu0 0.0
    %6529 = vmatprep.subr.mxu0 0.0
    %6530 = vmatpush1.msra.mxu0 0.0
    %6531 = vmatprep.mubr.f32.mxu0 0.0
    %v6532 = vand.u32 %v5719, 4294901760
    %6533 = vmatmul.mubr.f32.gmra.mrb[0].mxu0 %v6532
    %v6534 = vpop.f32.mrb[0].mxu0
    %v6535 = vadd.f32 %v6414, %v6534
    %v6536 = vpop.f32.mrb[0].mxu0
    %6537 = vmatprep.mubr.f32.mxu0 0.0
    %v6538 = vand.u32 %v5722, 4294901760
    %6539 = vmatmul.mubr.f32.gmra.mrb[0].mxu0 %v6538
    %v6540 = vpop.f32.mrb[0].mxu0
    %v6541 = vadd.f32 %v6420, %v6540
    %v6542 = vpop.f32.mrb[0].mxu0
    %6543 = vmatprep.mubr.f32.mxu0 0.0
    %v6544 = vand.u32 %v5725, 4294901760
    %6545 = vmatmul.mubr.f32.gmra.mrb[0].mxu0 %v6544
    %v6546 = vpop.f32.mrb[0].mxu0
    %v6547 = vadd.f32 %v6426, %v6546
    %v6548 = vpop.f32.mrb[0].mxu0
    %6549 = vmatprep.mubr.f32.mxu0 0.0
    %v6550 = vand.u32 %v5728, 4294901760
    %6551 = vmatmul.mubr.f32.gmra.mrb[0].mxu0 %v6550
    %v6552 = vpop.f32.mrb[0].mxu0
    %v6553 = vadd.f32 %v6432, %v6552
    %v6554 = vpop.f32.mrb[0].mxu0
    %6555 = vmatprep.mubr.f32.mxu0 0.0
    %v6556 = vand.u32 %v5731, 4294901760
    %6557 = vmatmul.mubr.f32.gmra.mrb[0].mxu0 %v6556
    %v6558 = vpop.f32.mrb[0].mxu0
    %v6559 = vadd.f32 %v6438, %v6558
    %v6560 = vpop.f32.mrb[0].mxu0
    %6561 = vmatprep.mubr.f32.mxu0 0.0
    %v6562 = vand.u32 %v5734, 4294901760
    %6563 = vmatmul.mubr.f32.gmra.mrb[0].mxu0 %v6562
    %v6564 = vpop.f32.mrb[0].mxu0
    %v6565 = vadd.f32 %v6444, %v6564
    %v6566 = vpop.f32.mrb[0].mxu0
    %6567 = vmatprep.mubr.f32.mxu0 0.0
    %v6568 = vand.u32 %v5737, 4294901760
    %6569 = vmatmul.mubr.f32.gmra.mrb[0].mxu0 %v6568
    %v6570 = vpop.f32.mrb[0].mxu0
    %v6571 = vadd.f32 %v6450, %v6570
    %v6572 = vpop.f32.mrb[0].mxu0
    %6573 = vmatprep.mubr.f32.mxu0 0.0
    %v6574 = vand.u32 %v5740, 4294901760
    %6575 = vmatmul.mubr.f32.gmra.mrb[0].mxu0 %v6574
    %v6576 = vpop.f32.mrb[0].mxu0
    %v6577 = vadd.f32 %v6456, %v6576
    %v6578 = vpop.f32.mrb[0].mxu0
    %6579 = vdwg.mxu0
    %v6580 = vmul.f32 %v6535, 0.25
    %v6581 = vmul.f32 %v6541, 0.25
    %v6582 = vmul.f32 %v6547, 0.25
    %v6583 = vmul.f32 %v6553, 0.25
    %v6584 = vmul.f32 %v6559, 0.25
    %v6585 = vmul.f32 %v6565, 0.25
    %v6586 = vmul.f32 %v6571, 0.25
    %v6587 = vmul.f32 %v6577, 0.25
    %v6588 = vadd.f32 %v6580, 1e-05
    %v6589 = vadd.f32 %v6581, 1e-05
    %v6590 = vadd.f32 %v6582, 1e-05
    %v6591 = vadd.f32 %v6583, 1e-05
    %v6592 = vadd.f32 %v6584, 1e-05
    %v6593 = vadd.f32 %v6585, 1e-05
    %v6594 = vadd.f32 %v6586, 1e-05
    %v6595 = vadd.f32 %v6587, 1e-05
    %v6596 = vrsqrt.pop %v6588
    %v6597 = vrsqrt.pop %v6589
    %v6598 = vrsqrt.pop %v6590
    %v6599 = vrsqrt.pop %v6591
    %v6600 = vrsqrt.pop %v6592
    %v6601 = vrsqrt.pop %v6593
    %v6602 = vrsqrt.pop %v6594
    %v6603 = vrsqrt.pop %v6595
    %v6604 = vmul.f32 %v5657, %v6596
    %v6605 = vmul.f32 %v5663, %v6597
    %v6606 = vmul.f32 %v5669, %v6598
    %v6607 = vmul.f32 %v5675, %v6599
    %v6608 = vmul.f32 %v5681, %v6600
    %v6609 = vmul.f32 %v5687, %v6601
    %v6610 = vmul.f32 %v5693, %v6602
    %v6611 = vmul.f32 %v5699, %v6603
    %v6612 = vld [vmem:[%s5] sm:$0xff]
    %v6613 = vld [vmem:[%s5 + $0x8] sm:$0xff]
    %v6614 = vld [vmem:[%s5 + $0x10] sm:$0xff]
    %v6615 = vld [vmem:[%s5 + $0x18] sm:$0xff]
    %v6616 = vld [vmem:[%s5 + $0x20] sm:$0xff]
    %v6617 = vld [vmem:[%s5 + $0x28] sm:$0xff]
    %v6618 = vld [vmem:[%s5 + $0x30] sm:$0xff]
    %v6619 = vld [vmem:[%s5 + $0x38] sm:$0xff]
    %6621 = vset.pattern.permute.xlu0 0
    %6622 = vperm.xlu0 %6621, %v6612
    %v6623 = vpop.permute.xlu0 %6622
    %6626 = vset.pattern.permute.xlu0 0
    %6627 = vperm.xlu0 %6626, %v6613
    %v6628 = vpop.permute.xlu0 %6627
    %6631 = vset.pattern.permute.xlu0 0
    %6632 = vperm.xlu0 %6631, %v6614
    %v6633 = vpop.permute.xlu0 %6632
    %6636 = vset.pattern.permute.xlu0 0
    %6637 = vperm.xlu0 %6636, %v6615
    %v6638 = vpop.permute.xlu0 %6637
    %6641 = vset.pattern.permute.xlu0 0
    %6642 = vperm.xlu0 %6641, %v6616
    %v6643 = vpop.permute.xlu0 %6642
    %6646 = vset.pattern.permute.xlu0 0
    %6647 = vperm.xlu0 %6646, %v6617
    %v6648 = vpop.permute.xlu0 %6647
    %6651 = vset.pattern.permute.xlu0 0
    %6652 = vperm.xlu0 %6651, %v6618
    %v6653 = vpop.permute.xlu0 %6652
    %6656 = vset.pattern.permute.xlu0 0
    %6657 = vperm.xlu0 %6656, %v6619
    %v6658 = vpop.permute.xlu0 %6657
    %v6660 = vmul.f32 %v6604, %v6623
    %v6661 = vmul.f32 %v6605, %v6628
    %v6662 = vmul.f32 %v6606, %v6633
    %v6663 = vmul.f32 %v6607, %v6638
    %v6664 = vmul.f32 %v6608, %v6643
    %v6665 = vmul.f32 %v6609, %v6648
    %v6666 = vmul.f32 %v6610, %v6653
    %v6667 = vmul.f32 %v6611, %v6658
    %v6668 = vld [vmem:[%s6] sm:$0xff]
    %v6669 = vld [vmem:[%s6 + $0x8] sm:$0xff]
    %v6670 = vld [vmem:[%s6 + $0x10] sm:$0xff]
    %v6671 = vld [vmem:[%s6 + $0x18] sm:$0xff]
    %v6672 = vld [vmem:[%s6 + $0x20] sm:$0xff]
    %v6673 = vld [vmem:[%s6 + $0x28] sm:$0xff]
    %v6674 = vld [vmem:[%s6 + $0x30] sm:$0xff]
    %v6675 = vld [vmem:[%s6 + $0x38] sm:$0xff]
    %6677 = vset.pattern.permute.xlu0 0
    %6678 = vperm.xlu0 %6677, %v6668
    %v6679 = vpop.permute.xlu0 %6678
    %6682 = vset.pattern.permute.xlu0 0
    %6683 = vperm.xlu0 %6682, %v6669
    %v6684 = vpop.permute.xlu0 %6683
    %6687 = vset.pattern.permute.xlu0 0
    %6688 = vperm.xlu0 %6687, %v6670
    %v6689 = vpop.permute.xlu0 %6688
    %6692 = vset.pattern.permute.xlu0 0
    %6693 = vperm.xlu0 %6692, %v6671
    %v6694 = vpop.permute.xlu0 %6693
    %6697 = vset.pattern.permute.xlu0 0
    %6698 = vperm.xlu0 %6697, %v6672
    %v6699 = vpop.permute.xlu0 %6698
    %6702 = vset.pattern.permute.xlu0 0
    %6703 = vperm.xlu0 %6702, %v6673
    %v6704 = vpop.permute.xlu0 %6703
    %6707 = vset.pattern.permute.xlu0 0
    %6708 = vperm.xlu0 %6707, %v6674
    %v6709 = vpop.permute.xlu0 %6708
    %6712 = vset.pattern.permute.xlu0 0
    %6713 = vperm.xlu0 %6712, %v6675
    %v6714 = vpop.permute.xlu0 %6713
    %v6716 = vadd.f32 %v6660, %v6679
    %v6717 = vadd.f32 %v6661, %v6684
    %v6718 = vadd.f32 %v6662, %v6689
    %v6719 = vadd.f32 %v6663, %v6694
    %v6720 = vadd.f32 %v6664, %v6699
    %v6721 = vadd.f32 %v6665, %v6704
    %v6722 = vadd.f32 %v6666, %v6709
    %v6723 = vadd.f32 %v6667, %v6714
    %6725 = vrot.lane.b32.xlu0 %v1094, 96
    %v6726 = vpop.permute.xlu0 %6725
    %v6729 = vsel %vm4742, %v6717, 0
    %6731 = vmatprep.subr.mxu0 0.0
    %v6732 = vand.u32 %v6726, 4294901760
    %6733 = vmatpush1.msra.mxu0 %v6732
    %6734 = vmatprep.subr.mxu0 0.0
    %6735 = vmatpush1.msra.mxu0 0.0
    %6736 = vmatprep.subr.mxu0 0.0
    %6737 = vmatpush1.msra.mxu0 0.0
    %6738 = vmatprep.subr.mxu0 0.0
    %6739 = vmatpush1.msra.mxu0 0.0
    %6740 = vmatprep.subr.mxu0 0.0
    %6741 = vmatpush1.msra.mxu0 0.0
    %6742 = vmatprep.subr.mxu0 0.0
    %6743 = vmatpush1.msra.mxu0 0.0
    %6744 = vmatprep.subr.mxu0 0.0
    %6745 = vmatpush1.msra.mxu0 0.0
    %6746 = vmatprep.subr.mxu0 0.0
    %6747 = vmatpush1.msra.mxu0 0.0
    %6748 = vmatprep.subr.mxu0 0.0
    %6749 = vmatpush1.msra.mxu0 0.0
    %6750 = vmatprep.subr.mxu0 0.0
    %6751 = vmatpush1.msra.mxu0 0.0
    %6752 = vmatprep.subr.mxu0 0.0
    %6753 = vmatpush1.msra.mxu0 0.0
    %6754 = vmatprep.subr.mxu0 0.0
    %6755 = vmatpush1.msra.mxu0 0.0
    %6756 = vmatprep.subr.mxu0 0.0
    %6757 = vmatpush1.msra.mxu0 0.0
    %6758 = vmatprep.subr.mxu0 0.0
    %6759 = vmatpush1.msra.mxu0 0.0
    %6760 = vmatprep.subr.mxu0 0.0
    %6761 = vmatpush1.msra.mxu0 0.0
    %6762 = vmatprep.subr.mxu0 0.0
    %6763 = vmatpush1.msra.mxu0 0.0
    %6764 = vmatprep.subr.mxu0 0.0
    %6765 = vmatpush1.msra.mxu0 0.0
    %6766 = vmatprep.subr.mxu0 0.0
    %6767 = vmatpush1.msra.mxu0 0.0
    %6768 = vmatprep.subr.mxu0 0.0
    %6769 = vmatpush1.msra.mxu0 0.0
    %6770 = vmatprep.subr.mxu0 0.0
    %6771 = vmatpush1.msra.mxu0 0.0
    %6772 = vmatprep.subr.mxu0 0.0
    %6773 = vmatpush1.msra.mxu0 0.0
    %6774 = vmatprep.subr.mxu0 0.0
    %6775 = vmatpush1.msra.mxu0 0.0
    %6776 = vmatprep.subr.mxu0 0.0
    %6777 = vmatpush1.msra.mxu0 0.0
    %6778 = vmatprep.subr.mxu0 0.0
    %6779 = vmatpush1.msra.mxu0 0.0
    %6780 = vmatprep.subr.mxu0 0.0
    %6781 = vmatpush1.msra.mxu0 0.0
    %6782 = vmatprep.subr.mxu0 0.0
    %6783 = vmatpush1.msra.mxu0 0.0
    %6784 = vmatprep.subr.mxu0 0.0
    %6785 = vmatpush1.msra.mxu0 0.0
    %6786 = vmatprep.subr.mxu0 0.0
    %6787 = vmatpush1.msra.mxu0 0.0
    %6788 = vmatprep.subr.mxu0 0.0
    %6789 = vmatpush1.msra.mxu0 0.0
    %6790 = vmatprep.subr.mxu0 0.0
    %6791 = vmatpush1.msra.mxu0 0.0
    %6792 = vmatprep.subr.mxu0 0.0
    %6793 = vmatpush1.msra.mxu0 0.0
    %6794 = vmatprep.subr.mxu0 0.0
    %6795 = vmatpush1.msra.mxu0 0.0
    %6796 = vmatprep.mubr.f32.mxu0 0.0
    %v6797 = vand.u32 %v6729, 4294901760
    %v6798 = vsub.f32 %v6729, %v6797
    %v6799 = vand.u32 %v6798, 4294901760
    %v6800 = vsub.f32 %v6798, %v6799
    %v6801 = vand.u32 %v6800, 4294901760
    %6802 = vmatmul.mubr.f32.gmra.mrb[0].mxu0 %v6801
    %v6803 = vpop.f32.mrb[0].mxu0
    %v6804 = vadd.f32 0.0, %v6803
    %v6805 = vpop.f32.mrb[0].mxu0
    %6806 = vdwg.mxu0
    %6807 = vmatprep.subr.mxu0 0.0
    %v6808 = vand.u32 %v6726, 4294901760
    %v6809 = vsub.f32 %v6726, %v6808
    %v6810 = vand.u32 %v6809, 4294901760
    %v6811 = vsub.f32 %v6809, %v6810
    %v6812 = vand.u32 %v6811, 4294901760
    %6813 = vmatpush1.msra.mxu0 %v6812
    %6814 = vmatprep.subr.mxu0 0.0
    %6815 = vmatpush1.msra.mxu0 0.0
    %6816 = vmatprep.subr.mxu0 0.0
    %6817 = vmatpush1.msra.mxu0 0.0
    %6818 = vmatprep.subr.mxu0 0.0
    %6819 = vmatpush1.msra.mxu0 0.0
    %6820 = vmatprep.subr.mxu0 0.0
    %6821 = vmatpush1.msra.mxu0 0.0
    %6822 = vmatprep.subr.mxu0 0.0
    %6823 = vmatpush1.msra.mxu0 0.0
    %6824 = vmatprep.subr.mxu0 0.0
    %6825 = vmatpush1.msra.mxu0 0.0
    %6826 = vmatprep.subr.mxu0 0.0
    %6827 = vmatpush1.msra.mxu0 0.0
    %6828 = vmatprep.subr.mxu0 0.0
    %6829 = vmatpush1.msra.mxu0 0.0
    %6830 = vmatprep.subr.mxu0 0.0
    %6831 = vmatpush1.msra.mxu0 0.0
    %6832 = vmatprep.subr.mxu0 0.0
    %6833 = vmatpush1.msra.mxu0 0.0
    %6834 = vmatprep.subr.mxu0 0.0
    %6835 = vmatpush1.msra.mxu0 0.0
    %6836 = vmatprep.subr.mxu0 0.0
    %6837 = vmatpush1.msra.mxu0 0.0
    %6838 = vmatprep.subr.mxu0 0.0
    %6839 = vmatpush1.msra.mxu0 0.0
    %6840 = vmatprep.subr.mxu0 0.0
    %6841 = vmatpush1.msra.mxu0 0.0
    %6842 = vmatprep.subr.mxu0 0.0
    %6843 = vmatpush1.msra.mxu0 0.0
    %6844 = vmatprep.subr.mxu0 0.0
    %6845 = vmatpush1.msra.mxu0 0.0
    %6846 = vmatprep.subr.mxu0 0.0
    %6847 = vmatpush1.msra.mxu0 0.0
    %6848 = vmatprep.subr.mxu0 0.0
    %6849 = vmatpush1.msra.mxu0 0.0
    %6850 = vmatprep.subr.mxu0 0.0
    %6851 = vmatpush1.msra.mxu0 0.0
    %6852 = vmatprep.subr.mxu0 0.0
    %6853 = vmatpush1.msra.mxu0 0.0
    %6854 = vmatprep.subr.mxu0 0.0
    %6855 = vmatpush1.msra.mxu0 0.0
    %6856 = vmatprep.subr.mxu0 0.0
    %6857 = vmatpush1.msra.mxu0 0.0
    %6858 = vmatprep.subr.mxu0 0.0
    %6859 = vmatpush1.msra.mxu0 0.0
    %6860 = vmatprep.subr.mxu0 0.0
    %6861 = vmatpush1.msra.mxu0 0.0
    %6862 = vmatprep.subr.mxu0 0.0
    %6863 = vmatpush1.msra.mxu0 0.0
    %6864 = vmatprep.subr.mxu0 0.0
    %6865 = vmatpush1.msra.mxu0 0.0
    %6866 = vmatprep.subr.mxu0 0.0
    %6867 = vmatpush1.msra.mxu0 0.0
    %6868 = vmatprep.subr.mxu0 0.0
    %6869 = vmatpush1.msra.mxu0 0.0
    %6870 = vmatprep.subr.mxu0 0.0
    %6871 = vmatpush1.msra.mxu0 0.0
    %6872 = vmatprep.subr.mxu0 0.0
    %6873 = vmatpush1.msra.mxu0 0.0
    %6874 = vmatprep.subr.mxu0 0.0
    %6875 = vmatpush1.msra.mxu0 0.0
    %6876 = vmatprep.mubr.f32.mxu0 0.0
    %v6877 = vand.u32 %v6729, 4294901760
    %6878 = vmatmul.mubr.f32.gmra.mrb[0].mxu0 %v6877
    %v6879 = vpop.f32.mrb[0].mxu0
    %v6880 = vadd.f32 %v6804, %v6879
    %v6881 = vpop.f32.mrb[0].mxu0
    %6882 = vdwg.mxu0
    %6883 = vmatprep.subr.mxu0 0.0
    %v6884 = vand.u32 %v6726, 4294901760
    %v6885 = vsub.f32 %v6726, %v6884
    %6886 = vmatpush1.msra.mxu0 %v6885
    %6887 = vmatprep.subr.mxu0 0.0
    %6888 = vmatpush1.msra.mxu0 0.0
    %6889 = vmatprep.subr.mxu0 0.0
    %6890 = vmatpush1.msra.mxu0 0.0
    %6891 = vmatprep.subr.mxu0 0.0
    %6892 = vmatpush1.msra.mxu0 0.0
    %6893 = vmatprep.subr.mxu0 0.0
    %6894 = vmatpush1.msra.mxu0 0.0
    %6895 = vmatprep.subr.mxu0 0.0
    %6896 = vmatpush1.msra.mxu0 0.0
    %6897 = vmatprep.subr.mxu0 0.0
    %6898 = vmatpush1.msra.mxu0 0.0
    %6899 = vmatprep.subr.mxu0 0.0
    %6900 = vmatpush1.msra.mxu0 0.0
    %6901 = vmatprep.subr.mxu0 0.0
    %6902 = vmatpush1.msra.mxu0 0.0
    %6903 = vmatprep.subr.mxu0 0.0
    %6904 = vmatpush1.msra.mxu0 0.0
    %6905 = vmatprep.subr.mxu0 0.0
    %6906 = vmatpush1.msra.mxu0 0.0
    %6907 = vmatprep.subr.mxu0 0.0
    %6908 = vmatpush1.msra.mxu0 0.0
    %6909 = vmatprep.subr.mxu0 0.0
    %6910 = vmatpush1.msra.mxu0 0.0
    %6911 = vmatprep.subr.mxu0 0.0
    %6912 = vmatpush1.msra.mxu0 0.0
    %6913 = vmatprep.subr.mxu0 0.0
    %6914 = vmatpush1.msra.mxu0 0.0
    %6915 = vmatprep.subr.mxu0 0.0
    %6916 = vmatpush1.msra.mxu0 0.0
    %6917 = vmatprep.subr.mxu0 0.0
    %6918 = vmatpush1.msra.mxu0 0.0
    %6919 = vmatprep.subr.mxu0 0.0
    %6920 = vmatpush1.msra.mxu0 0.0
    %6921 = vmatprep.subr.mxu0 0.0
    %6922 = vmatpush1.msra.mxu0 0.0
    %6923 = vmatprep.subr.mxu0 0.0
    %6924 = vmatpush1.msra.mxu0 0.0
    %6925 = vmatprep.subr.mxu0 0.0
    %6926 = vmatpush1.msra.mxu0 0.0
    %6927 = vmatprep.subr.mxu0 0.0
    %6928 = vmatpush1.msra.mxu0 0.0
    %6929 = vmatprep.subr.mxu0 0.0
    %6930 = vmatpush1.msra.mxu0 0.0
    %6931 = vmatprep.subr.mxu0 0.0
    %6932 = vmatpush1.msra.mxu0 0.0
    %6933 = vmatprep.subr.mxu0 0.0
    %6934 = vmatpush1.msra.mxu0 0.0
    %6935 = vmatprep.subr.mxu0 0.0
    %6936 = vmatpush1.msra.mxu0 0.0
    %6937 = vmatprep.subr.mxu0 0.0
    %6938 = vmatpush1.msra.mxu0 0.0
    %6939 = vmatprep.subr.mxu0 0.0
    %6940 = vmatpush1.msra.mxu0 0.0
    %6941 = vmatprep.subr.mxu0 0.0
    %6942 = vmatpush1.msra.mxu0 0.0
    %6943 = vmatprep.subr.mxu0 0.0
    %6944 = vmatpush1.msra.mxu0 0.0
    %6945 = vmatprep.subr.mxu0 0.0
    %6946 = vmatpush1.msra.mxu0 0.0
    %6947 = vmatprep.subr.mxu0 0.0
    %6948 = vmatpush1.msra.mxu0 0.0
    %6949 = vmatprep.mubr.f32.mxu0 0.0
    %v6950 = vand.u32 %v6729, 4294901760
    %v6951 = vsub.f32 %v6729, %v6950
    %6952 = vmatmul.mubr.f32.gmra.mrb[0].mxu0 %v6951
    %v6953 = vpop.f32.mrb[0].mxu0
    %v6954 = vadd.f32 %v6880, %v6953
    %v6955 = vpop.f32.mrb[0].mxu0
    %6956 = vdwg.mxu0
    %6957 = vmatprep.subr.mxu0 0.0
    %v6958 = vand.u32 %v6726, 4294901760
    %6959 = vmatpush1.msra.mxu0 %v6958
    %6960 = vmatprep.subr.mxu0 0.0
    %6961 = vmatpush1.msra.mxu0 0.0
    %6962 = vmatprep.subr.mxu0 0.0
    %6963 = vmatpush1.msra.mxu0 0.0
    %6964 = vmatprep.subr.mxu0 0.0
    %6965 = vmatpush1.msra.mxu0 0.0
    %6966 = vmatprep.subr.mxu0 0.0
    %6967 = vmatpush1.msra.mxu0 0.0
    %6968 = vmatprep.subr.mxu0 0.0
    %6969 = vmatpush1.msra.mxu0 0.0
    %6970 = vmatprep.subr.mxu0 0.0
    %6971 = vmatpush1.msra.mxu0 0.0
    %6972 = vmatprep.subr.mxu0 0.0
    %6973 = vmatpush1.msra.mxu0 0.0
    %6974 = vmatprep.subr.mxu0 0.0
    %6975 = vmatpush1.msra.mxu0 0.0
    %6976 = vmatprep.subr.mxu0 0.0
    %6977 = vmatpush1.msra.mxu0 0.0
    %6978 = vmatprep.subr.mxu0 0.0
    %6979 = vmatpush1.msra.mxu0 0.0
    %6980 = vmatprep.subr.mxu0 0.0
    %6981 = vmatpush1.msra.mxu0 0.0
    %6982 = vmatprep.subr.mxu0 0.0
    %6983 = vmatpush1.msra.mxu0 0.0
    %6984 = vmatprep.subr.mxu0 0.0
    %6985 = vmatpush1.msra.mxu0 0.0
    %6986 = vmatprep.subr.mxu0 0.0
    %6987 = vmatpush1.msra.mxu0 0.0
    %6988 = vmatprep.subr.mxu0 0.0
    %6989 = vmatpush1.msra.mxu0 0.0
    %6990 = vmatprep.subr.mxu0 0.0
    %6991 = vmatpush1.msra.mxu0 0.0
    %6992 = vmatprep.subr.mxu0 0.0
    %6993 = vmatpush1.msra.mxu0 0.0
    %6994 = vmatprep.subr.mxu0 0.0
    %6995 = vmatpush1.msra.mxu0 0.0
    %6996 = vmatprep.subr.mxu0 0.0
    %6997 = vmatpush1.msra.mxu0 0.0
    %6998 = vmatprep.subr.mxu0 0.0
    %6999 = vmatpush1.msra.mxu0 0.0
    %7000 = vmatprep.subr.mxu0 0.0
    %7001 = vmatpush1.msra.mxu0 0.0
    %7002 = vmatprep.subr.mxu0 0.0
    %7003 = vmatpush1.msra.mxu0 0.0
    %7004 = vmatprep.subr.mxu0 0.0
    %7005 = vmatpush1.msra.mxu0 0.0
    %7006 = vmatprep.subr.mxu0 0.0
    %7007 = vmatpush1.msra.mxu0 0.0
    %7008 = vmatprep.subr.mxu0 0.0
    %7009 = vmatpush1.msra.mxu0 0.0
    %7010 = vmatprep.subr.mxu0 0.0
    %7011 = vmatpush1.msra.mxu0 0.0
    %7012 = vmatprep.subr.mxu0 0.0
    %7013 = vmatpush1.msra.mxu0 0.0
    %7014 = vmatprep.subr.mxu0 0.0
    %7015 = vmatpush1.msra.mxu0 0.0
    %7016 = vmatprep.subr.mxu0 0.0
    %7017 = vmatpush1.msra.mxu0 0.0
    %7018 = vmatprep.subr.mxu0 0.0
    %7019 = vmatpush1.msra.mxu0 0.0
    %7020 = vmatprep.subr.mxu0 0.0
    %7021 = vmatpush1.msra.mxu0 0.0
    %7022 = vmatprep.mubr.f32.mxu0 0.0
    %v7023 = vand.u32 %v6729, 4294901760
    %v7024 = vsub.f32 %v6729, %v7023
    %v7025 = vand.u32 %v7024, 4294901760
    %7026 = vmatmul.mubr.f32.gmra.mrb[0].mxu0 %v7025
    %v7027 = vpop.f32.mrb[0].mxu0
    %v7028 = vadd.f32 %v6954, %v7027
    %v7029 = vpop.f32.mrb[0].mxu0
    %7030 = vdwg.mxu0
    %7031 = vmatprep.subr.mxu0 0.0
    %v7032 = vand.u32 %v6726, 4294901760
    %v7033 = vsub.f32 %v6726, %v7032
    %v7034 = vand.u32 %v7033, 4294901760
    %7035 = vmatpush1.msra.mxu0 %v7034
    %7036 = vmatprep.subr.mxu0 0.0
    %7037 = vmatpush1.msra.mxu0 0.0
    %7038 = vmatprep.subr.mxu0 0.0
    %7039 = vmatpush1.msra.mxu0 0.0
    %7040 = vmatprep.subr.mxu0 0.0
    %7041 = vmatpush1.msra.mxu0 0.0
    %7042 = vmatprep.subr.mxu0 0.0
    %7043 = vmatpush1.msra.mxu0 0.0
    %7044 = vmatprep.subr.mxu0 0.0
    %7045 = vmatpush1.msra.mxu0 0.0
    %7046 = vmatprep.subr.mxu0 0.0
    %7047 = vmatpush1.msra.mxu0 0.0
    %7048 = vmatprep.subr.mxu0 0.0
    %7049 = vmatpush1.msra.mxu0 0.0
    %7050 = vmatprep.subr.mxu0 0.0
    %7051 = vmatpush1.msra.mxu0 0.0
    %7052 = vmatprep.subr.mxu0 0.0
    %7053 = vmatpush1.msra.mxu0 0.0
    %7054 = vmatprep.subr.mxu0 0.0
    %7055 = vmatpush1.msra.mxu0 0.0
    %7056 = vmatprep.subr.mxu0 0.0
    %7057 = vmatpush1.msra.mxu0 0.0
    %7058 = vmatprep.subr.mxu0 0.0
    %7059 = vmatpush1.msra.mxu0 0.0
    %7060 = vmatprep.subr.mxu0 0.0
    %7061 = vmatpush1.msra.mxu0 0.0
    %7062 = vmatprep.subr.mxu0 0.0
    %7063 = vmatpush1.msra.mxu0 0.0
    %7064 = vmatprep.subr.mxu0 0.0
    %7065 = vmatpush1.msra.mxu0 0.0
    %7066 = vmatprep.subr.mxu0 0.0
    %7067 = vmatpush1.msra.mxu0 0.0
    %7068 = vmatprep.subr.mxu0 0.0
    %7069 = vmatpush1.msra.mxu0 0.0
    %7070 = vmatprep.subr.mxu0 0.0
    %7071 = vmatpush1.msra.mxu0 0.0
    %7072 = vmatprep.subr.mxu0 0.0
    %7073 = vmatpush1.msra.mxu0 0.0
    %7074 = vmatprep.subr.mxu0 0.0
    %7075 = vmatpush1.msra.mxu0 0.0
    %7076 = vmatprep.subr.mxu0 0.0
    %7077 = vmatpush1.msra.mxu0 0.0
    %7078 = vmatprep.subr.mxu0 0.0
    %7079 = vmatpush1.msra.mxu0 0.0
    %7080 = vmatprep.subr.mxu0 0.0
    %7081 = vmatpush1.msra.mxu0 0.0
    %7082 = vmatprep.subr.mxu0 0.0
    %7083 = vmatpush1.msra.mxu0 0.0
    %7084 = vmatprep.subr.mxu0 0.0
    %7085 = vmatpush1.msra.mxu0 0.0
    %7086 = vmatprep.subr.mxu0 0.0
    %7087 = vmatpush1.msra.mxu0 0.0
    %7088 = vmatprep.subr.mxu0 0.0
    %7089 = vmatpush1.msra.mxu0 0.0
    %7090 = vmatprep.subr.mxu0 0.0
    %7091 = vmatpush1.msra.mxu0 0.0
    %7092 = vmatprep.subr.mxu0 0.0
    %7093 = vmatpush1.msra.mxu0 0.0
    %7094 = vmatprep.subr.mxu0 0.0
    %7095 = vmatpush1.msra.mxu0 0.0
    %7096 = vmatprep.subr.mxu0 0.0
    %7097 = vmatpush1.msra.mxu0 0.0
    %7098 = vmatprep.mubr.f32.mxu0 0.0
    %v7099 = vand.u32 %v6729, 4294901760
    %7100 = vmatmul.mubr.f32.gmra.mrb[0].mxu0 %v7099
    %v7101 = vpop.f32.mrb[0].mxu0
    %v7102 = vadd.f32 %v7028, %v7101
    %v7103 = vpop.f32.mrb[0].mxu0
    %7104 = vdwg.mxu0
    %7105 = vmatprep.subr.mxu0 0.0
    %v7106 = vand.u32 %v6726, 4294901760
    %7107 = vmatpush1.msra.mxu0 %v7106
    %7108 = vmatprep.subr.mxu0 0.0
    %7109 = vmatpush1.msra.mxu0 0.0
    %7110 = vmatprep.subr.mxu0 0.0
    %7111 = vmatpush1.msra.mxu0 0.0
    %7112 = vmatprep.subr.mxu0 0.0
    %7113 = vmatpush1.msra.mxu0 0.0
    %7114 = vmatprep.subr.mxu0 0.0
    %7115 = vmatpush1.msra.mxu0 0.0
    %7116 = vmatprep.subr.mxu0 0.0
    %7117 = vmatpush1.msra.mxu0 0.0
    %7118 = vmatprep.subr.mxu0 0.0
    %7119 = vmatpush1.msra.mxu0 0.0
    %7120 = vmatprep.subr.mxu0 0.0
    %7121 = vmatpush1.msra.mxu0 0.0
    %7122 = vmatprep.subr.mxu0 0.0
    %7123 = vmatpush1.msra.mxu0 0.0
    %7124 = vmatprep.subr.mxu0 0.0
    %7125 = vmatpush1.msra.mxu0 0.0
    %7126 = vmatprep.subr.mxu0 0.0
    %7127 = vmatpush1.msra.mxu0 0.0
    %7128 = vmatprep.subr.mxu0 0.0
    %7129 = vmatpush1.msra.mxu0 0.0
    %7130 = vmatprep.subr.mxu0 0.0
    %7131 = vmatpush1.msra.mxu0 0.0
    %7132 = vmatprep.subr.mxu0 0.0
    %7133 = vmatpush1.msra.mxu0 0.0
    %7134 = vmatprep.subr.mxu0 0.0
    %7135 = vmatpush1.msra.mxu0 0.0
    %7136 = vmatprep.subr.mxu0 0.0
    %7137 = vmatpush1.msra.mxu0 0.0
    %7138 = vmatprep.subr.mxu0 0.0
    %7139 = vmatpush1.msra.mxu0 0.0
    %7140 = vmatprep.subr.mxu0 0.0
    %7141 = vmatpush1.msra.mxu0 0.0
    %7142 = vmatprep.subr.mxu0 0.0
    %7143 = vmatpush1.msra.mxu0 0.0
    %7144 = vmatprep.subr.mxu0 0.0
    %7145 = vmatpush1.msra.mxu0 0.0
    %7146 = vmatprep.subr.mxu0 0.0
    %7147 = vmatpush1.msra.mxu0 0.0
    %7148 = vmatprep.subr.mxu0 0.0
    %7149 = vmatpush1.msra.mxu0 0.0
    %7150 = vmatprep.subr.mxu0 0.0
    %7151 = vmatpush1.msra.mxu0 0.0
    %7152 = vmatprep.subr.mxu0 0.0
    %7153 = vmatpush1.msra.mxu0 0.0
    %7154 = vmatprep.subr.mxu0 0.0
    %7155 = vmatpush1.msra.mxu0 0.0
    %7156 = vmatprep.subr.mxu0 0.0
    %7157 = vmatpush1.msra.mxu0 0.0
    %7158 = vmatprep.subr.mxu0 0.0
    %7159 = vmatpush1.msra.mxu0 0.0
    %7160 = vmatprep.subr.mxu0 0.0
    %7161 = vmatpush1.msra.mxu0 0.0
    %7162 = vmatprep.subr.mxu0 0.0
    %7163 = vmatpush1.msra.mxu0 0.0
    %7164 = vmatprep.subr.mxu0 0.0
    %7165 = vmatpush1.msra.mxu0 0.0
    %7166 = vmatprep.subr.mxu0 0.0
    %7167 = vmatpush1.msra.mxu0 0.0
    %7168 = vmatprep.subr.mxu0 0.0
    %7169 = vmatpush1.msra.mxu0 0.0
    %7170 = vmatprep.mubr.f32.mxu0 0.0
    %v7171 = vand.u32 %v6729, 4294901760
    %7172 = vmatmul.mubr.f32.gmra.mrb[0].mxu0 %v7171
    %v7173 = vpop.f32.mrb[0].mxu0
    %v7174 = vadd.f32 %v7102, %v7173
    %v7175 = vpop.f32.mrb[0].mxu0
    %7176 = vdwg.mxu0
    %v7178 = vsel %vm4742, %v6716, 0
    %7180 = vmatprep.subr.mxu0 0.0
    %v7181 = vand.u32 %v1094, 4294901760
    %7182 = vmatpush1.msra.mxu0 %v7181
    %7183 = vmatprep.subr.mxu0 0.0
    %7184 = vmatpush1.msra.mxu0 0.0
    %7185 = vmatprep.subr.mxu0 0.0
    %7186 = vmatpush1.msra.mxu0 0.0
    %7187 = vmatprep.subr.mxu0 0.0
    %7188 = vmatpush1.msra.mxu0 0.0
    %7189 = vmatprep.subr.mxu0 0.0
    %7190 = vmatpush1.msra.mxu0 0.0
    %7191 = vmatprep.subr.mxu0 0.0
    %7192 = vmatpush1.msra.mxu0 0.0
    %7193 = vmatprep.subr.mxu0 0.0
    %7194 = vmatpush1.msra.mxu0 0.0
    %7195 = vmatprep.subr.mxu0 0.0
    %7196 = vmatpush1.msra.mxu0 0.0
    %7197 = vmatprep.subr.mxu0 0.0
    %7198 = vmatpush1.msra.mxu0 0.0
    %7199 = vmatprep.subr.mxu0 0.0
    %7200 = vmatpush1.msra.mxu0 0.0
    %7201 = vmatprep.subr.mxu0 0.0
    %7202 = vmatpush1.msra.mxu0 0.0
    %7203 = vmatprep.subr.mxu0 0.0
    %7204 = vmatpush1.msra.mxu0 0.0
    %7205 = vmatprep.subr.mxu0 0.0
    %7206 = vmatpush1.msra.mxu0 0.0
    %7207 = vmatprep.subr.mxu0 0.0
    %7208 = vmatpush1.msra.mxu0 0.0
    %7209 = vmatprep.subr.mxu0 0.0
    %7210 = vmatpush1.msra.mxu0 0.0
    %7211 = vmatprep.subr.mxu0 0.0
    %7212 = vmatpush1.msra.mxu0 0.0
    %7213 = vmatprep.subr.mxu0 0.0
    %7214 = vmatpush1.msra.mxu0 0.0
    %7215 = vmatprep.subr.mxu0 0.0
    %7216 = vmatpush1.msra.mxu0 0.0
    %7217 = vmatprep.subr.mxu0 0.0
    %7218 = vmatpush1.msra.mxu0 0.0
    %7219 = vmatprep.subr.mxu0 0.0
    %7220 = vmatpush1.msra.mxu0 0.0
    %7221 = vmatprep.subr.mxu0 0.0
    %7222 = vmatpush1.msra.mxu0 0.0
    %7223 = vmatprep.subr.mxu0 0.0
    %7224 = vmatpush1.msra.mxu0 0.0
    %7225 = vmatprep.subr.mxu0 0.0
    %7226 = vmatpush1.msra.mxu0 0.0
    %7227 = vmatprep.subr.mxu0 0.0
    %7228 = vmatpush1.msra.mxu0 0.0
    %7229 = vmatprep.subr.mxu0 0.0
    %7230 = vmatpush1.msra.mxu0 0.0
    %7231 = vmatprep.subr.mxu0 0.0
    %7232 = vmatpush1.msra.mxu0 0.0
    %7233 = vmatprep.subr.mxu0 0.0
    %7234 = vmatpush1.msra.mxu0 0.0
    %7235 = vmatprep.subr.mxu0 0.0
    %7236 = vmatpush1.msra.mxu0 0.0
    %7237 = vmatprep.subr.mxu0 0.0
    %7238 = vmatpush1.msra.mxu0 0.0
    %7239 = vmatprep.subr.mxu0 0.0
    %7240 = vmatpush1.msra.mxu0 0.0
    %7241 = vmatprep.subr.mxu0 0.0
    %7242 = vmatpush1.msra.mxu0 0.0
    %7243 = vmatprep.subr.mxu0 0.0
    %7244 = vmatpush1.msra.mxu0 0.0
    %7245 = vmatprep.mubr.f32.mxu0 0.0
    %v7246 = vand.u32 %v7178, 4294901760
    %v7247 = vsub.f32 %v7178, %v7246
    %v7248 = vand.u32 %v7247, 4294901760
    %v7249 = vsub.f32 %v7247, %v7248
    %v7250 = vand.u32 %v7249, 4294901760
    %7251 = vmatmul.mubr.f32.gmra.mrb[0].mxu0 %v7250
    %v7252 = vpop.f32.mrb[0].mxu0
    %v7253 = vadd.f32 %v7174, %v7252
    %v7254 = vpop.f32.mrb[0].mxu0
    %7255 = vdwg.mxu0
    %7256 = vmatprep.subr.mxu0 0.0
    %v7257 = vand.u32 %v1094, 4294901760
    %v7258 = vsub.f32 %v1094, %v7257
    %v7259 = vand.u32 %v7258, 4294901760
    %v7260 = vsub.f32 %v7258, %v7259
    %v7261 = vand.u32 %v7260, 4294901760
    %7262 = vmatpush1.msra.mxu0 %v7261
    %7263 = vmatprep.subr.mxu0 0.0
    %7264 = vmatpush1.msra.mxu0 0.0
    %7265 = vmatprep.subr.mxu0 0.0
    %7266 = vmatpush1.msra.mxu0 0.0
    %7267 = vmatprep.subr.mxu0 0.0
    %7268 = vmatpush1.msra.mxu0 0.0
    %7269 = vmatprep.subr.mxu0 0.0
    %7270 = vmatpush1.msra.mxu0 0.0
    %7271 = vmatprep.subr.mxu0 0.0
    %7272 = vmatpush1.msra.mxu0 0.0
    %7273 = vmatprep.subr.mxu0 0.0
    %7274 = vmatpush1.msra.mxu0 0.0
    %7275 = vmatprep.subr.mxu0 0.0
    %7276 = vmatpush1.msra.mxu0 0.0
    %7277 = vmatprep.subr.mxu0 0.0
    %7278 = vmatpush1.msra.mxu0 0.0
    %7279 = vmatprep.subr.mxu0 0.0
    %7280 = vmatpush1.msra.mxu0 0.0
    %7281 = vmatprep.subr.mxu0 0.0
    %7282 = vmatpush1.msra.mxu0 0.0
    %7283 = vmatprep.subr.mxu0 0.0
    %7284 = vmatpush1.msra.mxu0 0.0
    %7285 = vmatprep.subr.mxu0 0.0
    %7286 = vmatpush1.msra.mxu0 0.0
    %7287 = vmatprep.subr.mxu0 0.0
    %7288 = vmatpush1.msra.mxu0 0.0
    %7289 = vmatprep.subr.mxu0 0.0
    %7290 = vmatpush1.msra.mxu0 0.0
    %7291 = vmatprep.subr.mxu0 0.0
    %7292 = vmatpush1.msra.mxu0 0.0
    %7293 = vmatprep.subr.mxu0 0.0
    %7294 = vmatpush1.msra.mxu0 0.0
    %7295 = vmatprep.subr.mxu0 0.0
    %7296 = vmatpush1.msra.mxu0 0.0
    %7297 = vmatprep.subr.mxu0 0.0
    %7298 = vmatpush1.msra.mxu0 0.0
    %7299 = vmatprep.subr.mxu0 0.0
    %7300 = vmatpush1.msra.mxu0 0.0
    %7301 = vmatprep.subr.mxu0 0.0
    %7302 = vmatpush1.msra.mxu0 0.0
    %7303 = vmatprep.subr.mxu0 0.0
    %7304 = vmatpush1.msra.mxu0 0.0
    %7305 = vmatprep.subr.mxu0 0.0
    %7306 = vmatpush1.msra.mxu0 0.0
    %7307 = vmatprep.subr.mxu0 0.0
    %7308 = vmatpush1.msra.mxu0 0.0
    %7309 = vmatprep.subr.mxu0 0.0
    %7310 = vmatpush1.msra.mxu0 0.0
    %7311 = vmatprep.subr.mxu0 0.0
    %7312 = vmatpush1.msra.mxu0 0.0
    %7313 = vmatprep.subr.mxu0 0.0
    %7314 = vmatpush1.msra.mxu0 0.0
    %7315 = vmatprep.subr.mxu0 0.0
    %7316 = vmatpush1.msra.mxu0 0.0
    %7317 = vmatprep.subr.mxu0 0.0
    %7318 = vmatpush1.msra.mxu0 0.0
    %7319 = vmatprep.subr.mxu0 0.0
    %7320 = vmatpush1.msra.mxu0 0.0
    %7321 = vmatprep.subr.mxu0 0.0
    %7322 = vmatpush1.msra.mxu0 0.0
    %7323 = vmatprep.subr.mxu0 0.0
    %7324 = vmatpush1.msra.mxu0 0.0
    %7325 = vmatprep.mubr.f32.mxu0 0.0
    %v7326 = vand.u32 %v7178, 4294901760
    %7327 = vmatmul.mubr.f32.gmra.mrb[0].mxu0 %v7326
    %v7328 = vpop.f32.mrb[0].mxu0
    %v7329 = vadd.f32 %v7253, %v7328
    %v7330 = vpop.f32.mrb[0].mxu0
    %7331 = vdwg.mxu0
    %7332 = vmatprep.subr.mxu0 0.0
    %v7333 = vand.u32 %v1094, 4294901760
    %v7334 = vsub.f32 %v1094, %v7333
    %7335 = vmatpush1.msra.mxu0 %v7334
    %7336 = vmatprep.subr.mxu0 0.0
    %7337 = vmatpush1.msra.mxu0 0.0
    %7338 = vmatprep.subr.mxu0 0.0
    %7339 = vmatpush1.msra.mxu0 0.0
    %7340 = vmatprep.subr.mxu0 0.0
    %7341 = vmatpush1.msra.mxu0 0.0
    %7342 = vmatprep.subr.mxu0 0.0
    %7343 = vmatpush1.msra.mxu0 0.0
    %7344 = vmatprep.subr.mxu0 0.0
    %7345 = vmatpush1.msra.mxu0 0.0
    %7346 = vmatprep.subr.mxu0 0.0
    %7347 = vmatpush1.msra.mxu0 0.0
    %7348 = vmatprep.subr.mxu0 0.0
    %7349 = vmatpush1.msra.mxu0 0.0
    %7350 = vmatprep.subr.mxu0 0.0
    %7351 = vmatpush1.msra.mxu0 0.0
    %7352 = vmatprep.subr.mxu0 0.0
    %7353 = vmatpush1.msra.mxu0 0.0
    %7354 = vmatprep.subr.mxu0 0.0
    %7355 = vmatpush1.msra.mxu0 0.0
    %7356 = vmatprep.subr.mxu0 0.0
    %7357 = vmatpush1.msra.mxu0 0.0
    %7358 = vmatprep.subr.mxu0 0.0
    %7359 = vmatpush1.msra.mxu0 0.0
    %7360 = vmatprep.subr.mxu0 0.0
    %7361 = vmatpush1.msra.mxu0 0.0
    %7362 = vmatprep.subr.mxu0 0.0
    %7363 = vmatpush1.msra.mxu0 0.0
    %7364 = vmatprep.subr.mxu0 0.0
    %7365 = vmatpush1.msra.mxu0 0.0
    %7366 = vmatprep.subr.mxu0 0.0
    %7367 = vmatpush1.msra.mxu0 0.0
    %7368 = vmatprep.subr.mxu0 0.0
    %7369 = vmatpush1.msra.mxu0 0.0
    %7370 = vmatprep.subr.mxu0 0.0
    %7371 = vmatpush1.msra.mxu0 0.0
    %7372 = vmatprep.subr.mxu0 0.0
    %7373 = vmatpush1.msra.mxu0 0.0
    %7374 = vmatprep.subr.mxu0 0.0
    %7375 = vmatpush1.msra.mxu0 0.0
    %7376 = vmatprep.subr.mxu0 0.0
    %7377 = vmatpush1.msra.mxu0 0.0
    %7378 = vmatprep.subr.mxu0 0.0
    %7379 = vmatpush1.msra.mxu0 0.0
    %7380 = vmatprep.subr.mxu0 0.0
    %7381 = vmatpush1.msra.mxu0 0.0
    %7382 = vmatprep.subr.mxu0 0.0
    %7383 = vmatpush1.msra.mxu0 0.0
    %7384 = vmatprep.subr.mxu0 0.0
    %7385 = vmatpush1.msra.mxu0 0.0
    %7386 = vmatprep.subr.mxu0 0.0
    %7387 = vmatpush1.msra.mxu0 0.0
    %7388 = vmatprep.subr.mxu0 0.0
    %7389 = vmatpush1.msra.mxu0 0.0
    %7390 = vmatprep.subr.mxu0 0.0
    %7391 = vmatpush1.msra.mxu0 0.0
    %7392 = vmatprep.subr.mxu0 0.0
    %7393 = vmatpush1.msra.mxu0 0.0
    %7394 = vmatprep.subr.mxu0 0.0
    %7395 = vmatpush1.msra.mxu0 0.0
    %7396 = vmatprep.subr.mxu0 0.0
    %7397 = vmatpush1.msra.mxu0 0.0
    %7398 = vmatprep.mubr.f32.mxu0 0.0
    %v7399 = vand.u32 %v7178, 4294901760
    %v7400 = vsub.f32 %v7178, %v7399
    %7401 = vmatmul.mubr.f32.gmra.mrb[0].mxu0 %v7400
    %v7402 = vpop.f32.mrb[0].mxu0
    %v7403 = vadd.f32 %v7329, %v7402
    %v7404 = vpop.f32.mrb[0].mxu0
    %7405 = vdwg.mxu0
    %7406 = vmatprep.subr.mxu0 0.0
    %v7407 = vand.u32 %v1094, 4294901760
    %7408 = vmatpush1.msra.mxu0 %v7407
    %7409 = vmatprep.subr.mxu0 0.0
    %7410 = vmatpush1.msra.mxu0 0.0
    %7411 = vmatprep.subr.mxu0 0.0
    %7412 = vmatpush1.msra.mxu0 0.0
    %7413 = vmatprep.subr.mxu0 0.0
    %7414 = vmatpush1.msra.mxu0 0.0
    %7415 = vmatprep.subr.mxu0 0.0
    %7416 = vmatpush1.msra.mxu0 0.0
    %7417 = vmatprep.subr.mxu0 0.0
    %7418 = vmatpush1.msra.mxu0 0.0
    %7419 = vmatprep.subr.mxu0 0.0
    %7420 = vmatpush1.msra.mxu0 0.0
    %7421 = vmatprep.subr.mxu0 0.0
    %7422 = vmatpush1.msra.mxu0 0.0
    %7423 = vmatprep.subr.mxu0 0.0
    %7424 = vmatpush1.msra.mxu0 0.0
    %7425 = vmatprep.subr.mxu0 0.0
    %7426 = vmatpush1.msra.mxu0 0.0
    %7427 = vmatprep.subr.mxu0 0.0
    %7428 = vmatpush1.msra.mxu0 0.0
    %7429 = vmatprep.subr.mxu0 0.0
    %7430 = vmatpush1.msra.mxu0 0.0
    %7431 = vmatprep.subr.mxu0 0.0
    %7432 = vmatpush1.msra.mxu0 0.0
    %7433 = vmatprep.subr.mxu0 0.0
    %7434 = vmatpush1.msra.mxu0 0.0
    %7435 = vmatprep.subr.mxu0 0.0
    %7436 = vmatpush1.msra.mxu0 0.0
    %7437 = vmatprep.subr.mxu0 0.0
    %7438 = vmatpush1.msra.mxu0 0.0
    %7439 = vmatprep.subr.mxu0 0.0
    %7440 = vmatpush1.msra.mxu0 0.0
    %7441 = vmatprep.subr.mxu0 0.0
    %7442 = vmatpush1.msra.mxu0 0.0
    %7443 = vmatprep.subr.mxu0 0.0
    %7444 = vmatpush1.msra.mxu0 0.0
    %7445 = vmatprep.subr.mxu0 0.0
    %7446 = vmatpush1.msra.mxu0 0.0
    %7447 = vmatprep.subr.mxu0 0.0
    %7448 = vmatpush1.msra.mxu0 0.0
    %7449 = vmatprep.subr.mxu0 0.0
    %7450 = vmatpush1.msra.mxu0 0.0
    %7451 = vmatprep.subr.mxu0 0.0
    %7452 = vmatpush1.msra.mxu0 0.0
    %7453 = vmatprep.subr.mxu0 0.0
    %7454 = vmatpush1.msra.mxu0 0.0
    %7455 = vmatprep.subr.mxu0 0.0
    %7456 = vmatpush1.msra.mxu0 0.0
    %7457 = vmatprep.subr.mxu0 0.0
    %7458 = vmatpush1.msra.mxu0 0.0
    %7459 = vmatprep.subr.mxu0 0.0
    %7460 = vmatpush1.msra.mxu0 0.0
    %7461 = vmatprep.subr.mxu0 0.0
    %7462 = vmatpush1.msra.mxu0 0.0
    %7463 = vmatprep.subr.mxu0 0.0
    %7464 = vmatpush1.msra.mxu0 0.0
    %7465 = vmatprep.subr.mxu0 0.0
    %7466 = vmatpush1.msra.mxu0 0.0
    %7467 = vmatprep.subr.mxu0 0.0
    %7468 = vmatpush1.msra.mxu0 0.0
    %7469 = vmatprep.subr.mxu0 0.0
    %7470 = vmatpush1.msra.mxu0 0.0
    %7471 = vmatprep.mubr.f32.mxu0 0.0
    %v7472 = vand.u32 %v7178, 4294901760
    %v7473 = vsub.f32 %v7178, %v7472
    %v7474 = vand.u32 %v7473, 4294901760
    %7475 = vmatmul.mubr.f32.gmra.mrb[0].mxu0 %v7474
    %v7476 = vpop.f32.mrb[0].mxu0
    %v7477 = vadd.f32 %v7403, %v7476
    %v7478 = vpop.f32.mrb[0].mxu0
    %7479 = vdwg.mxu0
    %7480 = vmatprep.subr.mxu0 0.0
    %v7481 = vand.u32 %v1094, 4294901760
    %v7482 = vsub.f32 %v1094, %v7481
    %v7483 = vand.u32 %v7482, 4294901760
    %7484 = vmatpush1.msra.mxu0 %v7483
    %7485 = vmatprep.subr.mxu0 0.0
    %7486 = vmatpush1.msra.mxu0 0.0
    %7487 = vmatprep.subr.mxu0 0.0
    %7488 = vmatpush1.msra.mxu0 0.0
    %7489 = vmatprep.subr.mxu0 0.0
    %7490 = vmatpush1.msra.mxu0 0.0
    %7491 = vmatprep.subr.mxu0 0.0
    %7492 = vmatpush1.msra.mxu0 0.0
    %7493 = vmatprep.subr.mxu0 0.0
    %7494 = vmatpush1.msra.mxu0 0.0
    %7495 = vmatprep.subr.mxu0 0.0
    %7496 = vmatpush1.msra.mxu0 0.0
    %7497 = vmatprep.subr.mxu0 0.0
    %7498 = vmatpush1.msra.mxu0 0.0
    %7499 = vmatprep.subr.mxu0 0.0
    %7500 = vmatpush1.msra.mxu0 0.0
    %7501 = vmatprep.subr.mxu0 0.0
    %7502 = vmatpush1.msra.mxu0 0.0
    %7503 = vmatprep.subr.mxu0 0.0
    %7504 = vmatpush1.msra.mxu0 0.0
    %7505 = vmatprep.subr.mxu0 0.0
    %7506 = vmatpush1.msra.mxu0 0.0
    %7507 = vmatprep.subr.mxu0 0.0
    %7508 = vmatpush1.msra.mxu0 0.0
    %7509 = vmatprep.subr.mxu0 0.0
    %7510 = vmatpush1.msra.mxu0 0.0
    %7511 = vmatprep.subr.mxu0 0.0
    %7512 = vmatpush1.msra.mxu0 0.0
    %7513 = vmatprep.subr.mxu0 0.0
    %7514 = vmatpush1.msra.mxu0 0.0
    %7515 = vmatprep.subr.mxu0 0.0
    %7516 = vmatpush1.msra.mxu0 0.0
    %7517 = vmatprep.subr.mxu0 0.0
    %7518 = vmatpush1.msra.mxu0 0.0
    %7519 = vmatprep.subr.mxu0 0.0
    %7520 = vmatpush1.msra.mxu0 0.0
    %7521 = vmatprep.subr.mxu0 0.0
    %7522 = vmatpush1.msra.mxu0 0.0
    %7523 = vmatprep.subr.mxu0 0.0
    %7524 = vmatpush1.msra.mxu0 0.0
    %7525 = vmatprep.subr.mxu0 0.0
    %7526 = vmatpush1.msra.mxu0 0.0
    %7527 = vmatprep.subr.mxu0 0.0
    %7528 = vmatpush1.msra.mxu0 0.0
    %7529 = vmatprep.subr.mxu0 0.0
    %7530 = vmatpush1.msra.mxu0 0.0
    %7531 = vmatprep.subr.mxu0 0.0
    %7532 = vmatpush1.msra.mxu0 0.0
    %7533 = vmatprep.subr.mxu0 0.0
    %7534 = vmatpush1.msra.mxu0 0.0
    %7535 = vmatprep.subr.mxu0 0.0
    %7536 = vmatpush1.msra.mxu0 0.0
    %7537 = vmatprep.subr.mxu0 0.0
    %7538 = vmatpush1.msra.mxu0 0.0
    %7539 = vmatprep.subr.mxu0 0.0
    %7540 = vmatpush1.msra.mxu0 0.0
    %7541 = vmatprep.subr.mxu0 0.0
    %7542 = vmatpush1.msra.mxu0 0.0
    %7543 = vmatprep.subr.mxu0 0.0
    %7544 = vmatpush1.msra.mxu0 0.0
    %7545 = vmatprep.subr.mxu0 0.0
    %7546 = vmatpush1.msra.mxu0 0.0
    %7547 = vmatprep.mubr.f32.mxu0 0.0
    %v7548 = vand.u32 %v7178, 4294901760
    %7549 = vmatmul.mubr.f32.gmra.mrb[0].mxu0 %v7548
    %v7550 = vpop.f32.mrb[0].mxu0
    %v7551 = vadd.f32 %v7477, %v7550
    %v7552 = vpop.f32.mrb[0].mxu0
    %7553 = vdwg.mxu0
    %7554 = vmatprep.subr.mxu0 0.0
    %v7555 = vand.u32 %v1094, 4294901760
    %7556 = vmatpush1.msra.mxu0 %v7555
    %7557 = vmatprep.subr.mxu0 0.0
    %7558 = vmatpush1.msra.mxu0 0.0
    %7559 = vmatprep.subr.mxu0 0.0
    %7560 = vmatpush1.msra.mxu0 0.0
    %7561 = vmatprep.subr.mxu0 0.0
    %7562 = vmatpush1.msra.mxu0 0.0
    %7563 = vmatprep.subr.mxu0 0.0
    %7564 = vmatpush1.msra.mxu0 0.0
    %7565 = vmatprep.subr.mxu0 0.0
    %7566 = vmatpush1.msra.mxu0 0.0
    %7567 = vmatprep.subr.mxu0 0.0
    %7568 = vmatpush1.msra.mxu0 0.0
    %7569 = vmatprep.subr.mxu0 0.0
    %7570 = vmatpush1.msra.mxu0 0.0
    %7571 = vmatprep.subr.mxu0 0.0
    %7572 = vmatpush1.msra.mxu0 0.0
    %7573 = vmatprep.subr.mxu0 0.0
    %7574 = vmatpush1.msra.mxu0 0.0
    %7575 = vmatprep.subr.mxu0 0.0
    %7576 = vmatpush1.msra.mxu0 0.0
    %7577 = vmatprep.subr.mxu0 0.0
    %7578 = vmatpush1.msra.mxu0 0.0
    %7579 = vmatprep.subr.mxu0 0.0
    %7580 = vmatpush1.msra.mxu0 0.0
    %7581 = vmatprep.subr.mxu0 0.0
    %7582 = vmatpush1.msra.mxu0 0.0
    %7583 = vmatprep.subr.mxu0 0.0
    %7584 = vmatpush1.msra.mxu0 0.0
    %7585 = vmatprep.subr.mxu0 0.0
    %7586 = vmatpush1.msra.mxu0 0.0
    %7587 = vmatprep.subr.mxu0 0.0
    %7588 = vmatpush1.msra.mxu0 0.0
    %7589 = vmatprep.subr.mxu0 0.0
    %7590 = vmatpush1.msra.mxu0 0.0
    %7591 = vmatprep.subr.mxu0 0.0
    %7592 = vmatpush1.msra.mxu0 0.0
    %7593 = vmatprep.subr.mxu0 0.0
    %7594 = vmatpush1.msra.mxu0 0.0
    %7595 = vmatprep.subr.mxu0 0.0
    %7596 = vmatpush1.msra.mxu0 0.0
    %7597 = vmatprep.subr.mxu0 0.0
    %7598 = vmatpush1.msra.mxu0 0.0
    %7599 = vmatprep.subr.mxu0 0.0
    %7600 = vmatpush1.msra.mxu0 0.0
    %7601 = vmatprep.subr.mxu0 0.0
    %7602 = vmatpush1.msra.mxu0 0.0
    %7603 = vmatprep.subr.mxu0 0.0
    %7604 = vmatpush1.msra.mxu0 0.0
    %7605 = vmatprep.subr.mxu0 0.0
    %7606 = vmatpush1.msra.mxu0 0.0
    %7607 = vmatprep.subr.mxu0 0.0
    %7608 = vmatpush1.msra.mxu0 0.0
    %7609 = vmatprep.subr.mxu0 0.0
    %7610 = vmatpush1.msra.mxu0 0.0
    %7611 = vmatprep.subr.mxu0 0.0
    %7612 = vmatpush1.msra.mxu0 0.0
    %7613 = vmatprep.subr.mxu0 0.0
    %7614 = vmatpush1.msra.mxu0 0.0
    %7615 = vmatprep.subr.mxu0 0.0
    %7616 = vmatpush1.msra.mxu0 0.0
    %7617 = vmatprep.subr.mxu0 0.0
    %7618 = vmatpush1.msra.mxu0 0.0
    %7619 = vmatprep.mubr.f32.mxu0 0.0
    %v7620 = vand.u32 %v7178, 4294901760
    %7621 = vmatmul.mubr.f32.gmra.mrb[0].mxu0 %v7620
    %v7622 = vpop.f32.mrb[0].mxu0
    %v7623 = vadd.f32 %v7551, %v7622
    %v7624 = vpop.f32.mrb[0].mxu0
    %7625 = vdwg.mxu0
    %7626 = vrot.lane.b32.xlu0 %v1094, 64
    %v7627 = vpop.permute.xlu0 %7626
    %v7630 = vsel %vm4742, %v6718, 0
    %7632 = vmatprep.subr.mxu0 0.0
    %v7633 = vand.u32 %v7627, 4294901760
    %7634 = vmatpush1.msra.mxu0 %v7633
    %7635 = vmatprep.subr.mxu0 0.0
    %7636 = vmatpush1.msra.mxu0 0.0
    %7637 = vmatprep.subr.mxu0 0.0
    %7638 = vmatpush1.msra.mxu0 0.0
    %7639 = vmatprep.subr.mxu0 0.0
    %7640 = vmatpush1.msra.mxu0 0.0
    %7641 = vmatprep.subr.mxu0 0.0
    %7642 = vmatpush1.msra.mxu0 0.0
    %7643 = vmatprep.subr.mxu0 0.0
    %7644 = vmatpush1.msra.mxu0 0.0
    %7645 = vmatprep.subr.mxu0 0.0
    %7646 = vmatpush1.msra.mxu0 0.0
    %7647 = vmatprep.subr.mxu0 0.0
    %7648 = vmatpush1.msra.mxu0 0.0
    %7649 = vmatprep.subr.mxu0 0.0
    %7650 = vmatpush1.msra.mxu0 0.0
    %7651 = vmatprep.subr.mxu0 0.0
    %7652 = vmatpush1.msra.mxu0 0.0
    %7653 = vmatprep.subr.mxu0 0.0
    %7654 = vmatpush1.msra.mxu0 0.0
    %7655 = vmatprep.subr.mxu0 0.0
    %7656 = vmatpush1.msra.mxu0 0.0
    %7657 = vmatprep.subr.mxu0 0.0
    %7658 = vmatpush1.msra.mxu0 0.0
    %7659 = vmatprep.subr.mxu0 0.0
    %7660 = vmatpush1.msra.mxu0 0.0
    %7661 = vmatprep.subr.mxu0 0.0
    %7662 = vmatpush1.msra.mxu0 0.0
    %7663 = vmatprep.subr.mxu0 0.0
    %7664 = vmatpush1.msra.mxu0 0.0
    %7665 = vmatprep.subr.mxu0 0.0
    %7666 = vmatpush1.msra.mxu0 0.0
    %7667 = vmatprep.subr.mxu0 0.0
    %7668 = vmatpush1.msra.mxu0 0.0
    %7669 = vmatprep.subr.mxu0 0.0
    %7670 = vmatpush1.msra.mxu0 0.0
    %7671 = vmatprep.subr.mxu0 0.0
    %7672 = vmatpush1.msra.mxu0 0.0
    %7673 = vmatprep.subr.mxu0 0.0
    %7674 = vmatpush1.msra.mxu0 0.0
    %7675 = vmatprep.subr.mxu0 0.0
    %7676 = vmatpush1.msra.mxu0 0.0
    %7677 = vmatprep.subr.mxu0 0.0
    %7678 = vmatpush1.msra.mxu0 0.0
    %7679 = vmatprep.subr.mxu0 0.0
    %7680 = vmatpush1.msra.mxu0 0.0
    %7681 = vmatprep.subr.mxu0 0.0
    %7682 = vmatpush1.msra.mxu0 0.0
    %7683 = vmatprep.subr.mxu0 0.0
    %7684 = vmatpush1.msra.mxu0 0.0
    %7685 = vmatprep.subr.mxu0 0.0
    %7686 = vmatpush1.msra.mxu0 0.0
    %7687 = vmatprep.subr.mxu0 0.0
    %7688 = vmatpush1.msra.mxu0 0.0
    %7689 = vmatprep.subr.mxu0 0.0
    %7690 = vmatpush1.msra.mxu0 0.0
    %7691 = vmatprep.subr.mxu0 0.0
    %7692 = vmatpush1.msra.mxu0 0.0
    %7693 = vmatprep.subr.mxu0 0.0
    %7694 = vmatpush1.msra.mxu0 0.0
    %7695 = vmatprep.subr.mxu0 0.0
    %7696 = vmatpush1.msra.mxu0 0.0
    %7697 = vmatprep.mubr.f32.mxu0 0.0
    %v7698 = vand.u32 %v7630, 4294901760
    %v7699 = vsub.f32 %v7630, %v7698
    %v7700 = vand.u32 %v7699, 4294901760
    %v7701 = vsub.f32 %v7699, %v7700
    %v7702 = vand.u32 %v7701, 4294901760
    %7703 = vmatmul.mubr.f32.gmra.mrb[0].mxu0 %v7702
    %v7704 = vpop.f32.mrb[0].mxu0
    %v7705 = vadd.f32 0.0, %v7704
    %v7706 = vpop.f32.mrb[0].mxu0
    %7707 = vdwg.mxu0
    %7708 = vmatprep.subr.mxu0 0.0
    %v7709 = vand.u32 %v7627, 4294901760
    %v7710 = vsub.f32 %v7627, %v7709
    %v7711 = vand.u32 %v7710, 4294901760
    %v7712 = vsub.f32 %v7710, %v7711
    %v7713 = vand.u32 %v7712, 4294901760
    %7714 = vmatpush1.msra.mxu0 %v7713
    %7715 = vmatprep.subr.mxu0 0.0
    %7716 = vmatpush1.msra.mxu0 0.0
    %7717 = vmatprep.subr.mxu0 0.0
    %7718 = vmatpush1.msra.mxu0 0.0
    %7719 = vmatprep.subr.mxu0 0.0
    %7720 = vmatpush1.msra.mxu0 0.0
    %7721 = vmatprep.subr.mxu0 0.0
    %7722 = vmatpush1.msra.mxu0 0.0
    %7723 = vmatprep.subr.mxu0 0.0
    %7724 = vmatpush1.msra.mxu0 0.0
    %7725 = vmatprep.subr.mxu0 0.0
    %7726 = vmatpush1.msra.mxu0 0.0
    %7727 = vmatprep.subr.mxu0 0.0
    %7728 = vmatpush1.msra.mxu0 0.0
    %7729 = vmatprep.subr.mxu0 0.0
    %7730 = vmatpush1.msra.mxu0 0.0
    %7731 = vmatprep.subr.mxu0 0.0
    %7732 = vmatpush1.msra.mxu0 0.0
    %7733 = vmatprep.subr.mxu0 0.0
    %7734 = vmatpush1.msra.mxu0 0.0
    %7735 = vmatprep.subr.mxu0 0.0
    %7736 = vmatpush1.msra.mxu0 0.0
    %7737 = vmatprep.subr.mxu0 0.0
    %7738 = vmatpush1.msra.mxu0 0.0
    %7739 = vmatprep.subr.mxu0 0.0
    %7740 = vmatpush1.msra.mxu0 0.0
    %7741 = vmatprep.subr.mxu0 0.0
    %7742 = vmatpush1.msra.mxu0 0.0
    %7743 = vmatprep.subr.mxu0 0.0
    %7744 = vmatpush1.msra.mxu0 0.0
    %7745 = vmatprep.subr.mxu0 0.0
    %7746 = vmatpush1.msra.mxu0 0.0
    %7747 = vmatprep.subr.mxu0 0.0
    %7748 = vmatpush1.msra.mxu0 0.0
    %7749 = vmatprep.subr.mxu0 0.0
    %7750 = vmatpush1.msra.mxu0 0.0
    %7751 = vmatprep.subr.mxu0 0.0
    %7752 = vmatpush1.msra.mxu0 0.0
    %7753 = vmatprep.subr.mxu0 0.0
    %7754 = vmatpush1.msra.mxu0 0.0
    %7755 = vmatprep.subr.mxu0 0.0
    %7756 = vmatpush1.msra.mxu0 0.0
    %7757 = vmatprep.subr.mxu0 0.0
    %7758 = vmatpush1.msra.mxu0 0.0
    %7759 = vmatprep.subr.mxu0 0.0
    %7760 = vmatpush1.msra.mxu0 0.0
    %7761 = vmatprep.subr.mxu0 0.0
    %7762 = vmatpush1.msra.mxu0 0.0
    %7763 = vmatprep.subr.mxu0 0.0
    %7764 = vmatpush1.msra.mxu0 0.0
    %7765 = vmatprep.subr.mxu0 0.0
    %7766 = vmatpush1.msra.mxu0 0.0
    %7767 = vmatprep.subr.mxu0 0.0
    %7768 = vmatpush1.msra.mxu0 0.0
    %7769 = vmatprep.subr.mxu0 0.0
    %7770 = vmatpush1.msra.mxu0 0.0
    %7771 = vmatprep.subr.mxu0 0.0
    %7772 = vmatpush1.msra.mxu0 0.0
    %7773 = vmatprep.subr.mxu0 0.0
    %7774 = vmatpush1.msra.mxu0 0.0
    %7775 = vmatprep.subr.mxu0 0.0
    %7776 = vmatpush1.msra.mxu0 0.0
    %7777 = vmatprep.mubr.f32.mxu0 0.0
    %v7778 = vand.u32 %v7630, 4294901760
    %7779 = vmatmul.mubr.f32.gmra.mrb[0].mxu0 %v7778
    %v7780 = vpop.f32.mrb[0].mxu0
    %v7781 = vadd.f32 %v7705, %v7780
    %v7782 = vpop.f32.mrb[0].mxu0
    %7783 = vdwg.mxu0
    %7784 = vmatprep.subr.mxu0 0.0
    %v7785 = vand.u32 %v7627, 4294901760
    %v7786 = vsub.f32 %v7627, %v7785
    %7787 = vmatpush1.msra.mxu0 %v7786
    %7788 = vmatprep.subr.mxu0 0.0
    %7789 = vmatpush1.msra.mxu0 0.0
    %7790 = vmatprep.subr.mxu0 0.0
    %7791 = vmatpush1.msra.mxu0 0.0
    %7792 = vmatprep.subr.mxu0 0.0
    %7793 = vmatpush1.msra.mxu0 0.0
    %7794 = vmatprep.subr.mxu0 0.0
    %7795 = vmatpush1.msra.mxu0 0.0
    %7796 = vmatprep.subr.mxu0 0.0
    %7797 = vmatpush1.msra.mxu0 0.0
    %7798 = vmatprep.subr.mxu0 0.0
    %7799 = vmatpush1.msra.mxu0 0.0
    %7800 = vmatprep.subr.mxu0 0.0
    %7801 = vmatpush1.msra.mxu0 0.0
    %7802 = vmatprep.subr.mxu0 0.0
    %7803 = vmatpush1.msra.mxu0 0.0
    %7804 = vmatprep.subr.mxu0 0.0
    %7805 = vmatpush1.msra.mxu0 0.0
    %7806 = vmatprep.subr.mxu0 0.0
    %7807 = vmatpush1.msra.mxu0 0.0
    %7808 = vmatprep.subr.mxu0 0.0
    %7809 = vmatpush1.msra.mxu0 0.0
    %7810 = vmatprep.subr.mxu0 0.0
    %7811 = vmatpush1.msra.mxu0 0.0
    %7812 = vmatprep.subr.mxu0 0.0
    %7813 = vmatpush1.msra.mxu0 0.0
    %7814 = vmatprep.subr.mxu0 0.0
    %7815 = vmatpush1.msra.mxu0 0.0
    %7816 = vmatprep.subr.mxu0 0.0
    %7817 = vmatpush1.msra.mxu0 0.0
    %7818 = vmatprep.subr.mxu0 0.0
    %7819 = vmatpush1.msra.mxu0 0.0
    %7820 = vmatprep.subr.mxu0 0.0
    %7821 = vmatpush1.msra.mxu0 0.0
    %7822 = vmatprep.subr.mxu0 0.0
    %7823 = vmatpush1.msra.mxu0 0.0
    %7824 = vmatprep.subr.mxu0 0.0
    %7825 = vmatpush1.msra.mxu0 0.0
    %7826 = vmatprep.subr.mxu0 0.0
    %7827 = vmatpush1.msra.mxu0 0.0
    %7828 = vmatprep.subr.mxu0 0.0
    %7829 = vmatpush1.msra.mxu0 0.0
    %7830 = vmatprep.subr.mxu0 0.0
    %7831 = vmatpush1.msra.mxu0 0.0
    %7832 = vmatprep.subr.mxu0 0.0
    %7833 = vmatpush1.msra.mxu0 0.0
    %7834 = vmatprep.subr.mxu0 0.0
    %7835 = vmatpush1.msra.mxu0 0.0
    %7836 = vmatprep.subr.mxu0 0.0
    %7837 = vmatpush1.msra.mxu0 0.0
    %7838 = vmatprep.subr.mxu0 0.0
    %7839 = vmatpush1.msra.mxu0 0.0
    %7840 = vmatprep.subr.mxu0 0.0
    %7841 = vmatpush1.msra.mxu0 0.0
    %7842 = vmatprep.subr.mxu0 0.0
    %7843 = vmatpush1.msra.mxu0 0.0
    %7844 = vmatprep.subr.mxu0 0.0
    %7845 = vmatpush1.msra.mxu0 0.0
    %7846 = vmatprep.subr.mxu0 0.0
    %7847 = vmatpush1.msra.mxu0 0.0
    %7848 = vmatprep.subr.mxu0 0.0
    %7849 = vmatpush1.msra.mxu0 0.0
    %7850 = vmatprep.mubr.f32.mxu0 0.0
    %v7851 = vand.u32 %v7630, 4294901760
    %v7852 = vsub.f32 %v7630, %v7851
    %7853 = vmatmul.mubr.f32.gmra.mrb[0].mxu0 %v7852
    %v7854 = vpop.f32.mrb[0].mxu0
    %v7855 = vadd.f32 %v7781, %v7854
    %v7856 = vpop.f32.mrb[0].mxu0
    %7857 = vdwg.mxu0
    %7858 = vmatprep.subr.mxu0 0.0
    %v7859 = vand.u32 %v7627, 4294901760
    %7860 = vmatpush1.msra.mxu0 %v7859
    %7861 = vmatprep.subr.mxu0 0.0
    %7862 = vmatpush1.msra.mxu0 0.0
    %7863 = vmatprep.subr.mxu0 0.0
    %7864 = vmatpush1.msra.mxu0 0.0
    %7865 = vmatprep.subr.mxu0 0.0
    %7866 = vmatpush1.msra.mxu0 0.0
    %7867 = vmatprep.subr.mxu0 0.0
    %7868 = vmatpush1.msra.mxu0 0.0
    %7869 = vmatprep.subr.mxu0 0.0
    %7870 = vmatpush1.msra.mxu0 0.0
    %7871 = vmatprep.subr.mxu0 0.0
    %7872 = vmatpush1.msra.mxu0 0.0
    %7873 = vmatprep.subr.mxu0 0.0
    %7874 = vmatpush1.msra.mxu0 0.0
    %7875 = vmatprep.subr.mxu0 0.0
    %7876 = vmatpush1.msra.mxu0 0.0
    %7877 = vmatprep.subr.mxu0 0.0
    %7878 = vmatpush1.msra.mxu0 0.0
    %7879 = vmatprep.subr.mxu0 0.0
    %7880 = vmatpush1.msra.mxu0 0.0
    %7881 = vmatprep.subr.mxu0 0.0
    %7882 = vmatpush1.msra.mxu0 0.0
    %7883 = vmatprep.subr.mxu0 0.0
    %7884 = vmatpush1.msra.mxu0 0.0
    %7885 = vmatprep.subr.mxu0 0.0
    %7886 = vmatpush1.msra.mxu0 0.0
    %7887 = vmatprep.subr.mxu0 0.0
    %7888 = vmatpush1.msra.mxu0 0.0
    %7889 = vmatprep.subr.mxu0 0.0
    %7890 = vmatpush1.msra.mxu0 0.0
    %7891 = vmatprep.subr.mxu0 0.0
    %7892 = vmatpush1.msra.mxu0 0.0
    %7893 = vmatprep.subr.mxu0 0.0
    %7894 = vmatpush1.msra.mxu0 0.0
    %7895 = vmatprep.subr.mxu0 0.0
    %7896 = vmatpush1.msra.mxu0 0.0
    %7897 = vmatprep.subr.mxu0 0.0
    %7898 = vmatpush1.msra.mxu0 0.0
    %7899 = vmatprep.subr.mxu0 0.0
    %7900 = vmatpush1.msra.mxu0 0.0
    %7901 = vmatprep.subr.mxu0 0.0
    %7902 = vmatpush1.msra.mxu0 0.0
    %7903 = vmatprep.subr.mxu0 0.0
    %7904 = vmatpush1.msra.mxu0 0.0
    %7905 = vmatprep.subr.mxu0 0.0
    %7906 = vmatpush1.msra.mxu0 0.0
    %7907 = vmatprep.subr.mxu0 0.0
    %7908 = vmatpush1.msra.mxu0 0.0
    %7909 = vmatprep.subr.mxu0 0.0
    %7910 = vmatpush1.msra.mxu0 0.0
    %7911 = vmatprep.subr.mxu0 0.0
    %7912 = vmatpush1.msra.mxu0 0.0
    %7913 = vmatprep.subr.mxu0 0.0
    %7914 = vmatpush1.msra.mxu0 0.0
    %7915 = vmatprep.subr.mxu0 0.0
    %7916 = vmatpush1.msra.mxu0 0.0
    %7917 = vmatprep.subr.mxu0 0.0
    %7918 = vmatpush1.msra.mxu0 0.0
    %7919 = vmatprep.subr.mxu0 0.0
    %7920 = vmatpush1.msra.mxu0 0.0
    %7921 = vmatprep.subr.mxu0 0.0
    %7922 = vmatpush1.msra.mxu0 0.0
    %7923 = vmatprep.mubr.f32.mxu0 0.0
    %v7924 = vand.u32 %v7630, 4294901760
    %v7925 = vsub.f32 %v7630, %v7924
    %v7926 = vand.u32 %v7925, 4294901760
    %7927 = vmatmul.mubr.f32.gmra.mrb[0].mxu0 %v7926
    %v7928 = vpop.f32.mrb[0].mxu0
    %v7929 = vadd.f32 %v7855, %v7928
    %v7930 = vpop.f32.mrb[0].mxu0
    %7931 = vdwg.mxu0
    %7932 = vmatprep.subr.mxu0 0.0
    %v7933 = vand.u32 %v7627, 4294901760
    %v7934 = vsub.f32 %v7627, %v7933
    %v7935 = vand.u32 %v7934, 4294901760
    %7936 = vmatpush1.msra.mxu0 %v7935
    %7937 = vmatprep.subr.mxu0 0.0
    %7938 = vmatpush1.msra.mxu0 0.0
    %7939 = vmatprep.subr.mxu0 0.0
    %7940 = vmatpush1.msra.mxu0 0.0
    %7941 = vmatprep.subr.mxu0 0.0
    %7942 = vmatpush1.msra.mxu0 0.0
    %7943 = vmatprep.subr.mxu0 0.0
    %7944 = vmatpush1.msra.mxu0 0.0
    %7945 = vmatprep.subr.mxu0 0.0
    %7946 = vmatpush1.msra.mxu0 0.0
    %7947 = vmatprep.subr.mxu0 0.0
    %7948 = vmatpush1.msra.mxu0 0.0
    %7949 = vmatprep.subr.mxu0 0.0
    %7950 = vmatpush1.msra.mxu0 0.0
    %7951 = vmatprep.subr.mxu0 0.0
    %7952 = vmatpush1.msra.mxu0 0.0
    %7953 = vmatprep.subr.mxu0 0.0
    %7954 = vmatpush1.msra.mxu0 0.0
    %7955 = vmatprep.subr.mxu0 0.0
    %7956 = vmatpush1.msra.mxu0 0.0
    %7957 = vmatprep.subr.mxu0 0.0
    %7958 = vmatpush1.msra.mxu0 0.0
    %7959 = vmatprep.subr.mxu0 0.0
    %7960 = vmatpush1.msra.mxu0 0.0
    %7961 = vmatprep.subr.mxu0 0.0
    %7962 = vmatpush1.msra.mxu0 0.0
    %7963 = vmatprep.subr.mxu0 0.0
    %7964 = vmatpush1.msra.mxu0 0.0
    %7965 = vmatprep.subr.mxu0 0.0
    %7966 = vmatpush1.msra.mxu0 0.0
    %7967 = vmatprep.subr.mxu0 0.0
    %7968 = vmatpush1.msra.mxu0 0.0
    %7969 = vmatprep.subr.mxu0 0.0
    %7970 = vmatpush1.msra.mxu0 0.0
    %7971 = vmatprep.subr.mxu0 0.0
    %7972 = vmatpush1.msra.mxu0 0.0
    %7973 = vmatprep.subr.mxu0 0.0
    %7974 = vmatpush1.msra.mxu0 0.0
    %7975 = vmatprep.subr.mxu0 0.0
    %7976 = vmatpush1.msra.mxu0 0.0
    %7977 = vmatprep.subr.mxu0 0.0
    %7978 = vmatpush1.msra.mxu0 0.0
    %7979 = vmatprep.subr.mxu0 0.0
    %7980 = vmatpush1.msra.mxu0 0.0
    %7981 = vmatprep.subr.mxu0 0.0
    %7982 = vmatpush1.msra.mxu0 0.0
    %7983 = vmatprep.subr.mxu0 0.0
    %7984 = vmatpush1.msra.mxu0 0.0
    %7985 = vmatprep.subr.mxu0 0.0
    %7986 = vmatpush1.msra.mxu0 0.0
    %7987 = vmatprep.subr.mxu0 0.0
    %7988 = vmatpush1.msra.mxu0 0.0
    %7989 = vmatprep.subr.mxu0 0.0
    %7990 = vmatpush1.msra.mxu0 0.0
    %7991 = vmatprep.subr.mxu0 0.0
    %7992 = vmatpush1.msra.mxu0 0.0
    %7993 = vmatprep.subr.mxu0 0.0
    %7994 = vmatpush1.msra.mxu0 0.0
    %7995 = vmatprep.subr.mxu0 0.0
    %7996 = vmatpush1.msra.mxu0 0.0
    %7997 = vmatprep.subr.mxu0 0.0
    %7998 = vmatpush1.msra.mxu0 0.0
    %7999 = vmatprep.mubr.f32.mxu0 0.0
    %v8000 = vand.u32 %v7630, 4294901760
    %8001 = vmatmul.mubr.f32.gmra.mrb[0].mxu0 %v8000
    %v8002 = vpop.f32.mrb[0].mxu0
    %v8003 = vadd.f32 %v7929, %v8002
    %v8004 = vpop.f32.mrb[0].mxu0
    %8005 = vdwg.mxu0
    %8006 = vmatprep.subr.mxu0 0.0
    %v8007 = vand.u32 %v7627, 4294901760
    %8008 = vmatpush1.msra.mxu0 %v8007
    %8009 = vmatprep.subr.mxu0 0.0
    %8010 = vmatpush1.msra.mxu0 0.0
    %8011 = vmatprep.subr.mxu0 0.0
    %8012 = vmatpush1.msra.mxu0 0.0
    %8013 = vmatprep.subr.mxu0 0.0
    %8014 = vmatpush1.msra.mxu0 0.0
    %8015 = vmatprep.subr.mxu0 0.0
    %8016 = vmatpush1.msra.mxu0 0.0
    %8017 = vmatprep.subr.mxu0 0.0
    %8018 = vmatpush1.msra.mxu0 0.0
    %8019 = vmatprep.subr.mxu0 0.0
    %8020 = vmatpush1.msra.mxu0 0.0
    %8021 = vmatprep.subr.mxu0 0.0
    %8022 = vmatpush1.msra.mxu0 0.0
    %8023 = vmatprep.subr.mxu0 0.0
    %8024 = vmatpush1.msra.mxu0 0.0
    %8025 = vmatprep.subr.mxu0 0.0
    %8026 = vmatpush1.msra.mxu0 0.0
    %8027 = vmatprep.subr.mxu0 0.0
    %8028 = vmatpush1.msra.mxu0 0.0
    %8029 = vmatprep.subr.mxu0 0.0
    %8030 = vmatpush1.msra.mxu0 0.0
    %8031 = vmatprep.subr.mxu0 0.0
    %8032 = vmatpush1.msra.mxu0 0.0
    %8033 = vmatprep.subr.mxu0 0.0
    %8034 = vmatpush1.msra.mxu0 0.0
    %8035 = vmatprep.subr.mxu0 0.0
    %8036 = vmatpush1.msra.mxu0 0.0
    %8037 = vmatprep.subr.mxu0 0.0
    %8038 = vmatpush1.msra.mxu0 0.0
    %8039 = vmatprep.subr.mxu0 0.0
    %8040 = vmatpush1.msra.mxu0 0.0
    %8041 = vmatprep.subr.mxu0 0.0
    %8042 = vmatpush1.msra.mxu0 0.0
    %8043 = vmatprep.subr.mxu0 0.0
    %8044 = vmatpush1.msra.mxu0 0.0
    %8045 = vmatprep.subr.mxu0 0.0
    %8046 = vmatpush1.msra.mxu0 0.0
    %8047 = vmatprep.subr.mxu0 0.0
    %8048 = vmatpush1.msra.mxu0 0.0
    %8049 = vmatprep.subr.mxu0 0.0
    %8050 = vmatpush1.msra.mxu0 0.0
    %8051 = vmatprep.subr.mxu0 0.0
    %8052 = vmatpush1.msra.mxu0 0.0
    %8053 = vmatprep.subr.mxu0 0.0
    %8054 = vmatpush1.msra.mxu0 0.0
    %8055 = vmatprep.subr.mxu0 0.0
    %8056 = vmatpush1.msra.mxu0 0.0
    %8057 = vmatprep.subr.mxu0 0.0
    %8058 = vmatpush1.msra.mxu0 0.0
    %8059 = vmatprep.subr.mxu0 0.0
    %8060 = vmatpush1.msra.mxu0 0.0
    %8061 = vmatprep.subr.mxu0 0.0
    %8062 = vmatpush1.msra.mxu0 0.0
    %8063 = vmatprep.subr.mxu0 0.0
    %8064 = vmatpush1.msra.mxu0 0.0
    %8065 = vmatprep.subr.mxu0 0.0
    %8066 = vmatpush1.msra.mxu0 0.0
    %8067 = vmatprep.subr.mxu0 0.0
    %8068 = vmatpush1.msra.mxu0 0.0
    %8069 = vmatprep.subr.mxu0 0.0
    %8070 = vmatpush1.msra.mxu0 0.0
    %8071 = vmatprep.mubr.f32.mxu0 0.0
    %v8072 = vand.u32 %v7630, 4294901760
    %8073 = vmatmul.mubr.f32.gmra.mrb[0].mxu0 %v8072
    %v8074 = vpop.f32.mrb[0].mxu0
    %v8075 = vadd.f32 %v8003, %v8074
    %v8076 = vpop.f32.mrb[0].mxu0
    %8077 = vdwg.mxu0
    %v8078 = vadd.f32 %v7623, %v8075
    %8079 = vrot.lane.b32.xlu0 %v1094, 32
    %v8080 = vpop.permute.xlu0 %8079
    %v8083 = vsel %vm4742, %v6719, 0
    %8085 = vmatprep.subr.mxu0 0.0
    %v8086 = vand.u32 %v8080, 4294901760
    %8087 = vmatpush1.msra.mxu0 %v8086
    %8088 = vmatprep.subr.mxu0 0.0
    %8089 = vmatpush1.msra.mxu0 0.0
    %8090 = vmatprep.subr.mxu0 0.0
    %8091 = vmatpush1.msra.mxu0 0.0
    %8092 = vmatprep.subr.mxu0 0.0
    %8093 = vmatpush1.msra.mxu0 0.0
    %8094 = vmatprep.subr.mxu0 0.0
    %8095 = vmatpush1.msra.mxu0 0.0
    %8096 = vmatprep.subr.mxu0 0.0
    %8097 = vmatpush1.msra.mxu0 0.0
    %8098 = vmatprep.subr.mxu0 0.0
    %8099 = vmatpush1.msra.mxu0 0.0
    %8100 = vmatprep.subr.mxu0 0.0
    %8101 = vmatpush1.msra.mxu0 0.0
    %8102 = vmatprep.subr.mxu0 0.0
    %8103 = vmatpush1.msra.mxu0 0.0
    %8104 = vmatprep.subr.mxu0 0.0
    %8105 = vmatpush1.msra.mxu0 0.0
    %8106 = vmatprep.subr.mxu0 0.0
    %8107 = vmatpush1.msra.mxu0 0.0
    %8108 = vmatprep.subr.mxu0 0.0
    %8109 = vmatpush1.msra.mxu0 0.0
    %8110 = vmatprep.subr.mxu0 0.0
    %8111 = vmatpush1.msra.mxu0 0.0
    %8112 = vmatprep.subr.mxu0 0.0
    %8113 = vmatpush1.msra.mxu0 0.0
    %8114 = vmatprep.subr.mxu0 0.0
    %8115 = vmatpush1.msra.mxu0 0.0
    %8116 = vmatprep.subr.mxu0 0.0
    %8117 = vmatpush1.msra.mxu0 0.0
    %8118 = vmatprep.subr.mxu0 0.0
    %8119 = vmatpush1.msra.mxu0 0.0
    %8120 = vmatprep.subr.mxu0 0.0
    %8121 = vmatpush1.msra.mxu0 0.0
    %8122 = vmatprep.subr.mxu0 0.0
    %8123 = vmatpush1.msra.mxu0 0.0
    %8124 = vmatprep.subr.mxu0 0.0
    %8125 = vmatpush1.msra.mxu0 0.0
    %8126 = vmatprep.subr.mxu0 0.0
    %8127 = vmatpush1.msra.mxu0 0.0
    %8128 = vmatprep.subr.mxu0 0.0
    %8129 = vmatpush1.msra.mxu0 0.0
    %8130 = vmatprep.subr.mxu0 0.0
    %8131 = vmatpush1.msra.mxu0 0.0
    %8132 = vmatprep.subr.mxu0 0.0
    %8133 = vmatpush1.msra.mxu0 0.0
    %8134 = vmatprep.subr.mxu0 0.0
    %8135 = vmatpush1.msra.mxu0 0.0
    %8136 = vmatprep.subr.mxu0 0.0
    %8137 = vmatpush1.msra.mxu0 0.0
    %8138 = vmatprep.subr.mxu0 0.0
    %8139 = vmatpush1.msra.mxu0 0.0
    %8140 = vmatprep.subr.mxu0 0.0
    %8141 = vmatpush1.msra.mxu0 0.0
    %8142 = vmatprep.subr.mxu0 0.0
    %8143 = vmatpush1.msra.mxu0 0.0
    %8144 = vmatprep.subr.mxu0 0.0
    %8145 = vmatpush1.msra.mxu0 0.0
    %8146 = vmatprep.subr.mxu0 0.0
    %8147 = vmatpush1.msra.mxu0 0.0
    %8148 = vmatprep.subr.mxu0 0.0
    %8149 = vmatpush1.msra.mxu0 0.0
    %8150 = vmatprep.mubr.f32.mxu0 0.0
    %v8151 = vand.u32 %v8083, 4294901760
    %v8152 = vsub.f32 %v8083, %v8151
    %v8153 = vand.u32 %v8152, 4294901760
    %v8154 = vsub.f32 %v8152, %v8153
    %v8155 = vand.u32 %v8154, 4294901760
    %8156 = vmatmul.mubr.f32.gmra.mrb[0].mxu0 %v8155
    %v8157 = vpop.f32.mrb[0].mxu0
    %v8158 = vadd.f32 0.0, %v8157
    %v8159 = vpop.f32.mrb[0].mxu0
    %8160 = vdwg.mxu0
    %8161 = vmatprep.subr.mxu0 0.0
    %v8162 = vand.u32 %v8080, 4294901760
    %v8163 = vsub.f32 %v8080, %v8162
    %v8164 = vand.u32 %v8163, 4294901760
    %v8165 = vsub.f32 %v8163, %v8164
    %v8166 = vand.u32 %v8165, 4294901760
    %8167 = vmatpush1.msra.mxu0 %v8166
    %8168 = vmatprep.subr.mxu0 0.0
    %8169 = vmatpush1.msra.mxu0 0.0
    %8170 = vmatprep.subr.mxu0 0.0
    %8171 = vmatpush1.msra.mxu0 0.0
    %8172 = vmatprep.subr.mxu0 0.0
    %8173 = vmatpush1.msra.mxu0 0.0
    %8174 = vmatprep.subr.mxu0 0.0
    %8175 = vmatpush1.msra.mxu0 0.0
    %8176 = vmatprep.subr.mxu0 0.0
    %8177 = vmatpush1.msra.mxu0 0.0
    %8178 = vmatprep.subr.mxu0 0.0
    %8179 = vmatpush1.msra.mxu0 0.0
    %8180 = vmatprep.subr.mxu0 0.0
    %8181 = vmatpush1.msra.mxu0 0.0
    %8182 = vmatprep.subr.mxu0 0.0
    %8183 = vmatpush1.msra.mxu0 0.0
    %8184 = vmatprep.subr.mxu0 0.0
    %8185 = vmatpush1.msra.mxu0 0.0
    %8186 = vmatprep.subr.mxu0 0.0
    %8187 = vmatpush1.msra.mxu0 0.0
    %8188 = vmatprep.subr.mxu0 0.0
    %8189 = vmatpush1.msra.mxu0 0.0
    %8190 = vmatprep.subr.mxu0 0.0
    %8191 = vmatpush1.msra.mxu0 0.0
    %8192 = vmatprep.subr.mxu0 0.0
    %8193 = vmatpush1.msra.mxu0 0.0
    %8194 = vmatprep.subr.mxu0 0.0
    %8195 = vmatpush1.msra.mxu0 0.0
    %8196 = vmatprep.subr.mxu0 0.0
    %8197 = vmatpush1.msra.mxu0 0.0
    %8198 = vmatprep.subr.mxu0 0.0
    %8199 = vmatpush1.msra.mxu0 0.0
    %8200 = vmatprep.subr.mxu0 0.0
    %8201 = vmatpush1.msra.mxu0 0.0
    %8202 = vmatprep.subr.mxu0 0.0
    %8203 = vmatpush1.msra.mxu0 0.0
    %8204 = vmatprep.subr.mxu0 0.0
    %8205 = vmatpush1.msra.mxu0 0.0
    %8206 = vmatprep.subr.mxu0 0.0
    %8207 = vmatpush1.msra.mxu0 0.0
    %8208 = vmatprep.subr.mxu0 0.0
    %8209 = vmatpush1.msra.mxu0 0.0
    %8210 = vmatprep.subr.mxu0 0.0
    %8211 = vmatpush1.msra.mxu0 0.0
    %8212 = vmatprep.subr.mxu0 0.0
    %8213 = vmatpush1.msra.mxu0 0.0
    %8214 = vmatprep.subr.mxu0 0.0
    %8215 = vmatpush1.msra.mxu0 0.0
    %8216 = vmatprep.subr.mxu0 0.0
    %8217 = vmatpush1.msra.mxu0 0.0
    %8218 = vmatprep.subr.mxu0 0.0
    %8219 = vmatpush1.msra.mxu0 0.0
    %8220 = vmatprep.subr.mxu0 0.0
    %8221 = vmatpush1.msra.mxu0 0.0
    %8222 = vmatprep.subr.mxu0 0.0
    %8223 = vmatpush1.msra.mxu0 0.0
    %8224 = vmatprep.subr.mxu0 0.0
    %8225 = vmatpush1.msra.mxu0 0.0
    %8226 = vmatprep.subr.mxu0 0.0
    %8227 = vmatpush1.msra.mxu0 0.0
    %8228 = vmatprep.subr.mxu0 0.0
    %8229 = vmatpush1.msra.mxu0 0.0
    %8230 = vmatprep.mubr.f32.mxu0 0.0
    %v8231 = vand.u32 %v8083, 4294901760
    %8232 = vmatmul.mubr.f32.gmra.mrb[0].mxu0 %v8231
    %v8233 = vpop.f32.mrb[0].mxu0
    %v8234 = vadd.f32 %v8158, %v8233
    %v8235 = vpop.f32.mrb[0].mxu0
    %8236 = vdwg.mxu0
    %8237 = vmatprep.subr.mxu0 0.0
    %v8238 = vand.u32 %v8080, 4294901760
    %v8239 = vsub.f32 %v8080, %v8238
    %8240 = vmatpush1.msra.mxu0 %v8239
    %8241 = vmatprep.subr.mxu0 0.0
    %8242 = vmatpush1.msra.mxu0 0.0
    %8243 = vmatprep.subr.mxu0 0.0
    %8244 = vmatpush1.msra.mxu0 0.0
    %8245 = vmatprep.subr.mxu0 0.0
    %8246 = vmatpush1.msra.mxu0 0.0
    %8247 = vmatprep.subr.mxu0 0.0
    %8248 = vmatpush1.msra.mxu0 0.0
    %8249 = vmatprep.subr.mxu0 0.0
    %8250 = vmatpush1.msra.mxu0 0.0
    %8251 = vmatprep.subr.mxu0 0.0
    %8252 = vmatpush1.msra.mxu0 0.0
    %8253 = vmatprep.subr.mxu0 0.0
    %8254 = vmatpush1.msra.mxu0 0.0
    %8255 = vmatprep.subr.mxu0 0.0
    %8256 = vmatpush1.msra.mxu0 0.0
    %8257 = vmatprep.subr.mxu0 0.0
    %8258 = vmatpush1.msra.mxu0 0.0
    %8259 = vmatprep.subr.mxu0 0.0
    %8260 = vmatpush1.msra.mxu0 0.0
    %8261 = vmatprep.subr.mxu0 0.0
    %8262 = vmatpush1.msra.mxu0 0.0
    %8263 = vmatprep.subr.mxu0 0.0
    %8264 = vmatpush1.msra.mxu0 0.0
    %8265 = vmatprep.subr.mxu0 0.0
    %8266 = vmatpush1.msra.mxu0 0.0
    %8267 = vmatprep.subr.mxu0 0.0
    %8268 = vmatpush1.msra.mxu0 0.0
    %8269 = vmatprep.subr.mxu0 0.0
    %8270 = vmatpush1.msra.mxu0 0.0
    %8271 = vmatprep.subr.mxu0 0.0
    %8272 = vmatpush1.msra.mxu0 0.0
    %8273 = vmatprep.subr.mxu0 0.0
    %8274 = vmatpush1.msra.mxu0 0.0
    %8275 = vmatprep.subr.mxu0 0.0
    %8276 = vmatpush1.msra.mxu0 0.0
    %8277 = vmatprep.subr.mxu0 0.0
    %8278 = vmatpush1.msra.mxu0 0.0
    %8279 = vmatprep.subr.mxu0 0.0
    %8280 = vmatpush1.msra.mxu0 0.0
    %8281 = vmatprep.subr.mxu0 0.0
    %8282 = vmatpush1.msra.mxu0 0.0
    %8283 = vmatprep.subr.mxu0 0.0
    %8284 = vmatpush1.msra.mxu0 0.0
    %8285 = vmatprep.subr.mxu0 0.0
    %8286 = vmatpush1.msra.mxu0 0.0
    %8287 = vmatprep.subr.mxu0 0.0
    %8288 = vmatpush1.msra.mxu0 0.0
    %8289 = vmatprep.subr.mxu0 0.0
    %8290 = vmatpush1.msra.mxu0 0.0
    %8291 = vmatprep.subr.mxu0 0.0
    %8292 = vmatpush1.msra.mxu0 0.0
    %8293 = vmatprep.subr.mxu0 0.0
    %8294 = vmatpush1.msra.mxu0 0.0
    %8295 = vmatprep.subr.mxu0 0.0
    %8296 = vmatpush1.msra.mxu0 0.0
    %8297 = vmatprep.subr.mxu0 0.0
    %8298 = vmatpush1.msra.mxu0 0.0
    %8299 = vmatprep.subr.mxu0 0.0
    %8300 = vmatpush1.msra.mxu0 0.0
    %8301 = vmatprep.subr.mxu0 0.0
    %8302 = vmatpush1.msra.mxu0 0.0
    %8303 = vmatprep.mubr.f32.mxu0 0.0
    %v8304 = vand.u32 %v8083, 4294901760
    %v8305 = vsub.f32 %v8083, %v8304
    %8306 = vmatmul.mubr.f32.gmra.mrb[0].mxu0 %v8305
    %v8307 = vpop.f32.mrb[0].mxu0
    %v8308 = vadd.f32 %v8234, %v8307
    %v8309 = vpop.f32.mrb[0].mxu0
    %8310 = vdwg.mxu0
    %8311 = vmatprep.subr.mxu0 0.0
    %v8312 = vand.u32 %v8080, 4294901760
    %8313 = vmatpush1.msra.mxu0 %v8312
    %8314 = vmatprep.subr.mxu0 0.0
    %8315 = vmatpush1.msra.mxu0 0.0
    %8316 = vmatprep.subr.mxu0 0.0
    %8317 = vmatpush1.msra.mxu0 0.0
    %8318 = vmatprep.subr.mxu0 0.0
    %8319 = vmatpush1.msra.mxu0 0.0
    %8320 = vmatprep.subr.mxu0 0.0
    %8321 = vmatpush1.msra.mxu0 0.0
    %8322 = vmatprep.subr.mxu0 0.0
    %8323 = vmatpush1.msra.mxu0 0.0
    %8324 = vmatprep.subr.mxu0 0.0
    %8325 = vmatpush1.msra.mxu0 0.0
    %8326 = vmatprep.subr.mxu0 0.0
    %8327 = vmatpush1.msra.mxu0 0.0
    %8328 = vmatprep.subr.mxu0 0.0
    %8329 = vmatpush1.msra.mxu0 0.0
    %8330 = vmatprep.subr.mxu0 0.0
    %8331 = vmatpush1.msra.mxu0 0.0
    %8332 = vmatprep.subr.mxu0 0.0
    %8333 = vmatpush1.msra.mxu0 0.0
    %8334 = vmatprep.subr.mxu0 0.0
    %8335 = vmatpush1.msra.mxu0 0.0
    %8336 = vmatprep.subr.mxu0 0.0
    %8337 = vmatpush1.msra.mxu0 0.0
    %8338 = vmatprep.subr.mxu0 0.0
    %8339 = vmatpush1.msra.mxu0 0.0
    %8340 = vmatprep.subr.mxu0 0.0
    %8341 = vmatpush1.msra.mxu0 0.0
    %8342 = vmatprep.subr.mxu0 0.0
    %8343 = vmatpush1.msra.mxu0 0.0
    %8344 = vmatprep.subr.mxu0 0.0
    %8345 = vmatpush1.msra.mxu0 0.0
    %8346 = vmatprep.subr.mxu0 0.0
    %8347 = vmatpush1.msra.mxu0 0.0
    %8348 = vmatprep.subr.mxu0 0.0
    %8349 = vmatpush1.msra.mxu0 0.0
    %8350 = vmatprep.subr.mxu0 0.0
    %8351 = vmatpush1.msra.mxu0 0.0
    %8352 = vmatprep.subr.mxu0 0.0
    %8353 = vmatpush1.msra.mxu0 0.0
    %8354 = vmatprep.subr.mxu0 0.0
    %8355 = vmatpush1.msra.mxu0 0.0
    %8356 = vmatprep.subr.mxu0 0.0
    %8357 = vmatpush1.msra.mxu0 0.0
    %8358 = vmatprep.subr.mxu0 0.0
    %8359 = vmatpush1.msra.mxu0 0.0
    %8360 = vmatprep.subr.mxu0 0.0
    %8361 = vmatpush1.msra.mxu0 0.0
    %8362 = vmatprep.subr.mxu0 0.0
    %8363 = vmatpush1.msra.mxu0 0.0
    %8364 = vmatprep.subr.mxu0 0.0
    %8365 = vmatpush1.msra.mxu0 0.0
    %8366 = vmatprep.subr.mxu0 0.0
    %8367 = vmatpush1.msra.mxu0 0.0
    %8368 = vmatprep.subr.mxu0 0.0
    %8369 = vmatpush1.msra.mxu0 0.0
    %8370 = vmatprep.subr.mxu0 0.0
    %8371 = vmatpush1.msra.mxu0 0.0
    %8372 = vmatprep.subr.mxu0 0.0
    %8373 = vmatpush1.msra.mxu0 0.0
    %8374 = vmatprep.subr.mxu0 0.0
    %8375 = vmatpush1.msra.mxu0 0.0
    %8376 = vmatprep.mubr.f32.mxu0 0.0
    %v8377 = vand.u32 %v8083, 4294901760
    %v8378 = vsub.f32 %v8083, %v8377
    %v8379 = vand.u32 %v8378, 4294901760
    %8380 = vmatmul.mubr.f32.gmra.mrb[0].mxu0 %v8379
    %v8381 = vpop.f32.mrb[0].mxu0
    %v8382 = vadd.f32 %v8308, %v8381
    %v8383 = vpop.f32.mrb[0].mxu0
    %8384 = vdwg.mxu0
    %8385 = vmatprep.subr.mxu0 0.0
    %v8386 = vand.u32 %v8080, 4294901760
    %v8387 = vsub.f32 %v8080, %v8386
    %v8388 = vand.u32 %v8387, 4294901760
    %8389 = vmatpush1.msra.mxu0 %v8388
    %8390 = vmatprep.subr.mxu0 0.0
    %8391 = vmatpush1.msra.mxu0 0.0
    %8392 = vmatprep.subr.mxu0 0.0
    %8393 = vmatpush1.msra.mxu0 0.0
    %8394 = vmatprep.subr.mxu0 0.0
    %8395 = vmatpush1.msra.mxu0 0.0
    %8396 = vmatprep.subr.mxu0 0.0
    %8397 = vmatpush1.msra.mxu0 0.0
    %8398 = vmatprep.subr.mxu0 0.0
    %8399 = vmatpush1.msra.mxu0 0.0
    %8400 = vmatprep.subr.mxu0 0.0
    %8401 = vmatpush1.msra.mxu0 0.0
    %8402 = vmatprep.subr.mxu0 0.0
    %8403 = vmatpush1.msra.mxu0 0.0
    %8404 = vmatprep.subr.mxu0 0.0
    %8405 = vmatpush1.msra.mxu0 0.0
    %8406 = vmatprep.subr.mxu0 0.0
    %8407 = vmatpush1.msra.mxu0 0.0
    %8408 = vmatprep.subr.mxu0 0.0
    %8409 = vmatpush1.msra.mxu0 0.0
    %8410 = vmatprep.subr.mxu0 0.0
    %8411 = vmatpush1.msra.mxu0 0.0
    %8412 = vmatprep.subr.mxu0 0.0
    %8413 = vmatpush1.msra.mxu0 0.0
    %8414 = vmatprep.subr.mxu0 0.0
    %8415 = vmatpush1.msra.mxu0 0.0
    %8416 = vmatprep.subr.mxu0 0.0
    %8417 = vmatpush1.msra.mxu0 0.0
    %8418 = vmatprep.subr.mxu0 0.0
    %8419 = vmatpush1.msra.mxu0 0.0
    %8420 = vmatprep.subr.mxu0 0.0
    %8421 = vmatpush1.msra.mxu0 0.0
    %8422 = vmatprep.subr.mxu0 0.0
    %8423 = vmatpush1.msra.mxu0 0.0
    %8424 = vmatprep.subr.mxu0 0.0
    %8425 = vmatpush1.msra.mxu0 0.0
    %8426 = vmatprep.subr.mxu0 0.0
    %8427 = vmatpush1.msra.mxu0 0.0
    %8428 = vmatprep.subr.mxu0 0.0
    %8429 = vmatpush1.msra.mxu0 0.0
    %8430 = vmatprep.subr.mxu0 0.0
    %8431 = vmatpush1.msra.mxu0 0.0
    %8432 = vmatprep.subr.mxu0 0.0
    %8433 = vmatpush1.msra.mxu0 0.0
    %8434 = vmatprep.subr.mxu0 0.0
    %8435 = vmatpush1.msra.mxu0 0.0
    %8436 = vmatprep.subr.mxu0 0.0
    %8437 = vmatpush1.msra.mxu0 0.0
    %8438 = vmatprep.subr.mxu0 0.0
    %8439 = vmatpush1.msra.mxu0 0.0
    %8440 = vmatprep.subr.mxu0 0.0
    %8441 = vmatpush1.msra.mxu0 0.0
    %8442 = vmatprep.subr.mxu0 0.0
    %8443 = vmatpush1.msra.mxu0 0.0
    %8444 = vmatprep.subr.mxu0 0.0
    %8445 = vmatpush1.msra.mxu0 0.0
    %8446 = vmatprep.subr.mxu0 0.0
    %8447 = vmatpush1.msra.mxu0 0.0
    %8448 = vmatprep.subr.mxu0 0.0
    %8449 = vmatpush1.msra.mxu0 0.0
    %8450 = vmatprep.subr.mxu0 0.0
    %8451 = vmatpush1.msra.mxu0 0.0
    %8452 = vmatprep.mubr.f32.mxu0 0.0
    %v8453 = vand.u32 %v8083, 4294901760
    %8454 = vmatmul.mubr.f32.gmra.mrb[0].mxu0 %v8453
    %v8455 = vpop.f32.mrb[0].mxu0
    %v8456 = vadd.f32 %v8382, %v8455
    %v8457 = vpop.f32.mrb[0].mxu0
    %8458 = vdwg.mxu0
    %8459 = vmatprep.subr.mxu0 0.0
    %v8460 = vand.u32 %v8080, 4294901760
    %8461 = vmatpush1.msra.mxu0 %v8460
    %8462 = vmatprep.subr.mxu0 0.0
    %8463 = vmatpush1.msra.mxu0 0.0
    %8464 = vmatprep.subr.mxu0 0.0
    %8465 = vmatpush1.msra.mxu0 0.0
    %8466 = vmatprep.subr.mxu0 0.0
    %8467 = vmatpush1.msra.mxu0 0.0
    %8468 = vmatprep.subr.mxu0 0.0
    %8469 = vmatpush1.msra.mxu0 0.0
    %8470 = vmatprep.subr.mxu0 0.0
    %8471 = vmatpush1.msra.mxu0 0.0
    %8472 = vmatprep.subr.mxu0 0.0
    %8473 = vmatpush1.msra.mxu0 0.0
    %8474 = vmatprep.subr.mxu0 0.0
    %8475 = vmatpush1.msra.mxu0 0.0
    %8476 = vmatprep.subr.mxu0 0.0
    %8477 = vmatpush1.msra.mxu0 0.0
    %8478 = vmatprep.subr.mxu0 0.0
    %8479 = vmatpush1.msra.mxu0 0.0
    %8480 = vmatprep.subr.mxu0 0.0
    %8481 = vmatpush1.msra.mxu0 0.0
    %8482 = vmatprep.subr.mxu0 0.0
    %8483 = vmatpush1.msra.mxu0 0.0
    %8484 = vmatprep.subr.mxu0 0.0
    %8485 = vmatpush1.msra.mxu0 0.0
    %8486 = vmatprep.subr.mxu0 0.0
    %8487 = vmatpush1.msra.mxu0 0.0
    %8488 = vmatprep.subr.mxu0 0.0
    %8489 = vmatpush1.msra.mxu0 0.0
    %8490 = vmatprep.subr.mxu0 0.0
    %8491 = vmatpush1.msra.mxu0 0.0
    %8492 = vmatprep.subr.mxu0 0.0
    %8493 = vmatpush1.msra.mxu0 0.0
    %8494 = vmatprep.subr.mxu0 0.0
    %8495 = vmatpush1.msra.mxu0 0.0
    %8496 = vmatprep.subr.mxu0 0.0
    %8497 = vmatpush1.msra.mxu0 0.0
    %8498 = vmatprep.subr.mxu0 0.0
    %8499 = vmatpush1.msra.mxu0 0.0
    %8500 = vmatprep.subr.mxu0 0.0
    %8501 = vmatpush1.msra.mxu0 0.0
    %8502 = vmatprep.subr.mxu0 0.0
    %8503 = vmatpush1.msra.mxu0 0.0
    %8504 = vmatprep.subr.mxu0 0.0
    %8505 = vmatpush1.msra.mxu0 0.0
    %8506 = vmatprep.subr.mxu0 0.0
    %8507 = vmatpush1.msra.mxu0 0.0
    %8508 = vmatprep.subr.mxu0 0.0
    %8509 = vmatpush1.msra.mxu0 0.0
    %8510 = vmatprep.subr.mxu0 0.0
    %8511 = vmatpush1.msra.mxu0 0.0
    %8512 = vmatprep.subr.mxu0 0.0
    %8513 = vmatpush1.msra.mxu0 0.0
    %8514 = vmatprep.subr.mxu0 0.0
    %8515 = vmatpush1.msra.mxu0 0.0
    %8516 = vmatprep.subr.mxu0 0.0
    %8517 = vmatpush1.msra.mxu0 0.0
    %8518 = vmatprep.subr.mxu0 0.0
    %8519 = vmatpush1.msra.mxu0 0.0
    %8520 = vmatprep.subr.mxu0 0.0
    %8521 = vmatpush1.msra.mxu0 0.0
    %8522 = vmatprep.subr.mxu0 0.0
    %8523 = vmatpush1.msra.mxu0 0.0
    %8524 = vmatprep.mubr.f32.mxu0 0.0
    %v8525 = vand.u32 %v8083, 4294901760
    %8526 = vmatmul.mubr.f32.gmra.mrb[0].mxu0 %v8525
    %v8527 = vpop.f32.mrb[0].mxu0
    %v8528 = vadd.f32 %v8456, %v8527
    %v8529 = vpop.f32.mrb[0].mxu0
    %8530 = vdwg.mxu0
    %v8531 = vadd.f32 %v8078, %v8528
    %8533 = vrot.lane.b32.xlu0 %v1100, 96
    %v8534 = vpop.permute.xlu0 %8533
    %v8537 = vsel %vm4742, %v6721, 0
    %8539 = vmatprep.subr.mxu0 0.0
    %v8540 = vand.u32 %v8534, 4294901760
    %8541 = vmatpush1.msra.mxu0 %v8540
    %8542 = vmatprep.subr.mxu0 0.0
    %8543 = vmatpush1.msra.mxu0 0.0
    %8544 = vmatprep.subr.mxu0 0.0
    %8545 = vmatpush1.msra.mxu0 0.0
    %8546 = vmatprep.subr.mxu0 0.0
    %8547 = vmatpush1.msra.mxu0 0.0
    %8548 = vmatprep.subr.mxu0 0.0
    %8549 = vmatpush1.msra.mxu0 0.0
    %8550 = vmatprep.subr.mxu0 0.0
    %8551 = vmatpush1.msra.mxu0 0.0
    %8552 = vmatprep.subr.mxu0 0.0
    %8553 = vmatpush1.msra.mxu0 0.0
    %8554 = vmatprep.subr.mxu0 0.0
    %8555 = vmatpush1.msra.mxu0 0.0
    %8556 = vmatprep.subr.mxu0 0.0
    %8557 = vmatpush1.msra.mxu0 0.0
    %8558 = vmatprep.subr.mxu0 0.0
    %8559 = vmatpush1.msra.mxu0 0.0
    %8560 = vmatprep.subr.mxu0 0.0
    %8561 = vmatpush1.msra.mxu0 0.0
    %8562 = vmatprep.subr.mxu0 0.0
    %8563 = vmatpush1.msra.mxu0 0.0
    %8564 = vmatprep.subr.mxu0 0.0
    %8565 = vmatpush1.msra.mxu0 0.0
    %8566 = vmatprep.subr.mxu0 0.0
    %8567 = vmatpush1.msra.mxu0 0.0
    %8568 = vmatprep.subr.mxu0 0.0
    %8569 = vmatpush1.msra.mxu0 0.0
    %8570 = vmatprep.subr.mxu0 0.0
    %8571 = vmatpush1.msra.mxu0 0.0
    %8572 = vmatprep.subr.mxu0 0.0
    %8573 = vmatpush1.msra.mxu0 0.0
    %8574 = vmatprep.subr.mxu0 0.0
    %8575 = vmatpush1.msra.mxu0 0.0
    %8576 = vmatprep.subr.mxu0 0.0
    %8577 = vmatpush1.msra.mxu0 0.0
    %8578 = vmatprep.subr.mxu0 0.0
    %8579 = vmatpush1.msra.mxu0 0.0
    %8580 = vmatprep.subr.mxu0 0.0
    %8581 = vmatpush1.msra.mxu0 0.0
    %8582 = vmatprep.subr.mxu0 0.0
    %8583 = vmatpush1.msra.mxu0 0.0
    %8584 = vmatprep.subr.mxu0 0.0
    %8585 = vmatpush1.msra.mxu0 0.0
    %8586 = vmatprep.subr.mxu0 0.0
    %8587 = vmatpush1.msra.mxu0 0.0
    %8588 = vmatprep.subr.mxu0 0.0
    %8589 = vmatpush1.msra.mxu0 0.0
    %8590 = vmatprep.subr.mxu0 0.0
    %8591 = vmatpush1.msra.mxu0 0.0
    %8592 = vmatprep.subr.mxu0 0.0
    %8593 = vmatpush1.msra.mxu0 0.0
    %8594 = vmatprep.subr.mxu0 0.0
    %8595 = vmatpush1.msra.mxu0 0.0
    %8596 = vmatprep.subr.mxu0 0.0
    %8597 = vmatpush1.msra.mxu0 0.0
    %8598 = vmatprep.subr.mxu0 0.0
    %8599 = vmatpush1.msra.mxu0 0.0
    %8600 = vmatprep.subr.mxu0 0.0
    %8601 = vmatpush1.msra.mxu0 0.0
    %8602 = vmatprep.subr.mxu0 0.0
    %8603 = vmatpush1.msra.mxu0 0.0
    %8604 = vmatprep.mubr.f32.mxu0 0.0
    %v8605 = vand.u32 %v8537, 4294901760
    %v8606 = vsub.f32 %v8537, %v8605
    %v8607 = vand.u32 %v8606, 4294901760
    %v8608 = vsub.f32 %v8606, %v8607
    %v8609 = vand.u32 %v8608, 4294901760
    %8610 = vmatmul.mubr.f32.gmra.mrb[0].mxu0 %v8609
    %v8611 = vpop.f32.mrb[0].mxu0
    %v8612 = vadd.f32 0.0, %v8611
    %v8613 = vpop.f32.mrb[0].mxu0
    %8614 = vdwg.mxu0
    %8615 = vmatprep.subr.mxu0 0.0
    %v8616 = vand.u32 %v8534, 4294901760
    %v8617 = vsub.f32 %v8534, %v8616
    %v8618 = vand.u32 %v8617, 4294901760
    %v8619 = vsub.f32 %v8617, %v8618
    %v8620 = vand.u32 %v8619, 4294901760
    %8621 = vmatpush1.msra.mxu0 %v8620
    %8622 = vmatprep.subr.mxu0 0.0
    %8623 = vmatpush1.msra.mxu0 0.0
    %8624 = vmatprep.subr.mxu0 0.0
    %8625 = vmatpush1.msra.mxu0 0.0
    %8626 = vmatprep.subr.mxu0 0.0
    %8627 = vmatpush1.msra.mxu0 0.0
    %8628 = vmatprep.subr.mxu0 0.0
    %8629 = vmatpush1.msra.mxu0 0.0
    %8630 = vmatprep.subr.mxu0 0.0
    %8631 = vmatpush1.msra.mxu0 0.0
    %8632 = vmatprep.subr.mxu0 0.0
    %8633 = vmatpush1.msra.mxu0 0.0
    %8634 = vmatprep.subr.mxu0 0.0
    %8635 = vmatpush1.msra.mxu0 0.0
    %8636 = vmatprep.subr.mxu0 0.0
    %8637 = vmatpush1.msra.mxu0 0.0
    %8638 = vmatprep.subr.mxu0 0.0
    %8639 = vmatpush1.msra.mxu0 0.0
    %8640 = vmatprep.subr.mxu0 0.0
    %8641 = vmatpush1.msra.mxu0 0.0
    %8642 = vmatprep.subr.mxu0 0.0
    %8643 = vmatpush1.msra.mxu0 0.0
    %8644 = vmatprep.subr.mxu0 0.0
    %8645 = vmatpush1.msra.mxu0 0.0
    %8646 = vmatprep.subr.mxu0 0.0
    %8647 = vmatpush1.msra.mxu0 0.0
    %8648 = vmatprep.subr.mxu0 0.0
    %8649 = vmatpush1.msra.mxu0 0.0
    %8650 = vmatprep.subr.mxu0 0.0
    %8651 = vmatpush1.msra.mxu0 0.0
    %8652 = vmatprep.subr.mxu0 0.0
    %8653 = vmatpush1.msra.mxu0 0.0
    %8654 = vmatprep.subr.mxu0 0.0
    %8655 = vmatpush1.msra.mxu0 0.0
    %8656 = vmatprep.subr.mxu0 0.0
    %8657 = vmatpush1.msra.mxu0 0.0
    %8658 = vmatprep.subr.mxu0 0.0
    %8659 = vmatpush1.msra.mxu0 0.0
    %8660 = vmatprep.subr.mxu0 0.0
    %8661 = vmatpush1.msra.mxu0 0.0
    %8662 = vmatprep.subr.mxu0 0.0
    %8663 = vmatpush1.msra.mxu0 0.0
    %8664 = vmatprep.subr.mxu0 0.0
    %8665 = vmatpush1.msra.mxu0 0.0
    %8666 = vmatprep.subr.mxu0 0.0
    %8667 = vmatpush1.msra.mxu0 0.0
    %8668 = vmatprep.subr.mxu0 0.0
    %8669 = vmatpush1.msra.mxu0 0.0
    %8670 = vmatprep.subr.mxu0 0.0
    %8671 = vmatpush1.msra.mxu0 0.0
    %8672 = vmatprep.subr.mxu0 0.0
    %8673 = vmatpush1.msra.mxu0 0.0
    %8674 = vmatprep.subr.mxu0 0.0
    %8675 = vmatpush1.msra.mxu0 0.0
    %8676 = vmatprep.subr.mxu0 0.0
    %8677 = vmatpush1.msra.mxu0 0.0
    %8678 = vmatprep.subr.mxu0 0.0
    %8679 = vmatpush1.msra.mxu0 0.0
    %8680 = vmatprep.subr.mxu0 0.0
    %8681 = vmatpush1.msra.mxu0 0.0
    %8682 = vmatprep.subr.mxu0 0.0
    %8683 = vmatpush1.msra.mxu0 0.0
    %8684 = vmatprep.mubr.f32.mxu0 0.0
    %v8685 = vand.u32 %v8537, 4294901760
    %8686 = vmatmul.mubr.f32.gmra.mrb[0].mxu0 %v8685
    %v8687 = vpop.f32.mrb[0].mxu0
    %v8688 = vadd.f32 %v8612, %v8687
    %v8689 = vpop.f32.mrb[0].mxu0
    %8690 = vdwg.mxu0
    %8691 = vmatprep.subr.mxu0 0.0
    %v8692 = vand.u32 %v8534, 4294901760
    %v8693 = vsub.f32 %v8534, %v8692
    %8694 = vmatpush1.msra.mxu0 %v8693
    %8695 = vmatprep.subr.mxu0 0.0
    %8696 = vmatpush1.msra.mxu0 0.0
    %8697 = vmatprep.subr.mxu0 0.0
    %8698 = vmatpush1.msra.mxu0 0.0
    %8699 = vmatprep.subr.mxu0 0.0
    %8700 = vmatpush1.msra.mxu0 0.0
    %8701 = vmatprep.subr.mxu0 0.0
    %8702 = vmatpush1.msra.mxu0 0.0
    %8703 = vmatprep.subr.mxu0 0.0
    %8704 = vmatpush1.msra.mxu0 0.0
    %8705 = vmatprep.subr.mxu0 0.0
    %8706 = vmatpush1.msra.mxu0 0.0
    %8707 = vmatprep.subr.mxu0 0.0
    %8708 = vmatpush1.msra.mxu0 0.0
    %8709 = vmatprep.subr.mxu0 0.0
    %8710 = vmatpush1.msra.mxu0 0.0
    %8711 = vmatprep.subr.mxu0 0.0
    %8712 = vmatpush1.msra.mxu0 0.0
    %8713 = vmatprep.subr.mxu0 0.0
    %8714 = vmatpush1.msra.mxu0 0.0
    %8715 = vmatprep.subr.mxu0 0.0
    %8716 = vmatpush1.msra.mxu0 0.0
    %8717 = vmatprep.subr.mxu0 0.0
    %8718 = vmatpush1.msra.mxu0 0.0
    %8719 = vmatprep.subr.mxu0 0.0
    %8720 = vmatpush1.msra.mxu0 0.0
    %8721 = vmatprep.subr.mxu0 0.0
    %8722 = vmatpush1.msra.mxu0 0.0
    %8723 = vmatprep.subr.mxu0 0.0
    %8724 = vmatpush1.msra.mxu0 0.0
    %8725 = vmatprep.subr.mxu0 0.0
    %8726 = vmatpush1.msra.mxu0 0.0
    %8727 = vmatprep.subr.mxu0 0.0
    %8728 = vmatpush1.msra.mxu0 0.0
    %8729 = vmatprep.subr.mxu0 0.0
    %8730 = vmatpush1.msra.mxu0 0.0
    %8731 = vmatprep.subr.mxu0 0.0
    %8732 = vmatpush1.msra.mxu0 0.0
    %8733 = vmatprep.subr.mxu0 0.0
    %8734 = vmatpush1.msra.mxu0 0.0
    %8735 = vmatprep.subr.mxu0 0.0
    %8736 = vmatpush1.msra.mxu0 0.0
    %8737 = vmatprep.subr.mxu0 0.0
    %8738 = vmatpush1.msra.mxu0 0.0
    %8739 = vmatprep.subr.mxu0 0.0
    %8740 = vmatpush1.msra.mxu0 0.0
    %8741 = vmatprep.subr.mxu0 0.0
    %8742 = vmatpush1.msra.mxu0 0.0
    %8743 = vmatprep.subr.mxu0 0.0
    %8744 = vmatpush1.msra.mxu0 0.0
    %8745 = vmatprep.subr.mxu0 0.0
    %8746 = vmatpush1.msra.mxu0 0.0
    %8747 = vmatprep.subr.mxu0 0.0
    %8748 = vmatpush1.msra.mxu0 0.0
    %8749 = vmatprep.subr.mxu0 0.0
    %8750 = vmatpush1.msra.mxu0 0.0
    %8751 = vmatprep.subr.mxu0 0.0
    %8752 = vmatpush1.msra.mxu0 0.0
    %8753 = vmatprep.subr.mxu0 0.0
    %8754 = vmatpush1.msra.mxu0 0.0
    %8755 = vmatprep.subr.mxu0 0.0
    %8756 = vmatpush1.msra.mxu0 0.0
    %8757 = vmatprep.mubr.f32.mxu0 0.0
    %v8758 = vand.u32 %v8537, 4294901760
    %v8759 = vsub.f32 %v8537, %v8758
    %8760 = vmatmul.mubr.f32.gmra.mrb[0].mxu0 %v8759
    %v8761 = vpop.f32.mrb[0].mxu0
    %v8762 = vadd.f32 %v8688, %v8761
    %v8763 = vpop.f32.mrb[0].mxu0
    %8764 = vdwg.mxu0
    %8765 = vmatprep.subr.mxu0 0.0
    %v8766 = vand.u32 %v8534, 4294901760
    %8767 = vmatpush1.msra.mxu0 %v8766
    %8768 = vmatprep.subr.mxu0 0.0
    %8769 = vmatpush1.msra.mxu0 0.0
    %8770 = vmatprep.subr.mxu0 0.0
    %8771 = vmatpush1.msra.mxu0 0.0
    %8772 = vmatprep.subr.mxu0 0.0
    %8773 = vmatpush1.msra.mxu0 0.0
    %8774 = vmatprep.subr.mxu0 0.0
    %8775 = vmatpush1.msra.mxu0 0.0
    %8776 = vmatprep.subr.mxu0 0.0
    %8777 = vmatpush1.msra.mxu0 0.0
    %8778 = vmatprep.subr.mxu0 0.0
    %8779 = vmatpush1.msra.mxu0 0.0
    %8780 = vmatprep.subr.mxu0 0.0
    %8781 = vmatpush1.msra.mxu0 0.0
    %8782 = vmatprep.subr.mxu0 0.0
    %8783 = vmatpush1.msra.mxu0 0.0
    %8784 = vmatprep.subr.mxu0 0.0
    %8785 = vmatpush1.msra.mxu0 0.0
    %8786 = vmatprep.subr.mxu0 0.0
    %8787 = vmatpush1.msra.mxu0 0.0
    %8788 = vmatprep.subr.mxu0 0.0
    %8789 = vmatpush1.msra.mxu0 0.0
    %8790 = vmatprep.subr.mxu0 0.0
    %8791 = vmatpush1.msra.mxu0 0.0
    %8792 = vmatprep.subr.mxu0 0.0
    %8793 = vmatpush1.msra.mxu0 0.0
    %8794 = vmatprep.subr.mxu0 0.0
    %8795 = vmatpush1.msra.mxu0 0.0
    %8796 = vmatprep.subr.mxu0 0.0
    %8797 = vmatpush1.msra.mxu0 0.0
    %8798 = vmatprep.subr.mxu0 0.0
    %8799 = vmatpush1.msra.mxu0 0.0
    %8800 = vmatprep.subr.mxu0 0.0
    %8801 = vmatpush1.msra.mxu0 0.0
    %8802 = vmatprep.subr.mxu0 0.0
    %8803 = vmatpush1.msra.mxu0 0.0
    %8804 = vmatprep.subr.mxu0 0.0
    %8805 = vmatpush1.msra.mxu0 0.0
    %8806 = vmatprep.subr.mxu0 0.0
    %8807 = vmatpush1.msra.mxu0 0.0
    %8808 = vmatprep.subr.mxu0 0.0
    %8809 = vmatpush1.msra.mxu0 0.0
    %8810 = vmatprep.subr.mxu0 0.0
    %8811 = vmatpush1.msra.mxu0 0.0
    %8812 = vmatprep.subr.mxu0 0.0
    %8813 = vmatpush1.msra.mxu0 0.0
    %8814 = vmatprep.subr.mxu0 0.0
    %8815 = vmatpush1.msra.mxu0 0.0
    %8816 = vmatprep.subr.mxu0 0.0
    %8817 = vmatpush1.msra.mxu0 0.0
    %8818 = vmatprep.subr.mxu0 0.0
    %8819 = vmatpush1.msra.mxu0 0.0
    %8820 = vmatprep.subr.mxu0 0.0
    %8821 = vmatpush1.msra.mxu0 0.0
    %8822 = vmatprep.subr.mxu0 0.0
    %8823 = vmatpush1.msra.mxu0 0.0
    %8824 = vmatprep.subr.mxu0 0.0
    %8825 = vmatpush1.msra.mxu0 0.0
    %8826 = vmatprep.subr.mxu0 0.0
    %8827 = vmatpush1.msra.mxu0 0.0
    %8828 = vmatprep.subr.mxu0 0.0
    %8829 = vmatpush1.msra.mxu0 0.0
    %8830 = vmatprep.mubr.f32.mxu0 0.0
    %v8831 = vand.u32 %v8537, 4294901760
    %v8832 = vsub.f32 %v8537, %v8831
    %v8833 = vand.u32 %v8832, 4294901760
    %8834 = vmatmul.mubr.f32.gmra.mrb[0].mxu0 %v8833
    %v8835 = vpop.f32.mrb[0].mxu0
    %v8836 = vadd.f32 %v8762, %v8835
    %v8837 = vpop.f32.mrb[0].mxu0
    %8838 = vdwg.mxu0
    %8839 = vmatprep.subr.mxu0 0.0
    %v8840 = vand.u32 %v8534, 4294901760
    %v8841 = vsub.f32 %v8534, %v8840
    %v8842 = vand.u32 %v8841, 4294901760
    %8843 = vmatpush1.msra.mxu0 %v8842
    %8844 = vmatprep.subr.mxu0 0.0
    %8845 = vmatpush1.msra.mxu0 0.0
    %8846 = vmatprep.subr.mxu0 0.0
    %8847 = vmatpush1.msra.mxu0 0.0
    %8848 = vmatprep.subr.mxu0 0.0
    %8849 = vmatpush1.msra.mxu0 0.0
    %8850 = vmatprep.subr.mxu0 0.0
    %8851 = vmatpush1.msra.mxu0 0.0
    %8852 = vmatprep.subr.mxu0 0.0
    %8853 = vmatpush1.msra.mxu0 0.0
    %8854 = vmatprep.subr.mxu0 0.0
    %8855 = vmatpush1.msra.mxu0 0.0
    %8856 = vmatprep.subr.mxu0 0.0
    %8857 = vmatpush1.msra.mxu0 0.0
    %8858 = vmatprep.subr.mxu0 0.0
    %8859 = vmatpush1.msra.mxu0 0.0
    %8860 = vmatprep.subr.mxu0 0.0
    %8861 = vmatpush1.msra.mxu0 0.0
    %8862 = vmatprep.subr.mxu0 0.0
    %8863 = vmatpush1.msra.mxu0 0.0
    %8864 = vmatprep.subr.mxu0 0.0
    %8865 = vmatpush1.msra.mxu0 0.0
    %8866 = vmatprep.subr.mxu0 0.0
    %8867 = vmatpush1.msra.mxu0 0.0
    %8868 = vmatprep.subr.mxu0 0.0
    %8869 = vmatpush1.msra.mxu0 0.0
    %8870 = vmatprep.subr.mxu0 0.0
    %8871 = vmatpush1.msra.mxu0 0.0
    %8872 = vmatprep.subr.mxu0 0.0
    %8873 = vmatpush1.msra.mxu0 0.0
    %8874 = vmatprep.subr.mxu0 0.0
    %8875 = vmatpush1.msra.mxu0 0.0
    %8876 = vmatprep.subr.mxu0 0.0
    %8877 = vmatpush1.msra.mxu0 0.0
    %8878 = vmatprep.subr.mxu0 0.0
    %8879 = vmatpush1.msra.mxu0 0.0
    %8880 = vmatprep.subr.mxu0 0.0
    %8881 = vmatpush1.msra.mxu0 0.0
    %8882 = vmatprep.subr.mxu0 0.0
    %8883 = vmatpush1.msra.mxu0 0.0
    %8884 = vmatprep.subr.mxu0 0.0
    %8885 = vmatpush1.msra.mxu0 0.0
    %8886 = vmatprep.subr.mxu0 0.0
    %8887 = vmatpush1.msra.mxu0 0.0
    %8888 = vmatprep.subr.mxu0 0.0
    %8889 = vmatpush1.msra.mxu0 0.0
    %8890 = vmatprep.subr.mxu0 0.0
    %8891 = vmatpush1.msra.mxu0 0.0
    %8892 = vmatprep.subr.mxu0 0.0
    %8893 = vmatpush1.msra.mxu0 0.0
    %8894 = vmatprep.subr.mxu0 0.0
    %8895 = vmatpush1.msra.mxu0 0.0
    %8896 = vmatprep.subr.mxu0 0.0
    %8897 = vmatpush1.msra.mxu0 0.0
    %8898 = vmatprep.subr.mxu0 0.0
    %8899 = vmatpush1.msra.mxu0 0.0
    %8900 = vmatprep.subr.mxu0 0.0
    %8901 = vmatpush1.msra.mxu0 0.0
    %8902 = vmatprep.subr.mxu0 0.0
    %8903 = vmatpush1.msra.mxu0 0.0
    %8904 = vmatprep.subr.mxu0 0.0
    %8905 = vmatpush1.msra.mxu0 0.0
    %8906 = vmatprep.mubr.f32.mxu0 0.0
    %v8907 = vand.u32 %v8537, 4294901760
    %8908 = vmatmul.mubr.f32.gmra.mrb[0].mxu0 %v8907
    %v8909 = vpop.f32.mrb[0].mxu0
    %v8910 = vadd.f32 %v8836, %v8909
    %v8911 = vpop.f32.mrb[0].mxu0
    %8912 = vdwg.mxu0
    %8913 = vmatprep.subr.mxu0 0.0
    %v8914 = vand.u32 %v8534, 4294901760
    %8915 = vmatpush1.msra.mxu0 %v8914
    %8916 = vmatprep.subr.mxu0 0.0
    %8917 = vmatpush1.msra.mxu0 0.0
    %8918 = vmatprep.subr.mxu0 0.0
    %8919 = vmatpush1.msra.mxu0 0.0
    %8920 = vmatprep.subr.mxu0 0.0
    %8921 = vmatpush1.msra.mxu0 0.0
    %8922 = vmatprep.subr.mxu0 0.0
    %8923 = vmatpush1.msra.mxu0 0.0
    %8924 = vmatprep.subr.mxu0 0.0
    %8925 = vmatpush1.msra.mxu0 0.0
    %8926 = vmatprep.subr.mxu0 0.0
    %8927 = vmatpush1.msra.mxu0 0.0
    %8928 = vmatprep.subr.mxu0 0.0
    %8929 = vmatpush1.msra.mxu0 0.0
    %8930 = vmatprep.subr.mxu0 0.0
    %8931 = vmatpush1.msra.mxu0 0.0
    %8932 = vmatprep.subr.mxu0 0.0
    %8933 = vmatpush1.msra.mxu0 0.0
    %8934 = vmatprep.subr.mxu0 0.0
    %8935 = vmatpush1.msra.mxu0 0.0
    %8936 = vmatprep.subr.mxu0 0.0
    %8937 = vmatpush1.msra.mxu0 0.0
    %8938 = vmatprep.subr.mxu0 0.0
    %8939 = vmatpush1.msra.mxu0 0.0
    %8940 = vmatprep.subr.mxu0 0.0
    %8941 = vmatpush1.msra.mxu0 0.0
    %8942 = vmatprep.subr.mxu0 0.0
    %8943 = vmatpush1.msra.mxu0 0.0
    %8944 = vmatprep.subr.mxu0 0.0
    %8945 = vmatpush1.msra.mxu0 0.0
    %8946 = vmatprep.subr.mxu0 0.0
    %8947 = vmatpush1.msra.mxu0 0.0
    %8948 = vmatprep.subr.mxu0 0.0
    %8949 = vmatpush1.msra.mxu0 0.0
    %8950 = vmatprep.subr.mxu0 0.0
    %8951 = vmatpush1.msra.mxu0 0.0
    %8952 = vmatprep.subr.mxu0 0.0
    %8953 = vmatpush1.msra.mxu0 0.0
    %8954 = vmatprep.subr.mxu0 0.0
    %8955 = vmatpush1.msra.mxu0 0.0
    %8956 = vmatprep.subr.mxu0 0.0
    %8957 = vmatpush1.msra.mxu0 0.0
    %8958 = vmatprep.subr.mxu0 0.0
    %8959 = vmatpush1.msra.mxu0 0.0
    %8960 = vmatprep.subr.mxu0 0.0
    %8961 = vmatpush1.msra.mxu0 0.0
    %8962 = vmatprep.subr.mxu0 0.0
    %8963 = vmatpush1.msra.mxu0 0.0
    %8964 = vmatprep.subr.mxu0 0.0
    %8965 = vmatpush1.msra.mxu0 0.0
    %8966 = vmatprep.subr.mxu0 0.0
    %8967 = vmatpush1.msra.mxu0 0.0
    %8968 = vmatprep.subr.mxu0 0.0
    %8969 = vmatpush1.msra.mxu0 0.0
    %8970 = vmatprep.subr.mxu0 0.0
    %8971 = vmatpush1.msra.mxu0 0.0
    %8972 = vmatprep.subr.mxu0 0.0
    %8973 = vmatpush1.msra.mxu0 0.0
    %8974 = vmatprep.subr.mxu0 0.0
    %8975 = vmatpush1.msra.mxu0 0.0
    %8976 = vmatprep.subr.mxu0 0.0
    %8977 = vmatpush1.msra.mxu0 0.0
    %8978 = vmatprep.mubr.f32.mxu0 0.0
    %v8979 = vand.u32 %v8537, 4294901760
    %8980 = vmatmul.mubr.f32.gmra.mrb[0].mxu0 %v8979
    %v8981 = vpop.f32.mrb[0].mxu0
    %v8982 = vadd.f32 %v8910, %v8981
    %v8983 = vpop.f32.mrb[0].mxu0
    %8984 = vdwg.mxu0
    %v8986 = vsel %vm4742, %v6720, 0
    %8988 = vmatprep.subr.mxu0 0.0
    %v8989 = vand.u32 %v1100, 4294901760
    %8990 = vmatpush1.msra.mxu0 %v8989
    %8991 = vmatprep.subr.mxu0 0.0
    %8992 = vmatpush1.msra.mxu0 0.0
    %8993 = vmatprep.subr.mxu0 0.0
    %8994 = vmatpush1.msra.mxu0 0.0
    %8995 = vmatprep.subr.mxu0 0.0
    %8996 = vmatpush1.msra.mxu0 0.0
    %8997 = vmatprep.subr.mxu0 0.0
    %8998 = vmatpush1.msra.mxu0 0.0
    %8999 = vmatprep.subr.mxu0 0.0
    %9000 = vmatpush1.msra.mxu0 0.0
    %9001 = vmatprep.subr.mxu0 0.0
    %9002 = vmatpush1.msra.mxu0 0.0
    %9003 = vmatprep.subr.mxu0 0.0
    %9004 = vmatpush1.msra.mxu0 0.0
    %9005 = vmatprep.subr.mxu0 0.0
    %9006 = vmatpush1.msra.mxu0 0.0
    %9007 = vmatprep.subr.mxu0 0.0
    %9008 = vmatpush1.msra.mxu0 0.0
    %9009 = vmatprep.subr.mxu0 0.0
    %9010 = vmatpush1.msra.mxu0 0.0
    %9011 = vmatprep.subr.mxu0 0.0
    %9012 = vmatpush1.msra.mxu0 0.0
    %9013 = vmatprep.subr.mxu0 0.0
    %9014 = vmatpush1.msra.mxu0 0.0
    %9015 = vmatprep.subr.mxu0 0.0
    %9016 = vmatpush1.msra.mxu0 0.0
    %9017 = vmatprep.subr.mxu0 0.0
    %9018 = vmatpush1.msra.mxu0 0.0
    %9019 = vmatprep.subr.mxu0 0.0
    %9020 = vmatpush1.msra.mxu0 0.0
    %9021 = vmatprep.subr.mxu0 0.0
    %9022 = vmatpush1.msra.mxu0 0.0
    %9023 = vmatprep.subr.mxu0 0.0
    %9024 = vmatpush1.msra.mxu0 0.0
    %9025 = vmatprep.subr.mxu0 0.0
    %9026 = vmatpush1.msra.mxu0 0.0
    %9027 = vmatprep.subr.mxu0 0.0
    %9028 = vmatpush1.msra.mxu0 0.0
    %9029 = vmatprep.subr.mxu0 0.0
    %9030 = vmatpush1.msra.mxu0 0.0
    %9031 = vmatprep.subr.mxu0 0.0
    %9032 = vmatpush1.msra.mxu0 0.0
    %9033 = vmatprep.subr.mxu0 0.0
    %9034 = vmatpush1.msra.mxu0 0.0
    %9035 = vmatprep.subr.mxu0 0.0
    %9036 = vmatpush1.msra.mxu0 0.0
    %9037 = vmatprep.subr.mxu0 0.0
    %9038 = vmatpush1.msra.mxu0 0.0
    %9039 = vmatprep.subr.mxu0 0.0
    %9040 = vmatpush1.msra.mxu0 0.0
    %9041 = vmatprep.subr.mxu0 0.0
    %9042 = vmatpush1.msra.mxu0 0.0
    %9043 = vmatprep.subr.mxu0 0.0
    %9044 = vmatpush1.msra.mxu0 0.0
    %9045 = vmatprep.subr.mxu0 0.0
    %9046 = vmatpush1.msra.mxu0 0.0
    %9047 = vmatprep.subr.mxu0 0.0
    %9048 = vmatpush1.msra.mxu0 0.0
    %9049 = vmatprep.subr.mxu0 0.0
    %9050 = vmatpush1.msra.mxu0 0.0
    %9051 = vmatprep.subr.mxu0 0.0
    %9052 = vmatpush1.msra.mxu0 0.0
    %9053 = vmatprep.mubr.f32.mxu0 0.0
    %v9054 = vand.u32 %v8986, 4294901760
    %v9055 = vsub.f32 %v8986, %v9054
    %v9056 = vand.u32 %v9055, 4294901760
    %v9057 = vsub.f32 %v9055, %v9056
    %v9058 = vand.u32 %v9057, 4294901760
    %9059 = vmatmul.mubr.f32.gmra.mrb[0].mxu0 %v9058
    %v9060 = vpop.f32.mrb[0].mxu0
    %v9061 = vadd.f32 %v8982, %v9060
    %v9062 = vpop.f32.mrb[0].mxu0
    %9063 = vdwg.mxu0
    %9064 = vmatprep.subr.mxu0 0.0
    %v9065 = vand.u32 %v1100, 4294901760
    %v9066 = vsub.f32 %v1100, %v9065
    %v9067 = vand.u32 %v9066, 4294901760
    %v9068 = vsub.f32 %v9066, %v9067
    %v9069 = vand.u32 %v9068, 4294901760
    %9070 = vmatpush1.msra.mxu0 %v9069
    %9071 = vmatprep.subr.mxu0 0.0
    %9072 = vmatpush1.msra.mxu0 0.0
    %9073 = vmatprep.subr.mxu0 0.0
    %9074 = vmatpush1.msra.mxu0 0.0
    %9075 = vmatprep.subr.mxu0 0.0
    %9076 = vmatpush1.msra.mxu0 0.0
    %9077 = vmatprep.subr.mxu0 0.0
    %9078 = vmatpush1.msra.mxu0 0.0
    %9079 = vmatprep.subr.mxu0 0.0
    %9080 = vmatpush1.msra.mxu0 0.0
    %9081 = vmatprep.subr.mxu0 0.0
    %9082 = vmatpush1.msra.mxu0 0.0
    %9083 = vmatprep.subr.mxu0 0.0
    %9084 = vmatpush1.msra.mxu0 0.0
    %9085 = vmatprep.subr.mxu0 0.0
    %9086 = vmatpush1.msra.mxu0 0.0
    %9087 = vmatprep.subr.mxu0 0.0
    %9088 = vmatpush1.msra.mxu0 0.0
    %9089 = vmatprep.subr.mxu0 0.0
    %9090 = vmatpush1.msra.mxu0 0.0
    %9091 = vmatprep.subr.mxu0 0.0
    %9092 = vmatpush1.msra.mxu0 0.0
    %9093 = vmatprep.subr.mxu0 0.0
    %9094 = vmatpush1.msra.mxu0 0.0
    %9095 = vmatprep.subr.mxu0 0.0
    %9096 = vmatpush1.msra.mxu0 0.0
    %9097 = vmatprep.subr.mxu0 0.0
    %9098 = vmatpush1.msra.mxu0 0.0
    %9099 = vmatprep.subr.mxu0 0.0
    %9100 = vmatpush1.msra.mxu0 0.0
    %9101 = vmatprep.subr.mxu0 0.0
    %9102 = vmatpush1.msra.mxu0 0.0
    %9103 = vmatprep.subr.mxu0 0.0
    %9104 = vmatpush1.msra.mxu0 0.0
    %9105 = vmatprep.subr.mxu0 0.0
    %9106 = vmatpush1.msra.mxu0 0.0
    %9107 = vmatprep.subr.mxu0 0.0
    %9108 = vmatpush1.msra.mxu0 0.0
    %9109 = vmatprep.subr.mxu0 0.0
    %9110 = vmatpush1.msra.mxu0 0.0
    %9111 = vmatprep.subr.mxu0 0.0
    %9112 = vmatpush1.msra.mxu0 0.0
    %9113 = vmatprep.subr.mxu0 0.0
    %9114 = vmatpush1.msra.mxu0 0.0
    %9115 = vmatprep.subr.mxu0 0.0
    %9116 = vmatpush1.msra.mxu0 0.0
    %9117 = vmatprep.subr.mxu0 0.0
    %9118 = vmatpush1.msra.mxu0 0.0
    %9119 = vmatprep.subr.mxu0 0.0
    %9120 = vmatpush1.msra.mxu0 0.0
    %9121 = vmatprep.subr.mxu0 0.0
    %9122 = vmatpush1.msra.mxu0 0.0
    %9123 = vmatprep.subr.mxu0 0.0
    %9124 = vmatpush1.msra.mxu0 0.0
    %9125 = vmatprep.subr.mxu0 0.0
    %9126 = vmatpush1.msra.mxu0 0.0
    %9127 = vmatprep.subr.mxu0 0.0
    %9128 = vmatpush1.msra.mxu0 0.0
    %9129 = vmatprep.subr.mxu0 0.0
    %9130 = vmatpush1.msra.mxu0 0.0
    %9131 = vmatprep.subr.mxu0 0.0
    %9132 = vmatpush1.msra.mxu0 0.0
    %9133 = vmatprep.mubr.f32.mxu0 0.0
    %v9134 = vand.u32 %v8986, 4294901760
    %9135 = vmatmul.mubr.f32.gmra.mrb[0].mxu0 %v9134
    %v9136 = vpop.f32.mrb[0].mxu0
    %v9137 = vadd.f32 %v9061, %v9136
    %v9138 = vpop.f32.mrb[0].mxu0
    %9139 = vdwg.mxu0
    %9140 = vmatprep.subr.mxu0 0.0
    %v9141 = vand.u32 %v1100, 4294901760
    %v9142 = vsub.f32 %v1100, %v9141
    %9143 = vmatpush1.msra.mxu0 %v9142
    %9144 = vmatprep.subr.mxu0 0.0
    %9145 = vmatpush1.msra.mxu0 0.0
    %9146 = vmatprep.subr.mxu0 0.0
    %9147 = vmatpush1.msra.mxu0 0.0
    %9148 = vmatprep.subr.mxu0 0.0
    %9149 = vmatpush1.msra.mxu0 0.0
    %9150 = vmatprep.subr.mxu0 0.0
    %9151 = vmatpush1.msra.mxu0 0.0
    %9152 = vmatprep.subr.mxu0 0.0
    %9153 = vmatpush1.msra.mxu0 0.0
    %9154 = vmatprep.subr.mxu0 0.0
    %9155 = vmatpush1.msra.mxu0 0.0
    %9156 = vmatprep.subr.mxu0 0.0
    %9157 = vmatpush1.msra.mxu0 0.0
    %9158 = vmatprep.subr.mxu0 0.0
    %9159 = vmatpush1.msra.mxu0 0.0
    %9160 = vmatprep.subr.mxu0 0.0
    %9161 = vmatpush1.msra.mxu0 0.0
    %9162 = vmatprep.subr.mxu0 0.0
    %9163 = vmatpush1.msra.mxu0 0.0
    %9164 = vmatprep.subr.mxu0 0.0
    %9165 = vmatpush1.msra.mxu0 0.0
    %9166 = vmatprep.subr.mxu0 0.0
    %9167 = vmatpush1.msra.mxu0 0.0
    %9168 = vmatprep.subr.mxu0 0.0
    %9169 = vmatpush1.msra.mxu0 0.0
    %9170 = vmatprep.subr.mxu0 0.0
    %9171 = vmatpush1.msra.mxu0 0.0
    %9172 = vmatprep.subr.mxu0 0.0
    %9173 = vmatpush1.msra.mxu0 0.0
    %9174 = vmatprep.subr.mxu0 0.0
    %9175 = vmatpush1.msra.mxu0 0.0
    %9176 = vmatprep.subr.mxu0 0.0
    %9177 = vmatpush1.msra.mxu0 0.0
    %9178 = vmatprep.subr.mxu0 0.0
    %9179 = vmatpush1.msra.mxu0 0.0
    %9180 = vmatprep.subr.mxu0 0.0
    %9181 = vmatpush1.msra.mxu0 0.0
    %9182 = vmatprep.subr.mxu0 0.0
    %9183 = vmatpush1.msra.mxu0 0.0
    %9184 = vmatprep.subr.mxu0 0.0
    %9185 = vmatpush1.msra.mxu0 0.0
    %9186 = vmatprep.subr.mxu0 0.0
    %9187 = vmatpush1.msra.mxu0 0.0
    %9188 = vmatprep.subr.mxu0 0.0
    %9189 = vmatpush1.msra.mxu0 0.0
    %9190 = vmatprep.subr.mxu0 0.0
    %9191 = vmatpush1.msra.mxu0 0.0
    %9192 = vmatprep.subr.mxu0 0.0
    %9193 = vmatpush1.msra.mxu0 0.0
    %9194 = vmatprep.subr.mxu0 0.0
    %9195 = vmatpush1.msra.mxu0 0.0
    %9196 = vmatprep.subr.mxu0 0.0
    %9197 = vmatpush1.msra.mxu0 0.0
    %9198 = vmatprep.subr.mxu0 0.0
    %9199 = vmatpush1.msra.mxu0 0.0
    %9200 = vmatprep.subr.mxu0 0.0
    %9201 = vmatpush1.msra.mxu0 0.0
    %9202 = vmatprep.subr.mxu0 0.0
    %9203 = vmatpush1.msra.mxu0 0.0
    %9204 = vmatprep.subr.mxu0 0.0
    %9205 = vmatpush1.msra.mxu0 0.0
    %9206 = vmatprep.mubr.f32.mxu0 0.0
    %v9207 = vand.u32 %v8986, 4294901760
    %v9208 = vsub.f32 %v8986, %v9207
    %9209 = vmatmul.mubr.f32.gmra.mrb[0].mxu0 %v9208
    %v9210 = vpop.f32.mrb[0].mxu0
    %v9211 = vadd.f32 %v9137, %v9210
    %v9212 = vpop.f32.mrb[0].mxu0
    %9213 = vdwg.mxu0
    %9214 = vmatprep.subr.mxu0 0.0
    %v9215 = vand.u32 %v1100, 4294901760
    %9216 = vmatpush1.msra.mxu0 %v9215
    %9217 = vmatprep.subr.mxu0 0.0
    %9218 = vmatpush1.msra.mxu0 0.0
    %9219 = vmatprep.subr.mxu0 0.0
    %9220 = vmatpush1.msra.mxu0 0.0
    %9221 = vmatprep.subr.mxu0 0.0
    %9222 = vmatpush1.msra.mxu0 0.0
    %9223 = vmatprep.subr.mxu0 0.0
    %9224 = vmatpush1.msra.mxu0 0.0
    %9225 = vmatprep.subr.mxu0 0.0
    %9226 = vmatpush1.msra.mxu0 0.0
    %9227 = vmatprep.subr.mxu0 0.0
    %9228 = vmatpush1.msra.mxu0 0.0
    %9229 = vmatprep.subr.mxu0 0.0
    %9230 = vmatpush1.msra.mxu0 0.0
    %9231 = vmatprep.subr.mxu0 0.0
    %9232 = vmatpush1.msra.mxu0 0.0
    %9233 = vmatprep.subr.mxu0 0.0
    %9234 = vmatpush1.msra.mxu0 0.0
    %9235 = vmatprep.subr.mxu0 0.0
    %9236 = vmatpush1.msra.mxu0 0.0
    %9237 = vmatprep.subr.mxu0 0.0
    %9238 = vmatpush1.msra.mxu0 0.0
    %9239 = vmatprep.subr.mxu0 0.0
    %9240 = vmatpush1.msra.mxu0 0.0
    %9241 = vmatprep.subr.mxu0 0.0
    %9242 = vmatpush1.msra.mxu0 0.0
    %9243 = vmatprep.subr.mxu0 0.0
    %9244 = vmatpush1.msra.mxu0 0.0
    %9245 = vmatprep.subr.mxu0 0.0
    %9246 = vmatpush1.msra.mxu0 0.0
    %9247 = vmatprep.subr.mxu0 0.0
    %9248 = vmatpush1.msra.mxu0 0.0
    %9249 = vmatprep.subr.mxu0 0.0
    %9250 = vmatpush1.msra.mxu0 0.0
    %9251 = vmatprep.subr.mxu0 0.0
    %9252 = vmatpush1.msra.mxu0 0.0
    %9253 = vmatprep.subr.mxu0 0.0
    %9254 = vmatpush1.msra.mxu0 0.0
    %9255 = vmatprep.subr.mxu0 0.0
    %9256 = vmatpush1.msra.mxu0 0.0
    %9257 = vmatprep.subr.mxu0 0.0
    %9258 = vmatpush1.msra.mxu0 0.0
    %9259 = vmatprep.subr.mxu0 0.0
    %9260 = vmatpush1.msra.mxu0 0.0
    %9261 = vmatprep.subr.mxu0 0.0
    %9262 = vmatpush1.msra.mxu0 0.0
    %9263 = vmatprep.subr.mxu0 0.0
    %9264 = vmatpush1.msra.mxu0 0.0
    %9265 = vmatprep.subr.mxu0 0.0
    %9266 = vmatpush1.msra.mxu0 0.0
    %9267 = vmatprep.subr.mxu0 0.0
    %9268 = vmatpush1.msra.mxu0 0.0
    %9269 = vmatprep.subr.mxu0 0.0
    %9270 = vmatpush1.msra.mxu0 0.0
    %9271 = vmatprep.subr.mxu0 0.0
    %9272 = vmatpush1.msra.mxu0 0.0
    %9273 = vmatprep.subr.mxu0 0.0
    %9274 = vmatpush1.msra.mxu0 0.0
    %9275 = vmatprep.subr.mxu0 0.0
    %9276 = vmatpush1.msra.mxu0 0.0
    %9277 = vmatprep.subr.mxu0 0.0
    %9278 = vmatpush1.msra.mxu0 0.0
    %9279 = vmatprep.mubr.f32.mxu0 0.0
    %v9280 = vand.u32 %v8986, 4294901760
    %v9281 = vsub.f32 %v8986, %v9280
    %v9282 = vand.u32 %v9281, 4294901760
    %9283 = vmatmul.mubr.f32.gmra.mrb[0].mxu0 %v9282
    %v9284 = vpop.f32.mrb[0].mxu0
    %v9285 = vadd.f32 %v9211, %v9284
    %v9286 = vpop.f32.mrb[0].mxu0
    %9287 = vdwg.mxu0
    %9288 = vmatprep.subr.mxu0 0.0
    %v9289 = vand.u32 %v1100, 4294901760
    %v9290 = vsub.f32 %v1100, %v9289
    %v9291 = vand.u32 %v9290, 4294901760
    %9292 = vmatpush1.msra.mxu0 %v9291
    %9293 = vmatprep.subr.mxu0 0.0
    %9294 = vmatpush1.msra.mxu0 0.0
    %9295 = vmatprep.subr.mxu0 0.0
    %9296 = vmatpush1.msra.mxu0 0.0
    %9297 = vmatprep.subr.mxu0 0.0
    %9298 = vmatpush1.msra.mxu0 0.0
    %9299 = vmatprep.subr.mxu0 0.0
    %9300 = vmatpush1.msra.mxu0 0.0
    %9301 = vmatprep.subr.mxu0 0.0
    %9302 = vmatpush1.msra.mxu0 0.0
    %9303 = vmatprep.subr.mxu0 0.0
    %9304 = vmatpush1.msra.mxu0 0.0
    %9305 = vmatprep.subr.mxu0 0.0
    %9306 = vmatpush1.msra.mxu0 0.0
    %9307 = vmatprep.subr.mxu0 0.0
    %9308 = vmatpush1.msra.mxu0 0.0
    %9309 = vmatprep.subr.mxu0 0.0
    %9310 = vmatpush1.msra.mxu0 0.0
    %9311 = vmatprep.subr.mxu0 0.0
    %9312 = vmatpush1.msra.mxu0 0.0
    %9313 = vmatprep.subr.mxu0 0.0
    %9314 = vmatpush1.msra.mxu0 0.0
    %9315 = vmatprep.subr.mxu0 0.0
    %9316 = vmatpush1.msra.mxu0 0.0
    %9317 = vmatprep.subr.mxu0 0.0
    %9318 = vmatpush1.msra.mxu0 0.0
    %9319 = vmatprep.subr.mxu0 0.0
    %9320 = vmatpush1.msra.mxu0 0.0
    %9321 = vmatprep.subr.mxu0 0.0
    %9322 = vmatpush1.msra.mxu0 0.0
    %9323 = vmatprep.subr.mxu0 0.0
    %9324 = vmatpush1.msra.mxu0 0.0
    %9325 = vmatprep.subr.mxu0 0.0
    %9326 = vmatpush1.msra.mxu0 0.0
    %9327 = vmatprep.subr.mxu0 0.0
    %9328 = vmatpush1.msra.mxu0 0.0
    %9329 = vmatprep.subr.mxu0 0.0
    %9330 = vmatpush1.msra.mxu0 0.0
    %9331 = vmatprep.subr.mxu0 0.0
    %9332 = vmatpush1.msra.mxu0 0.0
    %9333 = vmatprep.subr.mxu0 0.0
    %9334 = vmatpush1.msra.mxu0 0.0
    %9335 = vmatprep.subr.mxu0 0.0
    %9336 = vmatpush1.msra.mxu0 0.0
    %9337 = vmatprep.subr.mxu0 0.0
    %9338 = vmatpush1.msra.mxu0 0.0
    %9339 = vmatprep.subr.mxu0 0.0
    %9340 = vmatpush1.msra.mxu0 0.0
    %9341 = vmatprep.subr.mxu0 0.0
    %9342 = vmatpush1.msra.mxu0 0.0
    %9343 = vmatprep.subr.mxu0 0.0
    %9344 = vmatpush1.msra.mxu0 0.0
    %9345 = vmatprep.subr.mxu0 0.0
    %9346 = vmatpush1.msra.mxu0 0.0
    %9347 = vmatprep.subr.mxu0 0.0
    %9348 = vmatpush1.msra.mxu0 0.0
    %9349 = vmatprep.subr.mxu0 0.0
    %9350 = vmatpush1.msra.mxu0 0.0
    %9351 = vmatprep.subr.mxu0 0.0
    %9352 = vmatpush1.msra.mxu0 0.0
    %9353 = vmatprep.subr.mxu0 0.0
    %9354 = vmatpush1.msra.mxu0 0.0
    %9355 = vmatprep.mubr.f32.mxu0 0.0
    %v9356 = vand.u32 %v8986, 4294901760
    %9357 = vmatmul.mubr.f32.gmra.mrb[0].mxu0 %v9356
    %v9358 = vpop.f32.mrb[0].mxu0
    %v9359 = vadd.f32 %v9285, %v9358
    %v9360 = vpop.f32.mrb[0].mxu0
    %9361 = vdwg.mxu0
    %9362 = vmatprep.subr.mxu0 0.0
    %v9363 = vand.u32 %v1100, 4294901760
    %9364 = vmatpush1.msra.mxu0 %v9363
    %9365 = vmatprep.subr.mxu0 0.0
    %9366 = vmatpush1.msra.mxu0 0.0
    %9367 = vmatprep.subr.mxu0 0.0
    %9368 = vmatpush1.msra.mxu0 0.0
    %9369 = vmatprep.subr.mxu0 0.0
    %9370 = vmatpush1.msra.mxu0 0.0
    %9371 = vmatprep.subr.mxu0 0.0
    %9372 = vmatpush1.msra.mxu0 0.0
    %9373 = vmatprep.subr.mxu0 0.0
    %9374 = vmatpush1.msra.mxu0 0.0
    %9375 = vmatprep.subr.mxu0 0.0
    %9376 = vmatpush1.msra.mxu0 0.0
    %9377 = vmatprep.subr.mxu0 0.0
    %9378 = vmatpush1.msra.mxu0 0.0
    %9379 = vmatprep.subr.mxu0 0.0
    %9380 = vmatpush1.msra.mxu0 0.0
    %9381 = vmatprep.subr.mxu0 0.0
    %9382 = vmatpush1.msra.mxu0 0.0
    %9383 = vmatprep.subr.mxu0 0.0
    %9384 = vmatpush1.msra.mxu0 0.0
    %9385 = vmatprep.subr.mxu0 0.0
    %9386 = vmatpush1.msra.mxu0 0.0
    %9387 = vmatprep.subr.mxu0 0.0
    %9388 = vmatpush1.msra.mxu0 0.0
    %9389 = vmatprep.subr.mxu0 0.0
    %9390 = vmatpush1.msra.mxu0 0.0
    %9391 = vmatprep.subr.mxu0 0.0
    %9392 = vmatpush1.msra.mxu0 0.0
    %9393 = vmatprep.subr.mxu0 0.0
    %9394 = vmatpush1.msra.mxu0 0.0
    %9395 = vmatprep.subr.mxu0 0.0
    %9396 = vmatpush1.msra.mxu0 0.0
    %9397 = vmatprep.subr.mxu0 0.0
    %9398 = vmatpush1.msra.mxu0 0.0
    %9399 = vmatprep.subr.mxu0 0.0
    %9400 = vmatpush1.msra.mxu0 0.0
    %9401 = vmatprep.subr.mxu0 0.0
    %9402 = vmatpush1.msra.mxu0 0.0
    %9403 = vmatprep.subr.mxu0 0.0
    %9404 = vmatpush1.msra.mxu0 0.0
    %9405 = vmatprep.subr.mxu0 0.0
    %9406 = vmatpush1.msra.mxu0 0.0
    %9407 = vmatprep.subr.mxu0 0.0
    %9408 = vmatpush1.msra.mxu0 0.0
    %9409 = vmatprep.subr.mxu0 0.0
    %9410 = vmatpush1.msra.mxu0 0.0
    %9411 = vmatprep.subr.mxu0 0.0
    %9412 = vmatpush1.msra.mxu0 0.0
    %9413 = vmatprep.subr.mxu0 0.0
    %9414 = vmatpush1.msra.mxu0 0.0
    %9415 = vmatprep.subr.mxu0 0.0
    %9416 = vmatpush1.msra.mxu0 0.0
    %9417 = vmatprep.subr.mxu0 0.0
    %9418 = vmatpush1.msra.mxu0 0.0
    %9419 = vmatprep.subr.mxu0 0.0
    %9420 = vmatpush1.msra.mxu0 0.0
    %9421 = vmatprep.subr.mxu0 0.0
    %9422 = vmatpush1.msra.mxu0 0.0
    %9423 = vmatprep.subr.mxu0 0.0
    %9424 = vmatpush1.msra.mxu0 0.0
    %9425 = vmatprep.subr.mxu0 0.0
    %9426 = vmatpush1.msra.mxu0 0.0
    %9427 = vmatprep.mubr.f32.mxu0 0.0
    %v9428 = vand.u32 %v8986, 4294901760
    %9429 = vmatmul.mubr.f32.gmra.mrb[0].mxu0 %v9428
    %v9430 = vpop.f32.mrb[0].mxu0
    %v9431 = vadd.f32 %v9359, %v9430
    %v9432 = vpop.f32.mrb[0].mxu0
    %9433 = vdwg.mxu0
    %9434 = vrot.lane.b32.xlu0 %v1100, 64
    %v9435 = vpop.permute.xlu0 %9434
    %v9438 = vsel %vm4742, %v6722, 0
    %9440 = vmatprep.subr.mxu0 0.0
    %v9441 = vand.u32 %v9435, 4294901760
    %9442 = vmatpush1.msra.mxu0 %v9441
    %9443 = vmatprep.subr.mxu0 0.0
    %9444 = vmatpush1.msra.mxu0 0.0
    %9445 = vmatprep.subr.mxu0 0.0
    %9446 = vmatpush1.msra.mxu0 0.0
    %9447 = vmatprep.subr.mxu0 0.0
    %9448 = vmatpush1.msra.mxu0 0.0
    %9449 = vmatprep.subr.mxu0 0.0
    %9450 = vmatpush1.msra.mxu0 0.0
    %9451 = vmatprep.subr.mxu0 0.0
    %9452 = vmatpush1.msra.mxu0 0.0
    %9453 = vmatprep.subr.mxu0 0.0
    %9454 = vmatpush1.msra.mxu0 0.0
    %9455 = vmatprep.subr.mxu0 0.0
    %9456 = vmatpush1.msra.mxu0 0.0
    %9457 = vmatprep.subr.mxu0 0.0
    %9458 = vmatpush1.msra.mxu0 0.0
    %9459 = vmatprep.subr.mxu0 0.0
    %9460 = vmatpush1.msra.mxu0 0.0
    %9461 = vmatprep.subr.mxu0 0.0
    %9462 = vmatpush1.msra.mxu0 0.0
    %9463 = vmatprep.subr.mxu0 0.0
    %9464 = vmatpush1.msra.mxu0 0.0
    %9465 = vmatprep.subr.mxu0 0.0
    %9466 = vmatpush1.msra.mxu0 0.0
    %9467 = vmatprep.subr.mxu0 0.0
    %9468 = vmatpush1.msra.mxu0 0.0
    %9469 = vmatprep.subr.mxu0 0.0
    %9470 = vmatpush1.msra.mxu0 0.0
    %9471 = vmatprep.subr.mxu0 0.0
    %9472 = vmatpush1.msra.mxu0 0.0
    %9473 = vmatprep.subr.mxu0 0.0
    %9474 = vmatpush1.msra.mxu0 0.0
    %9475 = vmatprep.subr.mxu0 0.0
    %9476 = vmatpush1.msra.mxu0 0.0
    %9477 = vmatprep.subr.mxu0 0.0
    %9478 = vmatpush1.msra.mxu0 0.0
    %9479 = vmatprep.subr.mxu0 0.0
    %9480 = vmatpush1.msra.mxu0 0.0
    %9481 = vmatprep.subr.mxu0 0.0
    %9482 = vmatpush1.msra.mxu0 0.0
    %9483 = vmatprep.subr.mxu0 0.0
    %9484 = vmatpush1.msra.mxu0 0.0
    %9485 = vmatprep.subr.mxu0 0.0
    %9486 = vmatpush1.msra.mxu0 0.0
    %9487 = vmatprep.subr.mxu0 0.0
    %9488 = vmatpush1.msra.mxu0 0.0
    %9489 = vmatprep.subr.mxu0 0.0
    %9490 = vmatpush1.msra.mxu0 0.0
    %9491 = vmatprep.subr.mxu0 0.0
    %9492 = vmatpush1.msra.mxu0 0.0
    %9493 = vmatprep.subr.mxu0 0.0
    %9494 = vmatpush1.msra.mxu0 0.0
    %9495 = vmatprep.subr.mxu0 0.0
    %9496 = vmatpush1.msra.mxu0 0.0
    %9497 = vmatprep.subr.mxu0 0.0
    %9498 = vmatpush1.msra.mxu0 0.0
    %9499 = vmatprep.subr.mxu0 0.0
    %9500 = vmatpush1.msra.mxu0 0.0
    %9501 = vmatprep.subr.mxu0 0.0
    %9502 = vmatpush1.msra.mxu0 0.0
    %9503 = vmatprep.subr.mxu0 0.0
    %9504 = vmatpush1.msra.mxu0 0.0
    %9505 = vmatprep.mubr.f32.mxu0 0.0
    %v9506 = vand.u32 %v9438, 4294901760
    %v9507 = vsub.f32 %v9438, %v9506
    %v9508 = vand.u32 %v9507, 4294901760
    %v9509 = vsub.f32 %v9507, %v9508
    %v9510 = vand.u32 %v9509, 4294901760
    %9511 = vmatmul.mubr.f32.gmra.mrb[0].mxu0 %v9510
    %v9512 = vpop.f32.mrb[0].mxu0
    %v9513 = vadd.f32 0.0, %v9512
    %v9514 = vpop.f32.mrb[0].mxu0
    %9515 = vdwg.mxu0
    %9516 = vmatprep.subr.mxu0 0.0
    %v9517 = vand.u32 %v9435, 4294901760
    %v9518 = vsub.f32 %v9435, %v9517
    %v9519 = vand.u32 %v9518, 4294901760
    %v9520 = vsub.f32 %v9518, %v9519
    %v9521 = vand.u32 %v9520, 4294901760
    %9522 = vmatpush1.msra.mxu0 %v9521
    %9523 = vmatprep.subr.mxu0 0.0
    %9524 = vmatpush1.msra.mxu0 0.0
    %9525 = vmatprep.subr.mxu0 0.0
    %9526 = vmatpush1.msra.mxu0 0.0
    %9527 = vmatprep.subr.mxu0 0.0
    %9528 = vmatpush1.msra.mxu0 0.0
    %9529 = vmatprep.subr.mxu0 0.0
    %9530 = vmatpush1.msra.mxu0 0.0
    %9531 = vmatprep.subr.mxu0 0.0
    %9532 = vmatpush1.msra.mxu0 0.0
    %9533 = vmatprep.subr.mxu0 0.0
    %9534 = vmatpush1.msra.mxu0 0.0
    %9535 = vmatprep.subr.mxu0 0.0
    %9536 = vmatpush1.msra.mxu0 0.0
    %9537 = vmatprep.subr.mxu0 0.0
    %9538 = vmatpush1.msra.mxu0 0.0
    %9539 = vmatprep.subr.mxu0 0.0
    %9540 = vmatpush1.msra.mxu0 0.0
    %9541 = vmatprep.subr.mxu0 0.0
    %9542 = vmatpush1.msra.mxu0 0.0
    %9543 = vmatprep.subr.mxu0 0.0
    %9544 = vmatpush1.msra.mxu0 0.0
    %9545 = vmatprep.subr.mxu0 0.0
    %9546 = vmatpush1.msra.mxu0 0.0
    %9547 = vmatprep.subr.mxu0 0.0
    %9548 = vmatpush1.msra.mxu0 0.0
    %9549 = vmatprep.subr.mxu0 0.0
    %9550 = vmatpush1.msra.mxu0 0.0
    %9551 = vmatprep.subr.mxu0 0.0
    %9552 = vmatpush1.msra.mxu0 0.0
    %9553 = vmatprep.subr.mxu0 0.0
    %9554 = vmatpush1.msra.mxu0 0.0
    %9555 = vmatprep.subr.mxu0 0.0
    %9556 = vmatpush1.msra.mxu0 0.0
    %9557 = vmatprep.subr.mxu0 0.0
    %9558 = vmatpush1.msra.mxu0 0.0
    %9559 = vmatprep.subr.mxu0 0.0
    %9560 = vmatpush1.msra.mxu0 0.0
    %9561 = vmatprep.subr.mxu0 0.0
    %9562 = vmatpush1.msra.mxu0 0.0
    %9563 = vmatprep.subr.mxu0 0.0
    %9564 = vmatpush1.msra.mxu0 0.0
    %9565 = vmatprep.subr.mxu0 0.0
    %9566 = vmatpush1.msra.mxu0 0.0
    %9567 = vmatprep.subr.mxu0 0.0
    %9568 = vmatpush1.msra.mxu0 0.0
    %9569 = vmatprep.subr.mxu0 0.0
    %9570 = vmatpush1.msra.mxu0 0.0
    %9571 = vmatprep.subr.mxu0 0.0
    %9572 = vmatpush1.msra.mxu0 0.0
    %9573 = vmatprep.subr.mxu0 0.0
    %9574 = vmatpush1.msra.mxu0 0.0
    %9575 = vmatprep.subr.mxu0 0.0
    %9576 = vmatpush1.msra.mxu0 0.0
    %9577 = vmatprep.subr.mxu0 0.0
    %9578 = vmatpush1.msra.mxu0 0.0
    %9579 = vmatprep.subr.mxu0 0.0
    %9580 = vmatpush1.msra.mxu0 0.0
    %9581 = vmatprep.subr.mxu0 0.0
    %9582 = vmatpush1.msra.mxu0 0.0
    %9583 = vmatprep.subr.mxu0 0.0
    %9584 = vmatpush1.msra.mxu0 0.0
    %9585 = vmatprep.mubr.f32.mxu0 0.0
    %v9586 = vand.u32 %v9438, 4294901760
    %9587 = vmatmul.mubr.f32.gmra.mrb[0].mxu0 %v9586
    %v9588 = vpop.f32.mrb[0].mxu0
    %v9589 = vadd.f32 %v9513, %v9588
    %v9590 = vpop.f32.mrb[0].mxu0
    %9591 = vdwg.mxu0
    %9592 = vmatprep.subr.mxu0 0.0
    %v9593 = vand.u32 %v9435, 4294901760
    %v9594 = vsub.f32 %v9435, %v9593
    %9595 = vmatpush1.msra.mxu0 %v9594
    %9596 = vmatprep.subr.mxu0 0.0
    %9597 = vmatpush1.msra.mxu0 0.0
    %9598 = vmatprep.subr.mxu0 0.0
    %9599 = vmatpush1.msra.mxu0 0.0
    %9600 = vmatprep.subr.mxu0 0.0
    %9601 = vmatpush1.msra.mxu0 0.0
    %9602 = vmatprep.subr.mxu0 0.0
    %9603 = vmatpush1.msra.mxu0 0.0
    %9604 = vmatprep.subr.mxu0 0.0
    %9605 = vmatpush1.msra.mxu0 0.0
    %9606 = vmatprep.subr.mxu0 0.0
    %9607 = vmatpush1.msra.mxu0 0.0
    %9608 = vmatprep.subr.mxu0 0.0
    %9609 = vmatpush1.msra.mxu0 0.0
    %9610 = vmatprep.subr.mxu0 0.0
    %9611 = vmatpush1.msra.mxu0 0.0
    %9612 = vmatprep.subr.mxu0 0.0
    %9613 = vmatpush1.msra.mxu0 0.0
    %9614 = vmatprep.subr.mxu0 0.0
    %9615 = vmatpush1.msra.mxu0 0.0
    %9616 = vmatprep.subr.mxu0 0.0
    %9617 = vmatpush1.msra.mxu0 0.0
    %9618 = vmatprep.subr.mxu0 0.0
    %9619 = vmatpush1.msra.mxu0 0.0
    %9620 = vmatprep.subr.mxu0 0.0
    %9621 = vmatpush1.msra.mxu0 0.0
    %9622 = vmatprep.subr.mxu0 0.0
    %9623 = vmatpush1.msra.mxu0 0.0
    %9624 = vmatprep.subr.mxu0 0.0
    %9625 = vmatpush1.msra.mxu0 0.0
    %9626 = vmatprep.subr.mxu0 0.0
    %9627 = vmatpush1.msra.mxu0 0.0
    %9628 = vmatprep.subr.mxu0 0.0
    %9629 = vmatpush1.msra.mxu0 0.0
    %9630 = vmatprep.subr.mxu0 0.0
    %9631 = vmatpush1.msra.mxu0 0.0
    %9632 = vmatprep.subr.mxu0 0.0
    %9633 = vmatpush1.msra.mxu0 0.0
    %9634 = vmatprep.subr.mxu0 0.0
    %9635 = vmatpush1.msra.mxu0 0.0
    %9636 = vmatprep.subr.mxu0 0.0
    %9637 = vmatpush1.msra.mxu0 0.0
    %9638 = vmatprep.subr.mxu0 0.0
    %9639 = vmatpush1.msra.mxu0 0.0
    %9640 = vmatprep.subr.mxu0 0.0
    %9641 = vmatpush1.msra.mxu0 0.0
    %9642 = vmatprep.subr.mxu0 0.0
    %9643 = vmatpush1.msra.mxu0 0.0
    %9644 = vmatprep.subr.mxu0 0.0
    %9645 = vmatpush1.msra.mxu0 0.0
    %9646 = vmatprep.subr.mxu0 0.0
    %9647 = vmatpush1.msra.mxu0 0.0
    %9648 = vmatprep.subr.mxu0 0.0
    %9649 = vmatpush1.msra.mxu0 0.0
    %9650 = vmatprep.subr.mxu0 0.0
    %9651 = vmatpush1.msra.mxu0 0.0
    %9652 = vmatprep.subr.mxu0 0.0
    %9653 = vmatpush1.msra.mxu0 0.0
    %9654 = vmatprep.subr.mxu0 0.0
    %9655 = vmatpush1.msra.mxu0 0.0
    %9656 = vmatprep.subr.mxu0 0.0
    %9657 = vmatpush1.msra.mxu0 0.0
    %9658 = vmatprep.mubr.f32.mxu0 0.0
    %v9659 = vand.u32 %v9438, 4294901760
    %v9660 = vsub.f32 %v9438, %v9659
    %9661 = vmatmul.mubr.f32.gmra.mrb[0].mxu0 %v9660
    %v9662 = vpop.f32.mrb[0].mxu0
    %v9663 = vadd.f32 %v9589, %v9662
    %v9664 = vpop.f32.mrb[0].mxu0
    %9665 = vdwg.mxu0
    %9666 = vmatprep.subr.mxu0 0.0
    %v9667 = vand.u32 %v9435, 4294901760
    %9668 = vmatpush1.msra.mxu0 %v9667
    %9669 = vmatprep.subr.mxu0 0.0
    %9670 = vmatpush1.msra.mxu0 0.0
    %9671 = vmatprep.subr.mxu0 0.0
    %9672 = vmatpush1.msra.mxu0 0.0
    %9673 = vmatprep.subr.mxu0 0.0
    %9674 = vmatpush1.msra.mxu0 0.0
    %9675 = vmatprep.subr.mxu0 0.0
    %9676 = vmatpush1.msra.mxu0 0.0
    %9677 = vmatprep.subr.mxu0 0.0
    %9678 = vmatpush1.msra.mxu0 0.0
    %9679 = vmatprep.subr.mxu0 0.0
    %9680 = vmatpush1.msra.mxu0 0.0
    %9681 = vmatprep.subr.mxu0 0.0
    %9682 = vmatpush1.msra.mxu0 0.0
    %9683 = vmatprep.subr.mxu0 0.0
    %9684 = vmatpush1.msra.mxu0 0.0
    %9685 = vmatprep.subr.mxu0 0.0
    %9686 = vmatpush1.msra.mxu0 0.0
    %9687 = vmatprep.subr.mxu0 0.0
    %9688 = vmatpush1.msra.mxu0 0.0
    %9689 = vmatprep.subr.mxu0 0.0
    %9690 = vmatpush1.msra.mxu0 0.0
    %9691 = vmatprep.subr.mxu0 0.0
    %9692 = vmatpush1.msra.mxu0 0.0
    %9693 = vmatprep.subr.mxu0 0.0
    %9694 = vmatpush1.msra.mxu0 0.0
    %9695 = vmatprep.subr.mxu0 0.0
    %9696 = vmatpush1.msra.mxu0 0.0
    %9697 = vmatprep.subr.mxu0 0.0
    %9698 = vmatpush1.msra.mxu0 0.0
    %9699 = vmatprep.subr.mxu0 0.0
    %9700 = vmatpush1.msra.mxu0 0.0
    %9701 = vmatprep.subr.mxu0 0.0
    %9702 = vmatpush1.msra.mxu0 0.0
    %9703 = vmatprep.subr.mxu0 0.0
    %9704 = vmatpush1.msra.mxu0 0.0
    %9705 = vmatprep.subr.mxu0 0.0
    %9706 = vmatpush1.msra.mxu0 0.0
    %9707 = vmatprep.subr.mxu0 0.0
    %9708 = vmatpush1.msra.mxu0 0.0
    %9709 = vmatprep.subr.mxu0 0.0
    %9710 = vmatpush1.msra.mxu0 0.0
    %9711 = vmatprep.subr.mxu0 0.0
    %9712 = vmatpush1.msra.mxu0 0.0
    %9713 = vmatprep.subr.mxu0 0.0
    %9714 = vmatpush1.msra.mxu0 0.0
    %9715 = vmatprep.subr.mxu0 0.0
    %9716 = vmatpush1.msra.mxu0 0.0
    %9717 = vmatprep.subr.mxu0 0.0
    %9718 = vmatpush1.msra.mxu0 0.0
    %9719 = vmatprep.subr.mxu0 0.0
    %9720 = vmatpush1.msra.mxu0 0.0
    %9721 = vmatprep.subr.mxu0 0.0
    %9722 = vmatpush1.msra.mxu0 0.0
    %9723 = vmatprep.subr.mxu0 0.0
    %9724 = vmatpush1.msra.mxu0 0.0
    %9725 = vmatprep.subr.mxu0 0.0
    %9726 = vmatpush1.msra.mxu0 0.0
    %9727 = vmatprep.subr.mxu0 0.0
    %9728 = vmatpush1.msra.mxu0 0.0
    %9729 = vmatprep.subr.mxu0 0.0
    %9730 = vmatpush1.msra.mxu0 0.0
    %9731 = vmatprep.mubr.f32.mxu0 0.0
    %v9732 = vand.u32 %v9438, 4294901760
    %v9733 = vsub.f32 %v9438, %v9732
    %v9734 = vand.u32 %v9733, 4294901760
    %9735 = vmatmul.mubr.f32.gmra.mrb[0].mxu0 %v9734
    %v9736 = vpop.f32.mrb[0].mxu0
    %v9737 = vadd.f32 %v9663, %v9736
    %v9738 = vpop.f32.mrb[0].mxu0
    %9739 = vdwg.mxu0
    %9740 = vmatprep.subr.mxu0 0.0
    %v9741 = vand.u32 %v9435, 4294901760
    %v9742 = vsub.f32 %v9435, %v9741
    %v9743 = vand.u32 %v9742, 4294901760
    %9744 = vmatpush1.msra.mxu0 %v9743
    %9745 = vmatprep.subr.mxu0 0.0
    %9746 = vmatpush1.msra.mxu0 0.0
    %9747 = vmatprep.subr.mxu0 0.0
    %9748 = vmatpush1.msra.mxu0 0.0
    %9749 = vmatprep.subr.mxu0 0.0
    %9750 = vmatpush1.msra.mxu0 0.0
    %9751 = vmatprep.subr.mxu0 0.0
    %9752 = vmatpush1.msra.mxu0 0.0
    %9753 = vmatprep.subr.mxu0 0.0
    %9754 = vmatpush1.msra.mxu0 0.0
    %9755 = vmatprep.subr.mxu0 0.0
    %9756 = vmatpush1.msra.mxu0 0.0
    %9757 = vmatprep.subr.mxu0 0.0
    %9758 = vmatpush1.msra.mxu0 0.0
    %9759 = vmatprep.subr.mxu0 0.0
    %9760 = vmatpush1.msra.mxu0 0.0
    %9761 = vmatprep.subr.mxu0 0.0
    %9762 = vmatpush1.msra.mxu0 0.0
    %9763 = vmatprep.subr.mxu0 0.0
    %9764 = vmatpush1.msra.mxu0 0.0
    %9765 = vmatprep.subr.mxu0 0.0
    %9766 = vmatpush1.msra.mxu0 0.0
    %9767 = vmatprep.subr.mxu0 0.0
    %9768 = vmatpush1.msra.mxu0 0.0
    %9769 = vmatprep.subr.mxu0 0.0
    %9770 = vmatpush1.msra.mxu0 0.0
    %9771 = vmatprep.subr.mxu0 0.0
    %9772 = vmatpush1.msra.mxu0 0.0
    %9773 = vmatprep.subr.mxu0 0.0
    %9774 = vmatpush1.msra.mxu0 0.0
    %9775 = vmatprep.subr.mxu0 0.0
    %9776 = vmatpush1.msra.mxu0 0.0
    %9777 = vmatprep.subr.mxu0 0.0
    %9778 = vmatpush1.msra.mxu0 0.0
    %9779 = vmatprep.subr.mxu0 0.0
    %9780 = vmatpush1.msra.mxu0 0.0
    %9781 = vmatprep.subr.mxu0 0.0
    %9782 = vmatpush1.msra.mxu0 0.0
    %9783 = vmatprep.subr.mxu0 0.0
    %9784 = vmatpush1.msra.mxu0 0.0
    %9785 = vmatprep.subr.mxu0 0.0
    %9786 = vmatpush1.msra.mxu0 0.0
    %9787 = vmatprep.subr.mxu0 0.0
    %9788 = vmatpush1.msra.mxu0 0.0
    %9789 = vmatprep.subr.mxu0 0.0
    %9790 = vmatpush1.msra.mxu0 0.0
    %9791 = vmatprep.subr.mxu0 0.0
    %9792 = vmatpush1.msra.mxu0 0.0
    %9793 = vmatprep.subr.mxu0 0.0
    %9794 = vmatpush1.msra.mxu0 0.0
    %9795 = vmatprep.subr.mxu0 0.0
    %9796 = vmatpush1.msra.mxu0 0.0
    %9797 = vmatprep.subr.mxu0 0.0
    %9798 = vmatpush1.msra.mxu0 0.0
    %9799 = vmatprep.subr.mxu0 0.0
    %9800 = vmatpush1.msra.mxu0 0.0
    %9801 = vmatprep.subr.mxu0 0.0
    %9802 = vmatpush1.msra.mxu0 0.0
    %9803 = vmatprep.subr.mxu0 0.0
    %9804 = vmatpush1.msra.mxu0 0.0
    %9805 = vmatprep.subr.mxu0 0.0
    %9806 = vmatpush1.msra.mxu0 0.0
    %9807 = vmatprep.mubr.f32.mxu0 0.0
    %v9808 = vand.u32 %v9438, 4294901760
    %9809 = vmatmul.mubr.f32.gmra.mrb[0].mxu0 %v9808
    %v9810 = vpop.f32.mrb[0].mxu0
    %v9811 = vadd.f32 %v9737, %v9810
    %v9812 = vpop.f32.mrb[0].mxu0
    %9813 = vdwg.mxu0
    %9814 = vmatprep.subr.mxu0 0.0
    %v9815 = vand.u32 %v9435, 4294901760
    %9816 = vmatpush1.msra.mxu0 %v9815
    %9817 = vmatprep.subr.mxu0 0.0
    %9818 = vmatpush1.msra.mxu0 0.0
    %9819 = vmatprep.subr.mxu0 0.0
    %9820 = vmatpush1.msra.mxu0 0.0
    %9821 = vmatprep.subr.mxu0 0.0
    %9822 = vmatpush1.msra.mxu0 0.0
    %9823 = vmatprep.subr.mxu0 0.0
    %9824 = vmatpush1.msra.mxu0 0.0
    %9825 = vmatprep.subr.mxu0 0.0
    %9826 = vmatpush1.msra.mxu0 0.0
    %9827 = vmatprep.subr.mxu0 0.0
    %9828 = vmatpush1.msra.mxu0 0.0
    %9829 = vmatprep.subr.mxu0 0.0
    %9830 = vmatpush1.msra.mxu0 0.0
    %9831 = vmatprep.subr.mxu0 0.0
    %9832 = vmatpush1.msra.mxu0 0.0
    %9833 = vmatprep.subr.mxu0 0.0
    %9834 = vmatpush1.msra.mxu0 0.0
    %9835 = vmatprep.subr.mxu0 0.0
    %9836 = vmatpush1.msra.mxu0 0.0
    %9837 = vmatprep.subr.mxu0 0.0
    %9838 = vmatpush1.msra.mxu0 0.0
    %9839 = vmatprep.subr.mxu0 0.0
    %9840 = vmatpush1.msra.mxu0 0.0
    %9841 = vmatprep.subr.mxu0 0.0
    %9842 = vmatpush1.msra.mxu0 0.0
    %9843 = vmatprep.subr.mxu0 0.0
    %9844 = vmatpush1.msra.mxu0 0.0
    %9845 = vmatprep.subr.mxu0 0.0
    %9846 = vmatpush1.msra.mxu0 0.0
    %9847 = vmatprep.subr.mxu0 0.0
    %9848 = vmatpush1.msra.mxu0 0.0
    %9849 = vmatprep.subr.mxu0 0.0
    %9850 = vmatpush1.msra.mxu0 0.0
    %9851 = vmatprep.subr.mxu0 0.0
    %9852 = vmatpush1.msra.mxu0 0.0
    %9853 = vmatprep.subr.mxu0 0.0
    %9854 = vmatpush1.msra.mxu0 0.0
    %9855 = vmatprep.subr.mxu0 0.0
    %9856 = vmatpush1.msra.mxu0 0.0
    %9857 = vmatprep.subr.mxu0 0.0
    %9858 = vmatpush1.msra.mxu0 0.0
    %9859 = vmatprep.subr.mxu0 0.0
    %9860 = vmatpush1.msra.mxu0 0.0
    %9861 = vmatprep.subr.mxu0 0.0
    %9862 = vmatpush1.msra.mxu0 0.0
    %9863 = vmatprep.subr.mxu0 0.0
    %9864 = vmatpush1.msra.mxu0 0.0
    %9865 = vmatprep.subr.mxu0 0.0
    %9866 = vmatpush1.msra.mxu0 0.0
    %9867 = vmatprep.subr.mxu0 0.0
    %9868 = vmatpush1.msra.mxu0 0.0
    %9869 = vmatprep.subr.mxu0 0.0
    %9870 = vmatpush1.msra.mxu0 0.0
    %9871 = vmatprep.subr.mxu0 0.0
    %9872 = vmatpush1.msra.mxu0 0.0
    %9873 = vmatprep.subr.mxu0 0.0
    %9874 = vmatpush1.msra.mxu0 0.0
    %9875 = vmatprep.subr.mxu0 0.0
    %9876 = vmatpush1.msra.mxu0 0.0
    %9877 = vmatprep.subr.mxu0 0.0
    %9878 = vmatpush1.msra.mxu0 0.0
    %9879 = vmatprep.mubr.f32.mxu0 0.0
    %v9880 = vand.u32 %v9438, 4294901760
    %9881 = vmatmul.mubr.f32.gmra.mrb[0].mxu0 %v9880
    %v9882 = vpop.f32.mrb[0].mxu0
    %v9883 = vadd.f32 %v9811, %v9882
    %v9884 = vpop.f32.mrb[0].mxu0
    %9885 = vdwg.mxu0
    %v9886 = vadd.f32 %v9431, %v9883
    %9887 = vrot.lane.b32.xlu0 %v1100, 32
    %v9888 = vpop.permute.xlu0 %9887
    %v9891 = vsel %vm4742, %v6723, 0
    %9893 = vmatprep.subr.mxu0 0.0
    %v9894 = vand.u32 %v9888, 4294901760
    %9895 = vmatpush1.msra.mxu0 %v9894
    %9896 = vmatprep.subr.mxu0 0.0
    %9897 = vmatpush1.msra.mxu0 0.0
    %9898 = vmatprep.subr.mxu0 0.0
    %9899 = vmatpush1.msra.mxu0 0.0
    %9900 = vmatprep.subr.mxu0 0.0
    %9901 = vmatpush1.msra.mxu0 0.0
    %9902 = vmatprep.subr.mxu0 0.0
    %9903 = vmatpush1.msra.mxu0 0.0
    %9904 = vmatprep.subr.mxu0 0.0
    %9905 = vmatpush1.msra.mxu0 0.0
    %9906 = vmatprep.subr.mxu0 0.0
    %9907 = vmatpush1.msra.mxu0 0.0
    %9908 = vmatprep.subr.mxu0 0.0
    %9909 = vmatpush1.msra.mxu0 0.0
    %9910 = vmatprep.subr.mxu0 0.0
    %9911 = vmatpush1.msra.mxu0 0.0
    %9912 = vmatprep.subr.mxu0 0.0
    %9913 = vmatpush1.msra.mxu0 0.0
    %9914 = vmatprep.subr.mxu0 0.0
    %9915 = vmatpush1.msra.mxu0 0.0
    %9916 = vmatprep.subr.mxu0 0.0
    %9917 = vmatpush1.msra.mxu0 0.0
    %9918 = vmatprep.subr.mxu0 0.0
    %9919 = vmatpush1.msra.mxu0 0.0
    %9920 = vmatprep.subr.mxu0 0.0
    %9921 = vmatpush1.msra.mxu0 0.0
    %9922 = vmatprep.subr.mxu0 0.0
    %9923 = vmatpush1.msra.mxu0 0.0
    %9924 = vmatprep.subr.mxu0 0.0
    %9925 = vmatpush1.msra.mxu0 0.0
    %9926 = vmatprep.subr.mxu0 0.0
    %9927 = vmatpush1.msra.mxu0 0.0
    %9928 = vmatprep.subr.mxu0 0.0
    %9929 = vmatpush1.msra.mxu0 0.0
    %9930 = vmatprep.subr.mxu0 0.0
    %9931 = vmatpush1.msra.mxu0 0.0
    %9932 = vmatprep.subr.mxu0 0.0
    %9933 = vmatpush1.msra.mxu0 0.0
    %9934 = vmatprep.subr.mxu0 0.0
    %9935 = vmatpush1.msra.mxu0 0.0
    %9936 = vmatprep.subr.mxu0 0.0
    %9937 = vmatpush1.msra.mxu0 0.0
    %9938 = vmatprep.subr.mxu0 0.0
    %9939 = vmatpush1.msra.mxu0 0.0
    %9940 = vmatprep.subr.mxu0 0.0
    %9941 = vmatpush1.msra.mxu0 0.0
    %9942 = vmatprep.subr.mxu0 0.0
    %9943 = vmatpush1.msra.mxu0 0.0
    %9944 = vmatprep.subr.mxu0 0.0
    %9945 = vmatpush1.msra.mxu0 0.0
    %9946 = vmatprep.subr.mxu0 0.0
    %9947 = vmatpush1.msra.mxu0 0.0
    %9948 = vmatprep.subr.mxu0 0.0
    %9949 = vmatpush1.msra.mxu0 0.0
    %9950 = vmatprep.subr.mxu0 0.0
    %9951 = vmatpush1.msra.mxu0 0.0
    %9952 = vmatprep.subr.mxu0 0.0
    %9953 = vmatpush1.msra.mxu0 0.0
    %9954 = vmatprep.subr.mxu0 0.0
    %9955 = vmatpush1.msra.mxu0 0.0
    %9956 = vmatprep.subr.mxu0 0.0
    %9957 = vmatpush1.msra.mxu0 0.0
    %9958 = vmatprep.mubr.f32.mxu0 0.0
    %v9959 = vand.u32 %v9891, 4294901760
    %v9960 = vsub.f32 %v9891, %v9959
    %v9961 = vand.u32 %v9960, 4294901760
    %v9962 = vsub.f32 %v9960, %v9961
    %v9963 = vand.u32 %v9962, 4294901760
    %9964 = vmatmul.mubr.f32.gmra.mrb[0].mxu0 %v9963
    %v9965 = vpop.f32.mrb[0].mxu0
    %v9966 = vadd.f32 0.0, %v9965
    %v9967 = vpop.f32.mrb[0].mxu0
    %9968 = vdwg.mxu0
    %9969 = vmatprep.subr.mxu0 0.0
    %v9970 = vand.u32 %v9888, 4294901760
    %v9971 = vsub.f32 %v9888, %v9970
    %v9972 = vand.u32 %v9971, 4294901760
    %v9973 = vsub.f32 %v9971, %v9972
    %v9974 = vand.u32 %v9973, 4294901760
    %9975 = vmatpush1.msra.mxu0 %v9974
    %9976 = vmatprep.subr.mxu0 0.0
    %9977 = vmatpush1.msra.mxu0 0.0
    %9978 = vmatprep.subr.mxu0 0.0
    %9979 = vmatpush1.msra.mxu0 0.0
    %9980 = vmatprep.subr.mxu0 0.0
    %9981 = vmatpush1.msra.mxu0 0.0
    %9982 = vmatprep.subr.mxu0 0.0
    %9983 = vmatpush1.msra.mxu0 0.0
    %9984 = vmatprep.subr.mxu0 0.0
    %9985 = vmatpush1.msra.mxu0 0.0
    %9986 = vmatprep.subr.mxu0 0.0
    %9987 = vmatpush1.msra.mxu0 0.0
    %9988 = vmatprep.subr.mxu0 0.0
    %9989 = vmatpush1.msra.mxu0 0.0
    %9990 = vmatprep.subr.mxu0 0.0
    %9991 = vmatpush1.msra.mxu0 0.0
    %9992 = vmatprep.subr.mxu0 0.0
    %9993 = vmatpush1.msra.mxu0 0.0
    %9994 = vmatprep.subr.mxu0 0.0
    %9995 = vmatpush1.msra.mxu0 0.0
    %9996 = vmatprep.subr.mxu0 0.0
    %9997 = vmatpush1.msra.mxu0 0.0
    %9998 = vmatprep.subr.mxu0 0.0
    %9999 = vmatpush1.msra.mxu0 0.0
    %10000 = vmatprep.subr.mxu0 0.0
    %10001 = vmatpush1.msra.mxu0 0.0
    %10002 = vmatprep.subr.mxu0 0.0
    %10003 = vmatpush1.msra.mxu0 0.0
    %10004 = vmatprep.subr.mxu0 0.0
    %10005 = vmatpush1.msra.mxu0 0.0
    %10006 = vmatprep.subr.mxu0 0.0
    %10007 = vmatpush1.msra.mxu0 0.0
    %10008 = vmatprep.subr.mxu0 0.0
    %10009 = vmatpush1.msra.mxu0 0.0
    %10010 = vmatprep.subr.mxu0 0.0
    %10011 = vmatpush1.msra.mxu0 0.0
    %10012 = vmatprep.subr.mxu0 0.0
    %10013 = vmatpush1.msra.mxu0 0.0
    %10014 = vmatprep.subr.mxu0 0.0
    %10015 = vmatpush1.msra.mxu0 0.0
    %10016 = vmatprep.subr.mxu0 0.0
    %10017 = vmatpush1.msra.mxu0 0.0
    %10018 = vmatprep.subr.mxu0 0.0
    %10019 = vmatpush1.msra.mxu0 0.0
    %10020 = vmatprep.subr.mxu0 0.0
    %10021 = vmatpush1.msra.mxu0 0.0
    %10022 = vmatprep.subr.mxu0 0.0
    %10023 = vmatpush1.msra.mxu0 0.0
    %10024 = vmatprep.subr.mxu0 0.0
    %10025 = vmatpush1.msra.mxu0 0.0
    %10026 = vmatprep.subr.mxu0 0.0
    %10027 = vmatpush1.msra.mxu0 0.0
    %10028 = vmatprep.subr.mxu0 0.0
    %10029 = vmatpush1.msra.mxu0 0.0
    %10030 = vmatprep.subr.mxu0 0.0
    %10031 = vmatpush1.msra.mxu0 0.0
    %10032 = vmatprep.subr.mxu0 0.0
    %10033 = vmatpush1.msra.mxu0 0.0
    %10034 = vmatprep.subr.mxu0 0.0
    %10035 = vmatpush1.msra.mxu0 0.0
    %10036 = vmatprep.subr.mxu0 0.0
    %10037 = vmatpush1.msra.mxu0 0.0
    %10038 = vmatprep.mubr.f32.mxu0 0.0
    %v10039 = vand.u32 %v9891, 4294901760
    %10040 = vmatmul.mubr.f32.gmra.mrb[0].mxu0 %v10039
    %v10041 = vpop.f32.mrb[0].mxu0
    %v10042 = vadd.f32 %v9966, %v10041
    %v10043 = vpop.f32.mrb[0].mxu0
    %10044 = vdwg.mxu0
    %10045 = vmatprep.subr.mxu0 0.0
    %v10046 = vand.u32 %v9888, 4294901760
    %v10047 = vsub.f32 %v9888, %v10046
    %10048 = vmatpush1.msra.mxu0 %v10047
    %10049 = vmatprep.subr.mxu0 0.0
    %10050 = vmatpush1.msra.mxu0 0.0
    %10051 = vmatprep.subr.mxu0 0.0
    %10052 = vmatpush1.msra.mxu0 0.0
    %10053 = vmatprep.subr.mxu0 0.0
    %10054 = vmatpush1.msra.mxu0 0.0
    %10055 = vmatprep.subr.mxu0 0.0
    %10056 = vmatpush1.msra.mxu0 0.0
    %10057 = vmatprep.subr.mxu0 0.0
    %10058 = vmatpush1.msra.mxu0 0.0
    %10059 = vmatprep.subr.mxu0 0.0
    %10060 = vmatpush1.msra.mxu0 0.0
    %10061 = vmatprep.subr.mxu0 0.0
    %10062 = vmatpush1.msra.mxu0 0.0
    %10063 = vmatprep.subr.mxu0 0.0
    %10064 = vmatpush1.msra.mxu0 0.0
    %10065 = vmatprep.subr.mxu0 0.0
    %10066 = vmatpush1.msra.mxu0 0.0
    %10067 = vmatprep.subr.mxu0 0.0
    %10068 = vmatpush1.msra.mxu0 0.0
    %10069 = vmatprep.subr.mxu0 0.0
    %10070 = vmatpush1.msra.mxu0 0.0
    %10071 = vmatprep.subr.mxu0 0.0
    %10072 = vmatpush1.msra.mxu0 0.0
    %10073 = vmatprep.subr.mxu0 0.0
    %10074 = vmatpush1.msra.mxu0 0.0
    %10075 = vmatprep.subr.mxu0 0.0
    %10076 = vmatpush1.msra.mxu0 0.0
    %10077 = vmatprep.subr.mxu0 0.0
    %10078 = vmatpush1.msra.mxu0 0.0
    %10079 = vmatprep.subr.mxu0 0.0
    %10080 = vmatpush1.msra.mxu0 0.0
    %10081 = vmatprep.subr.mxu0 0.0
    %10082 = vmatpush1.msra.mxu0 0.0
    %10083 = vmatprep.subr.mxu0 0.0
    %10084 = vmatpush1.msra.mxu0 0.0
    %10085 = vmatprep.subr.mxu0 0.0
    %10086 = vmatpush1.msra.mxu0 0.0
    %10087 = vmatprep.subr.mxu0 0.0
    %10088 = vmatpush1.msra.mxu0 0.0
    %10089 = vmatprep.subr.mxu0 0.0
    %10090 = vmatpush1.msra.mxu0 0.0
    %10091 = vmatprep.subr.mxu0 0.0
    %10092 = vmatpush1.msra.mxu0 0.0
    %10093 = vmatprep.subr.mxu0 0.0
    %10094 = vmatpush1.msra.mxu0 0.0
    %10095 = vmatprep.subr.mxu0 0.0
    %10096 = vmatpush1.msra.mxu0 0.0
    %10097 = vmatprep.subr.mxu0 0.0
    %10098 = vmatpush1.msra.mxu0 0.0
    %10099 = vmatprep.subr.mxu0 0.0
    %10100 = vmatpush1.msra.mxu0 0.0
    %10101 = vmatprep.subr.mxu0 0.0
    %10102 = vmatpush1.msra.mxu0 0.0
    %10103 = vmatprep.subr.mxu0 0.0
    %10104 = vmatpush1.msra.mxu0 0.0
    %10105 = vmatprep.subr.mxu0 0.0
    %10106 = vmatpush1.msra.mxu0 0.0
    %10107 = vmatprep.subr.mxu0 0.0
    %10108 = vmatpush1.msra.mxu0 0.0
    %10109 = vmatprep.subr.mxu0 0.0
    %10110 = vmatpush1.msra.mxu0 0.0
    %10111 = vmatprep.mubr.f32.mxu0 0.0
    %v10112 = vand.u32 %v9891, 4294901760
    %v10113 = vsub.f32 %v9891, %v10112
    %10114 = vmatmul.mubr.f32.gmra.mrb[0].mxu0 %v10113
    %v10115 = vpop.f32.mrb[0].mxu0
    %v10116 = vadd.f32 %v10042, %v10115
    %v10117 = vpop.f32.mrb[0].mxu0
    %10118 = vdwg.mxu0
    %10119 = vmatprep.subr.mxu0 0.0
    %v10120 = vand.u32 %v9888, 4294901760
    %10121 = vmatpush1.msra.mxu0 %v10120
    %10122 = vmatprep.subr.mxu0 0.0
    %10123 = vmatpush1.msra.mxu0 0.0
    %10124 = vmatprep.subr.mxu0 0.0
    %10125 = vmatpush1.msra.mxu0 0.0
    %10126 = vmatprep.subr.mxu0 0.0
    %10127 = vmatpush1.msra.mxu0 0.0
    %10128 = vmatprep.subr.mxu0 0.0
    %10129 = vmatpush1.msra.mxu0 0.0
    %10130 = vmatprep.subr.mxu0 0.0
    %10131 = vmatpush1.msra.mxu0 0.0
    %10132 = vmatprep.subr.mxu0 0.0
    %10133 = vmatpush1.msra.mxu0 0.0
    %10134 = vmatprep.subr.mxu0 0.0
    %10135 = vmatpush1.msra.mxu0 0.0
    %10136 = vmatprep.subr.mxu0 0.0
    %10137 = vmatpush1.msra.mxu0 0.0
    %10138 = vmatprep.subr.mxu0 0.0
    %10139 = vmatpush1.msra.mxu0 0.0
    %10140 = vmatprep.subr.mxu0 0.0
    %10141 = vmatpush1.msra.mxu0 0.0
    %10142 = vmatprep.subr.mxu0 0.0
    %10143 = vmatpush1.msra.mxu0 0.0
    %10144 = vmatprep.subr.mxu0 0.0
    %10145 = vmatpush1.msra.mxu0 0.0
    %10146 = vmatprep.subr.mxu0 0.0
    %10147 = vmatpush1.msra.mxu0 0.0
    %10148 = vmatprep.subr.mxu0 0.0
    %10149 = vmatpush1.msra.mxu0 0.0
    %10150 = vmatprep.subr.mxu0 0.0
    %10151 = vmatpush1.msra.mxu0 0.0
    %10152 = vmatprep.subr.mxu0 0.0
    %10153 = vmatpush1.msra.mxu0 0.0
    %10154 = vmatprep.subr.mxu0 0.0
    %10155 = vmatpush1.msra.mxu0 0.0
    %10156 = vmatprep.subr.mxu0 0.0
    %10157 = vmatpush1.msra.mxu0 0.0
    %10158 = vmatprep.subr.mxu0 0.0
    %10159 = vmatpush1.msra.mxu0 0.0
    %10160 = vmatprep.subr.mxu0 0.0
    %10161 = vmatpush1.msra.mxu0 0.0
    %10162 = vmatprep.subr.mxu0 0.0
    %10163 = vmatpush1.msra.mxu0 0.0
    %10164 = vmatprep.subr.mxu0 0.0
    %10165 = vmatpush1.msra.mxu0 0.0
    %10166 = vmatprep.subr.mxu0 0.0
    %10167 = vmatpush1.msra.mxu0 0.0
    %10168 = vmatprep.subr.mxu0 0.0
    %10169 = vmatpush1.msra.mxu0 0.0
    %10170 = vmatprep.subr.mxu0 0.0
    %10171 = vmatpush1.msra.mxu0 0.0
    %10172 = vmatprep.subr.mxu0 0.0
    %10173 = vmatpush1.msra.mxu0 0.0
    %10174 = vmatprep.subr.mxu0 0.0
    %10175 = vmatpush1.msra.mxu0 0.0
    %10176 = vmatprep.subr.mxu0 0.0
    %10177 = vmatpush1.msra.mxu0 0.0
    %10178 = vmatprep.subr.mxu0 0.0
    %10179 = vmatpush1.msra.mxu0 0.0
    %10180 = vmatprep.subr.mxu0 0.0
    %10181 = vmatpush1.msra.mxu0 0.0
    %10182 = vmatprep.subr.mxu0 0.0
    %10183 = vmatpush1.msra.mxu0 0.0
    %10184 = vmatprep.mubr.f32.mxu0 0.0
    %v10185 = vand.u32 %v9891, 4294901760
    %v10186 = vsub.f32 %v9891, %v10185
    %v10187 = vand.u32 %v10186, 4294901760
    %10188 = vmatmul.mubr.f32.gmra.mrb[0].mxu0 %v10187
    %v10189 = vpop.f32.mrb[0].mxu0
    %v10190 = vadd.f32 %v10116, %v10189
    %v10191 = vpop.f32.mrb[0].mxu0
    %10192 = vdwg.mxu0
    %10193 = vmatprep.subr.mxu0 0.0
    %v10194 = vand.u32 %v9888, 4294901760
    %v10195 = vsub.f32 %v9888, %v10194
    %v10196 = vand.u32 %v10195, 4294901760
    %10197 = vmatpush1.msra.mxu0 %v10196
    %10198 = vmatprep.subr.mxu0 0.0
    %10199 = vmatpush1.msra.mxu0 0.0
    %10200 = vmatprep.subr.mxu0 0.0
    %10201 = vmatpush1.msra.mxu0 0.0
    %10202 = vmatprep.subr.mxu0 0.0
    %10203 = vmatpush1.msra.mxu0 0.0
    %10204 = vmatprep.subr.mxu0 0.0
    %10205 = vmatpush1.msra.mxu0 0.0
    %10206 = vmatprep.subr.mxu0 0.0
    %10207 = vmatpush1.msra.mxu0 0.0
    %10208 = vmatprep.subr.mxu0 0.0
    %10209 = vmatpush1.msra.mxu0 0.0
    %10210 = vmatprep.subr.mxu0 0.0
    %10211 = vmatpush1.msra.mxu0 0.0
    %10212 = vmatprep.subr.mxu0 0.0
    %10213 = vmatpush1.msra.mxu0 0.0
    %10214 = vmatprep.subr.mxu0 0.0
    %10215 = vmatpush1.msra.mxu0 0.0
    %10216 = vmatprep.subr.mxu0 0.0
    %10217 = vmatpush1.msra.mxu0 0.0
    %10218 = vmatprep.subr.mxu0 0.0
    %10219 = vmatpush1.msra.mxu0 0.0
    %10220 = vmatprep.subr.mxu0 0.0
    %10221 = vmatpush1.msra.mxu0 0.0
    %10222 = vmatprep.subr.mxu0 0.0
    %10223 = vmatpush1.msra.mxu0 0.0
    %10224 = vmatprep.subr.mxu0 0.0
    %10225 = vmatpush1.msra.mxu0 0.0
    %10226 = vmatprep.subr.mxu0 0.0
    %10227 = vmatpush1.msra.mxu0 0.0
    %10228 = vmatprep.subr.mxu0 0.0
    %10229 = vmatpush1.msra.mxu0 0.0
    %10230 = vmatprep.subr.mxu0 0.0
    %10231 = vmatpush1.msra.mxu0 0.0
    %10232 = vmatprep.subr.mxu0 0.0
    %10233 = vmatpush1.msra.mxu0 0.0
    %10234 = vmatprep.subr.mxu0 0.0
    %10235 = vmatpush1.msra.mxu0 0.0
    %10236 = vmatprep.subr.mxu0 0.0
    %10237 = vmatpush1.msra.mxu0 0.0
    %10238 = vmatprep.subr.mxu0 0.0
    %10239 = vmatpush1.msra.mxu0 0.0
    %10240 = vmatprep.subr.mxu0 0.0
    %10241 = vmatpush1.msra.mxu0 0.0
    %10242 = vmatprep.subr.mxu0 0.0
    %10243 = vmatpush1.msra.mxu0 0.0
    %10244 = vmatprep.subr.mxu0 0.0
    %10245 = vmatpush1.msra.mxu0 0.0
    %10246 = vmatprep.subr.mxu0 0.0
    %10247 = vmatpush1.msra.mxu0 0.0
    %10248 = vmatprep.subr.mxu0 0.0
    %10249 = vmatpush1.msra.mxu0 0.0
    %10250 = vmatprep.subr.mxu0 0.0
    %10251 = vmatpush1.msra.mxu0 0.0
    %10252 = vmatprep.subr.mxu0 0.0
    %10253 = vmatpush1.msra.mxu0 0.0
    %10254 = vmatprep.subr.mxu0 0.0
    %10255 = vmatpush1.msra.mxu0 0.0
    %10256 = vmatprep.subr.mxu0 0.0
    %10257 = vmatpush1.msra.mxu0 0.0
    %10258 = vmatprep.subr.mxu0 0.0
    %10259 = vmatpush1.msra.mxu0 0.0
    %10260 = vmatprep.mubr.f32.mxu0 0.0
    %v10261 = vand.u32 %v9891, 4294901760
    %10262 = vmatmul.mubr.f32.gmra.mrb[0].mxu0 %v10261
    %v10263 = vpop.f32.mrb[0].mxu0
    %v10264 = vadd.f32 %v10190, %v10263
    %v10265 = vpop.f32.mrb[0].mxu0
    %10266 = vdwg.mxu0
    %10267 = vmatprep.subr.mxu0 0.0
    %v10268 = vand.u32 %v9888, 4294901760
    %10269 = vmatpush1.msra.mxu0 %v10268
    %10270 = vmatprep.subr.mxu0 0.0
    %10271 = vmatpush1.msra.mxu0 0.0
    %10272 = vmatprep.subr.mxu0 0.0
    %10273 = vmatpush1.msra.mxu0 0.0
    %10274 = vmatprep.subr.mxu0 0.0
    %10275 = vmatpush1.msra.mxu0 0.0
    %10276 = vmatprep.subr.mxu0 0.0
    %10277 = vmatpush1.msra.mxu0 0.0
    %10278 = vmatprep.subr.mxu0 0.0
    %10279 = vmatpush1.msra.mxu0 0.0
    %10280 = vmatprep.subr.mxu0 0.0
    %10281 = vmatpush1.msra.mxu0 0.0
    %10282 = vmatprep.subr.mxu0 0.0
    %10283 = vmatpush1.msra.mxu0 0.0
    %10284 = vmatprep.subr.mxu0 0.0
    %10285 = vmatpush1.msra.mxu0 0.0
    %10286 = vmatprep.subr.mxu0 0.0
    %10287 = vmatpush1.msra.mxu0 0.0
    %10288 = vmatprep.subr.mxu0 0.0
    %10289 = vmatpush1.msra.mxu0 0.0
    %10290 = vmatprep.subr.mxu0 0.0
    %10291 = vmatpush1.msra.mxu0 0.0
    %10292 = vmatprep.subr.mxu0 0.0
    %10293 = vmatpush1.msra.mxu0 0.0
    %10294 = vmatprep.subr.mxu0 0.0
    %10295 = vmatpush1.msra.mxu0 0.0
    %10296 = vmatprep.subr.mxu0 0.0
    %10297 = vmatpush1.msra.mxu0 0.0
    %10298 = vmatprep.subr.mxu0 0.0
    %10299 = vmatpush1.msra.mxu0 0.0
    %10300 = vmatprep.subr.mxu0 0.0
    %10301 = vmatpush1.msra.mxu0 0.0
    %10302 = vmatprep.subr.mxu0 0.0
    %10303 = vmatpush1.msra.mxu0 0.0
    %10304 = vmatprep.subr.mxu0 0.0
    %10305 = vmatpush1.msra.mxu0 0.0
    %10306 = vmatprep.subr.mxu0 0.0
    %10307 = vmatpush1.msra.mxu0 0.0
    %10308 = vmatprep.subr.mxu0 0.0
    %10309 = vmatpush1.msra.mxu0 0.0
    %10310 = vmatprep.subr.mxu0 0.0
    %10311 = vmatpush1.msra.mxu0 0.0
    %10312 = vmatprep.subr.mxu0 0.0
    %10313 = vmatpush1.msra.mxu0 0.0
    %10314 = vmatprep.subr.mxu0 0.0
    %10315 = vmatpush1.msra.mxu0 0.0
    %10316 = vmatprep.subr.mxu0 0.0
    %10317 = vmatpush1.msra.mxu0 0.0
    %10318 = vmatprep.subr.mxu0 0.0
    %10319 = vmatpush1.msra.mxu0 0.0
    %10320 = vmatprep.subr.mxu0 0.0
    %10321 = vmatpush1.msra.mxu0 0.0
    %10322 = vmatprep.subr.mxu0 0.0
    %10323 = vmatpush1.msra.mxu0 0.0
    %10324 = vmatprep.subr.mxu0 0.0
    %10325 = vmatpush1.msra.mxu0 0.0
    %10326 = vmatprep.subr.mxu0 0.0
    %10327 = vmatpush1.msra.mxu0 0.0
    %10328 = vmatprep.subr.mxu0 0.0
    %10329 = vmatpush1.msra.mxu0 0.0
    %10330 = vmatprep.subr.mxu0 0.0
    %10331 = vmatpush1.msra.mxu0 0.0
    %10332 = vmatprep.mubr.f32.mxu0 0.0
    %v10333 = vand.u32 %v9891, 4294901760
    %10334 = vmatmul.mubr.f32.gmra.mrb[0].mxu0 %v10333
    %v10335 = vpop.f32.mrb[0].mxu0
    %v10336 = vadd.f32 %v10264, %v10335
    %v10337 = vpop.f32.mrb[0].mxu0
    %10338 = vdwg.mxu0
    %v10339 = vadd.f32 %v9886, %v10336
    %v10340 = vld [vmem:[%s7] sm:$0x1]
    %v10342 = vlaneseq
    %v10343 = vshrl.u32 %v10342, 7
    %v10344 = vsub.s32 0, %v10343
    %v10345 = vrot.slane %v10340, %v10344
    %v10347 = vadd.f32 %v8531, %v10345
    %v10348 = vadd.f32 %v10339, %v10345
    %10349 = vst.msk [vmem:[#allocation2] sm:$0xff] %vm36, %v10347
    %10350 = vst.msk [vmem:[#allocation2 + $0x8] sm:$0xff] %vm36, %v10348
    // Predicated region
    $region34: #{reattention.1} parent=1 // pred_check
      _
    $region35: #{reattention.1} parent=1 // pred_check_branch
      %10352 = sbr.rel (0) target = $region37
    $region36: #{reattention.1} parent=1 // pred_region
      %s10354 = ssub.s32 256, 256
      %10355 = vsyncadd [#allocation3], %s10354
      %s10356 = sshll.u32 [#allocation2], 4
      %s10357 = int_to_ptr.vmem [resolvable:$true] %s10356
      %10362 = dma.vmem_to_hbm [thread:$0]  %s10357, 256, %s8, [#allocation3], 128, 128, 8
    $region37: #{reattention.1} parent=1 // pred_fallthru
      _
    // Predicated region
    $region38: #{reattention.1} parent=1 // pred_check
      _
    $region39: #{reattention.1} parent=1 // pred_check_branch
      %10364 = sbr.rel (0) target = $region41
    $region40: #{reattention.1} parent=1 // pred_region
      %10365 = dma.done [#allocation3], 256
    $region41: #{reattention.1} parent=1 // pred_fallthru
      _
    %10366 = vsyncpa [#allocation3], 1

</llo_original>
